<compile_context>
chip_gen: v7x
topology: tpu7x:2x2x1
jax: 0.10.0
libtpu: 0.0.40
codegen_flags: <defaults>
</compile_context>

<pallas_src>
import math

import numpy as np

import jax
import jax.numpy as jnp
from jax.experimental import pallas as pl
from jax.experimental.pallas import tpu as pltpu

# ----------------------------- config ---------------------------------------
BATCH = 2            # bs
E = 32               # pe_hidden_dim / d_model
NHEADS = 4           # nheads
DH = E // NHEADS     # head dim
NQ = 8               # num_queries
HQ = NHEADS * NQ     # head-stacked query rows
DEC_LAYERS = 3       # dec_layers
DFF = 64             # dim_feedforward
NUM_CLASSES = 4      # -> class head out dim 5
MASK_DIM = 32        # mask_dim
NUM_LEVELS = 3       # num_feature_levels
OUT_LANES = 128      # packed small-output lane width
RT_OFF = 8           # rt lanes [RT_OFF, RT_OFF+4) in the packed output


# ----------------------------- fused decoder kernel -------------------------
def _decoder_kernel(
    # per-batch inputs
    mf_ref, s0_ref, s1_ref, s2_ref,
    # batch-invariant constants
    qf_ref, dln_ref, hm_ref,
    r0_ref, r1_ref, r2_ref,
    pk0_ref, pk1_ref, pk2_ref,
    cawq_ref, caqc_ref, cawkv_ref, cawo_ref,
    sawq_ref, saqc_ref, sawkv_ref, sakvc_ref, sawo_ref,
    fw1_ref, fb1_ref, fw2_ref, vec_ref,
    hw1_ref, hw2_ref, hw3_ref,
    # outputs
    osm_ref, omk_ref,
):
    f32 = jnp.float32

    def mm(a, b):
        return jnp.dot(a, b, preferred_element_type=f32)

    def layer_norm(x, g, b):
        # var = E[x^2] - mu^2 so the two reduces can overlap.
        mu = jnp.mean(x, axis=-1, keepdims=True)
        ms = jnp.mean(x * x, axis=-1, keepdims=True)
        var = ms - mu * mu
        return (x - mu) * jax.lax.rsqrt(var + 1e-5) * g + b

    hmask = hm_ref[...]                      # (HQ, E) 0/1 head block mask
    mf = mf_ref[0]                           # (MASK_DIM, HWm)
    dln = dln_ref[...]                       # (2, E): [gamma, beta]
    srcs = (s0_ref[0], s1_ref[0], s2_ref[0])
    posks = (pk0_ref[...], pk1_ref[...], pk2_ref[...])
    rmats = (r0_ref[...], r1_ref[...], r2_ref[...])

    hw1f = hw1_ref[...]                      # (E+1, 2E + NUM_CLASSES + 1)
    hw2f = hw2_ref[...]                      # (2E+1, 2E)
    hw3f = hw3_ref[...]                      # (2E+1, MASK_DIM + 4)

    # zero the packed (class | rt) output block once (lanes we never write
    # would otherwise hold garbage in the returned array).
    osm_ref[...] = jnp.zeros((1, DEC_LAYERS + 1, NQ, OUT_LANES), f32)

    def attention(x_q, k, v, wq, qc, wo, bo, mask_add):
        """MHA with all heads stacked along sublanes.

        x_q: (NQ, E) query-side input (query_pos folded into qc).
        k, v: (S, E) full keys / values.
        wq:  (E, E) query projection pre-scaled by 1/sqrt(DH).
        qc:  (HQ, E) tiled+masked+scaled (query_embed@Wq + bq) constant.
        wo/bo: output projection.  mask_add: (HQ, S) additive mask or None.
        """
        x_t = jnp.concatenate([x_q] * NHEADS, axis=0)             # (HQ, E)
        qbs = mm(x_t, wq) * hmask + qc                            # head-blocked Q
        s = jax.lax.dot_general(qbs, k, (((1,), (1,)), ((), ())),
                                preferred_element_type=f32)       # (HQ, S)
        if mask_add is not None:
            s = s + mask_add
        p = jnp.exp(s - jnp.max(s, axis=-1, keepdims=True))
        inv = pl.reciprocal(jnp.sum(p, axis=-1, keepdims=True), approx=True)
        c = mm(p, v) * (inv * hmask)                              # (HQ, E)
        ctx = c[0:NQ, :]
        for h in range(1, NHEADS):                                # head combine
            ctx = ctx + c[h * NQ:(h + 1) * NQ, :]                 # (NQ, E)
        return mm(ctx, wo) + bo

    def pred_head(out_tgt, stage, rmat):
        """decoder_norm + fused (mask_embed | rt | class) heads + mask matmul.

        Returns the head-tiled additive attention mask for the next
        cross-attention, or None when it is not needed.
        """
        dec = layer_norm(out_tgt, dln[0:1, :], dln[1:2, :])       # (NQ, E)
        f1 = mm(dec, hw1f[0:E, :]) + hw1f[E:E + 1, :]             # (NQ, 2E+5)
        osm_ref[0, stage, :, 0:NUM_CLASSES + 1] = (
            f1[:, 2 * E:2 * E + NUM_CLASSES + 1])                 # class logits
        h2 = jnp.maximum(f1[:, 0:2 * E], 0.0)                     # [me_h1 | rt_h1]
        h2 = jnp.maximum(mm(h2, hw2f[0:2 * E, :]) + hw2f[2 * E:2 * E + 1, :], 0.0)
        f3 = mm(h2, hw3f[0:2 * E, :]) + hw3f[2 * E:2 * E + 1, :]  # [memb | rt]
        if stage > 0:   # rt predictions are only collected after each layer
            osm_ref[0, stage, :, RT_OFF:RT_OFF + 4] = (
                jax.nn.sigmoid(f3[:, MASK_DIM:MASK_DIM + 4]))
        mask_flat = mm(f3[:, 0:MASK_DIM], mf)                     # (NQ, HWm)
        omk_ref[0, stage] = mask_flat
        if rmat is None:
            return None
        # bilinear resize as one matmul with a static resize matrix;
        # sigmoid(x) < 0.5 <=> x < 0.  Rows that would be fully masked are
        # un-masked (attn_mask[sum(-1)==S] = False in the reference).
        resized = mm(mask_flat, rmat)                             # (NQ, S_next)
        row_ok = jnp.max(resized, axis=-1, keepdims=True) >= 0.0
        madd = jnp.where(jnp.logical_and(resized < 0.0, row_ok),
                         f32(-1e30), f32(0.0))
        return jnp.concatenate([madd] * NHEADS, axis=0)           # (HQ, S_next)

    # ----- decoder -----
    output = qf_ref[...]                                          # (NQ, E)
    mask_add = pred_head(output, 0, rmats[0])

    for i in range(DEC_LAYERS):
        lvl = i % NUM_LEVELS
        vec = vec_ref[i]                                          # (10, E)

        # ---- cross-attention (post-norm) ----
        kv = mm(srcs[lvl], cawkv_ref[i])                          # (S, 2E)
        k = kv[:, 0:E] + posks[i]                                 # + (pos@Wk + bk)
        v = kv[:, E:2 * E] + vec[0:1, :]                          # + bv
        att = attention(output, k, v, cawq_ref[i], caqc_ref[i],
                        cawo_ref[i], vec[1:2, :], mask_add)
        output = layer_norm(output + att, vec[4:5, :], vec[5:6, :])

        # ---- self-attention (fused K/V, no mask) ----
        kv = mm(output, sawkv_ref[i]) + sakvc_ref[i]              # (NQ, 2E)
        att = attention(output, kv[:, 0:E], kv[:, E:2 * E],
                        sawq_ref[i], saqc_ref[i], sawo_ref[i],
                        vec[2:3, :], None)
        output = layer_norm(output + att, vec[6:7, :], vec[7:8, :])

        # ---- FFN ----
        h = jnp.maximum(mm(output, fw1_ref[i]) + fb1_ref[i], 0.0)
        output = layer_norm(output + mm(h, fw2_ref[i]) + vec[3:4, :],
                            vec[8:9, :], vec[9:10, :])

        # ---- prediction head (last one needs no new attn mask) ----
        next_rmat = rmats[(i + 1) % NUM_LEVELS] if i < DEC_LAYERS - 1 else None
        mask_add = pred_head(output, i + 1, next_rmat)


# ----------------------------- static helpers (numpy) ------------------------
def _head_mask():
    hm = np.zeros((HQ, E), np.float32)
    for h in range(NHEADS):
        hm[h * NQ:(h + 1) * NQ, h * DH:(h + 1) * DH] = 1.0
    return hm


def _interp_weights(in_size, out_size):
    # F.interpolate(mode='bilinear', align_corners=False), no antialias.
    scale = in_size / out_size
    s = (np.arange(out_size, dtype=np.float64) + 0.5) * scale - 0.5
    s = np.maximum(s, 0.0)
    i0 = np.floor(s).astype(np.int64)
    i1 = np.minimum(i0 + 1, in_size - 1)
    frac = s - i0
    w = np.zeros((out_size, in_size), dtype=np.float64)
    w[np.arange(out_size), i0] += 1.0 - frac
    w[np.arange(out_size), i1] += frac
    return w


def _bilinear_resize_matrix(in_hw, out_hw):
    wy = _interp_weights(in_hw[0], out_hw[0])          # (out_h, in_h)
    wx = _interp_weights(in_hw[1], out_hw[1])          # (out_w, in_w)
    r = np.kron(wy, wx)                                # (out_hw, in_hw)
    return r.T.astype(np.float32)                      # (HW_in, HW_out)


# ----------------------------- positional embedding (plain JAX) --------------
def position_embedding_sine(H, W, num_pos_feats, temperature=10000.0):
    # PositionEmbeddingSine(normalize=True), mask=None -> cumsum of ones.
    # Batch-invariant; returns (H*W, 2*num_pos_feats).
    scale = 2.0 * math.pi
    eps = 1e-6
    y_embed = jnp.broadcast_to(
        jnp.arange(1, H + 1, dtype=jnp.float32)[:, None], (H, W))
    x_embed = jnp.broadcast_to(
        jnp.arange(1, W + 1, dtype=jnp.float32)[None, :], (H, W))
    y_embed = y_embed / (float(H) + eps) * scale
    x_embed = x_embed / (float(W) + eps) * scale
    dim_t = jnp.arange(num_pos_feats, dtype=jnp.float32)
    dim_t = temperature ** (2.0 * jnp.floor(dim_t / 2.0) / num_pos_feats)
    pos_x = x_embed[:, :, None] / dim_t
    pos_y = y_embed[:, :, None] / dim_t
    pos_x = jnp.stack([jnp.sin(pos_x[:, :, 0::2]), jnp.cos(pos_x[:, :, 1::2])],
                      axis=3).reshape(H, W, num_pos_feats)
    pos_y = jnp.stack([jnp.sin(pos_y[:, :, 0::2]), jnp.cos(pos_y[:, :, 1::2])],
                      axis=3).reshape(H, W, num_pos_feats)
    pos = jnp.concatenate([pos_y, pos_x], axis=2)      # (H, W, C)
    return pos.reshape(H * W, 2 * num_pos_feats)


# ----------------------------- BlockSpec helpers ------------------------------
def _batch_spec(arr):
    nd = arr.ndim
    return pl.BlockSpec((1,) + arr.shape[1:],
                        lambda b, nd=nd: (b,) + (0,) * (nd - 1))


def _const_spec(arr):
    nd = arr.ndim
    return pl.BlockSpec(arr.shape, lambda b, nd=nd: (0,) * nd)


# ----------------------------- full decoder ----------------------------------
def decoder_forward(params, x, mask_features, bev_decoder_out):
    assert len(x) == NUM_LEVELS and DEC_LAYERS == NUM_LEVELS
    B = mask_features.shape[0]
    Hm, Wm = mask_features.shape[2], mask_features.shape[3]
    HWm = Hm * Wm
    scale = 1.0 / math.sqrt(DH)
    hmask = jnp.asarray(_head_mask())

    # ---- per-batch data: src (memory + level_embed) per level ----------------
    # input_proj[i] is nn.Sequential() (identity): in_channels == pe_hidden_dim.
    srcs, size_list, pos_list = [], [], []
    for l in range(NUM_LEVELS):
        _, C, H, W = x[l].shape
        size_list.append((H, W))
        src = (x[l].reshape(B, C, H * W)
               + params["level_embed"][l][None, :, None]).transpose(0, 2, 1)
        srcs.append(src)                                          # (B, HW, E)
        pos_list.append(position_embedding_sine(H, W, C // 2))    # (HW, E)

    mf_flat = mask_features.reshape(B, MASK_DIM, HWm)
    rmats = [jnp.asarray(_bilinear_resize_matrix((Hm, Wm), size_list[l]))
             for l in range(NUM_LEVELS)]

    # ---- batch-invariant derived constants (tiny, fused by XLA) --------------
    qe = params["query_embed"]

    def q_side(wq, bq):
        # pre-scaled Q weight and the tiled+masked+scaled query_pos constant
        return wq * scale, jnp.tile(qe @ wq + bq, (NHEADS, 1)) * hmask * scale

    ca_wq, ca_qc, ca_wkv, posks = [], [], [], []
    sa_wq, sa_qc, sa_wkv, sa_kvc = [], [], [], []
    vecs = []
    for i in range(DEC_LAYERS):
        lvl = i % NUM_LEVELS
        wqs, qc = q_side(params["ca_wq"][i], params["ca_bq"][i])
        ca_wq.append(wqs)
        ca_qc.append(qc)
        ca_wkv.append(jnp.concatenate(
            [params["ca_wk"][i], params["ca_wv"][i]], axis=1))
        posks.append(pos_list[lvl] @ params["ca_wk"][i] + params["ca_bk"][i])

        wqs, qc = q_side(params["sa_wq"][i], params["sa_bq"][i])
        sa_wq.append(wqs)
        sa_qc.append(qc)
        sa_wkv.append(jnp.concatenate(
            [params["sa_wk"][i], params["sa_wv"][i]], axis=1))
        sa_kvc.append(jnp.concatenate(
            [qe @ params["sa_wk"][i] + params["sa_bk"][i],
             jnp.tile(params["sa_bv"][i], (NQ, 1))], axis=1))

        # row bundle: [ca_bv, ca_bo, sa_bo, ffn_b2, ca_ln(g,b), sa_ln(g,b), ffn_ln(g,b)]
        vecs.append(jnp.concatenate(
            [params["ca_bv"][i], params["ca_bo"][i], params["sa_bo"][i],
             params["ffn_b2"][i], params["ca_ln"][i], params["sa_ln"][i],
             params["ffn_ln"][i]], axis=0))                       # (10, E)

    stack = lambda xs: jnp.stack(xs, axis=0)

    # fused prediction-head weights:
    #   hw1: [me_w1 | rt_w1 | class_w] with bias as the last row
    #   hw2: block-diag [[me_w2,0],[0,rt_w2]] + bias row
    #   hw3: block-diag [[me_w3,0],[0,rt_w3]] + bias row
    z_ee = jnp.zeros((E, E), jnp.float32)
    hw1f = jnp.concatenate([
        jnp.concatenate([params["me_w1"], params["rt_w1"], params["class_w"]], axis=1),
        jnp.concatenate([params["me_b1"], params["rt_b1"], params["class_b"]], axis=1),
    ], axis=0)                                                    # (E+1, 2E+5)
    hw2f = jnp.concatenate([
        jnp.concatenate([jnp.concatenate([params["me_w2"], z_ee], axis=1),
                         jnp.concatenate([z_ee, params["rt_w2"]], axis=1)], axis=0),
        jnp.concatenate([params["me_b2"], params["rt_b2"]], axis=1),
    ], axis=0)                                                    # (2E+1, 2E)
    hw3f = jnp.concatenate([
        jnp.concatenate(
            [jnp.concatenate([params["me_w3"], jnp.zeros((E, 4), jnp.float32)], axis=1),
             jnp.concatenate([jnp.zeros((E, MASK_DIM), jnp.float32), params["rt_w3"]], axis=1)],
            axis=0),
        jnp.concatenate([params["me_b3"], params["rt_b3"]], axis=1),
    ], axis=0)                                                    # (2E+1, MASK_DIM+4)

    batch_inputs = [mf_flat, srcs[0], srcs[1], srcs[2]]
    const_inputs = [
        params["query_feat"], params["dec_ln"], hmask,
        rmats[0], rmats[1], rmats[2],
        posks[0], posks[1], posks[2],
        stack(ca_wq), stack(ca_qc), stack(ca_wkv), params["ca_wo"],
        stack(sa_wq), stack(sa_qc), stack(sa_wkv), stack(sa_kvc), params["sa_wo"],
        params["ffn_w1"], params["ffn_b1"], params["ffn_w2"], stack(vecs),
        hw1f, hw2f, hw3f,
    ]
    inputs = batch_inputs + const_inputs
    in_specs = ([_batch_spec(a) for a in batch_inputs]
                + [_const_spec(a) for a in const_inputs])

    out_shape = (
        jax.ShapeDtypeStruct((B, DEC_LAYERS + 1, NQ, OUT_LANES), jnp.float32),
        jax.ShapeDtypeStruct((B, DEC_LAYERS + 1, NQ, HWm), jnp.float32),
    )
    out_specs = (
        pl.BlockSpec((1, DEC_LAYERS + 1, NQ, OUT_LANES), lambda b: (b, 0, 0, 0)),
        pl.BlockSpec((1, DEC_LAYERS + 1, NQ, HWm), lambda b: (b, 0, 0, 0)),
    )

    out_small, out_msk = pl.pallas_call(
        _decoder_kernel,
        out_shape=out_shape,
        grid=(B,),
        in_specs=in_specs,
        out_specs=out_specs,
        compiler_params=pltpu.CompilerParams(
            dimension_semantics=("parallel",)),
    )(*inputs)

    preds_class = [out_small[:, s, :, :NUM_CLASSES + 1]
                   for s in range(DEC_LAYERS + 1)]
    preds_mask = [out_msk[:, s].reshape(B, NQ, Hm, Wm)
                  for s in range(DEC_LAYERS + 1)]
    preds_rt = [out_small[:, s + 1, :, RT_OFF:RT_OFF + 4]
                for s in range(DEC_LAYERS)]

    return {
        "pred_logits": preds_class[-1],
        "pred_masks": preds_mask[-1],
        "pred_rt": preds_rt[-1],
        "aux_outputs": [
            {"pred_logits": a, "pred_masks": b, "pred_rt": c}
            for a, b, c in zip(preds_class[:-1], preds_mask[:-1], preds_rt[:-1])
        ],
        "bev_decoder_out": bev_decoder_out,
    }


# ----------------------------- deterministic params --------------------------
def init_params(key):
    kit = iter(jax.random.split(key, 64))

    def rnd(shape, s=0.1):
        return s * jax.random.normal(next(kit), shape, dtype=jnp.float32)

    L = DEC_LAYERS
    ln_pair = jnp.stack([jnp.ones((E,), jnp.float32),
                         jnp.zeros((E,), jnp.float32)])            # (2, E)
    ln_stack = jnp.tile(ln_pair[None], (L, 1, 1))                  # (L, 2, E)

    return {
        "query_feat": rnd((NQ, E)),
        "query_embed": rnd((NQ, E)),
        "level_embed": rnd((NUM_LEVELS, E)),
        "dec_ln": ln_pair,
        "class_w": rnd((E, NUM_CLASSES + 1)), "class_b": rnd((1, NUM_CLASSES + 1)),
        "rt_w1": rnd((E, E)), "rt_b1": rnd((1, E)),
        "rt_w2": rnd((E, E)), "rt_b2": rnd((1, E)),
        "rt_w3": rnd((E, 4)), "rt_b3": rnd((1, 4)),
        "me_w1": rnd((E, E)), "me_b1": rnd((1, E)),
        "me_w2": rnd((E, E)), "me_b2": rnd((1, E)),
        "me_w3": rnd((E, MASK_DIM)), "me_b3": rnd((1, MASK_DIM)),
        "ca_wq": rnd((L, E, E)), "ca_wk": rnd((L, E, E)),
        "ca_wv": rnd((L, E, E)), "ca_wo": rnd((L, E, E)),
        "ca_bq": rnd((L, 1, E)), "ca_bk": rnd((L, 1, E)),
        "ca_bv": rnd((L, 1, E)), "ca_bo": rnd((L, 1, E)),
        "ca_ln": ln_stack,
        "sa_wq": rnd((L, E, E)), "sa_wk": rnd((L, E, E)),
        "sa_wv": rnd((L, E, E)), "sa_wo": rnd((L, E, E)),
        "sa_bq": rnd((L, 1, E)), "sa_bk": rnd((L, 1, E)),
        "sa_bv": rnd((L, 1, E)), "sa_bo": rnd((L, 1, E)),
        "sa_ln": ln_stack,
        "ffn_w1": rnd((L, E, DFF)), "ffn_b1": rnd((L, 1, DFF)),
        "ffn_w2": rnd((L, DFF, E)), "ffn_b2": rnd((L, 1, E)),
        "ffn_ln": ln_stack,
    }


# ----------------------------- main ------------------------------------------
if __name__ == "__main__":
    key = jax.random.PRNGKey(0)
    kp, kx0, kx1, kx2, kmf, kbev = jax.random.split(key, 6)
    params = init_params(kp)

    # x: three multiscale feature maps, NCHW, channels == pe_hidden_dim
    x = (
        jax.random.normal(kx0, (BATCH, E, 8, 8), jnp.float32),
        jax.random.normal(kx1, (BATCH, E, 4, 4), jnp.float32),
        jax.random.normal(kx2, (BATCH, E, 2, 2), jnp.float32),
    )
    mask_features = jax.random.normal(kmf, (BATCH, MASK_DIM, 16, 16), jnp.float32)
    bev_decoder_out = jax.random.normal(kbev, (BATCH, E, 16, 16), jnp.float32)

    fwd = jax.jit(decoder_forward)
    out = fwd(params, x, mask_features, bev_decoder_out)
    jax.block_until_ready(out)

    # light sanity checks on shapes
    assert out["pred_logits"].shape == (BATCH, NQ, NUM_CLASSES + 1)
    assert out["pred_masks"].shape == (BATCH, NQ, 16, 16)
    assert out["pred_rt"].shape == (BATCH, NQ, 4)
    assert len(out["aux_outputs"]) == 2
    print("KERNEL_OK")
</pallas_src>

<mosaic_0001>
module attributes {stable_mosaic.version = 11 : i64} {
  func.func @_decoder_kernel(%arg0: i32, %arg1: memref<1x32x256xf32, #tpu.memory_space<vmem>>, %arg2: memref<1x64x32xf32, #tpu.memory_space<vmem>>, %arg3: memref<1x16x32xf32, #tpu.memory_space<vmem>>, %arg4: memref<1x4x32xf32, #tpu.memory_space<vmem>>, %arg5: memref<8x32xf32, #tpu.memory_space<vmem>>, %arg6: memref<2x32xf32, #tpu.memory_space<vmem>>, %arg7: memref<32x32xf32, #tpu.memory_space<vmem>>, %arg8: memref<256x64xf32, #tpu.memory_space<vmem>>, %arg9: memref<256x16xf32, #tpu.memory_space<vmem>>, %arg10: memref<256x4xf32, #tpu.memory_space<vmem>>, %arg11: memref<64x32xf32, #tpu.memory_space<vmem>>, %arg12: memref<16x32xf32, #tpu.memory_space<vmem>>, %arg13: memref<4x32xf32, #tpu.memory_space<vmem>>, %arg14: memref<3x32x32xf32, #tpu.memory_space<vmem>>, %arg15: memref<3x32x32xf32, #tpu.memory_space<vmem>>, %arg16: memref<3x32x64xf32, #tpu.memory_space<vmem>>, %arg17: memref<3x32x32xf32, #tpu.memory_space<vmem>>, %arg18: memref<3x32x32xf32, #tpu.memory_space<vmem>>, %arg19: memref<3x32x32xf32, #tpu.memory_space<vmem>>, %arg20: memref<3x32x64xf32, #tpu.memory_space<vmem>>, %arg21: memref<3x8x64xf32, #tpu.memory_space<vmem>>, %arg22: memref<3x32x32xf32, #tpu.memory_space<vmem>>, %arg23: memref<3x32x64xf32, #tpu.memory_space<vmem>>, %arg24: memref<3x1x64xf32, #tpu.memory_space<vmem>>, %arg25: memref<3x64x32xf32, #tpu.memory_space<vmem>>, %arg26: memref<3x10x32xf32, #tpu.memory_space<vmem>>, %arg27: memref<33x69xf32, #tpu.memory_space<vmem>>, %arg28: memref<65x64xf32, #tpu.memory_space<vmem>>, %arg29: memref<65x36xf32, #tpu.memory_space<vmem>>, %arg30: memref<1x4x8x128xf32, #tpu.memory_space<vmem>>, %arg31: memref<1x4x8x256xf32, #tpu.memory_space<vmem>>) attributes {dimension_semantics = [#tpu.dimension_semantics<parallel>], iteration_bounds = array<i64: 2>, scalar_prefetch = 0 : i64, scratch_operands = 0 : i64, tpu.core_type = #tpu.core_type<tc>, window_params = [{transform_indices = @transform_0, window_bounds = array<i64: 1, 32, 256>}, {transform_indices = @transform_1, window_bounds = array<i64: 1, 64, 32>}, {transform_indices = @transform_2, window_bounds = array<i64: 1, 16, 32>}, {transform_indices = @transform_3, window_bounds = array<i64: 1, 4, 32>}, {pipeline_mode = #tpu.pipeline_mode<synchronous>, transform_indices = @transform_4, window_bounds = array<i64: 8, 32>}, {pipeline_mode = #tpu.pipeline_mode<synchronous>, transform_indices = @transform_5, window_bounds = array<i64: 2, 32>}, {pipeline_mode = #tpu.pipeline_mode<synchronous>, transform_indices = @transform_6, window_bounds = array<i64: 32, 32>}, {pipeline_mode = #tpu.pipeline_mode<synchronous>, transform_indices = @transform_7, window_bounds = array<i64: 256, 64>}, {pipeline_mode = #tpu.pipeline_mode<synchronous>, transform_indices = @transform_8, window_bounds = array<i64: 256, 16>}, {pipeline_mode = #tpu.pipeline_mode<synchronous>, transform_indices = @transform_9, window_bounds = array<i64: 256, 4>}, {pipeline_mode = #tpu.pipeline_mode<synchronous>, transform_indices = @transform_10, window_bounds = array<i64: 64, 32>}, {pipeline_mode = #tpu.pipeline_mode<synchronous>, transform_indices = @transform_11, window_bounds = array<i64: 16, 32>}, {pipeline_mode = #tpu.pipeline_mode<synchronous>, transform_indices = @transform_12, window_bounds = array<i64: 4, 32>}, {pipeline_mode = #tpu.pipeline_mode<synchronous>, transform_indices = @transform_13, window_bounds = array<i64: 3, 32, 32>}, {pipeline_mode = #tpu.pipeline_mode<synchronous>, transform_indices = @transform_14, window_bounds = array<i64: 3, 32, 32>}, {pipeline_mode = #tpu.pipeline_mode<synchronous>, transform_indices = @transform_15, window_bounds = array<i64: 3, 32, 64>}, {pipeline_mode = #tpu.pipeline_mode<synchronous>, transform_indices = @transform_16, window_bounds = array<i64: 3, 32, 32>}, {pipeline_mode = #tpu.pipeline_mode<synchronous>, transform_indices = @transform_17, window_bounds = array<i64: 3, 32, 32>}, {pipeline_mode = #tpu.pipeline_mode<synchronous>, transform_indices = @transform_18, window_bounds = array<i64: 3, 32, 32>}, {pipeline_mode = #tpu.pipeline_mode<synchronous>, transform_indices = @transform_19, window_bounds = array<i64: 3, 32, 64>}, {pipeline_mode = #tpu.pipeline_mode<synchronous>, transform_indices = @transform_20, window_bounds = array<i64: 3, 8, 64>}, {pipeline_mode = #tpu.pipeline_mode<synchronous>, transform_indices = @transform_21, window_bounds = array<i64: 3, 32, 32>}, {pipeline_mode = #tpu.pipeline_mode<synchronous>, transform_indices = @transform_22, window_bounds = array<i64: 3, 32, 64>}, {pipeline_mode = #tpu.pipeline_mode<synchronous>, transform_indices = @transform_23, window_bounds = array<i64: 3, 1, 64>}, {pipeline_mode = #tpu.pipeline_mode<synchronous>, transform_indices = @transform_24, window_bounds = array<i64: 3, 64, 32>}, {pipeline_mode = #tpu.pipeline_mode<synchronous>, transform_indices = @transform_25, window_bounds = array<i64: 3, 10, 32>}, {pipeline_mode = #tpu.pipeline_mode<synchronous>, transform_indices = @transform_26, window_bounds = array<i64: 33, 69>}, {pipeline_mode = #tpu.pipeline_mode<synchronous>, transform_indices = @transform_27, window_bounds = array<i64: 65, 64>}, {pipeline_mode = #tpu.pipeline_mode<synchronous>, transform_indices = @transform_28, window_bounds = array<i64: 65, 36>}, {transform_indices = @transform_29, window_bounds = array<i64: 1, 4, 8, 128>}, {transform_indices = @transform_30, window_bounds = array<i64: 1, 4, 8, 256>}]} {
    %c0 = arith.constant 0 : index
    %c0_0 = arith.constant 0 : index
    %0 = vector.load %arg7[%c0, %c0_0] : memref<32x32xf32, #tpu.memory_space<vmem>>, vector<32x32xf32>
    %c0_1 = arith.constant 0 : index
    %c0_2 = arith.constant 0 : index
    %c0_3 = arith.constant 0 : index
    %1 = vector.load %arg1[%c0_1, %c0_2, %c0_3] : memref<1x32x256xf32, #tpu.memory_space<vmem>>, vector<1x32x256xf32>
    %2 = vector.shape_cast %1 : vector<1x32x256xf32> to vector<32x256xf32>
    %c0_4 = arith.constant 0 : index
    %c0_5 = arith.constant 0 : index
    %3 = vector.load %arg6[%c0_4, %c0_5] : memref<2x32xf32, #tpu.memory_space<vmem>>, vector<2x32xf32>
    %c0_6 = arith.constant 0 : index
    %c0_7 = arith.constant 0 : index
    %c0_8 = arith.constant 0 : index
    %4 = vector.load %arg2[%c0_6, %c0_7, %c0_8] : memref<1x64x32xf32, #tpu.memory_space<vmem>>, vector<1x64x32xf32>
    %5 = vector.shape_cast %4 : vector<1x64x32xf32> to vector<64x32xf32>
    %c0_9 = arith.constant 0 : index
    %c0_10 = arith.constant 0 : index
    %c0_11 = arith.constant 0 : index
    %6 = vector.load %arg3[%c0_9, %c0_10, %c0_11] : memref<1x16x32xf32, #tpu.memory_space<vmem>>, vector<1x16x32xf32>
    %7 = vector.shape_cast %6 : vector<1x16x32xf32> to vector<16x32xf32>
    %c0_12 = arith.constant 0 : index
    %c0_13 = arith.constant 0 : index
    %c0_14 = arith.constant 0 : index
    %8 = vector.load %arg4[%c0_12, %c0_13, %c0_14] : memref<1x4x32xf32, #tpu.memory_space<vmem>>, vector<1x4x32xf32>
    %9 = vector.shape_cast %8 : vector<1x4x32xf32> to vector<4x32xf32>
    %c0_15 = arith.constant 0 : index
    %c0_16 = arith.constant 0 : index
    %10 = vector.load %arg11[%c0_15, %c0_16] : memref<64x32xf32, #tpu.memory_space<vmem>>, vector<64x32xf32>
    %c0_17 = arith.constant 0 : index
    %c0_18 = arith.constant 0 : index
    %11 = vector.load %arg12[%c0_17, %c0_18] : memref<16x32xf32, #tpu.memory_space<vmem>>, vector<16x32xf32>
    %c0_19 = arith.constant 0 : index
    %c0_20 = arith.constant 0 : index
    %12 = vector.load %arg13[%c0_19, %c0_20] : memref<4x32xf32, #tpu.memory_space<vmem>>, vector<4x32xf32>
    %c0_21 = arith.constant 0 : index
    %c0_22 = arith.constant 0 : index
    %13 = vector.load %arg8[%c0_21, %c0_22] : memref<256x64xf32, #tpu.memory_space<vmem>>, vector<256x64xf32>
    %c0_23 = arith.constant 0 : index
    %c0_24 = arith.constant 0 : index
    %14 = vector.load %arg9[%c0_23, %c0_24] : memref<256x16xf32, #tpu.memory_space<vmem>>, vector<256x16xf32>
    %c0_25 = arith.constant 0 : index
    %c0_26 = arith.constant 0 : index
    %15 = vector.load %arg10[%c0_25, %c0_26] : memref<256x4xf32, #tpu.memory_space<vmem>>, vector<256x4xf32>
    %c0_27 = arith.constant 0 : index
    %c0_28 = arith.constant 0 : index
    %16 = vector.load %arg27[%c0_27, %c0_28] : memref<33x69xf32, #tpu.memory_space<vmem>>, vector<33x69xf32>
    %c0_29 = arith.constant 0 : index
    %c0_30 = arith.constant 0 : index
    %17 = vector.load %arg28[%c0_29, %c0_30] : memref<65x64xf32, #tpu.memory_space<vmem>>, vector<65x64xf32>
    %c0_31 = arith.constant 0 : index
    %c0_32 = arith.constant 0 : index
    %18 = vector.load %arg29[%c0_31, %c0_32] : memref<65x36xf32, #tpu.memory_space<vmem>>, vector<65x36xf32>
    %cst = arith.constant 0.000000e+00 : f32
    %19 = vector.broadcast %cst : f32 to vector<1x4x8x128xf32>
    %c0_33 = arith.constant 0 : index
    %c0_34 = arith.constant 0 : index
    %c0_35 = arith.constant 0 : index
    %c0_36 = arith.constant 0 : index
    %20 = vector.load %arg30[%c0_33, %c0_34, %c0_35, %c0_36] : memref<1x4x8x128xf32, #tpu.memory_space<vmem>>, vector<1x4x8x128xf32>
    tpu.vector_store %arg30[%c0_33, %c0_34, %c0_35, %c0_36], %19 {strides = array<i32>} : memref<1x4x8x128xf32, #tpu.memory_space<vmem>>, vector<1x4x8x128xf32>,
    %c0_37 = arith.constant 0 : index
    %c0_38 = arith.constant 0 : index
    %21 = vector.load %arg5[%c0_37, %c0_38] : memref<8x32xf32, #tpu.memory_space<vmem>>, vector<8x32xf32>
    %22 = vector.extract_strided_slice %3 {offsets = [0, 0], sizes = [1, 32], strides = [1, 1]} : vector<2x32xf32> to vector<1x32xf32>
    %23 = vector.extract_strided_slice %3 {offsets = [1, 0], sizes = [1, 32], strides = [1, 1]} : vector<2x32xf32> to vector<1x32xf32>
    %cst_39 = arith.constant dense<0.000000e+00> : vector<8xf32>
    %24 = vector.multi_reduction <add>, %21, %cst_39 [1] : vector<8x32xf32> to vector<8xf32>
    %25 = vector.shape_cast %24 : vector<8xf32> to vector<8x1xf32>
    %cst_40 = arith.constant 3.200000e+01 : f32
    %26 = vector.broadcast %cst_40 : f32 to vector<8x1xf32>
    %27 = arith.divf %25, %26 : vector<8x1xf32>
    %28 = arith.mulf %21, %21 : vector<8x32xf32>
    %cst_41 = arith.constant dense<0.000000e+00> : vector<8xf32>
    %29 = vector.multi_reduction <add>, %28, %cst_41 [1] : vector<8x32xf32> to vector<8xf32>
    %30 = vector.shape_cast %29 : vector<8xf32> to vector<8x1xf32>
    %cst_42 = arith.constant 3.200000e+01 : f32
    %31 = vector.broadcast %cst_42 : f32 to vector<8x1xf32>
    %32 = arith.divf %30, %31 : vector<8x1xf32>
    %33 = arith.mulf %27, %27 : vector<8x1xf32>
    %34 = arith.subf %32, %33 : vector<8x1xf32>
    %35 = vector.broadcast %27 : vector<8x1xf32> to vector<8x32xf32>
    %36 = arith.subf %21, %35 : vector<8x32xf32>
    %cst_43 = arith.constant 9.99999974E-6 : f32
    %37 = vector.broadcast %cst_43 : f32 to vector<8x1xf32>
    %38 = arith.addf %34, %37 : vector<8x1xf32>
    %39 = math.rsqrt %38 : vector<8x1xf32>
    %40 = vector.broadcast %39 : vector<8x1xf32> to vector<8x32xf32>
    %41 = arith.mulf %36, %40 : vector<8x32xf32>
    %42 = vector.broadcast %22 : vector<1x32xf32> to vector<8x32xf32>
    %43 = arith.mulf %41, %42 : vector<8x32xf32>
    %44 = vector.broadcast %23 : vector<1x32xf32> to vector<8x32xf32>
    %45 = arith.addf %43, %44 : vector<8x32xf32>
    %46 = vector.extract_strided_slice %16 {offsets = [0, 0], sizes = [32, 69], strides = [1, 1]} : vector<33x69xf32> to vector<32x69xf32>
    %cst_44 = arith.constant dense<0.000000e+00> : vector<8x69xf32>
    %47 = tpu.matmul %45, %46, %cst_44 {dimension_numbers = #tpu.dot_dimension_numbers<[1], [0], [0], [1], [0, 0, 1, 1], [], []>} : vector<8x32xf32>, vector<32x69xf32>, vector<8x69xf32> -> vector<8x69xf32>
    %48 = vector.extract_strided_slice %16 {offsets = [32, 0], sizes = [1, 69], strides = [1, 1]} : vector<33x69xf32> to vector<1x69xf32>
    %49 = vector.broadcast %48 : vector<1x69xf32> to vector<8x69xf32>
    %50 = arith.addf %47, %49 : vector<8x69xf32>
    %51 = vector.extract_strided_slice %50 {offsets = [0, 64], sizes = [8, 5], strides = [1, 1]} : vector<8x69xf32> to vector<8x5xf32>
    %c0_45 = arith.constant 0 : index
    %c0_46 = arith.constant 0 : index
    %c0_47 = arith.constant 0 : index
    %c0_48 = arith.constant 0 : index
    %52 = vector.load %arg30[%c0_45, %c0_46, %c0_47, %c0_48] : memref<1x4x8x128xf32, #tpu.memory_space<vmem>>, vector<1x1x8x5xf32>
    %53 = vector.shape_cast %52 : vector<1x1x8x5xf32> to vector<8x5xf32>
    %54 = vector.shape_cast %51 : vector<8x5xf32> to vector<1x1x8x5xf32>
    tpu.vector_store %arg30[%c0_45, %c0_46, %c0_47, %c0_48], %54 {strides = array<i32>} : memref<1x4x8x128xf32, #tpu.memory_space<vmem>>, vector<1x1x8x5xf32>,
    %55 = vector.extract_strided_slice %50 {offsets = [0, 0], sizes = [8, 64], strides = [1, 1]} : vector<8x69xf32> to vector<8x64xf32>
    %cst_49 = arith.constant 0.000000e+00 : f32
    %56 = vector.broadcast %cst_49 : f32 to vector<8x64xf32>
    %57 = arith.maximumf %55, %56 : vector<8x64xf32>
    %58 = vector.extract_strided_slice %17 {offsets = [0, 0], sizes = [64, 64], strides = [1, 1]} : vector<65x64xf32> to vector<64x64xf32>
    %cst_50 = arith.constant dense<0.000000e+00> : vector<8x64xf32>
    %59 = tpu.matmul %57, %58, %cst_50 {dimension_numbers = #tpu.dot_dimension_numbers<[1], [0], [0], [1], [0, 0, 1, 1], [], []>} : vector<8x64xf32>, vector<64x64xf32>, vector<8x64xf32> -> vector<8x64xf32>
    %60 = vector.extract_strided_slice %17 {offsets = [64, 0], sizes = [1, 64], strides = [1, 1]} : vector<65x64xf32> to vector<1x64xf32>
    %61 = vector.broadcast %60 : vector<1x64xf32> to vector<8x64xf32>
    %62 = arith.addf %59, %61 : vector<8x64xf32>
    %cst_51 = arith.constant 0.000000e+00 : f32
    %63 = vector.broadcast %cst_51 : f32 to vector<8x64xf32>
    %64 = arith.maximumf %62, %63 : vector<8x64xf32>
    %65 = vector.extract_strided_slice %18 {offsets = [0, 0], sizes = [64, 36], strides = [1, 1]} : vector<65x36xf32> to vector<64x36xf32>
    %cst_52 = arith.constant dense<0.000000e+00> : vector<8x36xf32>
    %66 = tpu.matmul %64, %65, %cst_52 {dimension_numbers = #tpu.dot_dimension_numbers<[1], [0], [0], [1], [0, 0, 1, 1], [], []>} : vector<8x64xf32>, vector<64x36xf32>, vector<8x36xf32> -> vector<8x36xf32>
    %67 = vector.extract_strided_slice %18 {offsets = [64, 0], sizes = [1, 36], strides = [1, 1]} : vector<65x36xf32> to vector<1x36xf32>
    %68 = vector.broadcast %67 : vector<1x36xf32> to vector<8x36xf32>
    %69 = arith.addf %66, %68 : vector<8x36xf32>
    %70 = vector.extract_strided_slice %69 {offsets = [0, 0], sizes = [8, 32], strides = [1, 1]} : vector<8x36xf32> to vector<8x32xf32>
    %cst_53 = arith.constant dense<0.000000e+00> : vector<8x256xf32>
    %71 = tpu.matmul %70, %2, %cst_53 {dimension_numbers = #tpu.dot_dimension_numbers<[1], [0], [0], [1], [0, 0, 1, 1], [], []>} : vector<8x32xf32>, vector<32x256xf32>, vector<8x256xf32> -> vector<8x256xf32>
    %c0_54 = arith.constant 0 : index
    %c0_55 = arith.constant 0 : index
    %c0_56 = arith.constant 0 : index
    %c0_57 = arith.constant 0 : index
    %72 = vector.load %arg31[%c0_54, %c0_55, %c0_56, %c0_57] : memref<1x4x8x256xf32, #tpu.memory_space<vmem>>, vector<1x1x8x256xf32>
    %73 = vector.shape_cast %72 : vector<1x1x8x256xf32> to vector<8x256xf32>
    %74 = vector.shape_cast %71 : vector<8x256xf32> to vector<1x1x8x256xf32>
    tpu.vector_store %arg31[%c0_54, %c0_55, %c0_56, %c0_57], %74 {strides = array<i32>} : memref<1x4x8x256xf32, #tpu.memory_space<vmem>>, vector<1x1x8x256xf32>,
    %cst_58 = arith.constant dense<0.000000e+00> : vector<8x64xf32>
    %75 = tpu.matmul %71, %13, %cst_58 {dimension_numbers = #tpu.dot_dimension_numbers<[1], [0], [0], [1], [0, 0, 1, 1], [], []>} : vector<8x256xf32>, vector<256x64xf32>, vector<8x64xf32> -> vector<8x64xf32>
    %cst_59 = arith.constant dense<0xFF800000> : vector<8xf32>
    %76 = vector.multi_reduction <maximumf>, %75, %cst_59 [1] : vector<8x64xf32> to vector<8xf32>
    %77 = vector.shape_cast %76 : vector<8xf32> to vector<8x1xf32>
    %cst_60 = arith.constant 0.000000e+00 : f32
    %78 = vector.broadcast %cst_60 : f32 to vector<8x1xf32>
    %79 = arith.cmpf oge, %77, %78 : vector<8x1xf32>
    %cst_61 = arith.constant 0.000000e+00 : f32
    %80 = vector.broadcast %cst_61 : f32 to vector<8x64xf32>
    %81 = arith.cmpf olt, %75, %80 : vector<8x64xf32>
    %82 = vector.broadcast %79 : vector<8x1xi1> to vector<8x64xi1>
    %83 = arith.andi %81, %82 : vector<8x64xi1>
    %cst_62 = arith.constant -1.000000e+30 : f32
    %cst_63 = arith.constant 0.000000e+00 : f32
    %84 = vector.broadcast %cst_62 : f32 to vector<8x64xf32>
    %85 = vector.broadcast %cst_63 : f32 to vector<8x64xf32>
    %86 = arith.select %83, %84, %85 : vector<8x64xi1>, vector<8x64xf32>
    %87 = tpu.concatenate %86, %86, %86, %86 in 0 : vector<8x64xf32>, vector<8x64xf32>, vector<8x64xf32>, vector<8x64xf32> -> vector<32x64xf32>
    %c0_64 = arith.constant 0 : index
    %c0_65 = arith.constant 0 : index
    %c0_66 = arith.constant 0 : index
    %88 = vector.load %arg26[%c0_64, %c0_65, %c0_66] : memref<3x10x32xf32, #tpu.memory_space<vmem>>, vector<1x10x32xf32>
    %89 = vector.shape_cast %88 : vector<1x10x32xf32> to vector<10x32xf32>
    %c0_67 = arith.constant 0 : index
    %c0_68 = arith.constant 0 : index
    %c0_69 = arith.constant 0 : index
    %90 = vector.load %arg16[%c0_67, %c0_68, %c0_69] : memref<3x32x64xf32, #tpu.memory_space<vmem>>, vector<1x32x64xf32>
    %91 = vector.shape_cast %90 : vector<1x32x64xf32> to vector<32x64xf32>
    %cst_70 = arith.constant dense<0.000000e+00> : vector<64x64xf32>
    %92 = tpu.matmul %5, %91, %cst_70 {dimension_numbers = #tpu.dot_dimension_numbers<[1], [0], [0], [1], [0, 0, 1, 1], [], []>} : vector<64x32xf32>, vector<32x64xf32>, vector<64x64xf32> -> vector<64x64xf32>
    %93 = vector.extract_strided_slice %92 {offsets = [0, 0], sizes = [64, 32], strides = [1, 1]} : vector<64x64xf32> to vector<64x32xf32>
    %94 = arith.addf %93, %10 : vector<64x32xf32>
    %95 = vector.extract_strided_slice %92 {offsets = [0, 32], sizes = [64, 32], strides = [1, 1]} : vector<64x64xf32> to vector<64x32xf32>
    %96 = vector.extract_strided_slice %89 {offsets = [0, 0], sizes = [1, 32], strides = [1, 1]} : vector<10x32xf32> to vector<1x32xf32>
    %97 = vector.broadcast %96 : vector<1x32xf32> to vector<64x32xf32>
    %98 = arith.addf %95, %97 : vector<64x32xf32>
    %c0_71 = arith.constant 0 : index
    %c0_72 = arith.constant 0 : index
    %c0_73 = arith.constant 0 : index
    %99 = vector.load %arg14[%c0_71, %c0_72, %c0_73] : memref<3x32x32xf32, #tpu.memory_space<vmem>>, vector<1x32x32xf32>
    %100 = vector.shape_cast %99 : vector<1x32x32xf32> to vector<32x32xf32>
    %c0_74 = arith.constant 0 : index
    %c0_75 = arith.constant 0 : index
    %c0_76 = arith.constant 0 : index
    %101 = vector.load %arg15[%c0_74, %c0_75, %c0_76] : memref<3x32x32xf32, #tpu.memory_space<vmem>>, vector<1x32x32xf32>
    %102 = vector.shape_cast %101 : vector<1x32x32xf32> to vector<32x32xf32>
    %c0_77 = arith.constant 0 : index
    %c0_78 = arith.constant 0 : index
    %c0_79 = arith.constant 0 : index
    %103 = vector.load %arg17[%c0_77, %c0_78, %c0_79] : memref<3x32x32xf32, #tpu.memory_space<vmem>>, vector<1x32x32xf32>
    %104 = vector.shape_cast %103 : vector<1x32x32xf32> to vector<32x32xf32>
    %105 = vector.extract_strided_slice %89 {offsets = [1, 0], sizes = [1, 32], strides = [1, 1]} : vector<10x32xf32> to vector<1x32xf32>
    %106 = tpu.concatenate %21, %21, %21, %21 in 0 : vector<8x32xf32>, vector<8x32xf32>, vector<8x32xf32>, vector<8x32xf32> -> vector<32x32xf32>
    %cst_80 = arith.constant dense<0.000000e+00> : vector<32x32xf32>
    %107 = tpu.matmul %106, %100, %cst_80 {dimension_numbers = #tpu.dot_dimension_numbers<[1], [0], [0], [1], [0, 0, 1, 1], [], []>} : vector<32x32xf32>, vector<32x32xf32>, vector<32x32xf32> -> vector<32x32xf32>
    %108 = arith.mulf %107, %0 : vector<32x32xf32>
    %109 = arith.addf %108, %102 : vector<32x32xf32>
    %cst_81 = arith.constant dense<0.000000e+00> : vector<32x64xf32>
    %110 = tpu.matmul %109, %94, %cst_81 {dimension_numbers = #tpu.dot_dimension_numbers<[1], [1], [0], [0], [0, 0, 1, 0], [], []>} : vector<32x32xf32>, vector<64x32xf32>, vector<32x64xf32> -> vector<32x64xf32>
    %111 = arith.addf %110, %87 : vector<32x64xf32>
    %cst_82 = arith.constant dense<0xFF800000> : vector<32xf32>
    %112 = vector.multi_reduction <maximumf>, %111, %cst_82 [1] : vector<32x64xf32> to vector<32xf32>
    %113 = vector.shape_cast %112 : vector<32xf32> to vector<32x1xf32>
    %114 = vector.broadcast %113 : vector<32x1xf32> to vector<32x64xf32>
    %115 = arith.subf %111, %114 : vector<32x64xf32>
    %116 = math.exp %115 : vector<32x64xf32>
    %cst_83 = arith.constant dense<0.000000e+00> : vector<32xf32>
    %117 = vector.multi_reduction <add>, %116, %cst_83 [1] : vector<32x64xf32> to vector<32xf32>
    %118 = vector.shape_cast %117 : vector<32xf32> to vector<32x1xf32>
    %119 = tpu.reciprocal %118 {approx = true} : vector<32x1xf32> -> vector<32x1xf32>
    %cst_84 = arith.constant dense<0.000000e+00> : vector<32x32xf32>
    %120 = tpu.matmul %116, %98, %cst_84 {dimension_numbers = #tpu.dot_dimension_numbers<[1], [0], [0], [1], [0, 0, 1, 1], [], []>} : vector<32x64xf32>, vector<64x32xf32>, vector<32x32xf32> -> vector<32x32xf32>
    %121 = vector.broadcast %119 : vector<32x1xf32> to vector<32x32xf32>
    %122 = arith.mulf %121, %0 : vector<32x32xf32>
    %123 = arith.mulf %120, %122 : vector<32x32xf32>
    %124 = vector.extract_strided_slice %123 {offsets = [0, 0], sizes = [8, 32], strides = [1, 1]} : vector<32x32xf32> to vector<8x32xf32>
    %125 = vector.extract_strided_slice %123 {offsets = [8, 0], sizes = [8, 32], strides = [1, 1]} : vector<32x32xf32> to vector<8x32xf32>
    %126 = arith.addf %124, %125 : vector<8x32xf32>
    %127 = vector.extract_strided_slice %123 {offsets = [16, 0], sizes = [8, 32], strides = [1, 1]} : vector<32x32xf32> to vector<8x32xf32>
    %128 = arith.addf %126, %127 : vector<8x32xf32>
    %129 = vector.extract_strided_slice %123 {offsets = [24, 0], sizes = [8, 32], strides = [1, 1]} : vector<32x32xf32> to vector<8x32xf32>
    %130 = arith.addf %128, %129 : vector<8x32xf32>
    %cst_85 = arith.constant dense<0.000000e+00> : vector<8x32xf32>
    %131 = tpu.matmul %130, %104, %cst_85 {dimension_numbers = #tpu.dot_dimension_numbers<[1], [0], [0], [1], [0, 0, 1, 1], [], []>} : vector<8x32xf32>, vector<32x32xf32>, vector<8x32xf32> -> vector<8x32xf32>
    %132 = vector.broadcast %105 : vector<1x32xf32> to vector<8x32xf32>
    %133 = arith.addf %131, %132 : vector<8x32xf32>
    %134 = arith.addf %21, %133 : vector<8x32xf32>
    %135 = vector.extract_strided_slice %89 {offsets = [4, 0], sizes = [1, 32], strides = [1, 1]} : vector<10x32xf32> to vector<1x32xf32>
    %136 = vector.extract_strided_slice %89 {offsets = [5, 0], sizes = [1, 32], strides = [1, 1]} : vector<10x32xf32> to vector<1x32xf32>
    %cst_86 = arith.constant dense<0.000000e+00> : vector<8xf32>
    %137 = vector.multi_reduction <add>, %134, %cst_86 [1] : vector<8x32xf32> to vector<8xf32>
    %138 = vector.shape_cast %137 : vector<8xf32> to vector<8x1xf32>
    %cst_87 = arith.constant 3.200000e+01 : f32
    %139 = vector.broadcast %cst_87 : f32 to vector<8x1xf32>
    %140 = arith.divf %138, %139 : vector<8x1xf32>
    %141 = arith.mulf %134, %134 : vector<8x32xf32>
    %cst_88 = arith.constant dense<0.000000e+00> : vector<8xf32>
    %142 = vector.multi_reduction <add>, %141, %cst_88 [1] : vector<8x32xf32> to vector<8xf32>
    %143 = vector.shape_cast %142 : vector<8xf32> to vector<8x1xf32>
    %cst_89 = arith.constant 3.200000e+01 : f32
    %144 = vector.broadcast %cst_89 : f32 to vector<8x1xf32>
    %145 = arith.divf %143, %144 : vector<8x1xf32>
    %146 = arith.mulf %140, %140 : vector<8x1xf32>
    %147 = arith.subf %145, %146 : vector<8x1xf32>
    %148 = vector.broadcast %140 : vector<8x1xf32> to vector<8x32xf32>
    %149 = arith.subf %134, %148 : vector<8x32xf32>
    %cst_90 = arith.constant 9.99999974E-6 : f32
    %150 = vector.broadcast %cst_90 : f32 to vector<8x1xf32>
    %151 = arith.addf %147, %150 : vector<8x1xf32>
    %152 = math.rsqrt %151 : vector<8x1xf32>
    %153 = vector.broadcast %152 : vector<8x1xf32> to vector<8x32xf32>
    %154 = arith.mulf %149, %153 : vector<8x32xf32>
    %155 = vector.broadcast %135 : vector<1x32xf32> to vector<8x32xf32>
    %156 = arith.mulf %154, %155 : vector<8x32xf32>
    %157 = vector.broadcast %136 : vector<1x32xf32> to vector<8x32xf32>
    %158 = arith.addf %156, %157 : vector<8x32xf32>
    %c0_91 = arith.constant 0 : index
    %c0_92 = arith.constant 0 : index
    %c0_93 = arith.constant 0 : index
    %159 = vector.load %arg20[%c0_91, %c0_92, %c0_93] : memref<3x32x64xf32, #tpu.memory_space<vmem>>, vector<1x32x64xf32>
    %160 = vector.shape_cast %159 : vector<1x32x64xf32> to vector<32x64xf32>
    %cst_94 = arith.constant dense<0.000000e+00> : vector<8x64xf32>
    %161 = tpu.matmul %158, %160, %cst_94 {dimension_numbers = #tpu.dot_dimension_numbers<[1], [0], [0], [1], [0, 0, 1, 1], [], []>} : vector<8x32xf32>, vector<32x64xf32>, vector<8x64xf32> -> vector<8x64xf32>
    %c0_95 = arith.constant 0 : index
    %c0_96 = arith.constant 0 : index
    %c0_97 = arith.constant 0 : index
    %162 = vector.load %arg21[%c0_95, %c0_96, %c0_97] : memref<3x8x64xf32, #tpu.memory_space<vmem>>, vector<1x8x64xf32>
    %163 = vector.shape_cast %162 : vector<1x8x64xf32> to vector<8x64xf32>
    %164 = arith.addf %161, %163 : vector<8x64xf32>
    %165 = vector.extract_strided_slice %164 {offsets = [0, 0], sizes = [8, 32], strides = [1, 1]} : vector<8x64xf32> to vector<8x32xf32>
    %166 = vector.extract_strided_slice %164 {offsets = [0, 32], sizes = [8, 32], strides = [1, 1]} : vector<8x64xf32> to vector<8x32xf32>
    %c0_98 = arith.constant 0 : index
    %c0_99 = arith.constant 0 : index
    %c0_100 = arith.constant 0 : index
    %167 = vector.load %arg18[%c0_98, %c0_99, %c0_100] : memref<3x32x32xf32, #tpu.memory_space<vmem>>, vector<1x32x32xf32>
    %168 = vector.shape_cast %167 : vector<1x32x32xf32> to vector<32x32xf32>
    %c0_101 = arith.constant 0 : index
    %c0_102 = arith.constant 0 : index
    %c0_103 = arith.constant 0 : index
    %169 = vector.load %arg19[%c0_101, %c0_102, %c0_103] : memref<3x32x32xf32, #tpu.memory_space<vmem>>, vector<1x32x32xf32>
    %170 = vector.shape_cast %169 : vector<1x32x32xf32> to vector<32x32xf32>
    %c0_104 = arith.constant 0 : index
    %c0_105 = arith.constant 0 : index
    %c0_106 = arith.constant 0 : index
    %171 = vector.load %arg22[%c0_104, %c0_105, %c0_106] : memref<3x32x32xf32, #tpu.memory_space<vmem>>, vector<1x32x32xf32>
    %172 = vector.shape_cast %171 : vector<1x32x32xf32> to vector<32x32xf32>
    %173 = vector.extract_strided_slice %89 {offsets = [2, 0], sizes = [1, 32], strides = [1, 1]} : vector<10x32xf32> to vector<1x32xf32>
    %174 = tpu.concatenate %158, %158, %158, %158 in 0 : vector<8x32xf32>, vector<8x32xf32>, vector<8x32xf32>, vector<8x32xf32> -> vector<32x32xf32>
    %cst_107 = arith.constant dense<0.000000e+00> : vector<32x32xf32>
    %175 = tpu.matmul %174, %168, %cst_107 {dimension_numbers = #tpu.dot_dimension_numbers<[1], [0], [0], [1], [0, 0, 1, 1], [], []>} : vector<32x32xf32>, vector<32x32xf32>, vector<32x32xf32> -> vector<32x32xf32>
    %176 = arith.mulf %175, %0 : vector<32x32xf32>
    %177 = arith.addf %176, %170 : vector<32x32xf32>
    %cst_108 = arith.constant dense<0.000000e+00> : vector<32x8xf32>
    %178 = tpu.matmul %177, %165, %cst_108 {dimension_numbers = #tpu.dot_dimension_numbers<[1], [1], [0], [0], [0, 0, 1, 0], [], []>} : vector<32x32xf32>, vector<8x32xf32>, vector<32x8xf32> -> vector<32x8xf32>
    %cst_109 = arith.constant dense<0xFF800000> : vector<32xf32>
    %179 = vector.multi_reduction <maximumf>, %178, %cst_109 [1] : vector<32x8xf32> to vector<32xf32>
    %180 = vector.shape_cast %179 : vector<32xf32> to vector<32x1xf32>
    %181 = vector.broadcast %180 : vector<32x1xf32> to vector<32x8xf32>
    %182 = arith.subf %178, %181 : vector<32x8xf32>
    %183 = math.exp %182 : vector<32x8xf32>
    %cst_110 = arith.constant dense<0.000000e+00> : vector<32xf32>
    %184 = vector.multi_reduction <add>, %183, %cst_110 [1] : vector<32x8xf32> to vector<32xf32>
    %185 = vector.shape_cast %184 : vector<32xf32> to vector<32x1xf32>
    %186 = tpu.reciprocal %185 {approx = true} : vector<32x1xf32> -> vector<32x1xf32>
    %cst_111 = arith.constant dense<0.000000e+00> : vector<32x32xf32>
    %187 = tpu.matmul %183, %166, %cst_111 {dimension_numbers = #tpu.dot_dimension_numbers<[1], [0], [0], [1], [0, 0, 1, 1], [], []>} : vector<32x8xf32>, vector<8x32xf32>, vector<32x32xf32> -> vector<32x32xf32>
    %188 = vector.broadcast %186 : vector<32x1xf32> to vector<32x32xf32>
    %189 = arith.mulf %188, %0 : vector<32x32xf32>
    %190 = arith.mulf %187, %189 : vector<32x32xf32>
    %191 = vector.extract_strided_slice %190 {offsets = [0, 0], sizes = [8, 32], strides = [1, 1]} : vector<32x32xf32> to vector<8x32xf32>
    %192 = vector.extract_strided_slice %190 {offsets = [8, 0], sizes = [8, 32], strides = [1, 1]} : vector<32x32xf32> to vector<8x32xf32>
    %193 = arith.addf %191, %192 : vector<8x32xf32>
    %194 = vector.extract_strided_slice %190 {offsets = [16, 0], sizes = [8, 32], strides = [1, 1]} : vector<32x32xf32> to vector<8x32xf32>
    %195 = arith.addf %193, %194 : vector<8x32xf32>
    %196 = vector.extract_strided_slice %190 {offsets = [24, 0], sizes = [8, 32], strides = [1, 1]} : vector<32x32xf32> to vector<8x32xf32>
    %197 = arith.addf %195, %196 : vector<8x32xf32>
    %cst_112 = arith.constant dense<0.000000e+00> : vector<8x32xf32>
    %198 = tpu.matmul %197, %172, %cst_112 {dimension_numbers = #tpu.dot_dimension_numbers<[1], [0], [0], [1], [0, 0, 1, 1], [], []>} : vector<8x32xf32>, vector<32x32xf32>, vector<8x32xf32> -> vector<8x32xf32>
    %199 = vector.broadcast %173 : vector<1x32xf32> to vector<8x32xf32>
    %200 = arith.addf %198, %199 : vector<8x32xf32>
    %201 = arith.addf %158, %200 : vector<8x32xf32>
    %202 = vector.extract_strided_slice %89 {offsets = [6, 0], sizes = [1, 32], strides = [1, 1]} : vector<10x32xf32> to vector<1x32xf32>
    %203 = vector.extract_strided_slice %89 {offsets = [7, 0], sizes = [1, 32], strides = [1, 1]} : vector<10x32xf32> to vector<1x32xf32>
    %cst_113 = arith.constant dense<0.000000e+00> : vector<8xf32>
    %204 = vector.multi_reduction <add>, %201, %cst_113 [1] : vector<8x32xf32> to vector<8xf32>
    %205 = vector.shape_cast %204 : vector<8xf32> to vector<8x1xf32>
    %cst_114 = arith.constant 3.200000e+01 : f32
    %206 = vector.broadcast %cst_114 : f32 to vector<8x1xf32>
    %207 = arith.divf %205, %206 : vector<8x1xf32>
    %208 = arith.mulf %201, %201 : vector<8x32xf32>
    %cst_115 = arith.constant dense<0.000000e+00> : vector<8xf32>
    %209 = vector.multi_reduction <add>, %208, %cst_115 [1] : vector<8x32xf32> to vector<8xf32>
    %210 = vector.shape_cast %209 : vector<8xf32> to vector<8x1xf32>
    %cst_116 = arith.constant 3.200000e+01 : f32
    %211 = vector.broadcast %cst_116 : f32 to vector<8x1xf32>
    %212 = arith.divf %210, %211 : vector<8x1xf32>
    %213 = arith.mulf %207, %207 : vector<8x1xf32>
    %214 = arith.subf %212, %213 : vector<8x1xf32>
    %215 = vector.broadcast %207 : vector<8x1xf32> to vector<8x32xf32>
    %216 = arith.subf %201, %215 : vector<8x32xf32>
    %cst_117 = arith.constant 9.99999974E-6 : f32
    %217 = vector.broadcast %cst_117 : f32 to vector<8x1xf32>
    %218 = arith.addf %214, %217 : vector<8x1xf32>
    %219 = math.rsqrt %218 : vector<8x1xf32>
    %220 = vector.broadcast %219 : vector<8x1xf32> to vector<8x32xf32>
    %221 = arith.mulf %216, %220 : vector<8x32xf32>
    %222 = vector.broadcast %202 : vector<1x32xf32> to vector<8x32xf32>
    %223 = arith.mulf %221, %222 : vector<8x32xf32>
    %224 = vector.broadcast %203 : vector<1x32xf32> to vector<8x32xf32>
    %225 = arith.addf %223, %224 : vector<8x32xf32>
    %c0_118 = arith.constant 0 : index
    %c0_119 = arith.constant 0 : index
    %c0_120 = arith.constant 0 : index
    %226 = vector.load %arg23[%c0_118, %c0_119, %c0_120] : memref<3x32x64xf32, #tpu.memory_space<vmem>>, vector<1x32x64xf32>
    %227 = vector.shape_cast %226 : vector<1x32x64xf32> to vector<32x64xf32>
    %cst_121 = arith.constant dense<0.000000e+00> : vector<8x64xf32>
    %228 = tpu.matmul %225, %227, %cst_121 {dimension_numbers = #tpu.dot_dimension_numbers<[1], [0], [0], [1], [0, 0, 1, 1], [], []>} : vector<8x32xf32>, vector<32x64xf32>, vector<8x64xf32> -> vector<8x64xf32>
    %c0_122 = arith.constant 0 : index
    %c0_123 = arith.constant 0 : index
    %c0_124 = arith.constant 0 : index
    %229 = vector.load %arg24[%c0_122, %c0_123, %c0_124] : memref<3x1x64xf32, #tpu.memory_space<vmem>>, vector<1x1x64xf32>
    %230 = vector.shape_cast %229 : vector<1x1x64xf32> to vector<1x64xf32>
    %231 = vector.broadcast %230 : vector<1x64xf32> to vector<8x64xf32>
    %232 = arith.addf %228, %231 : vector<8x64xf32>
    %cst_125 = arith.constant 0.000000e+00 : f32
    %233 = vector.broadcast %cst_125 : f32 to vector<8x64xf32>
    %234 = arith.maximumf %232, %233 : vector<8x64xf32>
    %c0_126 = arith.constant 0 : index
    %c0_127 = arith.constant 0 : index
    %c0_128 = arith.constant 0 : index
    %235 = vector.load %arg25[%c0_126, %c0_127, %c0_128] : memref<3x64x32xf32, #tpu.memory_space<vmem>>, vector<1x64x32xf32>
    %236 = vector.shape_cast %235 : vector<1x64x32xf32> to vector<64x32xf32>
    %cst_129 = arith.constant dense<0.000000e+00> : vector<8x32xf32>
    %237 = tpu.matmul %234, %236, %cst_129 {dimension_numbers = #tpu.dot_dimension_numbers<[1], [0], [0], [1], [0, 0, 1, 1], [], []>} : vector<8x64xf32>, vector<64x32xf32>, vector<8x32xf32> -> vector<8x32xf32>
    %238 = arith.addf %225, %237 : vector<8x32xf32>
    %239 = vector.extract_strided_slice %89 {offsets = [3, 0], sizes = [1, 32], strides = [1, 1]} : vector<10x32xf32> to vector<1x32xf32>
    %240 = vector.broadcast %239 : vector<1x32xf32> to vector<8x32xf32>
    %241 = arith.addf %238, %240 : vector<8x32xf32>
    %242 = vector.extract_strided_slice %89 {offsets = [8, 0], sizes = [1, 32], strides = [1, 1]} : vector<10x32xf32> to vector<1x32xf32>
    %243 = vector.extract_strided_slice %89 {offsets = [9, 0], sizes = [1, 32], strides = [1, 1]} : vector<10x32xf32> to vector<1x32xf32>
    %cst_130 = arith.constant dense<0.000000e+00> : vector<8xf32>
    %244 = vector.multi_reduction <add>, %241, %cst_130 [1] : vector<8x32xf32> to vector<8xf32>
    %245 = vector.shape_cast %244 : vector<8xf32> to vector<8x1xf32>
    %cst_131 = arith.constant 3.200000e+01 : f32
    %246 = vector.broadcast %cst_131 : f32 to vector<8x1xf32>
    %247 = arith.divf %245, %246 : vector<8x1xf32>
    %248 = arith.mulf %241, %241 : vector<8x32xf32>
    %cst_132 = arith.constant dense<0.000000e+00> : vector<8xf32>
    %249 = vector.multi_reduction <add>, %248, %cst_132 [1] : vector<8x32xf32> to vector<8xf32>
    %250 = vector.shape_cast %249 : vector<8xf32> to vector<8x1xf32>
    %cst_133 = arith.constant 3.200000e+01 : f32
    %251 = vector.broadcast %cst_133 : f32 to vector<8x1xf32>
    %252 = arith.divf %250, %251 : vector<8x1xf32>
    %253 = arith.mulf %247, %247 : vector<8x1xf32>
    %254 = arith.subf %252, %253 : vector<8x1xf32>
    %255 = vector.broadcast %247 : vector<8x1xf32> to vector<8x32xf32>
    %256 = arith.subf %241, %255 : vector<8x32xf32>
    %cst_134 = arith.constant 9.99999974E-6 : f32
    %257 = vector.broadcast %cst_134 : f32 to vector<8x1xf32>
    %258 = arith.addf %254, %257 : vector<8x1xf32>
    %259 = math.rsqrt %258 : vector<8x1xf32>
    %260 = vector.broadcast %259 : vector<8x1xf32> to vector<8x32xf32>
    %261 = arith.mulf %256, %260 : vector<8x32xf32>
    %262 = vector.broadcast %242 : vector<1x32xf32> to vector<8x32xf32>
    %263 = arith.mulf %261, %262 : vector<8x32xf32>
    %264 = vector.broadcast %243 : vector<1x32xf32> to vector<8x32xf32>
    %265 = arith.addf %263, %264 : vector<8x32xf32>
    %266 = vector.extract_strided_slice %3 {offsets = [0, 0], sizes = [1, 32], strides = [1, 1]} : vector<2x32xf32> to vector<1x32xf32>
    %267 = vector.extract_strided_slice %3 {offsets = [1, 0], sizes = [1, 32], strides = [1, 1]} : vector<2x32xf32> to vector<1x32xf32>
    %cst_135 = arith.constant dense<0.000000e+00> : vector<8xf32>
    %268 = vector.multi_reduction <add>, %265, %cst_135 [1] : vector<8x32xf32> to vector<8xf32>
    %269 = vector.shape_cast %268 : vector<8xf32> to vector<8x1xf32>
    %cst_136 = arith.constant 3.200000e+01 : f32
    %270 = vector.broadcast %cst_136 : f32 to vector<8x1xf32>
    %271 = arith.divf %269, %270 : vector<8x1xf32>
    %272 = arith.mulf %265, %265 : vector<8x32xf32>
    %cst_137 = arith.constant dense<0.000000e+00> : vector<8xf32>
    %273 = vector.multi_reduction <add>, %272, %cst_137 [1] : vector<8x32xf32> to vector<8xf32>
    %274 = vector.shape_cast %273 : vector<8xf32> to vector<8x1xf32>
    %cst_138 = arith.constant 3.200000e+01 : f32
    %275 = vector.broadcast %cst_138 : f32 to vector<8x1xf32>
    %276 = arith.divf %274, %275 : vector<8x1xf32>
    %277 = arith.mulf %271, %271 : vector<8x1xf32>
    %278 = arith.subf %276, %277 : vector<8x1xf32>
    %279 = vector.broadcast %271 : vector<8x1xf32> to vector<8x32xf32>
    %280 = arith.subf %265, %279 : vector<8x32xf32>
    %cst_139 = arith.constant 9.99999974E-6 : f32
    %281 = vector.broadcast %cst_139 : f32 to vector<8x1xf32>
    %282 = arith.addf %278, %281 : vector<8x1xf32>
    %283 = math.rsqrt %282 : vector<8x1xf32>
    %284 = vector.broadcast %283 : vector<8x1xf32> to vector<8x32xf32>
    %285 = arith.mulf %280, %284 : vector<8x32xf32>
    %286 = vector.broadcast %266 : vector<1x32xf32> to vector<8x32xf32>
    %287 = arith.mulf %285, %286 : vector<8x32xf32>
    %288 = vector.broadcast %267 : vector<1x32xf32> to vector<8x32xf32>
    %289 = arith.addf %287, %288 : vector<8x32xf32>
    %290 = vector.extract_strided_slice %16 {offsets = [0, 0], sizes = [32, 69], strides = [1, 1]} : vector<33x69xf32> to vector<32x69xf32>
    %cst_140 = arith.constant dense<0.000000e+00> : vector<8x69xf32>
    %291 = tpu.matmul %289, %290, %cst_140 {dimension_numbers = #tpu.dot_dimension_numbers<[1], [0], [0], [1], [0, 0, 1, 1], [], []>} : vector<8x32xf32>, vector<32x69xf32>, vector<8x69xf32> -> vector<8x69xf32>
    %292 = vector.extract_strided_slice %16 {offsets = [32, 0], sizes = [1, 69], strides = [1, 1]} : vector<33x69xf32> to vector<1x69xf32>
    %293 = vector.broadcast %292 : vector<1x69xf32> to vector<8x69xf32>
    %294 = arith.addf %291, %293 : vector<8x69xf32>
    %295 = vector.extract_strided_slice %294 {offsets = [0, 64], sizes = [8, 5], strides = [1, 1]} : vector<8x69xf32> to vector<8x5xf32>
    %c0_141 = arith.constant 0 : index
    %c1 = arith.constant 1 : index
    %c0_142 = arith.constant 0 : index
    %c0_143 = arith.constant 0 : index
    %296 = vector.load %arg30[%c0_141, %c1, %c0_142, %c0_143] : memref<1x4x8x128xf32, #tpu.memory_space<vmem>>, vector<1x1x8x5xf32>
    %297 = vector.shape_cast %296 : vector<1x1x8x5xf32> to vector<8x5xf32>
    %298 = vector.shape_cast %295 : vector<8x5xf32> to vector<1x1x8x5xf32>
    tpu.vector_store %arg30[%c0_141, %c1, %c0_142, %c0_143], %298 {strides = array<i32>} : memref<1x4x8x128xf32, #tpu.memory_space<vmem>>, vector<1x1x8x5xf32>,
    %299 = vector.extract_strided_slice %294 {offsets = [0, 0], sizes = [8, 64], strides = [1, 1]} : vector<8x69xf32> to vector<8x64xf32>
    %cst_144 = arith.constant 0.000000e+00 : f32
    %300 = vector.broadcast %cst_144 : f32 to vector<8x64xf32>
    %301 = arith.maximumf %299, %300 : vector<8x64xf32>
    %302 = vector.extract_strided_slice %17 {offsets = [0, 0], sizes = [64, 64], strides = [1, 1]} : vector<65x64xf32> to vector<64x64xf32>
    %cst_145 = arith.constant dense<0.000000e+00> : vector<8x64xf32>
    %303 = tpu.matmul %301, %302, %cst_145 {dimension_numbers = #tpu.dot_dimension_numbers<[1], [0], [0], [1], [0, 0, 1, 1], [], []>} : vector<8x64xf32>, vector<64x64xf32>, vector<8x64xf32> -> vector<8x64xf32>
    %304 = vector.extract_strided_slice %17 {offsets = [64, 0], sizes = [1, 64], strides = [1, 1]} : vector<65x64xf32> to vector<1x64xf32>
    %305 = vector.broadcast %304 : vector<1x64xf32> to vector<8x64xf32>
    %306 = arith.addf %303, %305 : vector<8x64xf32>
    %cst_146 = arith.constant 0.000000e+00 : f32
    %307 = vector.broadcast %cst_146 : f32 to vector<8x64xf32>
    %308 = arith.maximumf %306, %307 : vector<8x64xf32>
    %309 = vector.extract_strided_slice %18 {offsets = [0, 0], sizes = [64, 36], strides = [1, 1]} : vector<65x36xf32> to vector<64x36xf32>
    %cst_147 = arith.constant dense<0.000000e+00> : vector<8x36xf32>
    %310 = tpu.matmul %308, %309, %cst_147 {dimension_numbers = #tpu.dot_dimension_numbers<[1], [0], [0], [1], [0, 0, 1, 1], [], []>} : vector<8x64xf32>, vector<64x36xf32>, vector<8x36xf32> -> vector<8x36xf32>
    %311 = vector.extract_strided_slice %18 {offsets = [64, 0], sizes = [1, 36], strides = [1, 1]} : vector<65x36xf32> to vector<1x36xf32>
    %312 = vector.broadcast %311 : vector<1x36xf32> to vector<8x36xf32>
    %313 = arith.addf %310, %312 : vector<8x36xf32>
    %314 = vector.extract_strided_slice %313 {offsets = [0, 32], sizes = [8, 4], strides = [1, 1]} : vector<8x36xf32> to vector<8x4xf32>
    %315 = arith.negf %314 : vector<8x4xf32>
    %316 = math.exp %315 : vector<8x4xf32>
    %cst_148 = arith.constant 1.000000e+00 : f32
    %317 = vector.broadcast %cst_148 : f32 to vector<8x4xf32>
    %318 = arith.addf %317, %316 : vector<8x4xf32>
    %319 = arith.divf %317, %318 : vector<8x4xf32>
    %c0_149 = arith.constant 0 : index
    %c1_150 = arith.constant 1 : index
    %c0_151 = arith.constant 0 : index
    %c8 = arith.constant 8 : index
    %320 = vector.load %arg30[%c0_149, %c1_150, %c0_151, %c8] : memref<1x4x8x128xf32, #tpu.memory_space<vmem>>, vector<1x1x8x4xf32>
    %321 = vector.shape_cast %320 : vector<1x1x8x4xf32> to vector<8x4xf32>
    %322 = vector.shape_cast %319 : vector<8x4xf32> to vector<1x1x8x4xf32>
    tpu.vector_store %arg30[%c0_149, %c1_150, %c0_151, %c8], %322 {strides = array<i32>} : memref<1x4x8x128xf32, #tpu.memory_space<vmem>>, vector<1x1x8x4xf32>,
    %323 = vector.extract_strided_slice %313 {offsets = [0, 0], sizes = [8, 32], strides = [1, 1]} : vector<8x36xf32> to vector<8x32xf32>
    %cst_152 = arith.constant dense<0.000000e+00> : vector<8x256xf32>
    %324 = tpu.matmul %323, %2, %cst_152 {dimension_numbers = #tpu.dot_dimension_numbers<[1], [0], [0], [1], [0, 0, 1, 1], [], []>} : vector<8x32xf32>, vector<32x256xf32>, vector<8x256xf32> -> vector<8x256xf32>
    %c0_153 = arith.constant 0 : index
    %c1_154 = arith.constant 1 : index
    %c0_155 = arith.constant 0 : index
    %c0_156 = arith.constant 0 : index
    %325 = vector.load %arg31[%c0_153, %c1_154, %c0_155, %c0_156] : memref<1x4x8x256xf32, #tpu.memory_space<vmem>>, vector<1x1x8x256xf32>
    %326 = vector.shape_cast %325 : vector<1x1x8x256xf32> to vector<8x256xf32>
    %327 = vector.shape_cast %324 : vector<8x256xf32> to vector<1x1x8x256xf32>
    tpu.vector_store %arg31[%c0_153, %c1_154, %c0_155, %c0_156], %327 {strides = array<i32>} : memref<1x4x8x256xf32, #tpu.memory_space<vmem>>, vector<1x1x8x256xf32>,
    %cst_157 = arith.constant dense<0.000000e+00> : vector<8x16xf32>
    %328 = tpu.matmul %324, %14, %cst_157 {dimension_numbers = #tpu.dot_dimension_numbers<[1], [0], [0], [1], [0, 0, 1, 1], [], []>} : vector<8x256xf32>, vector<256x16xf32>, vector<8x16xf32> -> vector<8x16xf32>
    %cst_158 = arith.constant dense<0xFF800000> : vector<8xf32>
    %329 = vector.multi_reduction <maximumf>, %328, %cst_158 [1] : vector<8x16xf32> to vector<8xf32>
    %330 = vector.shape_cast %329 : vector<8xf32> to vector<8x1xf32>
    %cst_159 = arith.constant 0.000000e+00 : f32
    %331 = vector.broadcast %cst_159 : f32 to vector<8x1xf32>
    %332 = arith.cmpf oge, %330, %331 : vector<8x1xf32>
    %cst_160 = arith.constant 0.000000e+00 : f32
    %333 = vector.broadcast %cst_160 : f32 to vector<8x16xf32>
    %334 = arith.cmpf olt, %328, %333 : vector<8x16xf32>
    %335 = vector.broadcast %332 : vector<8x1xi1> to vector<8x16xi1>
    %336 = arith.andi %334, %335 : vector<8x16xi1>
    %cst_161 = arith.constant -1.000000e+30 : f32
    %cst_162 = arith.constant 0.000000e+00 : f32
    %337 = vector.broadcast %cst_161 : f32 to vector<8x16xf32>
    %338 = vector.broadcast %cst_162 : f32 to vector<8x16xf32>
    %339 = arith.select %336, %337, %338 : vector<8x16xi1>, vector<8x16xf32>
    %340 = tpu.concatenate %339, %339, %339, %339 in 0 : vector<8x16xf32>, vector<8x16xf32>, vector<8x16xf32>, vector<8x16xf32> -> vector<32x16xf32>
    %c1_163 = arith.constant 1 : index
    %c0_164 = arith.constant 0 : index
    %c0_165 = arith.constant 0 : index
    %341 = vector.load %arg26[%c1_163, %c0_164, %c0_165] : memref<3x10x32xf32, #tpu.memory_space<vmem>>, vector<1x10x32xf32>
    %342 = vector.shape_cast %341 : vector<1x10x32xf32> to vector<10x32xf32>
    %c1_166 = arith.constant 1 : index
    %c0_167 = arith.constant 0 : index
    %c0_168 = arith.constant 0 : index
    %343 = vector.load %arg16[%c1_166, %c0_167, %c0_168] : memref<3x32x64xf32, #tpu.memory_space<vmem>>, vector<1x32x64xf32>
    %344 = vector.shape_cast %343 : vector<1x32x64xf32> to vector<32x64xf32>
    %cst_169 = arith.constant dense<0.000000e+00> : vector<16x64xf32>
    %345 = tpu.matmul %7, %344, %cst_169 {dimension_numbers = #tpu.dot_dimension_numbers<[1], [0], [0], [1], [0, 0, 1, 1], [], []>} : vector<16x32xf32>, vector<32x64xf32>, vector<16x64xf32> -> vector<16x64xf32>
    %346 = vector.extract_strided_slice %345 {offsets = [0, 0], sizes = [16, 32], strides = [1, 1]} : vector<16x64xf32> to vector<16x32xf32>
    %347 = arith.addf %346, %11 : vector<16x32xf32>
    %348 = vector.extract_strided_slice %345 {offsets = [0, 32], sizes = [16, 32], strides = [1, 1]} : vector<16x64xf32> to vector<16x32xf32>
    %349 = vector.extract_strided_slice %342 {offsets = [0, 0], sizes = [1, 32], strides = [1, 1]} : vector<10x32xf32> to vector<1x32xf32>
    %350 = vector.broadcast %349 : vector<1x32xf32> to vector<16x32xf32>
    %351 = arith.addf %348, %350 : vector<16x32xf32>
    %c1_170 = arith.constant 1 : index
    %c0_171 = arith.constant 0 : index
    %c0_172 = arith.constant 0 : index
    %352 = vector.load %arg14[%c1_170, %c0_171, %c0_172] : memref<3x32x32xf32, #tpu.memory_space<vmem>>, vector<1x32x32xf32>
    %353 = vector.shape_cast %352 : vector<1x32x32xf32> to vector<32x32xf32>
    %c1_173 = arith.constant 1 : index
    %c0_174 = arith.constant 0 : index
    %c0_175 = arith.constant 0 : index
    %354 = vector.load %arg15[%c1_173, %c0_174, %c0_175] : memref<3x32x32xf32, #tpu.memory_space<vmem>>, vector<1x32x32xf32>
    %355 = vector.shape_cast %354 : vector<1x32x32xf32> to vector<32x32xf32>
    %c1_176 = arith.constant 1 : index
    %c0_177 = arith.constant 0 : index
    %c0_178 = arith.constant 0 : index
    %356 = vector.load %arg17[%c1_176, %c0_177, %c0_178] : memref<3x32x32xf32, #tpu.memory_space<vmem>>, vector<1x32x32xf32>
    %357 = vector.shape_cast %356 : vector<1x32x32xf32> to vector<32x32xf32>
    %358 = vector.extract_strided_slice %342 {offsets = [1, 0], sizes = [1, 32], strides = [1, 1]} : vector<10x32xf32> to vector<1x32xf32>
    %359 = tpu.concatenate %265, %265, %265, %265 in 0 : vector<8x32xf32>, vector<8x32xf32>, vector<8x32xf32>, vector<8x32xf32> -> vector<32x32xf32>
    %cst_179 = arith.constant dense<0.000000e+00> : vector<32x32xf32>
    %360 = tpu.matmul %359, %353, %cst_179 {dimension_numbers = #tpu.dot_dimension_numbers<[1], [0], [0], [1], [0, 0, 1, 1], [], []>} : vector<32x32xf32>, vector<32x32xf32>, vector<32x32xf32> -> vector<32x32xf32>
    %361 = arith.mulf %360, %0 : vector<32x32xf32>
    %362 = arith.addf %361, %355 : vector<32x32xf32>
    %cst_180 = arith.constant dense<0.000000e+00> : vector<32x16xf32>
    %363 = tpu.matmul %362, %347, %cst_180 {dimension_numbers = #tpu.dot_dimension_numbers<[1], [1], [0], [0], [0, 0, 1, 0], [], []>} : vector<32x32xf32>, vector<16x32xf32>, vector<32x16xf32> -> vector<32x16xf32>
    %364 = arith.addf %363, %340 : vector<32x16xf32>
    %cst_181 = arith.constant dense<0xFF800000> : vector<32xf32>
    %365 = vector.multi_reduction <maximumf>, %364, %cst_181 [1] : vector<32x16xf32> to vector<32xf32>
    %366 = vector.shape_cast %365 : vector<32xf32> to vector<32x1xf32>
    %367 = vector.broadcast %366 : vector<32x1xf32> to vector<32x16xf32>
    %368 = arith.subf %364, %367 : vector<32x16xf32>
    %369 = math.exp %368 : vector<32x16xf32>
    %cst_182 = arith.constant dense<0.000000e+00> : vector<32xf32>
    %370 = vector.multi_reduction <add>, %369, %cst_182 [1] : vector<32x16xf32> to vector<32xf32>
    %371 = vector.shape_cast %370 : vector<32xf32> to vector<32x1xf32>
    %372 = tpu.reciprocal %371 {approx = true} : vector<32x1xf32> -> vector<32x1xf32>
    %cst_183 = arith.constant dense<0.000000e+00> : vector<32x32xf32>
    %373 = tpu.matmul %369, %351, %cst_183 {dimension_numbers = #tpu.dot_dimension_numbers<[1], [0], [0], [1], [0, 0, 1, 1], [], []>} : vector<32x16xf32>, vector<16x32xf32>, vector<32x32xf32> -> vector<32x32xf32>
    %374 = vector.broadcast %372 : vector<32x1xf32> to vector<32x32xf32>
    %375 = arith.mulf %374, %0 : vector<32x32xf32>
    %376 = arith.mulf %373, %375 : vector<32x32xf32>
    %377 = vector.extract_strided_slice %376 {offsets = [0, 0], sizes = [8, 32], strides = [1, 1]} : vector<32x32xf32> to vector<8x32xf32>
    %378 = vector.extract_strided_slice %376 {offsets = [8, 0], sizes = [8, 32], strides = [1, 1]} : vector<32x32xf32> to vector<8x32xf32>
    %379 = arith.addf %377, %378 : vector<8x32xf32>
    %380 = vector.extract_strided_slice %376 {offsets = [16, 0], sizes = [8, 32], strides = [1, 1]} : vector<32x32xf32> to vector<8x32xf32>
    %381 = arith.addf %379, %380 : vector<8x32xf32>
    %382 = vector.extract_strided_slice %376 {offsets = [24, 0], sizes = [8, 32], strides = [1, 1]} : vector<32x32xf32> to vector<8x32xf32>
    %383 = arith.addf %381, %382 : vector<8x32xf32>
    %cst_184 = arith.constant dense<0.000000e+00> : vector<8x32xf32>
    %384 = tpu.matmul %383, %357, %cst_184 {dimension_numbers = #tpu.dot_dimension_numbers<[1], [0], [0], [1], [0, 0, 1, 1], [], []>} : vector<8x32xf32>, vector<32x32xf32>, vector<8x32xf32> -> vector<8x32xf32>
    %385 = vector.broadcast %358 : vector<1x32xf32> to vector<8x32xf32>
    %386 = arith.addf %384, %385 : vector<8x32xf32>
    %387 = arith.addf %265, %386 : vector<8x32xf32>
    %388 = vector.extract_strided_slice %342 {offsets = [4, 0], sizes = [1, 32], strides = [1, 1]} : vector<10x32xf32> to vector<1x32xf32>
    %389 = vector.extract_strided_slice %342 {offsets = [5, 0], sizes = [1, 32], strides = [1, 1]} : vector<10x32xf32> to vector<1x32xf32>
    %cst_185 = arith.constant dense<0.000000e+00> : vector<8xf32>
    %390 = vector.multi_reduction <add>, %387, %cst_185 [1] : vector<8x32xf32> to vector<8xf32>
    %391 = vector.shape_cast %390 : vector<8xf32> to vector<8x1xf32>
    %cst_186 = arith.constant 3.200000e+01 : f32
    %392 = vector.broadcast %cst_186 : f32 to vector<8x1xf32>
    %393 = arith.divf %391, %392 : vector<8x1xf32>
    %394 = arith.mulf %387, %387 : vector<8x32xf32>
    %cst_187 = arith.constant dense<0.000000e+00> : vector<8xf32>
    %395 = vector.multi_reduction <add>, %394, %cst_187 [1] : vector<8x32xf32> to vector<8xf32>
    %396 = vector.shape_cast %395 : vector<8xf32> to vector<8x1xf32>
    %cst_188 = arith.constant 3.200000e+01 : f32
    %397 = vector.broadcast %cst_188 : f32 to vector<8x1xf32>
    %398 = arith.divf %396, %397 : vector<8x1xf32>
    %399 = arith.mulf %393, %393 : vector<8x1xf32>
    %400 = arith.subf %398, %399 : vector<8x1xf32>
    %401 = vector.broadcast %393 : vector<8x1xf32> to vector<8x32xf32>
    %402 = arith.subf %387, %401 : vector<8x32xf32>
    %cst_189 = arith.constant 9.99999974E-6 : f32
    %403 = vector.broadcast %cst_189 : f32 to vector<8x1xf32>
    %404 = arith.addf %400, %403 : vector<8x1xf32>
    %405 = math.rsqrt %404 : vector<8x1xf32>
    %406 = vector.broadcast %405 : vector<8x1xf32> to vector<8x32xf32>
    %407 = arith.mulf %402, %406 : vector<8x32xf32>
    %408 = vector.broadcast %388 : vector<1x32xf32> to vector<8x32xf32>
    %409 = arith.mulf %407, %408 : vector<8x32xf32>
    %410 = vector.broadcast %389 : vector<1x32xf32> to vector<8x32xf32>
    %411 = arith.addf %409, %410 : vector<8x32xf32>
    %c1_190 = arith.constant 1 : index
    %c0_191 = arith.constant 0 : index
    %c0_192 = arith.constant 0 : index
    %412 = vector.load %arg20[%c1_190, %c0_191, %c0_192] : memref<3x32x64xf32, #tpu.memory_space<vmem>>, vector<1x32x64xf32>
    %413 = vector.shape_cast %412 : vector<1x32x64xf32> to vector<32x64xf32>
    %cst_193 = arith.constant dense<0.000000e+00> : vector<8x64xf32>
    %414 = tpu.matmul %411, %413, %cst_193 {dimension_numbers = #tpu.dot_dimension_numbers<[1], [0], [0], [1], [0, 0, 1, 1], [], []>} : vector<8x32xf32>, vector<32x64xf32>, vector<8x64xf32> -> vector<8x64xf32>
    %c1_194 = arith.constant 1 : index
    %c0_195 = arith.constant 0 : index
    %c0_196 = arith.constant 0 : index
    %415 = vector.load %arg21[%c1_194, %c0_195, %c0_196] : memref<3x8x64xf32, #tpu.memory_space<vmem>>, vector<1x8x64xf32>
    %416 = vector.shape_cast %415 : vector<1x8x64xf32> to vector<8x64xf32>
    %417 = arith.addf %414, %416 : vector<8x64xf32>
    %418 = vector.extract_strided_slice %417 {offsets = [0, 0], sizes = [8, 32], strides = [1, 1]} : vector<8x64xf32> to vector<8x32xf32>
    %419 = vector.extract_strided_slice %417 {offsets = [0, 32], sizes = [8, 32], strides = [1, 1]} : vector<8x64xf32> to vector<8x32xf32>
    %c1_197 = arith.constant 1 : index
    %c0_198 = arith.constant 0 : index
    %c0_199 = arith.constant 0 : index
    %420 = vector.load %arg18[%c1_197, %c0_198, %c0_199] : memref<3x32x32xf32, #tpu.memory_space<vmem>>, vector<1x32x32xf32>
    %421 = vector.shape_cast %420 : vector<1x32x32xf32> to vector<32x32xf32>
    %c1_200 = arith.constant 1 : index
    %c0_201 = arith.constant 0 : index
    %c0_202 = arith.constant 0 : index
    %422 = vector.load %arg19[%c1_200, %c0_201, %c0_202] : memref<3x32x32xf32, #tpu.memory_space<vmem>>, vector<1x32x32xf32>
    %423 = vector.shape_cast %422 : vector<1x32x32xf32> to vector<32x32xf32>
    %c1_203 = arith.constant 1 : index
    %c0_204 = arith.constant 0 : index
    %c0_205 = arith.constant 0 : index
    %424 = vector.load %arg22[%c1_203, %c0_204, %c0_205] : memref<3x32x32xf32, #tpu.memory_space<vmem>>, vector<1x32x32xf32>
    %425 = vector.shape_cast %424 : vector<1x32x32xf32> to vector<32x32xf32>
    %426 = vector.extract_strided_slice %342 {offsets = [2, 0], sizes = [1, 32], strides = [1, 1]} : vector<10x32xf32> to vector<1x32xf32>
    %427 = tpu.concatenate %411, %411, %411, %411 in 0 : vector<8x32xf32>, vector<8x32xf32>, vector<8x32xf32>, vector<8x32xf32> -> vector<32x32xf32>
    %cst_206 = arith.constant dense<0.000000e+00> : vector<32x32xf32>
    %428 = tpu.matmul %427, %421, %cst_206 {dimension_numbers = #tpu.dot_dimension_numbers<[1], [0], [0], [1], [0, 0, 1, 1], [], []>} : vector<32x32xf32>, vector<32x32xf32>, vector<32x32xf32> -> vector<32x32xf32>
    %429 = arith.mulf %428, %0 : vector<32x32xf32>
    %430 = arith.addf %429, %423 : vector<32x32xf32>
    %cst_207 = arith.constant dense<0.000000e+00> : vector<32x8xf32>
    %431 = tpu.matmul %430, %418, %cst_207 {dimension_numbers = #tpu.dot_dimension_numbers<[1], [1], [0], [0], [0, 0, 1, 0], [], []>} : vector<32x32xf32>, vector<8x32xf32>, vector<32x8xf32> -> vector<32x8xf32>
    %cst_208 = arith.constant dense<0xFF800000> : vector<32xf32>
    %432 = vector.multi_reduction <maximumf>, %431, %cst_208 [1] : vector<32x8xf32> to vector<32xf32>
    %433 = vector.shape_cast %432 : vector<32xf32> to vector<32x1xf32>
    %434 = vector.broadcast %433 : vector<32x1xf32> to vector<32x8xf32>
    %435 = arith.subf %431, %434 : vector<32x8xf32>
    %436 = math.exp %435 : vector<32x8xf32>
    %cst_209 = arith.constant dense<0.000000e+00> : vector<32xf32>
    %437 = vector.multi_reduction <add>, %436, %cst_209 [1] : vector<32x8xf32> to vector<32xf32>
    %438 = vector.shape_cast %437 : vector<32xf32> to vector<32x1xf32>
    %439 = tpu.reciprocal %438 {approx = true} : vector<32x1xf32> -> vector<32x1xf32>
    %cst_210 = arith.constant dense<0.000000e+00> : vector<32x32xf32>
    %440 = tpu.matmul %436, %419, %cst_210 {dimension_numbers = #tpu.dot_dimension_numbers<[1], [0], [0], [1], [0, 0, 1, 1], [], []>} : vector<32x8xf32>, vector<8x32xf32>, vector<32x32xf32> -> vector<32x32xf32>
    %441 = vector.broadcast %439 : vector<32x1xf32> to vector<32x32xf32>
    %442 = arith.mulf %441, %0 : vector<32x32xf32>
    %443 = arith.mulf %440, %442 : vector<32x32xf32>
    %444 = vector.extract_strided_slice %443 {offsets = [0, 0], sizes = [8, 32], strides = [1, 1]} : vector<32x32xf32> to vector<8x32xf32>
    %445 = vector.extract_strided_slice %443 {offsets = [8, 0], sizes = [8, 32], strides = [1, 1]} : vector<32x32xf32> to vector<8x32xf32>
    %446 = arith.addf %444, %445 : vector<8x32xf32>
    %447 = vector.extract_strided_slice %443 {offsets = [16, 0], sizes = [8, 32], strides = [1, 1]} : vector<32x32xf32> to vector<8x32xf32>
    %448 = arith.addf %446, %447 : vector<8x32xf32>
    %449 = vector.extract_strided_slice %443 {offsets = [24, 0], sizes = [8, 32], strides = [1, 1]} : vector<32x32xf32> to vector<8x32xf32>
    %450 = arith.addf %448, %449 : vector<8x32xf32>
    %cst_211 = arith.constant dense<0.000000e+00> : vector<8x32xf32>
    %451 = tpu.matmul %450, %425, %cst_211 {dimension_numbers = #tpu.dot_dimension_numbers<[1], [0], [0], [1], [0, 0, 1, 1], [], []>} : vector<8x32xf32>, vector<32x32xf32>, vector<8x32xf32> -> vector<8x32xf32>
    %452 = vector.broadcast %426 : vector<1x32xf32> to vector<8x32xf32>
    %453 = arith.addf %451, %452 : vector<8x32xf32>
    %454 = arith.addf %411, %453 : vector<8x32xf32>
    %455 = vector.extract_strided_slice %342 {offsets = [6, 0], sizes = [1, 32], strides = [1, 1]} : vector<10x32xf32> to vector<1x32xf32>
    %456 = vector.extract_strided_slice %342 {offsets = [7, 0], sizes = [1, 32], strides = [1, 1]} : vector<10x32xf32> to vector<1x32xf32>
    %cst_212 = arith.constant dense<0.000000e+00> : vector<8xf32>
    %457 = vector.multi_reduction <add>, %454, %cst_212 [1] : vector<8x32xf32> to vector<8xf32>
    %458 = vector.shape_cast %457 : vector<8xf32> to vector<8x1xf32>
    %cst_213 = arith.constant 3.200000e+01 : f32
    %459 = vector.broadcast %cst_213 : f32 to vector<8x1xf32>
    %460 = arith.divf %458, %459 : vector<8x1xf32>
    %461 = arith.mulf %454, %454 : vector<8x32xf32>
    %cst_214 = arith.constant dense<0.000000e+00> : vector<8xf32>
    %462 = vector.multi_reduction <add>, %461, %cst_214 [1] : vector<8x32xf32> to vector<8xf32>
    %463 = vector.shape_cast %462 : vector<8xf32> to vector<8x1xf32>
    %cst_215 = arith.constant 3.200000e+01 : f32
    %464 = vector.broadcast %cst_215 : f32 to vector<8x1xf32>
    %465 = arith.divf %463, %464 : vector<8x1xf32>
    %466 = arith.mulf %460, %460 : vector<8x1xf32>
    %467 = arith.subf %465, %466 : vector<8x1xf32>
    %468 = vector.broadcast %460 : vector<8x1xf32> to vector<8x32xf32>
    %469 = arith.subf %454, %468 : vector<8x32xf32>
    %cst_216 = arith.constant 9.99999974E-6 : f32
    %470 = vector.broadcast %cst_216 : f32 to vector<8x1xf32>
    %471 = arith.addf %467, %470 : vector<8x1xf32>
    %472 = math.rsqrt %471 : vector<8x1xf32>
    %473 = vector.broadcast %472 : vector<8x1xf32> to vector<8x32xf32>
    %474 = arith.mulf %469, %473 : vector<8x32xf32>
    %475 = vector.broadcast %455 : vector<1x32xf32> to vector<8x32xf32>
    %476 = arith.mulf %474, %475 : vector<8x32xf32>
    %477 = vector.broadcast %456 : vector<1x32xf32> to vector<8x32xf32>
    %478 = arith.addf %476, %477 : vector<8x32xf32>
    %c1_217 = arith.constant 1 : index
    %c0_218 = arith.constant 0 : index
    %c0_219 = arith.constant 0 : index
    %479 = vector.load %arg23[%c1_217, %c0_218, %c0_219] : memref<3x32x64xf32, #tpu.memory_space<vmem>>, vector<1x32x64xf32>
    %480 = vector.shape_cast %479 : vector<1x32x64xf32> to vector<32x64xf32>
    %cst_220 = arith.constant dense<0.000000e+00> : vector<8x64xf32>
    %481 = tpu.matmul %478, %480, %cst_220 {dimension_numbers = #tpu.dot_dimension_numbers<[1], [0], [0], [1], [0, 0, 1, 1], [], []>} : vector<8x32xf32>, vector<32x64xf32>, vector<8x64xf32> -> vector<8x64xf32>
    %c1_221 = arith.constant 1 : index
    %c0_222 = arith.constant 0 : index
    %c0_223 = arith.constant 0 : index
    %482 = vector.load %arg24[%c1_221, %c0_222, %c0_223] : memref<3x1x64xf32, #tpu.memory_space<vmem>>, vector<1x1x64xf32>
    %483 = vector.shape_cast %482 : vector<1x1x64xf32> to vector<1x64xf32>
    %484 = vector.broadcast %483 : vector<1x64xf32> to vector<8x64xf32>
    %485 = arith.addf %481, %484 : vector<8x64xf32>
    %cst_224 = arith.constant 0.000000e+00 : f32
    %486 = vector.broadcast %cst_224 : f32 to vector<8x64xf32>
    %487 = arith.maximumf %485, %486 : vector<8x64xf32>
    %c1_225 = arith.constant 1 : index
    %c0_226 = arith.constant 0 : index
    %c0_227 = arith.constant 0 : index
    %488 = vector.load %arg25[%c1_225, %c0_226, %c0_227] : memref<3x64x32xf32, #tpu.memory_space<vmem>>, vector<1x64x32xf32>
    %489 = vector.shape_cast %488 : vector<1x64x32xf32> to vector<64x32xf32>
    %cst_228 = arith.constant dense<0.000000e+00> : vector<8x32xf32>
    %490 = tpu.matmul %487, %489, %cst_228 {dimension_numbers = #tpu.dot_dimension_numbers<[1], [0], [0], [1], [0, 0, 1, 1], [], []>} : vector<8x64xf32>, vector<64x32xf32>, vector<8x32xf32> -> vector<8x32xf32>
    %491 = arith.addf %478, %490 : vector<8x32xf32>
    %492 = vector.extract_strided_slice %342 {offsets = [3, 0], sizes = [1, 32], strides = [1, 1]} : vector<10x32xf32> to vector<1x32xf32>
    %493 = vector.broadcast %492 : vector<1x32xf32> to vector<8x32xf32>
    %494 = arith.addf %491, %493 : vector<8x32xf32>
    %495 = vector.extract_strided_slice %342 {offsets = [8, 0], sizes = [1, 32], strides = [1, 1]} : vector<10x32xf32> to vector<1x32xf32>
    %496 = vector.extract_strided_slice %342 {offsets = [9, 0], sizes = [1, 32], strides = [1, 1]} : vector<10x32xf32> to vector<1x32xf32>
    %cst_229 = arith.constant dense<0.000000e+00> : vector<8xf32>
    %497 = vector.multi_reduction <add>, %494, %cst_229 [1] : vector<8x32xf32> to vector<8xf32>
    %498 = vector.shape_cast %497 : vector<8xf32> to vector<8x1xf32>
    %cst_230 = arith.constant 3.200000e+01 : f32
    %499 = vector.broadcast %cst_230 : f32 to vector<8x1xf32>
    %500 = arith.divf %498, %499 : vector<8x1xf32>
    %501 = arith.mulf %494, %494 : vector<8x32xf32>
    %cst_231 = arith.constant dense<0.000000e+00> : vector<8xf32>
    %502 = vector.multi_reduction <add>, %501, %cst_231 [1] : vector<8x32xf32> to vector<8xf32>
    %503 = vector.shape_cast %502 : vector<8xf32> to vector<8x1xf32>
    %cst_232 = arith.constant 3.200000e+01 : f32
    %504 = vector.broadcast %cst_232 : f32 to vector<8x1xf32>
    %505 = arith.divf %503, %504 : vector<8x1xf32>
    %506 = arith.mulf %500, %500 : vector<8x1xf32>
    %507 = arith.subf %505, %506 : vector<8x1xf32>
    %508 = vector.broadcast %500 : vector<8x1xf32> to vector<8x32xf32>
    %509 = arith.subf %494, %508 : vector<8x32xf32>
    %cst_233 = arith.constant 9.99999974E-6 : f32
    %510 = vector.broadcast %cst_233 : f32 to vector<8x1xf32>
    %511 = arith.addf %507, %510 : vector<8x1xf32>
    %512 = math.rsqrt %511 : vector<8x1xf32>
    %513 = vector.broadcast %512 : vector<8x1xf32> to vector<8x32xf32>
    %514 = arith.mulf %509, %513 : vector<8x32xf32>
    %515 = vector.broadcast %495 : vector<1x32xf32> to vector<8x32xf32>
    %516 = arith.mulf %514, %515 : vector<8x32xf32>
    %517 = vector.broadcast %496 : vector<1x32xf32> to vector<8x32xf32>
    %518 = arith.addf %516, %517 : vector<8x32xf32>
    %519 = vector.extract_strided_slice %3 {offsets = [0, 0], sizes = [1, 32], strides = [1, 1]} : vector<2x32xf32> to vector<1x32xf32>
    %520 = vector.extract_strided_slice %3 {offsets = [1, 0], sizes = [1, 32], strides = [1, 1]} : vector<2x32xf32> to vector<1x32xf32>
    %cst_234 = arith.constant dense<0.000000e+00> : vector<8xf32>
    %521 = vector.multi_reduction <add>, %518, %cst_234 [1] : vector<8x32xf32> to vector<8xf32>
    %522 = vector.shape_cast %521 : vector<8xf32> to vector<8x1xf32>
    %cst_235 = arith.constant 3.200000e+01 : f32
    %523 = vector.broadcast %cst_235 : f32 to vector<8x1xf32>
    %524 = arith.divf %522, %523 : vector<8x1xf32>
    %525 = arith.mulf %518, %518 : vector<8x32xf32>
    %cst_236 = arith.constant dense<0.000000e+00> : vector<8xf32>
    %526 = vector.multi_reduction <add>, %525, %cst_236 [1] : vector<8x32xf32> to vector<8xf32>
    %527 = vector.shape_cast %526 : vector<8xf32> to vector<8x1xf32>
    %cst_237 = arith.constant 3.200000e+01 : f32
    %528 = vector.broadcast %cst_237 : f32 to vector<8x1xf32>
    %529 = arith.divf %527, %528 : vector<8x1xf32>
    %530 = arith.mulf %524, %524 : vector<8x1xf32>
    %531 = arith.subf %529, %530 : vector<8x1xf32>
    %532 = vector.broadcast %524 : vector<8x1xf32> to vector<8x32xf32>
    %533 = arith.subf %518, %532 : vector<8x32xf32>
    %cst_238 = arith.constant 9.99999974E-6 : f32
    %534 = vector.broadcast %cst_238 : f32 to vector<8x1xf32>
    %535 = arith.addf %531, %534 : vector<8x1xf32>
    %536 = math.rsqrt %535 : vector<8x1xf32>
    %537 = vector.broadcast %536 : vector<8x1xf32> to vector<8x32xf32>
    %538 = arith.mulf %533, %537 : vector<8x32xf32>
    %539 = vector.broadcast %519 : vector<1x32xf32> to vector<8x32xf32>
    %540 = arith.mulf %538, %539 : vector<8x32xf32>
    %541 = vector.broadcast %520 : vector<1x32xf32> to vector<8x32xf32>
    %542 = arith.addf %540, %541 : vector<8x32xf32>
    %543 = vector.extract_strided_slice %16 {offsets = [0, 0], sizes = [32, 69], strides = [1, 1]} : vector<33x69xf32> to vector<32x69xf32>
    %cst_239 = arith.constant dense<0.000000e+00> : vector<8x69xf32>
    %544 = tpu.matmul %542, %543, %cst_239 {dimension_numbers = #tpu.dot_dimension_numbers<[1], [0], [0], [1], [0, 0, 1, 1], [], []>} : vector<8x32xf32>, vector<32x69xf32>, vector<8x69xf32> -> vector<8x69xf32>
    %545 = vector.extract_strided_slice %16 {offsets = [32, 0], sizes = [1, 69], strides = [1, 1]} : vector<33x69xf32> to vector<1x69xf32>
    %546 = vector.broadcast %545 : vector<1x69xf32> to vector<8x69xf32>
    %547 = arith.addf %544, %546 : vector<8x69xf32>
    %548 = vector.extract_strided_slice %547 {offsets = [0, 64], sizes = [8, 5], strides = [1, 1]} : vector<8x69xf32> to vector<8x5xf32>
    %c0_240 = arith.constant 0 : index
    %c2 = arith.constant 2 : index
    %c0_241 = arith.constant 0 : index
    %c0_242 = arith.constant 0 : index
    %549 = vector.load %arg30[%c0_240, %c2, %c0_241, %c0_242] : memref<1x4x8x128xf32, #tpu.memory_space<vmem>>, vector<1x1x8x5xf32>
    %550 = vector.shape_cast %549 : vector<1x1x8x5xf32> to vector<8x5xf32>
    %551 = vector.shape_cast %548 : vector<8x5xf32> to vector<1x1x8x5xf32>
    tpu.vector_store %arg30[%c0_240, %c2, %c0_241, %c0_242], %551 {strides = array<i32>} : memref<1x4x8x128xf32, #tpu.memory_space<vmem>>, vector<1x1x8x5xf32>,
    %552 = vector.extract_strided_slice %547 {offsets = [0, 0], sizes = [8, 64], strides = [1, 1]} : vector<8x69xf32> to vector<8x64xf32>
    %cst_243 = arith.constant 0.000000e+00 : f32
    %553 = vector.broadcast %cst_243 : f32 to vector<8x64xf32>
    %554 = arith.maximumf %552, %553 : vector<8x64xf32>
    %555 = vector.extract_strided_slice %17 {offsets = [0, 0], sizes = [64, 64], strides = [1, 1]} : vector<65x64xf32> to vector<64x64xf32>
    %cst_244 = arith.constant dense<0.000000e+00> : vector<8x64xf32>
    %556 = tpu.matmul %554, %555, %cst_244 {dimension_numbers = #tpu.dot_dimension_numbers<[1], [0], [0], [1], [0, 0, 1, 1], [], []>} : vector<8x64xf32>, vector<64x64xf32>, vector<8x64xf32> -> vector<8x64xf32>
    %557 = vector.extract_strided_slice %17 {offsets = [64, 0], sizes = [1, 64], strides = [1, 1]} : vector<65x64xf32> to vector<1x64xf32>
    %558 = vector.broadcast %557 : vector<1x64xf32> to vector<8x64xf32>
    %559 = arith.addf %556, %558 : vector<8x64xf32>
    %cst_245 = arith.constant 0.000000e+00 : f32
    %560 = vector.broadcast %cst_245 : f32 to vector<8x64xf32>
    %561 = arith.maximumf %559, %560 : vector<8x64xf32>
    %562 = vector.extract_strided_slice %18 {offsets = [0, 0], sizes = [64, 36], strides = [1, 1]} : vector<65x36xf32> to vector<64x36xf32>
    %cst_246 = arith.constant dense<0.000000e+00> : vector<8x36xf32>
    %563 = tpu.matmul %561, %562, %cst_246 {dimension_numbers = #tpu.dot_dimension_numbers<[1], [0], [0], [1], [0, 0, 1, 1], [], []>} : vector<8x64xf32>, vector<64x36xf32>, vector<8x36xf32> -> vector<8x36xf32>
    %564 = vector.extract_strided_slice %18 {offsets = [64, 0], sizes = [1, 36], strides = [1, 1]} : vector<65x36xf32> to vector<1x36xf32>
    %565 = vector.broadcast %564 : vector<1x36xf32> to vector<8x36xf32>
    %566 = arith.addf %563, %565 : vector<8x36xf32>
    %567 = vector.extract_strided_slice %566 {offsets = [0, 32], sizes = [8, 4], strides = [1, 1]} : vector<8x36xf32> to vector<8x4xf32>
    %568 = arith.negf %567 : vector<8x4xf32>
    %569 = math.exp %568 : vector<8x4xf32>
    %cst_247 = arith.constant 1.000000e+00 : f32
    %570 = vector.broadcast %cst_247 : f32 to vector<8x4xf32>
    %571 = arith.addf %570, %569 : vector<8x4xf32>
    %572 = arith.divf %570, %571 : vector<8x4xf32>
    %c0_248 = arith.constant 0 : index
    %c2_249 = arith.constant 2 : index
    %c0_250 = arith.constant 0 : index
    %c8_251 = arith.constant 8 : index
    %573 = vector.load %arg30[%c0_248, %c2_249, %c0_250, %c8_251] : memref<1x4x8x128xf32, #tpu.memory_space<vmem>>, vector<1x1x8x4xf32>
    %574 = vector.shape_cast %573 : vector<1x1x8x4xf32> to vector<8x4xf32>
    %575 = vector.shape_cast %572 : vector<8x4xf32> to vector<1x1x8x4xf32>
    tpu.vector_store %arg30[%c0_248, %c2_249, %c0_250, %c8_251], %575 {strides = array<i32>} : memref<1x4x8x128xf32, #tpu.memory_space<vmem>>, vector<1x1x8x4xf32>,
    %576 = vector.extract_strided_slice %566 {offsets = [0, 0], sizes = [8, 32], strides = [1, 1]} : vector<8x36xf32> to vector<8x32xf32>
    %cst_252 = arith.constant dense<0.000000e+00> : vector<8x256xf32>
    %577 = tpu.matmul %576, %2, %cst_252 {dimension_numbers = #tpu.dot_dimension_numbers<[1], [0], [0], [1], [0, 0, 1, 1], [], []>} : vector<8x32xf32>, vector<32x256xf32>, vector<8x256xf32> -> vector<8x256xf32>
    %c0_253 = arith.constant 0 : index
    %c2_254 = arith.constant 2 : index
    %c0_255 = arith.constant 0 : index
    %c0_256 = arith.constant 0 : index
    %578 = vector.load %arg31[%c0_253, %c2_254, %c0_255, %c0_256] : memref<1x4x8x256xf32, #tpu.memory_space<vmem>>, vector<1x1x8x256xf32>
    %579 = vector.shape_cast %578 : vector<1x1x8x256xf32> to vector<8x256xf32>
    %580 = vector.shape_cast %577 : vector<8x256xf32> to vector<1x1x8x256xf32>
    tpu.vector_store %arg31[%c0_253, %c2_254, %c0_255, %c0_256], %580 {strides = array<i32>} : memref<1x4x8x256xf32, #tpu.memory_space<vmem>>, vector<1x1x8x256xf32>,
    %cst_257 = arith.constant dense<0.000000e+00> : vector<8x4xf32>
    %581 = tpu.matmul %577, %15, %cst_257 {dimension_numbers = #tpu.dot_dimension_numbers<[1], [0], [0], [1], [0, 0, 1, 1], [], []>} : vector<8x256xf32>, vector<256x4xf32>, vector<8x4xf32> -> vector<8x4xf32>
    %cst_258 = arith.constant dense<0xFF800000> : vector<8xf32>
    %582 = vector.multi_reduction <maximumf>, %581, %cst_258 [1] : vector<8x4xf32> to vector<8xf32>
    %583 = vector.shape_cast %582 : vector<8xf32> to vector<8x1xf32>
    %cst_259 = arith.constant 0.000000e+00 : f32
    %584 = vector.broadcast %cst_259 : f32 to vector<8x1xf32>
    %585 = arith.cmpf oge, %583, %584 : vector<8x1xf32>
    %cst_260 = arith.constant 0.000000e+00 : f32
    %586 = vector.broadcast %cst_260 : f32 to vector<8x4xf32>
    %587 = arith.cmpf olt, %581, %586 : vector<8x4xf32>
    %588 = vector.broadcast %585 : vector<8x1xi1> to vector<8x4xi1>
    %589 = arith.andi %587, %588 : vector<8x4xi1>
    %cst_261 = arith.constant -1.000000e+30 : f32
    %cst_262 = arith.constant 0.000000e+00 : f32
    %590 = vector.broadcast %cst_261 : f32 to vector<8x4xf32>
    %591 = vector.broadcast %cst_262 : f32 to vector<8x4xf32>
    %592 = arith.select %589, %590, %591 : vector<8x4xi1>, vector<8x4xf32>
    %593 = tpu.concatenate %592, %592, %592, %592 in 0 : vector<8x4xf32>, vector<8x4xf32>, vector<8x4xf32>, vector<8x4xf32> -> vector<32x4xf32>
    %c2_263 = arith.constant 2 : index
    %c0_264 = arith.constant 0 : index
    %c0_265 = arith.constant 0 : index
    %594 = vector.load %arg26[%c2_263, %c0_264, %c0_265] : memref<3x10x32xf32, #tpu.memory_space<vmem>>, vector<1x10x32xf32>
    %595 = vector.shape_cast %594 : vector<1x10x32xf32> to vector<10x32xf32>
    %c2_266 = arith.constant 2 : index
    %c0_267 = arith.constant 0 : index
    %c0_268 = arith.constant 0 : index
    %596 = vector.load %arg16[%c2_266, %c0_267, %c0_268] : memref<3x32x64xf32, #tpu.memory_space<vmem>>, vector<1x32x64xf32>
    %597 = vector.shape_cast %596 : vector<1x32x64xf32> to vector<32x64xf32>
    %cst_269 = arith.constant dense<0.000000e+00> : vector<4x64xf32>
    %598 = tpu.matmul %9, %597, %cst_269 {dimension_numbers = #tpu.dot_dimension_numbers<[1], [0], [0], [1], [0, 0, 1, 1], [], []>} : vector<4x32xf32>, vector<32x64xf32>, vector<4x64xf32> -> vector<4x64xf32>
    %599 = vector.extract_strided_slice %598 {offsets = [0, 0], sizes = [4, 32], strides = [1, 1]} : vector<4x64xf32> to vector<4x32xf32>
    %600 = arith.addf %599, %12 : vector<4x32xf32>
    %601 = vector.extract_strided_slice %598 {offsets = [0, 32], sizes = [4, 32], strides = [1, 1]} : vector<4x64xf32> to vector<4x32xf32>
    %602 = vector.extract_strided_slice %595 {offsets = [0, 0], sizes = [1, 32], strides = [1, 1]} : vector<10x32xf32> to vector<1x32xf32>
    %603 = vector.broadcast %602 : vector<1x32xf32> to vector<4x32xf32>
    %604 = arith.addf %601, %603 : vector<4x32xf32>
    %c2_270 = arith.constant 2 : index
    %c0_271 = arith.constant 0 : index
    %c0_272 = arith.constant 0 : index
    %605 = vector.load %arg14[%c2_270, %c0_271, %c0_272] : memref<3x32x32xf32, #tpu.memory_space<vmem>>, vector<1x32x32xf32>
    %606 = vector.shape_cast %605 : vector<1x32x32xf32> to vector<32x32xf32>
    %c2_273 = arith.constant 2 : index
    %c0_274 = arith.constant 0 : index
    %c0_275 = arith.constant 0 : index
    %607 = vector.load %arg15[%c2_273, %c0_274, %c0_275] : memref<3x32x32xf32, #tpu.memory_space<vmem>>, vector<1x32x32xf32>
    %608 = vector.shape_cast %607 : vector<1x32x32xf32> to vector<32x32xf32>
    %c2_276 = arith.constant 2 : index
    %c0_277 = arith.constant 0 : index
    %c0_278 = arith.constant 0 : index
    %609 = vector.load %arg17[%c2_276, %c0_277, %c0_278] : memref<3x32x32xf32, #tpu.memory_space<vmem>>, vector<1x32x32xf32>
    %610 = vector.shape_cast %609 : vector<1x32x32xf32> to vector<32x32xf32>
    %611 = vector.extract_strided_slice %595 {offsets = [1, 0], sizes = [1, 32], strides = [1, 1]} : vector<10x32xf32> to vector<1x32xf32>
    %612 = tpu.concatenate %518, %518, %518, %518 in 0 : vector<8x32xf32>, vector<8x32xf32>, vector<8x32xf32>, vector<8x32xf32> -> vector<32x32xf32>
    %cst_279 = arith.constant dense<0.000000e+00> : vector<32x32xf32>
    %613 = tpu.matmul %612, %606, %cst_279 {dimension_numbers = #tpu.dot_dimension_numbers<[1], [0], [0], [1], [0, 0, 1, 1], [], []>} : vector<32x32xf32>, vector<32x32xf32>, vector<32x32xf32> -> vector<32x32xf32>
    %614 = arith.mulf %613, %0 : vector<32x32xf32>
    %615 = arith.addf %614, %608 : vector<32x32xf32>
    %cst_280 = arith.constant dense<0.000000e+00> : vector<32x4xf32>
    %616 = tpu.matmul %615, %600, %cst_280 {dimension_numbers = #tpu.dot_dimension_numbers<[1], [1], [0], [0], [0, 0, 1, 0], [], []>} : vector<32x32xf32>, vector<4x32xf32>, vector<32x4xf32> -> vector<32x4xf32>
    %617 = arith.addf %616, %593 : vector<32x4xf32>
    %cst_281 = arith.constant dense<0xFF800000> : vector<32xf32>
    %618 = vector.multi_reduction <maximumf>, %617, %cst_281 [1] : vector<32x4xf32> to vector<32xf32>
    %619 = vector.shape_cast %618 : vector<32xf32> to vector<32x1xf32>
    %620 = vector.broadcast %619 : vector<32x1xf32> to vector<32x4xf32>
    %621 = arith.subf %617, %620 : vector<32x4xf32>
    %622 = math.exp %621 : vector<32x4xf32>
    %cst_282 = arith.constant dense<0.000000e+00> : vector<32xf32>
    %623 = vector.multi_reduction <add>, %622, %cst_282 [1] : vector<32x4xf32> to vector<32xf32>
    %624 = vector.shape_cast %623 : vector<32xf32> to vector<32x1xf32>
    %625 = tpu.reciprocal %624 {approx = true} : vector<32x1xf32> -> vector<32x1xf32>
    %cst_283 = arith.constant dense<0.000000e+00> : vector<32x32xf32>
    %626 = tpu.matmul %622, %604, %cst_283 {dimension_numbers = #tpu.dot_dimension_numbers<[1], [0], [0], [1], [0, 0, 1, 1], [], []>} : vector<32x4xf32>, vector<4x32xf32>, vector<32x32xf32> -> vector<32x32xf32>
    %627 = vector.broadcast %625 : vector<32x1xf32> to vector<32x32xf32>
    %628 = arith.mulf %627, %0 : vector<32x32xf32>
    %629 = arith.mulf %626, %628 : vector<32x32xf32>
    %630 = vector.extract_strided_slice %629 {offsets = [0, 0], sizes = [8, 32], strides = [1, 1]} : vector<32x32xf32> to vector<8x32xf32>
    %631 = vector.extract_strided_slice %629 {offsets = [8, 0], sizes = [8, 32], strides = [1, 1]} : vector<32x32xf32> to vector<8x32xf32>
    %632 = arith.addf %630, %631 : vector<8x32xf32>
    %633 = vector.extract_strided_slice %629 {offsets = [16, 0], sizes = [8, 32], strides = [1, 1]} : vector<32x32xf32> to vector<8x32xf32>
    %634 = arith.addf %632, %633 : vector<8x32xf32>
    %635 = vector.extract_strided_slice %629 {offsets = [24, 0], sizes = [8, 32], strides = [1, 1]} : vector<32x32xf32> to vector<8x32xf32>
    %636 = arith.addf %634, %635 : vector<8x32xf32>
    %cst_284 = arith.constant dense<0.000000e+00> : vector<8x32xf32>
    %637 = tpu.matmul %636, %610, %cst_284 {dimension_numbers = #tpu.dot_dimension_numbers<[1], [0], [0], [1], [0, 0, 1, 1], [], []>} : vector<8x32xf32>, vector<32x32xf32>, vector<8x32xf32> -> vector<8x32xf32>
    %638 = vector.broadcast %611 : vector<1x32xf32> to vector<8x32xf32>
    %639 = arith.addf %637, %638 : vector<8x32xf32>
    %640 = arith.addf %518, %639 : vector<8x32xf32>
    %641 = vector.extract_strided_slice %595 {offsets = [4, 0], sizes = [1, 32], strides = [1, 1]} : vector<10x32xf32> to vector<1x32xf32>
    %642 = vector.extract_strided_slice %595 {offsets = [5, 0], sizes = [1, 32], strides = [1, 1]} : vector<10x32xf32> to vector<1x32xf32>
    %cst_285 = arith.constant dense<0.000000e+00> : vector<8xf32>
    %643 = vector.multi_reduction <add>, %640, %cst_285 [1] : vector<8x32xf32> to vector<8xf32>
    %644 = vector.shape_cast %643 : vector<8xf32> to vector<8x1xf32>
    %cst_286 = arith.constant 3.200000e+01 : f32
    %645 = vector.broadcast %cst_286 : f32 to vector<8x1xf32>
    %646 = arith.divf %644, %645 : vector<8x1xf32>
    %647 = arith.mulf %640, %640 : vector<8x32xf32>
    %cst_287 = arith.constant dense<0.000000e+00> : vector<8xf32>
    %648 = vector.multi_reduction <add>, %647, %cst_287 [1] : vector<8x32xf32> to vector<8xf32>
    %649 = vector.shape_cast %648 : vector<8xf32> to vector<8x1xf32>
    %cst_288 = arith.constant 3.200000e+01 : f32
    %650 = vector.broadcast %cst_288 : f32 to vector<8x1xf32>
    %651 = arith.divf %649, %650 : vector<8x1xf32>
    %652 = arith.mulf %646, %646 : vector<8x1xf32>
    %653 = arith.subf %651, %652 : vector<8x1xf32>
    %654 = vector.broadcast %646 : vector<8x1xf32> to vector<8x32xf32>
    %655 = arith.subf %640, %654 : vector<8x32xf32>
    %cst_289 = arith.constant 9.99999974E-6 : f32
    %656 = vector.broadcast %cst_289 : f32 to vector<8x1xf32>
    %657 = arith.addf %653, %656 : vector<8x1xf32>
    %658 = math.rsqrt %657 : vector<8x1xf32>
    %659 = vector.broadcast %658 : vector<8x1xf32> to vector<8x32xf32>
    %660 = arith.mulf %655, %659 : vector<8x32xf32>
    %661 = vector.broadcast %641 : vector<1x32xf32> to vector<8x32xf32>
    %662 = arith.mulf %660, %661 : vector<8x32xf32>
    %663 = vector.broadcast %642 : vector<1x32xf32> to vector<8x32xf32>
    %664 = arith.addf %662, %663 : vector<8x32xf32>
    %c2_290 = arith.constant 2 : index
    %c0_291 = arith.constant 0 : index
    %c0_292 = arith.constant 0 : index
    %665 = vector.load %arg20[%c2_290, %c0_291, %c0_292] : memref<3x32x64xf32, #tpu.memory_space<vmem>>, vector<1x32x64xf32>
    %666 = vector.shape_cast %665 : vector<1x32x64xf32> to vector<32x64xf32>
    %cst_293 = arith.constant dense<0.000000e+00> : vector<8x64xf32>
    %667 = tpu.matmul %664, %666, %cst_293 {dimension_numbers = #tpu.dot_dimension_numbers<[1], [0], [0], [1], [0, 0, 1, 1], [], []>} : vector<8x32xf32>, vector<32x64xf32>, vector<8x64xf32> -> vector<8x64xf32>
    %c2_294 = arith.constant 2 : index
    %c0_295 = arith.constant 0 : index
    %c0_296 = arith.constant 0 : index
    %668 = vector.load %arg21[%c2_294, %c0_295, %c0_296] : memref<3x8x64xf32, #tpu.memory_space<vmem>>, vector<1x8x64xf32>
    %669 = vector.shape_cast %668 : vector<1x8x64xf32> to vector<8x64xf32>
    %670 = arith.addf %667, %669 : vector<8x64xf32>
    %671 = vector.extract_strided_slice %670 {offsets = [0, 0], sizes = [8, 32], strides = [1, 1]} : vector<8x64xf32> to vector<8x32xf32>
    %672 = vector.extract_strided_slice %670 {offsets = [0, 32], sizes = [8, 32], strides = [1, 1]} : vector<8x64xf32> to vector<8x32xf32>
    %c2_297 = arith.constant 2 : index
    %c0_298 = arith.constant 0 : index
    %c0_299 = arith.constant 0 : index
    %673 = vector.load %arg18[%c2_297, %c0_298, %c0_299] : memref<3x32x32xf32, #tpu.memory_space<vmem>>, vector<1x32x32xf32>
    %674 = vector.shape_cast %673 : vector<1x32x32xf32> to vector<32x32xf32>
    %c2_300 = arith.constant 2 : index
    %c0_301 = arith.constant 0 : index
    %c0_302 = arith.constant 0 : index
    %675 = vector.load %arg19[%c2_300, %c0_301, %c0_302] : memref<3x32x32xf32, #tpu.memory_space<vmem>>, vector<1x32x32xf32>
    %676 = vector.shape_cast %675 : vector<1x32x32xf32> to vector<32x32xf32>
    %c2_303 = arith.constant 2 : index
    %c0_304 = arith.constant 0 : index
    %c0_305 = arith.constant 0 : index
    %677 = vector.load %arg22[%c2_303, %c0_304, %c0_305] : memref<3x32x32xf32, #tpu.memory_space<vmem>>, vector<1x32x32xf32>
    %678 = vector.shape_cast %677 : vector<1x32x32xf32> to vector<32x32xf32>
    %679 = vector.extract_strided_slice %595 {offsets = [2, 0], sizes = [1, 32], strides = [1, 1]} : vector<10x32xf32> to vector<1x32xf32>
    %680 = tpu.concatenate %664, %664, %664, %664 in 0 : vector<8x32xf32>, vector<8x32xf32>, vector<8x32xf32>, vector<8x32xf32> -> vector<32x32xf32>
    %cst_306 = arith.constant dense<0.000000e+00> : vector<32x32xf32>
    %681 = tpu.matmul %680, %674, %cst_306 {dimension_numbers = #tpu.dot_dimension_numbers<[1], [0], [0], [1], [0, 0, 1, 1], [], []>} : vector<32x32xf32>, vector<32x32xf32>, vector<32x32xf32> -> vector<32x32xf32>
    %682 = arith.mulf %681, %0 : vector<32x32xf32>
    %683 = arith.addf %682, %676 : vector<32x32xf32>
    %cst_307 = arith.constant dense<0.000000e+00> : vector<32x8xf32>
    %684 = tpu.matmul %683, %671, %cst_307 {dimension_numbers = #tpu.dot_dimension_numbers<[1], [1], [0], [0], [0, 0, 1, 0], [], []>} : vector<32x32xf32>, vector<8x32xf32>, vector<32x8xf32> -> vector<32x8xf32>
    %cst_308 = arith.constant dense<0xFF800000> : vector<32xf32>
    %685 = vector.multi_reduction <maximumf>, %684, %cst_308 [1] : vector<32x8xf32> to vector<32xf32>
    %686 = vector.shape_cast %685 : vector<32xf32> to vector<32x1xf32>
    %687 = vector.broadcast %686 : vector<32x1xf32> to vector<32x8xf32>
    %688 = arith.subf %684, %687 : vector<32x8xf32>
    %689 = math.exp %688 : vector<32x8xf32>
    %cst_309 = arith.constant dense<0.000000e+00> : vector<32xf32>
    %690 = vector.multi_reduction <add>, %689, %cst_309 [1] : vector<32x8xf32> to vector<32xf32>
    %691 = vector.shape_cast %690 : vector<32xf32> to vector<32x1xf32>
    %692 = tpu.reciprocal %691 {approx = true} : vector<32x1xf32> -> vector<32x1xf32>
    %cst_310 = arith.constant dense<0.000000e+00> : vector<32x32xf32>
    %693 = tpu.matmul %689, %672, %cst_310 {dimension_numbers = #tpu.dot_dimension_numbers<[1], [0], [0], [1], [0, 0, 1, 1], [], []>} : vector<32x8xf32>, vector<8x32xf32>, vector<32x32xf32> -> vector<32x32xf32>
    %694 = vector.broadcast %692 : vector<32x1xf32> to vector<32x32xf32>
    %695 = arith.mulf %694, %0 : vector<32x32xf32>
    %696 = arith.mulf %693, %695 : vector<32x32xf32>
    %697 = vector.extract_strided_slice %696 {offsets = [0, 0], sizes = [8, 32], strides = [1, 1]} : vector<32x32xf32> to vector<8x32xf32>
    %698 = vector.extract_strided_slice %696 {offsets = [8, 0], sizes = [8, 32], strides = [1, 1]} : vector<32x32xf32> to vector<8x32xf32>
    %699 = arith.addf %697, %698 : vector<8x32xf32>
    %700 = vector.extract_strided_slice %696 {offsets = [16, 0], sizes = [8, 32], strides = [1, 1]} : vector<32x32xf32> to vector<8x32xf32>
    %701 = arith.addf %699, %700 : vector<8x32xf32>
    %702 = vector.extract_strided_slice %696 {offsets = [24, 0], sizes = [8, 32], strides = [1, 1]} : vector<32x32xf32> to vector<8x32xf32>
    %703 = arith.addf %701, %702 : vector<8x32xf32>
    %cst_311 = arith.constant dense<0.000000e+00> : vector<8x32xf32>
    %704 = tpu.matmul %703, %678, %cst_311 {dimension_numbers = #tpu.dot_dimension_numbers<[1], [0], [0], [1], [0, 0, 1, 1], [], []>} : vector<8x32xf32>, vector<32x32xf32>, vector<8x32xf32> -> vector<8x32xf32>
    %705 = vector.broadcast %679 : vector<1x32xf32> to vector<8x32xf32>
    %706 = arith.addf %704, %705 : vector<8x32xf32>
    %707 = arith.addf %664, %706 : vector<8x32xf32>
    %708 = vector.extract_strided_slice %595 {offsets = [6, 0], sizes = [1, 32], strides = [1, 1]} : vector<10x32xf32> to vector<1x32xf32>
    %709 = vector.extract_strided_slice %595 {offsets = [7, 0], sizes = [1, 32], strides = [1, 1]} : vector<10x32xf32> to vector<1x32xf32>
    %cst_312 = arith.constant dense<0.000000e+00> : vector<8xf32>
    %710 = vector.multi_reduction <add>, %707, %cst_312 [1] : vector<8x32xf32> to vector<8xf32>
    %711 = vector.shape_cast %710 : vector<8xf32> to vector<8x1xf32>
    %cst_313 = arith.constant 3.200000e+01 : f32
    %712 = vector.broadcast %cst_313 : f32 to vector<8x1xf32>
    %713 = arith.divf %711, %712 : vector<8x1xf32>
    %714 = arith.mulf %707, %707 : vector<8x32xf32>
    %cst_314 = arith.constant dense<0.000000e+00> : vector<8xf32>
    %715 = vector.multi_reduction <add>, %714, %cst_314 [1] : vector<8x32xf32> to vector<8xf32>
    %716 = vector.shape_cast %715 : vector<8xf32> to vector<8x1xf32>
    %cst_315 = arith.constant 3.200000e+01 : f32
    %717 = vector.broadcast %cst_315 : f32 to vector<8x1xf32>
    %718 = arith.divf %716, %717 : vector<8x1xf32>
    %719 = arith.mulf %713, %713 : vector<8x1xf32>
    %720 = arith.subf %718, %719 : vector<8x1xf32>
    %721 = vector.broadcast %713 : vector<8x1xf32> to vector<8x32xf32>
    %722 = arith.subf %707, %721 : vector<8x32xf32>
    %cst_316 = arith.constant 9.99999974E-6 : f32
    %723 = vector.broadcast %cst_316 : f32 to vector<8x1xf32>
    %724 = arith.addf %720, %723 : vector<8x1xf32>
    %725 = math.rsqrt %724 : vector<8x1xf32>
    %726 = vector.broadcast %725 : vector<8x1xf32> to vector<8x32xf32>
    %727 = arith.mulf %722, %726 : vector<8x32xf32>
    %728 = vector.broadcast %708 : vector<1x32xf32> to vector<8x32xf32>
    %729 = arith.mulf %727, %728 : vector<8x32xf32>
    %730 = vector.broadcast %709 : vector<1x32xf32> to vector<8x32xf32>
    %731 = arith.addf %729, %730 : vector<8x32xf32>
    %c2_317 = arith.constant 2 : index
    %c0_318 = arith.constant 0 : index
    %c0_319 = arith.constant 0 : index
    %732 = vector.load %arg23[%c2_317, %c0_318, %c0_319] : memref<3x32x64xf32, #tpu.memory_space<vmem>>, vector<1x32x64xf32>
    %733 = vector.shape_cast %732 : vector<1x32x64xf32> to vector<32x64xf32>
    %cst_320 = arith.constant dense<0.000000e+00> : vector<8x64xf32>
    %734 = tpu.matmul %731, %733, %cst_320 {dimension_numbers = #tpu.dot_dimension_numbers<[1], [0], [0], [1], [0, 0, 1, 1], [], []>} : vector<8x32xf32>, vector<32x64xf32>, vector<8x64xf32> -> vector<8x64xf32>
    %c2_321 = arith.constant 2 : index
    %c0_322 = arith.constant 0 : index
    %c0_323 = arith.constant 0 : index
    %735 = vector.load %arg24[%c2_321, %c0_322, %c0_323] : memref<3x1x64xf32, #tpu.memory_space<vmem>>, vector<1x1x64xf32>
    %736 = vector.shape_cast %735 : vector<1x1x64xf32> to vector<1x64xf32>
    %737 = vector.broadcast %736 : vector<1x64xf32> to vector<8x64xf32>
    %738 = arith.addf %734, %737 : vector<8x64xf32>
    %cst_324 = arith.constant 0.000000e+00 : f32
    %739 = vector.broadcast %cst_324 : f32 to vector<8x64xf32>
    %740 = arith.maximumf %738, %739 : vector<8x64xf32>
    %c2_325 = arith.constant 2 : index
    %c0_326 = arith.constant 0 : index
    %c0_327 = arith.constant 0 : index
    %741 = vector.load %arg25[%c2_325, %c0_326, %c0_327] : memref<3x64x32xf32, #tpu.memory_space<vmem>>, vector<1x64x32xf32>
    %742 = vector.shape_cast %741 : vector<1x64x32xf32> to vector<64x32xf32>
    %cst_328 = arith.constant dense<0.000000e+00> : vector<8x32xf32>
    %743 = tpu.matmul %740, %742, %cst_328 {dimension_numbers = #tpu.dot_dimension_numbers<[1], [0], [0], [1], [0, 0, 1, 1], [], []>} : vector<8x64xf32>, vector<64x32xf32>, vector<8x32xf32> -> vector<8x32xf32>
    %744 = arith.addf %731, %743 : vector<8x32xf32>
    %745 = vector.extract_strided_slice %595 {offsets = [3, 0], sizes = [1, 32], strides = [1, 1]} : vector<10x32xf32> to vector<1x32xf32>
    %746 = vector.broadcast %745 : vector<1x32xf32> to vector<8x32xf32>
    %747 = arith.addf %744, %746 : vector<8x32xf32>
    %748 = vector.extract_strided_slice %595 {offsets = [8, 0], sizes = [1, 32], strides = [1, 1]} : vector<10x32xf32> to vector<1x32xf32>
    %749 = vector.extract_strided_slice %595 {offsets = [9, 0], sizes = [1, 32], strides = [1, 1]} : vector<10x32xf32> to vector<1x32xf32>
    %cst_329 = arith.constant dense<0.000000e+00> : vector<8xf32>
    %750 = vector.multi_reduction <add>, %747, %cst_329 [1] : vector<8x32xf32> to vector<8xf32>
    %751 = vector.shape_cast %750 : vector<8xf32> to vector<8x1xf32>
    %cst_330 = arith.constant 3.200000e+01 : f32
    %752 = vector.broadcast %cst_330 : f32 to vector<8x1xf32>
    %753 = arith.divf %751, %752 : vector<8x1xf32>
    %754 = arith.mulf %747, %747 : vector<8x32xf32>
    %cst_331 = arith.constant dense<0.000000e+00> : vector<8xf32>
    %755 = vector.multi_reduction <add>, %754, %cst_331 [1] : vector<8x32xf32> to vector<8xf32>
    %756 = vector.shape_cast %755 : vector<8xf32> to vector<8x1xf32>
    %cst_332 = arith.constant 3.200000e+01 : f32
    %757 = vector.broadcast %cst_332 : f32 to vector<8x1xf32>
    %758 = arith.divf %756, %757 : vector<8x1xf32>
    %759 = arith.mulf %753, %753 : vector<8x1xf32>
    %760 = arith.subf %758, %759 : vector<8x1xf32>
    %761 = vector.broadcast %753 : vector<8x1xf32> to vector<8x32xf32>
    %762 = arith.subf %747, %761 : vector<8x32xf32>
    %cst_333 = arith.constant 9.99999974E-6 : f32
    %763 = vector.broadcast %cst_333 : f32 to vector<8x1xf32>
    %764 = arith.addf %760, %763 : vector<8x1xf32>
    %765 = math.rsqrt %764 : vector<8x1xf32>
    %766 = vector.broadcast %765 : vector<8x1xf32> to vector<8x32xf32>
    %767 = arith.mulf %762, %766 : vector<8x32xf32>
    %768 = vector.broadcast %748 : vector<1x32xf32> to vector<8x32xf32>
    %769 = arith.mulf %767, %768 : vector<8x32xf32>
    %770 = vector.broadcast %749 : vector<1x32xf32> to vector<8x32xf32>
    %771 = arith.addf %769, %770 : vector<8x32xf32>
    %772 = vector.extract_strided_slice %3 {offsets = [0, 0], sizes = [1, 32], strides = [1, 1]} : vector<2x32xf32> to vector<1x32xf32>
    %773 = vector.extract_strided_slice %3 {offsets = [1, 0], sizes = [1, 32], strides = [1, 1]} : vector<2x32xf32> to vector<1x32xf32>
    %cst_334 = arith.constant dense<0.000000e+00> : vector<8xf32>
    %774 = vector.multi_reduction <add>, %771, %cst_334 [1] : vector<8x32xf32> to vector<8xf32>
    %775 = vector.shape_cast %774 : vector<8xf32> to vector<8x1xf32>
    %cst_335 = arith.constant 3.200000e+01 : f32
    %776 = vector.broadcast %cst_335 : f32 to vector<8x1xf32>
    %777 = arith.divf %775, %776 : vector<8x1xf32>
    %778 = arith.mulf %771, %771 : vector<8x32xf32>
    %cst_336 = arith.constant dense<0.000000e+00> : vector<8xf32>
    %779 = vector.multi_reduction <add>, %778, %cst_336 [1] : vector<8x32xf32> to vector<8xf32>
    %780 = vector.shape_cast %779 : vector<8xf32> to vector<8x1xf32>
    %cst_337 = arith.constant 3.200000e+01 : f32
    %781 = vector.broadcast %cst_337 : f32 to vector<8x1xf32>
    %782 = arith.divf %780, %781 : vector<8x1xf32>
    %783 = arith.mulf %777, %777 : vector<8x1xf32>
    %784 = arith.subf %782, %783 : vector<8x1xf32>
    %785 = vector.broadcast %777 : vector<8x1xf32> to vector<8x32xf32>
    %786 = arith.subf %771, %785 : vector<8x32xf32>
    %cst_338 = arith.constant 9.99999974E-6 : f32
    %787 = vector.broadcast %cst_338 : f32 to vector<8x1xf32>
    %788 = arith.addf %784, %787 : vector<8x1xf32>
    %789 = math.rsqrt %788 : vector<8x1xf32>
    %790 = vector.broadcast %789 : vector<8x1xf32> to vector<8x32xf32>
    %791 = arith.mulf %786, %790 : vector<8x32xf32>
    %792 = vector.broadcast %772 : vector<1x32xf32> to vector<8x32xf32>
    %793 = arith.mulf %791, %792 : vector<8x32xf32>
    %794 = vector.broadcast %773 : vector<1x32xf32> to vector<8x32xf32>
    %795 = arith.addf %793, %794 : vector<8x32xf32>
    %796 = vector.extract_strided_slice %16 {offsets = [0, 0], sizes = [32, 69], strides = [1, 1]} : vector<33x69xf32> to vector<32x69xf32>
    %cst_339 = arith.constant dense<0.000000e+00> : vector<8x69xf32>
    %797 = tpu.matmul %795, %796, %cst_339 {dimension_numbers = #tpu.dot_dimension_numbers<[1], [0], [0], [1], [0, 0, 1, 1], [], []>} : vector<8x32xf32>, vector<32x69xf32>, vector<8x69xf32> -> vector<8x69xf32>
    %798 = vector.extract_strided_slice %16 {offsets = [32, 0], sizes = [1, 69], strides = [1, 1]} : vector<33x69xf32> to vector<1x69xf32>
    %799 = vector.broadcast %798 : vector<1x69xf32> to vector<8x69xf32>
    %800 = arith.addf %797, %799 : vector<8x69xf32>
    %801 = vector.extract_strided_slice %800 {offsets = [0, 64], sizes = [8, 5], strides = [1, 1]} : vector<8x69xf32> to vector<8x5xf32>
    %c0_340 = arith.constant 0 : index
    %c3 = arith.constant 3 : index
    %c0_341 = arith.constant 0 : index
    %c0_342 = arith.constant 0 : index
    %802 = vector.load %arg30[%c0_340, %c3, %c0_341, %c0_342] : memref<1x4x8x128xf32, #tpu.memory_space<vmem>>, vector<1x1x8x5xf32>
    %803 = vector.shape_cast %802 : vector<1x1x8x5xf32> to vector<8x5xf32>
    %804 = vector.shape_cast %801 : vector<8x5xf32> to vector<1x1x8x5xf32>
    tpu.vector_store %arg30[%c0_340, %c3, %c0_341, %c0_342], %804 {strides = array<i32>} : memref<1x4x8x128xf32, #tpu.memory_space<vmem>>, vector<1x1x8x5xf32>,
    %805 = vector.extract_strided_slice %800 {offsets = [0, 0], sizes = [8, 64], strides = [1, 1]} : vector<8x69xf32> to vector<8x64xf32>
    %cst_343 = arith.constant 0.000000e+00 : f32
    %806 = vector.broadcast %cst_343 : f32 to vector<8x64xf32>
    %807 = arith.maximumf %805, %806 : vector<8x64xf32>
    %808 = vector.extract_strided_slice %17 {offsets = [0, 0], sizes = [64, 64], strides = [1, 1]} : vector<65x64xf32> to vector<64x64xf32>
    %cst_344 = arith.constant dense<0.000000e+00> : vector<8x64xf32>
    %809 = tpu.matmul %807, %808, %cst_344 {dimension_numbers = #tpu.dot_dimension_numbers<[1], [0], [0], [1], [0, 0, 1, 1], [], []>} : vector<8x64xf32>, vector<64x64xf32>, vector<8x64xf32> -> vector<8x64xf32>
    %810 = vector.extract_strided_slice %17 {offsets = [64, 0], sizes = [1, 64], strides = [1, 1]} : vector<65x64xf32> to vector<1x64xf32>
    %811 = vector.broadcast %810 : vector<1x64xf32> to vector<8x64xf32>
    %812 = arith.addf %809, %811 : vector<8x64xf32>
    %cst_345 = arith.constant 0.000000e+00 : f32
    %813 = vector.broadcast %cst_345 : f32 to vector<8x64xf32>
    %814 = arith.maximumf %812, %813 : vector<8x64xf32>
    %815 = vector.extract_strided_slice %18 {offsets = [0, 0], sizes = [64, 36], strides = [1, 1]} : vector<65x36xf32> to vector<64x36xf32>
    %cst_346 = arith.constant dense<0.000000e+00> : vector<8x36xf32>
    %816 = tpu.matmul %814, %815, %cst_346 {dimension_numbers = #tpu.dot_dimension_numbers<[1], [0], [0], [1], [0, 0, 1, 1], [], []>} : vector<8x64xf32>, vector<64x36xf32>, vector<8x36xf32> -> vector<8x36xf32>
    %817 = vector.extract_strided_slice %18 {offsets = [64, 0], sizes = [1, 36], strides = [1, 1]} : vector<65x36xf32> to vector<1x36xf32>
    %818 = vector.broadcast %817 : vector<1x36xf32> to vector<8x36xf32>
    %819 = arith.addf %816, %818 : vector<8x36xf32>
    %820 = vector.extract_strided_slice %819 {offsets = [0, 32], sizes = [8, 4], strides = [1, 1]} : vector<8x36xf32> to vector<8x4xf32>
    %821 = arith.negf %820 : vector<8x4xf32>
    %822 = math.exp %821 : vector<8x4xf32>
    %cst_347 = arith.constant 1.000000e+00 : f32
    %823 = vector.broadcast %cst_347 : f32 to vector<8x4xf32>
    %824 = arith.addf %823, %822 : vector<8x4xf32>
    %825 = arith.divf %823, %824 : vector<8x4xf32>
    %c0_348 = arith.constant 0 : index
    %c3_349 = arith.constant 3 : index
    %c0_350 = arith.constant 0 : index
    %c8_351 = arith.constant 8 : index
    %826 = vector.load %arg30[%c0_348, %c3_349, %c0_350, %c8_351] : memref<1x4x8x128xf32, #tpu.memory_space<vmem>>, vector<1x1x8x4xf32>
    %827 = vector.shape_cast %826 : vector<1x1x8x4xf32> to vector<8x4xf32>
    %828 = vector.shape_cast %825 : vector<8x4xf32> to vector<1x1x8x4xf32>
    tpu.vector_store %arg30[%c0_348, %c3_349, %c0_350, %c8_351], %828 {strides = array<i32>} : memref<1x4x8x128xf32, #tpu.memory_space<vmem>>, vector<1x1x8x4xf32>,
    %829 = vector.extract_strided_slice %819 {offsets = [0, 0], sizes = [8, 32], strides = [1, 1]} : vector<8x36xf32> to vector<8x32xf32>
    %cst_352 = arith.constant dense<0.000000e+00> : vector<8x256xf32>
    %830 = tpu.matmul %829, %2, %cst_352 {dimension_numbers = #tpu.dot_dimension_numbers<[1], [0], [0], [1], [0, 0, 1, 1], [], []>} : vector<8x32xf32>, vector<32x256xf32>, vector<8x256xf32> -> vector<8x256xf32>
    %c0_353 = arith.constant 0 : index
    %c3_354 = arith.constant 3 : index
    %c0_355 = arith.constant 0 : index
    %c0_356 = arith.constant 0 : index
    %831 = vector.load %arg31[%c0_353, %c3_354, %c0_355, %c0_356] : memref<1x4x8x256xf32, #tpu.memory_space<vmem>>, vector<1x1x8x256xf32>
    %832 = vector.shape_cast %831 : vector<1x1x8x256xf32> to vector<8x256xf32>
    %833 = vector.shape_cast %830 : vector<8x256xf32> to vector<1x1x8x256xf32>
    tpu.vector_store %arg31[%c0_353, %c3_354, %c0_355, %c0_356], %833 {strides = array<i32>} : memref<1x4x8x256xf32, #tpu.memory_space<vmem>>, vector<1x1x8x256xf32>,
    return
  }
  func.func @transform_0(%arg0: i32) -> (i32, i32, i32) {
    %c0_i32 = arith.constant 0 : i32
    %c0_i32_0 = arith.constant 0 : i32
    %c0_i32_1 = arith.constant 0 : i32
    return %arg0, %c0_i32, %c0_i32_0 : i32, i32, i32
  }
  func.func @transform_1(%arg0: i32) -> (i32, i32, i32) {
    %c0_i32 = arith.constant 0 : i32
    %c0_i32_0 = arith.constant 0 : i32
    %c0_i32_1 = arith.constant 0 : i32
    return %arg0, %c0_i32, %c0_i32_0 : i32, i32, i32
  }
  func.func @transform_2(%arg0: i32) -> (i32, i32, i32) {
    %c0_i32 = arith.constant 0 : i32
    %c0_i32_0 = arith.constant 0 : i32
    %c0_i32_1 = arith.constant 0 : i32
    return %arg0, %c0_i32, %c0_i32_0 : i32, i32, i32
  }
  func.func @transform_3(%arg0: i32) -> (i32, i32, i32) {
    %c0_i32 = arith.constant 0 : i32
    %c0_i32_0 = arith.constant 0 : i32
    %c0_i32_1 = arith.constant 0 : i32
    return %arg0, %c0_i32, %c0_i32_0 : i32, i32, i32
  }
  func.func @transform_4(%arg0: i32) -> (i32, i32) {
    %c0_i32 = arith.constant 0 : i32
    %c0_i32_0 = arith.constant 0 : i32
    %c0_i32_1 = arith.constant 0 : i32
    return %c0_i32, %c0_i32_0 : i32, i32
  }
  func.func @transform_5(%arg0: i32) -> (i32, i32) {
    %c0_i32 = arith.constant 0 : i32
    %c0_i32_0 = arith.constant 0 : i32
    %c0_i32_1 = arith.constant 0 : i32
    return %c0_i32, %c0_i32_0 : i32, i32
  }
  func.func @transform_6(%arg0: i32) -> (i32, i32) {
    %c0_i32 = arith.constant 0 : i32
    %c0_i32_0 = arith.constant 0 : i32
    %c0_i32_1 = arith.constant 0 : i32
    return %c0_i32, %c0_i32_0 : i32, i32
  }
  func.func @transform_7(%arg0: i32) -> (i32, i32) {
    %c0_i32 = arith.constant 0 : i32
    %c0_i32_0 = arith.constant 0 : i32
    %c0_i32_1 = arith.constant 0 : i32
    return %c0_i32, %c0_i32_0 : i32, i32
  }
  func.func @transform_8(%arg0: i32) -> (i32, i32) {
    %c0_i32 = arith.constant 0 : i32
    %c0_i32_0 = arith.constant 0 : i32
    %c0_i32_1 = arith.constant 0 : i32
    return %c0_i32, %c0_i32_0 : i32, i32
  }
  func.func @transform_9(%arg0: i32) -> (i32, i32) {
    %c0_i32 = arith.constant 0 : i32
    %c0_i32_0 = arith.constant 0 : i32
    %c0_i32_1 = arith.constant 0 : i32
    return %c0_i32, %c0_i32_0 : i32, i32
  }
  func.func @transform_10(%arg0: i32) -> (i32, i32) {
    %c0_i32 = arith.constant 0 : i32
    %c0_i32_0 = arith.constant 0 : i32
    %c0_i32_1 = arith.constant 0 : i32
    return %c0_i32, %c0_i32_0 : i32, i32
  }
  func.func @transform_11(%arg0: i32) -> (i32, i32) {
    %c0_i32 = arith.constant 0 : i32
    %c0_i32_0 = arith.constant 0 : i32
    %c0_i32_1 = arith.constant 0 : i32
    return %c0_i32, %c0_i32_0 : i32, i32
  }
  func.func @transform_12(%arg0: i32) -> (i32, i32) {
    %c0_i32 = arith.constant 0 : i32
    %c0_i32_0 = arith.constant 0 : i32
    %c0_i32_1 = arith.constant 0 : i32
    return %c0_i32, %c0_i32_0 : i32, i32
  }
  func.func @transform_13(%arg0: i32) -> (i32, i32, i32) {
    %c0_i32 = arith.constant 0 : i32
    %c0_i32_0 = arith.constant 0 : i32
    %c0_i32_1 = arith.constant 0 : i32
    %c0_i32_2 = arith.constant 0 : i32
    return %c0_i32, %c0_i32_0, %c0_i32_1 : i32, i32, i32
  }
  func.func @transform_14(%arg0: i32) -> (i32, i32, i32) {
    %c0_i32 = arith.constant 0 : i32
    %c0_i32_0 = arith.constant 0 : i32
    %c0_i32_1 = arith.constant 0 : i32
    %c0_i32_2 = arith.constant 0 : i32
    return %c0_i32, %c0_i32_0, %c0_i32_1 : i32, i32, i32
  }
  func.func @transform_15(%arg0: i32) -> (i32, i32, i32) {
    %c0_i32 = arith.constant 0 : i32
    %c0_i32_0 = arith.constant 0 : i32
    %c0_i32_1 = arith.constant 0 : i32
    %c0_i32_2 = arith.constant 0 : i32
    return %c0_i32, %c0_i32_0, %c0_i32_1 : i32, i32, i32
  }
  func.func @transform_16(%arg0: i32) -> (i32, i32, i32) {
    %c0_i32 = arith.constant 0 : i32
    %c0_i32_0 = arith.constant 0 : i32
    %c0_i32_1 = arith.constant 0 : i32
    %c0_i32_2 = arith.constant 0 : i32
    return %c0_i32, %c0_i32_0, %c0_i32_1 : i32, i32, i32
  }
  func.func @transform_17(%arg0: i32) -> (i32, i32, i32) {
    %c0_i32 = arith.constant 0 : i32
    %c0_i32_0 = arith.constant 0 : i32
    %c0_i32_1 = arith.constant 0 : i32
    %c0_i32_2 = arith.constant 0 : i32
    return %c0_i32, %c0_i32_0, %c0_i32_1 : i32, i32, i32
  }
  func.func @transform_18(%arg0: i32) -> (i32, i32, i32) {
    %c0_i32 = arith.constant 0 : i32
    %c0_i32_0 = arith.constant 0 : i32
    %c0_i32_1 = arith.constant 0 : i32
    %c0_i32_2 = arith.constant 0 : i32
    return %c0_i32, %c0_i32_0, %c0_i32_1 : i32, i32, i32
  }
  func.func @transform_19(%arg0: i32) -> (i32, i32, i32) {
    %c0_i32 = arith.constant 0 : i32
    %c0_i32_0 = arith.constant 0 : i32
    %c0_i32_1 = arith.constant 0 : i32
    %c0_i32_2 = arith.constant 0 : i32
    return %c0_i32, %c0_i32_0, %c0_i32_1 : i32, i32, i32
  }
  func.func @transform_20(%arg0: i32) -> (i32, i32, i32) {
    %c0_i32 = arith.constant 0 : i32
    %c0_i32_0 = arith.constant 0 : i32
    %c0_i32_1 = arith.constant 0 : i32
    %c0_i32_2 = arith.constant 0 : i32
    return %c0_i32, %c0_i32_0, %c0_i32_1 : i32, i32, i32
  }
  func.func @transform_21(%arg0: i32) -> (i32, i32, i32) {
    %c0_i32 = arith.constant 0 : i32
    %c0_i32_0 = arith.constant 0 : i32
    %c0_i32_1 = arith.constant 0 : i32
    %c0_i32_2 = arith.constant 0 : i32
    return %c0_i32, %c0_i32_0, %c0_i32_1 : i32, i32, i32
  }
  func.func @transform_22(%arg0: i32) -> (i32, i32, i32) {
    %c0_i32 = arith.constant 0 : i32
    %c0_i32_0 = arith.constant 0 : i32
    %c0_i32_1 = arith.constant 0 : i32
    %c0_i32_2 = arith.constant 0 : i32
    return %c0_i32, %c0_i32_0, %c0_i32_1 : i32, i32, i32
  }
  func.func @transform_23(%arg0: i32) -> (i32, i32, i32) {
    %c0_i32 = arith.constant 0 : i32
    %c0_i32_0 = arith.constant 0 : i32
    %c0_i32_1 = arith.constant 0 : i32
    %c0_i32_2 = arith.constant 0 : i32
    return %c0_i32, %c0_i32_0, %c0_i32_1 : i32, i32, i32
  }
  func.func @transform_24(%arg0: i32) -> (i32, i32, i32) {
    %c0_i32 = arith.constant 0 : i32
    %c0_i32_0 = arith.constant 0 : i32
    %c0_i32_1 = arith.constant 0 : i32
    %c0_i32_2 = arith.constant 0 : i32
    return %c0_i32, %c0_i32_0, %c0_i32_1 : i32, i32, i32
  }
  func.func @transform_25(%arg0: i32) -> (i32, i32, i32) {
    %c0_i32 = arith.constant 0 : i32
    %c0_i32_0 = arith.constant 0 : i32
    %c0_i32_1 = arith.constant 0 : i32
    %c0_i32_2 = arith.constant 0 : i32
    return %c0_i32, %c0_i32_0, %c0_i32_1 : i32, i32, i32
  }
  func.func @transform_26(%arg0: i32) -> (i32, i32) {
    %c0_i32 = arith.constant 0 : i32
    %c0_i32_0 = arith.constant 0 : i32
    %c0_i32_1 = arith.constant 0 : i32
    return %c0_i32, %c0_i32_0 : i32, i32
  }
  func.func @transform_27(%arg0: i32) -> (i32, i32) {
    %c0_i32 = arith.constant 0 : i32
    %c0_i32_0 = arith.constant 0 : i32
    %c0_i32_1 = arith.constant 0 : i32
    return %c0_i32, %c0_i32_0 : i32, i32
  }
  func.func @transform_28(%arg0: i32) -> (i32, i32) {
    %c0_i32 = arith.constant 0 : i32
    %c0_i32_0 = arith.constant 0 : i32
    %c0_i32_1 = arith.constant 0 : i32
    return %c0_i32, %c0_i32_0 : i32, i32
  }
  func.func @transform_29(%arg0: i32) -> (i32, i32, i32, i32) {
    %c0_i32 = arith.constant 0 : i32
    %c0_i32_0 = arith.constant 0 : i32
    %c0_i32_1 = arith.constant 0 : i32
    %c0_i32_2 = arith.constant 0 : i32
    return %arg0, %c0_i32, %c0_i32_0, %c0_i32_1 : i32, i32, i32, i32
  }
  func.func @transform_30(%arg0: i32) -> (i32, i32, i32, i32) {
    %c0_i32 = arith.constant 0 : i32
    %c0_i32_0 = arith.constant 0 : i32
    %c0_i32_1 = arith.constant 0 : i32
    %c0_i32_2 = arith.constant 0 : i32
    return %arg0, %c0_i32, %c0_i32_0, %c0_i32_1 : i32, i32, i32, i32
  }
}

</mosaic_0001>

<llo_original>
// kernel: squeeze.138
$region0: #{squeeze.138}
  %s0 = inlined_call_operand.vmem [shape: f32[2,1,8,256], index: 0, kind: input, shape index: {}]
  %s1 = inlined_call_operand.hbm [shape: f32[2,8,16,16], index: 1, kind: output, shape index: {}]
  $region1: #{squeeze.138} parent=0
    #allocation0 [shape = 'u8[131072]{0}', space=vmem, size = 0x20000, scoped, tag = 'operand span for operand 1']
    #allocation1 [shape = 's32[1]{0}', space=sflag, size = 0x4, scoped, tag = 'scoped memory for squeeze.138']
    %2 = vsyncpa [#allocation1], 0
    %v3 = vld [vmem:[%s0] sm:$0xff]
    %vm4 = vcmask 130048
    %5 = vst.msk [vmem:[#allocation0] ss:$16 sm:$0x3] %vm4, %v3
    %6 = vst.msk [vmem:[#allocation0] ss:$16 sm:$0xc] %vm4, %v3
    %7 = vst.msk [vmem:[#allocation0] ss:$16 sm:$0x30] %vm4, %v3
    %8 = vst.msk [vmem:[#allocation0] ss:$16 sm:$0xc0] %vm4, %v3
    %s9 = scalar_lea.vmem %s0, 8
    %v10 = vld [vmem:[%s9] sm:$0xff]
    %vm11 = vcmask 130048
    %s12 = scalar_lea.vmem [#allocation0], 8
    %13 = vst.msk [vmem:[%s12] ss:$16 sm:$0x3] %vm11, %v10
    %s14 = scalar_lea.vmem [#allocation0], 8
    %15 = vst.msk [vmem:[%s14] ss:$16 sm:$0xc] %vm11, %v10
    %s16 = scalar_lea.vmem [#allocation0], 8
    %17 = vst.msk [vmem:[%s16] ss:$16 sm:$0x30] %vm11, %v10
    %s18 = scalar_lea.vmem [#allocation0], 8
    %19 = vst.msk [vmem:[%s18] ss:$16 sm:$0xc0] %vm11, %v10
    %s20 = scalar_lea.vmem %s0, 16
    %v21 = vld [vmem:[%s20] sm:$0xff]
    %vm22 = vcmask 130048
    %s23 = scalar_lea.vmem [#allocation0], 128
    %24 = vst.msk [vmem:[%s23] ss:$16 sm:$0x3] %vm22, %v21
    %s25 = scalar_lea.vmem [#allocation0], 128
    %26 = vst.msk [vmem:[%s25] ss:$16 sm:$0xc] %vm22, %v21
    %s27 = scalar_lea.vmem [#allocation0], 128
    %28 = vst.msk [vmem:[%s27] ss:$16 sm:$0x30] %vm22, %v21
    %s29 = scalar_lea.vmem [#allocation0], 128
    %30 = vst.msk [vmem:[%s29] ss:$16 sm:$0xc0] %vm22, %v21
    %s31 = scalar_lea.vmem %s0, 24
    %v32 = vld [vmem:[%s31] sm:$0xff]
    %vm33 = vcmask 130048
    %s34 = scalar_lea.vmem [#allocation0], 136
    %35 = vst.msk [vmem:[%s34] ss:$16 sm:$0x3] %vm33, %v32
    %s36 = scalar_lea.vmem [#allocation0], 136
    %37 = vst.msk [vmem:[%s36] ss:$16 sm:$0xc] %vm33, %v32
    %s38 = scalar_lea.vmem [#allocation0], 136
    %39 = vst.msk [vmem:[%s38] ss:$16 sm:$0x30] %vm33, %v32
    %s40 = scalar_lea.vmem [#allocation0], 136
    %41 = vst.msk [vmem:[%s40] ss:$16 sm:$0xc0] %vm33, %v32
    %v42 = vld.sshfl [vmem:[%s0] sm:$0xff pattern:$0xb3a29180]
    %43 = vrot.lane.b32.xlu0 %v42, 112
    %v44 = vpop.permute.xlu0 %43
    %vm45 = vcmask 130048
    %s46 = scalar_lea.vmem [#allocation0], 1
    %47 = vst.msk [vmem:[%s46] ss:$8 sm:$0xf] %vm45, %v44
    %s48 = scalar_lea.vmem [#allocation0], 1
    %49 = vst.msk [vmem:[%s48] ss:$8 sm:$0xf0] %vm45, %v44
    %s50 = scalar_lea.vmem %s0, 4
    %v51 = vld.sshfl [vmem:[%s50] sm:$0xff pattern:$0xb3a29180]
    %52 = vrot.lane.b32.xlu0 %v51, 112
    %v53 = vpop.permute.xlu0 %52
    %vm54 = vcmask 130048
    %s55 = scalar_lea.vmem [#allocation0], 65
    %56 = vst.msk [vmem:[%s55] ss:$8 sm:$0xf] %vm54, %v53
    %s57 = scalar_lea.vmem [#allocation0], 65
    %58 = vst.msk [vmem:[%s57] ss:$8 sm:$0xf0] %vm54, %v53
    %s59 = scalar_lea.vmem %s0, 16
    %v60 = vld.sshfl [vmem:[%s59] sm:$0xff pattern:$0xb3a29180]
    %61 = vrot.lane.b32.xlu0 %v60, 112
    %v62 = vpop.permute.xlu0 %61
    %vm63 = vcmask 130048
    %s64 = scalar_lea.vmem [#allocation0], 129
    %65 = vst.msk [vmem:[%s64] ss:$8 sm:$0xf] %vm63, %v62
    %s66 = scalar_lea.vmem [#allocation0], 129
    %67 = vst.msk [vmem:[%s66] ss:$8 sm:$0xf0] %vm63, %v62
    %s68 = scalar_lea.vmem %s0, 20
    %v69 = vld.sshfl [vmem:[%s68] sm:$0xff pattern:$0xb3a29180]
    %70 = vrot.lane.b32.xlu0 %v69, 112
    %v71 = vpop.permute.xlu0 %70
    %vm72 = vcmask 130048
    %s73 = scalar_lea.vmem [#allocation0], 193
    %74 = vst.msk [vmem:[%s73] ss:$8 sm:$0xf] %vm72, %v71
    %s75 = scalar_lea.vmem [#allocation0], 193
    %76 = vst.msk [vmem:[%s75] ss:$8 sm:$0xf0] %vm72, %v71
    %v77 = vld.sshfl [vmem:[%s0] sm:$0xff pattern:$0xb3a29180]
    %78 = vrot.lane.b32.xlu0 %v77, 96
    %v79 = vpop.permute.xlu0 %78
    %vm80 = vcmask 130048
    %s81 = scalar_lea.vmem [#allocation0], 2
    %82 = vst.msk [vmem:[%s81] ss:$8 sm:$0xf] %vm80, %v79
    %s83 = scalar_lea.vmem [#allocation0], 2
    %84 = vst.msk [vmem:[%s83] ss:$8 sm:$0xf0] %vm80, %v79
    %s85 = scalar_lea.vmem %s0, 4
    %v86 = vld.sshfl [vmem:[%s85] sm:$0xff pattern:$0xb3a29180]
    %87 = vrot.lane.b32.xlu0 %v86, 96
    %v88 = vpop.permute.xlu0 %87
    %vm89 = vcmask 130048
    %s90 = scalar_lea.vmem [#allocation0], 66
    %91 = vst.msk [vmem:[%s90] ss:$8 sm:$0xf] %vm89, %v88
    %s92 = scalar_lea.vmem [#allocation0], 66
    %93 = vst.msk [vmem:[%s92] ss:$8 sm:$0xf0] %vm89, %v88
    %s94 = scalar_lea.vmem %s0, 16
    %v95 = vld.sshfl [vmem:[%s94] sm:$0xff pattern:$0xb3a29180]
    %96 = vrot.lane.b32.xlu0 %v95, 96
    %v97 = vpop.permute.xlu0 %96
    %vm98 = vcmask 130048
    %s99 = scalar_lea.vmem [#allocation0], 130
    %100 = vst.msk [vmem:[%s99] ss:$8 sm:$0xf] %vm98, %v97
    %s101 = scalar_lea.vmem [#allocation0], 130
    %102 = vst.msk [vmem:[%s101] ss:$8 sm:$0xf0] %vm98, %v97
    %s103 = scalar_lea.vmem %s0, 20
    %v104 = vld.sshfl [vmem:[%s103] sm:$0xff pattern:$0xb3a29180]
    %105 = vrot.lane.b32.xlu0 %v104, 96
    %v106 = vpop.permute.xlu0 %105
    %vm107 = vcmask 130048
    %s108 = scalar_lea.vmem [#allocation0], 194
    %109 = vst.msk [vmem:[%s108] ss:$8 sm:$0xf] %vm107, %v106
    %s110 = scalar_lea.vmem [#allocation0], 194
    %111 = vst.msk [vmem:[%s110] ss:$8 sm:$0xf0] %vm107, %v106
    %v112 = vld.sshfl [vmem:[%s0] sm:$0xff pattern:$0xb3a29180]
    %113 = vrot.lane.b32.xlu0 %v112, 80
    %v114 = vpop.permute.xlu0 %113
    %vm115 = vcmask 130048
    %s116 = scalar_lea.vmem [#allocation0], 3
    %117 = vst.msk [vmem:[%s116] ss:$8 sm:$0xf] %vm115, %v114
    %s118 = scalar_lea.vmem [#allocation0], 3
    %119 = vst.msk [vmem:[%s118] ss:$8 sm:$0xf0] %vm115, %v114
    %s120 = scalar_lea.vmem %s0, 4
    %v121 = vld.sshfl [vmem:[%s120] sm:$0xff pattern:$0xb3a29180]
    %122 = vrot.lane.b32.xlu0 %v121, 80
    %v123 = vpop.permute.xlu0 %122
    %vm124 = vcmask 130048
    %s125 = scalar_lea.vmem [#allocation0], 67
    %126 = vst.msk [vmem:[%s125] ss:$8 sm:$0xf] %vm124, %v123
    %s127 = scalar_lea.vmem [#allocation0], 67
    %128 = vst.msk [vmem:[%s127] ss:$8 sm:$0xf0] %vm124, %v123
    %s129 = scalar_lea.vmem %s0, 16
    %v130 = vld.sshfl [vmem:[%s129] sm:$0xff pattern:$0xb3a29180]
    %131 = vrot.lane.b32.xlu0 %v130, 80
    %v132 = vpop.permute.xlu0 %131
    %vm133 = vcmask 130048
    %s134 = scalar_lea.vmem [#allocation0], 131
    %135 = vst.msk [vmem:[%s134] ss:$8 sm:$0xf] %vm133, %v132
    %s136 = scalar_lea.vmem [#allocation0], 131
    %137 = vst.msk [vmem:[%s136] ss:$8 sm:$0xf0] %vm133, %v132
    %s138 = scalar_lea.vmem %s0, 20
    %v139 = vld.sshfl [vmem:[%s138] sm:$0xff pattern:$0xb3a29180]
    %140 = vrot.lane.b32.xlu0 %v139, 80
    %v141 = vpop.permute.xlu0 %140
    %vm142 = vcmask 130048
    %s143 = scalar_lea.vmem [#allocation0], 195
    %144 = vst.msk [vmem:[%s143] ss:$8 sm:$0xf] %vm142, %v141
    %s145 = scalar_lea.vmem [#allocation0], 195
    %146 = vst.msk [vmem:[%s145] ss:$8 sm:$0xf0] %vm142, %v141
    %v147 = vld.sshfl [vmem:[%s0] sm:$0xff pattern:$0xb3a29180]
    %148 = vrot.lane.b32.xlu0 %v147, 64
    %v149 = vpop.permute.xlu0 %148
    %vm150 = vcmask 130048
    %s151 = scalar_lea.vmem [#allocation0], 4
    %152 = vst.msk [vmem:[%s151] ss:$8 sm:$0xf] %vm150, %v149
    %s153 = scalar_lea.vmem [#allocation0], 4
    %154 = vst.msk [vmem:[%s153] ss:$8 sm:$0xf0] %vm150, %v149
    %s155 = scalar_lea.vmem %s0, 4
    %v156 = vld.sshfl [vmem:[%s155] sm:$0xff pattern:$0xb3a29180]
    %157 = vrot.lane.b32.xlu0 %v156, 64
    %v158 = vpop.permute.xlu0 %157
    %vm159 = vcmask 130048
    %s160 = scalar_lea.vmem [#allocation0], 68
    %161 = vst.msk [vmem:[%s160] ss:$8 sm:$0xf] %vm159, %v158
    %s162 = scalar_lea.vmem [#allocation0], 68
    %163 = vst.msk [vmem:[%s162] ss:$8 sm:$0xf0] %vm159, %v158
    %s164 = scalar_lea.vmem %s0, 16
    %v165 = vld.sshfl [vmem:[%s164] sm:$0xff pattern:$0xb3a29180]
    %166 = vrot.lane.b32.xlu0 %v165, 64
    %v167 = vpop.permute.xlu0 %166
    %vm168 = vcmask 130048
    %s169 = scalar_lea.vmem [#allocation0], 132
    %170 = vst.msk [vmem:[%s169] ss:$8 sm:$0xf] %vm168, %v167
    %s171 = scalar_lea.vmem [#allocation0], 132
    %172 = vst.msk [vmem:[%s171] ss:$8 sm:$0xf0] %vm168, %v167
    %s173 = scalar_lea.vmem %s0, 20
    %v174 = vld.sshfl [vmem:[%s173] sm:$0xff pattern:$0xb3a29180]
    %175 = vrot.lane.b32.xlu0 %v174, 64
    %v176 = vpop.permute.xlu0 %175
    %vm177 = vcmask 130048
    %s178 = scalar_lea.vmem [#allocation0], 196
    %179 = vst.msk [vmem:[%s178] ss:$8 sm:$0xf] %vm177, %v176
    %s180 = scalar_lea.vmem [#allocation0], 196
    %181 = vst.msk [vmem:[%s180] ss:$8 sm:$0xf0] %vm177, %v176
    %v182 = vld.sshfl [vmem:[%s0] sm:$0xff pattern:$0xb3a29180]
    %183 = vrot.lane.b32.xlu0 %v182, 48
    %v184 = vpop.permute.xlu0 %183
    %vm185 = vcmask 130048
    %s186 = scalar_lea.vmem [#allocation0], 5
    %187 = vst.msk [vmem:[%s186] ss:$8 sm:$0xf] %vm185, %v184
    %s188 = scalar_lea.vmem [#allocation0], 5
    %189 = vst.msk [vmem:[%s188] ss:$8 sm:$0xf0] %vm185, %v184
    %s190 = scalar_lea.vmem %s0, 4
    %v191 = vld.sshfl [vmem:[%s190] sm:$0xff pattern:$0xb3a29180]
    %192 = vrot.lane.b32.xlu0 %v191, 48
    %v193 = vpop.permute.xlu0 %192
    %vm194 = vcmask 130048
    %s195 = scalar_lea.vmem [#allocation0], 69
    %196 = vst.msk [vmem:[%s195] ss:$8 sm:$0xf] %vm194, %v193
    %s197 = scalar_lea.vmem [#allocation0], 69
    %198 = vst.msk [vmem:[%s197] ss:$8 sm:$0xf0] %vm194, %v193
    %s199 = scalar_lea.vmem %s0, 16
    %v200 = vld.sshfl [vmem:[%s199] sm:$0xff pattern:$0xb3a29180]
    %201 = vrot.lane.b32.xlu0 %v200, 48
    %v202 = vpop.permute.xlu0 %201
    %vm203 = vcmask 130048
    %s204 = scalar_lea.vmem [#allocation0], 133
    %205 = vst.msk [vmem:[%s204] ss:$8 sm:$0xf] %vm203, %v202
    %s206 = scalar_lea.vmem [#allocation0], 133
    %207 = vst.msk [vmem:[%s206] ss:$8 sm:$0xf0] %vm203, %v202
    %s208 = scalar_lea.vmem %s0, 20
    %v209 = vld.sshfl [vmem:[%s208] sm:$0xff pattern:$0xb3a29180]
    %210 = vrot.lane.b32.xlu0 %v209, 48
    %v211 = vpop.permute.xlu0 %210
    %vm212 = vcmask 130048
    %s213 = scalar_lea.vmem [#allocation0], 197
    %214 = vst.msk [vmem:[%s213] ss:$8 sm:$0xf] %vm212, %v211
    %s215 = scalar_lea.vmem [#allocation0], 197
    %216 = vst.msk [vmem:[%s215] ss:$8 sm:$0xf0] %vm212, %v211
    %v217 = vld.sshfl [vmem:[%s0] sm:$0xff pattern:$0xb3a29180]
    %218 = vrot.lane.b32.xlu0 %v217, 32
    %v219 = vpop.permute.xlu0 %218
    %vm220 = vcmask 130048
    %s221 = scalar_lea.vmem [#allocation0], 6
    %222 = vst.msk [vmem:[%s221] ss:$8 sm:$0xf] %vm220, %v219
    %s223 = scalar_lea.vmem [#allocation0], 6
    %224 = vst.msk [vmem:[%s223] ss:$8 sm:$0xf0] %vm220, %v219
    %s225 = scalar_lea.vmem %s0, 4
    %v226 = vld.sshfl [vmem:[%s225] sm:$0xff pattern:$0xb3a29180]
    %227 = vrot.lane.b32.xlu0 %v226, 32
    %v228 = vpop.permute.xlu0 %227
    %vm229 = vcmask 130048
    %s230 = scalar_lea.vmem [#allocation0], 70
    %231 = vst.msk [vmem:[%s230] ss:$8 sm:$0xf] %vm229, %v228
    %s232 = scalar_lea.vmem [#allocation0], 70
    %233 = vst.msk [vmem:[%s232] ss:$8 sm:$0xf0] %vm229, %v228
    %s234 = scalar_lea.vmem %s0, 16
    %v235 = vld.sshfl [vmem:[%s234] sm:$0xff pattern:$0xb3a29180]
    %236 = vrot.lane.b32.xlu0 %v235, 32
    %v237 = vpop.permute.xlu0 %236
    %vm238 = vcmask 130048
    %s239 = scalar_lea.vmem [#allocation0], 134
    %240 = vst.msk [vmem:[%s239] ss:$8 sm:$0xf] %vm238, %v237
    %s241 = scalar_lea.vmem [#allocation0], 134
    %242 = vst.msk [vmem:[%s241] ss:$8 sm:$0xf0] %vm238, %v237
    %s243 = scalar_lea.vmem %s0, 20
    %v244 = vld.sshfl [vmem:[%s243] sm:$0xff pattern:$0xb3a29180]
    %245 = vrot.lane.b32.xlu0 %v244, 32
    %v246 = vpop.permute.xlu0 %245
    %vm247 = vcmask 130048
    %s248 = scalar_lea.vmem [#allocation0], 198
    %249 = vst.msk [vmem:[%s248] ss:$8 sm:$0xf] %vm247, %v246
    %s250 = scalar_lea.vmem [#allocation0], 198
    %251 = vst.msk [vmem:[%s250] ss:$8 sm:$0xf0] %vm247, %v246
    %v252 = vld.sshfl [vmem:[%s0] sm:$0xff pattern:$0xb3a29180]
    %253 = vrot.lane.b32.xlu0 %v252, 16
    %v254 = vpop.permute.xlu0 %253
    %vm255 = vcmask 130048
    %s256 = scalar_lea.vmem [#allocation0], 7
    %257 = vst.msk [vmem:[%s256] ss:$8 sm:$0xf] %vm255, %v254
    %s258 = scalar_lea.vmem [#allocation0], 7
    %259 = vst.msk [vmem:[%s258] ss:$8 sm:$0xf0] %vm255, %v254
    %s260 = scalar_lea.vmem %s0, 4
    %v261 = vld.sshfl [vmem:[%s260] sm:$0xff pattern:$0xb3a29180]
    %262 = vrot.lane.b32.xlu0 %v261, 16
    %v263 = vpop.permute.xlu0 %262
    %vm264 = vcmask 130048
    %s265 = scalar_lea.vmem [#allocation0], 71
    %266 = vst.msk [vmem:[%s265] ss:$8 sm:$0xf] %vm264, %v263
    %s267 = scalar_lea.vmem [#allocation0], 71
    %268 = vst.msk [vmem:[%s267] ss:$8 sm:$0xf0] %vm264, %v263
    %s269 = scalar_lea.vmem %s0, 16
    %v270 = vld.sshfl [vmem:[%s269] sm:$0xff pattern:$0xb3a29180]
    %271 = vrot.lane.b32.xlu0 %v270, 16
    %v272 = vpop.permute.xlu0 %271
    %vm273 = vcmask 130048
    %s274 = scalar_lea.vmem [#allocation0], 135
    %275 = vst.msk [vmem:[%s274] ss:$8 sm:$0xf] %vm273, %v272
    %s276 = scalar_lea.vmem [#allocation0], 135
    %277 = vst.msk [vmem:[%s276] ss:$8 sm:$0xf0] %vm273, %v272
    %s278 = scalar_lea.vmem %s0, 20
    %v279 = vld.sshfl [vmem:[%s278] sm:$0xff pattern:$0xb3a29180]
    %280 = vrot.lane.b32.xlu0 %v279, 16
    %v281 = vpop.permute.xlu0 %280
    %vm282 = vcmask 130048
    %s283 = scalar_lea.vmem [#allocation0], 199
    %284 = vst.msk [vmem:[%s283] ss:$8 sm:$0xf] %vm282, %v281
    %s285 = scalar_lea.vmem [#allocation0], 199
    %286 = vst.msk [vmem:[%s285] ss:$8 sm:$0xf0] %vm282, %v281
    %s288 = ssub.s32 4096, 4096
    %289 = vsyncadd [#allocation1], %s288
    %s291 = sshll.u32 [#allocation0], 4
    %s292 = int_to_ptr.vmem [resolvable:$true] %s291
    %294 = dma.vmem_to_hbm [thread:$0]  %s292, 4096, %s1, [#allocation1]
    %295 = dma.done [#allocation1], 4096
    %296 = vsyncpa [#allocation1], 1

// kernel: decoder_forward.1
$region0: #{decoder_forward.1}
  #allocation0 [shape = 'u32[]', space=smem, size = 0x4, offset = 0x4, fixed_abs, tag = 'smem constant byte address 0x4 - core index']
  #allocation1 [shape = 'u32[144,128]{1,0:T(1,128)}', space=vmem, size = 0x12000, scoped, tag = 'internal scratch']
  %s0 = inlined_call_operand.smem [shape: u32[31], index: -1, kind: input, shape index: {}]
  %s1 = sld [smem:[%s0]]
  %s2 = scalar_lea.smem %s0, 1
  %s3 = sld [smem:[%s2]]
  %s4 = scalar_lea.smem %s0, 2
  %s5 = sld [smem:[%s4]]
  %s6 = scalar_lea.smem %s0, 3
  %s7 = sld [smem:[%s6]]
  %s8 = scalar_lea.smem %s0, 4
  %s9 = sld [smem:[%s8]]
  %s10 = scalar_lea.smem %s0, 5
  %s11 = sld [smem:[%s10]]
  %s12 = scalar_lea.smem %s0, 6
  %s13 = sld [smem:[%s12]]
  %s14 = scalar_lea.smem %s0, 7
  %s15 = sld [smem:[%s14]]
  %s16 = scalar_lea.smem %s0, 8
  %s17 = sld [smem:[%s16]]
  %s18 = scalar_lea.smem %s0, 9
  %s19 = sld [smem:[%s18]]
  %s20 = scalar_lea.smem %s0, 10
  %s21 = sld [smem:[%s20]]
  %s22 = scalar_lea.smem %s0, 11
  %s23 = sld [smem:[%s22]]
  %s24 = scalar_lea.smem %s0, 12
  %s25 = sld [smem:[%s24]]
  %s26 = scalar_lea.smem %s0, 13
  %s27 = sld [smem:[%s26]]
  %s28 = scalar_lea.smem %s0, 14
  %s29 = sld [smem:[%s28]]
  %s30 = scalar_lea.smem %s0, 15
  %s31 = sld [smem:[%s30]]
  %s32 = scalar_lea.smem %s0, 16
  %s33 = sld [smem:[%s32]]
  %s34 = scalar_lea.smem %s0, 17
  %s35 = sld [smem:[%s34]]
  %s36 = scalar_lea.smem %s0, 18
  %s37 = sld [smem:[%s36]]
  %s38 = scalar_lea.smem %s0, 19
  %s39 = sld [smem:[%s38]]
  %s40 = scalar_lea.smem %s0, 20
  %s41 = sld [smem:[%s40]]
  %s42 = scalar_lea.smem %s0, 21
  %s43 = sld [smem:[%s42]]
  %s44 = scalar_lea.smem %s0, 22
  %s45 = sld [smem:[%s44]]
  %s46 = scalar_lea.smem %s0, 23
  %s47 = sld [smem:[%s46]]
  %s48 = scalar_lea.smem %s0, 24
  %s49 = sld [smem:[%s48]]
  %s50 = scalar_lea.smem %s0, 25
  %s51 = sld [smem:[%s50]]
  %s52 = scalar_lea.smem %s0, 26
  %s53 = sld [smem:[%s52]]
  %s54 = scalar_lea.smem %s0, 27
  %s55 = sld [smem:[%s54]]
  %s56 = scalar_lea.smem %s0, 28
  %s57 = sld [smem:[%s56]]
  %s58 = scalar_lea.smem %s0, 29
  %s59 = sld [smem:[%s58]]
  %s60 = scalar_lea.smem %s0, 30
  %s61 = sld [smem:[%s60]]
  %62 = xla_tuple %s59, %s61
  %s63 = sld [smem:[#allocation0]]
  $region157: #{decoder_forward.1} parent=0
    _
  %s65 = ssub.s32 1, %s63
  %s66 = scalar_select 0, %s65, %s63
  loop: start=0, step=1, limit=4
  $region2: #{decoder_forward.1} parent=0 // loop_pre_header
    _
  $region3: #{decoder_forward.1} parent=0 // loop_header
    %s68 = sphi 0, %s72
    %p69 = scmp.ge.s32.totalorder %s68, 4
    %s78 = sphi 0, %s80
    %s81 = sphi 0, %s78
    %s82 = sphi 0, %s81
    %s98 = sphi 0, %s82
    %s104 = sphi 0, %s106
    %s107 = sphi 0, %s104
    %s108 = sphi 0, %s107
    %s124 = sphi 0, %s108
    %s130 = sphi 0, %s132
    %s133 = sphi 0, %s130
    %s134 = sphi 0, %s133
    %s150 = sphi 0, %s134
    %s156 = sphi 0, %s158
    %s159 = sphi 0, %s156
    %s160 = sphi 0, %s159
    %s176 = sphi 0, %s160
    %s180 = sphi 0, %s180
    %s182 = sphi 0, %s180
    %s183 = sphi 0, %s182
    %s197 = sphi 0, %s183
    %s201 = sphi 0, %s201
    %s203 = sphi 0, %s201
    %s204 = sphi 0, %s203
    %s218 = sphi 0, %s204
    %s222 = sphi 0, %s222
    %s224 = sphi 0, %s222
    %s225 = sphi 0, %s224
    %s239 = sphi 0, %s225
    %s243 = sphi 0, %s243
    %s245 = sphi 0, %s243
    %s246 = sphi 0, %s245
    %s260 = sphi 0, %s246
    %s264 = sphi 0, %s264
    %s266 = sphi 0, %s264
    %s267 = sphi 0, %s266
    %s281 = sphi 0, %s267
    %s285 = sphi 0, %s285
    %s287 = sphi 0, %s285
    %s288 = sphi 0, %s287
    %s302 = sphi 0, %s288
    %s306 = sphi 0, %s306
    %s308 = sphi 0, %s306
    %s309 = sphi 0, %s308
    %s323 = sphi 0, %s309
    %s327 = sphi 0, %s327
    %s329 = sphi 0, %s327
    %s330 = sphi 0, %s329
    %s344 = sphi 0, %s330
    %s348 = sphi 0, %s348
    %s350 = sphi 0, %s348
    %s351 = sphi 0, %s350
    %s365 = sphi 0, %s351
    %s369 = sphi 0, %s369
    %s371 = sphi 0, %s369
    %s372 = sphi 0, %s371
    %s386 = sphi 0, %s372
    %s390 = sphi 0, %s390
    %s392 = sphi 0, %s390
    %s393 = sphi 0, %s392
    %s407 = sphi 0, %s393
    %s411 = sphi 0, %s411
    %s413 = sphi 0, %s411
    %s414 = sphi 0, %s413
    %s428 = sphi 0, %s414
    %s432 = sphi 0, %s432
    %s434 = sphi 0, %s432
    %s435 = sphi 0, %s434
    %s449 = sphi 0, %s435
    %s453 = sphi 0, %s453
    %s455 = sphi 0, %s453
    %s456 = sphi 0, %s455
    %s470 = sphi 0, %s456
    %s474 = sphi 0, %s474
    %s476 = sphi 0, %s474
    %s477 = sphi 0, %s476
    %s491 = sphi 0, %s477
    %s495 = sphi 0, %s495
    %s497 = sphi 0, %s495
    %s498 = sphi 0, %s497
    %s512 = sphi 0, %s498
    %s516 = sphi 0, %s516
    %s518 = sphi 0, %s516
    %s519 = sphi 0, %s518
    %s533 = sphi 0, %s519
    %s537 = sphi 0, %s537
    %s539 = sphi 0, %s537
    %s540 = sphi 0, %s539
    %s554 = sphi 0, %s540
    %s558 = sphi 0, %s558
    %s560 = sphi 0, %s558
    %s561 = sphi 0, %s560
    %s575 = sphi 0, %s561
    %s579 = sphi 0, %s579
    %s581 = sphi 0, %s579
    %s582 = sphi 0, %s581
    %s596 = sphi 0, %s582
    %s600 = sphi 0, %s600
    %s602 = sphi 0, %s600
    %s603 = sphi 0, %s602
    %s617 = sphi 0, %s603
    %s621 = sphi 0, %s621
    %s623 = sphi 0, %s621
    %s624 = sphi 0, %s623
    %s638 = sphi 0, %s624
    %s642 = sphi 0, %s642
    %s644 = sphi 0, %s642
    %s645 = sphi 0, %s644
    %s659 = sphi 0, %s645
    %s663 = sphi 0, %s663
    %s665 = sphi 0, %s663
    %s666 = sphi 0, %s665
    %s680 = sphi 0, %s666
    %s684 = sphi 0, %s684
    %s686 = sphi 0, %s684
    %s687 = sphi 0, %s686
    %s701 = sphi 0, %s687
    %s707 = sphi 0, %s709
    %s710 = sphi 0, %s707
    %s711 = sphi 0, %s710
    %s727 = sphi 0, %s711
    %s733 = sphi 0, %s735
    %s736 = sphi 0, %s733
    %s737 = sphi 0, %s736
    %s753 = sphi 0, %s737
  $region4: #{decoder_forward.1} parent=0 // loop_header_branch
    %71 = sbr.rel (%p69) target = $region8
  $region5: #{decoder_forward.1} parent=0 // loop_body
    %s73 = ssub.s32 %s68, 1
    %s74 = ssub.s32 %s68, 2
    %s75 = sadd.s32 %s68, 1
    %s76 = ssub.s32 %s68, %s75
    %p77 = scmp.eq.s32.totalorder %s76, 0
    %s79 = sadd.s32 %s78, 1
    %s80 = scalar_select %p77, %s78, %s79
    %p83 = pneg %p77
    %p84 = scmp.eq.s32.totalorder %s68, 1
    %p85 = por %p83, %p84
    %p86 = scmp.ne.s32.totalorder %s78, %s81
    %p87 = scmp.eq.s32.totalorder %s68, 0
    %p88 = por %p86, %p87
    %p89 = scmp.ne.s32.totalorder %s78, %s81
    %p90 = scmp.eq.s32.totalorder %s73, 1
    %p91 = por %p89, %p90
    %p92 = scmp.ne.s32.totalorder %s81, %s82
    %p93 = scmp.eq.s32.totalorder %s73, 0
    %p94 = por %p92, %p93
    %p95 = scmp.ne.s32.totalorder %s81, %s82
    %p96 = scmp.eq.s32.totalorder %s74, 1
    %p97 = por %p95, %p96
    %p99 = scmp.ne.s32.totalorder %s82, %s98
    %p100 = scmp.eq.s32.totalorder %s74, 0
    %p101 = por %p99, %p100
    %s102 = ssub.s32 %s68, %s75
    %p103 = scmp.eq.s32.totalorder %s102, 0
    %s105 = sadd.s32 %s104, 1
    %s106 = scalar_select %p103, %s104, %s105
    %p109 = pneg %p103
    %p110 = scmp.eq.s32.totalorder %s68, 1
    %p111 = por %p109, %p110
    %p112 = scmp.ne.s32.totalorder %s104, %s107
    %p113 = scmp.eq.s32.totalorder %s68, 0
    %p114 = por %p112, %p113
    %p115 = scmp.ne.s32.totalorder %s104, %s107
    %p116 = scmp.eq.s32.totalorder %s73, 1
    %p117 = por %p115, %p116
    %p118 = scmp.ne.s32.totalorder %s107, %s108
    %p119 = scmp.eq.s32.totalorder %s73, 0
    %p120 = por %p118, %p119
    %p121 = scmp.ne.s32.totalorder %s107, %s108
    %p122 = scmp.eq.s32.totalorder %s74, 1
    %p123 = por %p121, %p122
    %p125 = scmp.ne.s32.totalorder %s108, %s124
    %p126 = scmp.eq.s32.totalorder %s74, 0
    %p127 = por %p125, %p126
    %s128 = ssub.s32 %s68, %s75
    %p129 = scmp.eq.s32.totalorder %s128, 0
    %s131 = sadd.s32 %s130, 1
    %s132 = scalar_select %p129, %s130, %s131
    %p135 = pneg %p129
    %p136 = scmp.eq.s32.totalorder %s68, 1
    %p137 = por %p135, %p136
    %p138 = scmp.ne.s32.totalorder %s130, %s133
    %p139 = scmp.eq.s32.totalorder %s68, 0
    %p140 = por %p138, %p139
    %p141 = scmp.ne.s32.totalorder %s130, %s133
    %p142 = scmp.eq.s32.totalorder %s73, 1
    %p143 = por %p141, %p142
    %p144 = scmp.ne.s32.totalorder %s133, %s134
    %p145 = scmp.eq.s32.totalorder %s73, 0
    %p146 = por %p144, %p145
    %p147 = scmp.ne.s32.totalorder %s133, %s134
    %p148 = scmp.eq.s32.totalorder %s74, 1
    %p149 = por %p147, %p148
    %p151 = scmp.ne.s32.totalorder %s134, %s150
    %p152 = scmp.eq.s32.totalorder %s74, 0
    %p153 = por %p151, %p152
    %s154 = ssub.s32 %s68, %s75
    %p155 = scmp.eq.s32.totalorder %s154, 0
    %s157 = sadd.s32 %s156, 1
    %s158 = scalar_select %p155, %s156, %s157
    %p161 = pneg %p155
    %p162 = scmp.eq.s32.totalorder %s68, 1
    %p163 = por %p161, %p162
    %p164 = scmp.ne.s32.totalorder %s156, %s159
    %p165 = scmp.eq.s32.totalorder %s68, 0
    %p166 = por %p164, %p165
    %p167 = scmp.ne.s32.totalorder %s156, %s159
    %p168 = scmp.eq.s32.totalorder %s73, 1
    %p169 = por %p167, %p168
    %p170 = scmp.ne.s32.totalorder %s159, %s160
    %p171 = scmp.eq.s32.totalorder %s73, 0
    %p172 = por %p170, %p171
    %p173 = scmp.ne.s32.totalorder %s159, %s160
    %p174 = scmp.eq.s32.totalorder %s74, 1
    %p175 = por %p173, %p174
    %p177 = scmp.ne.s32.totalorder %s160, %s176
    %p178 = scmp.eq.s32.totalorder %s74, 0
    %p179 = por %p177, %p178
    %s181 = sadd.s32 %s180, 1
    %p184 = scmp.eq.s32.totalorder %s68, 1
    %p185 = scmp.ne.s32.totalorder %s180, %s182
    %p186 = scmp.eq.s32.totalorder %s68, 0
    %p187 = por %p185, %p186
    %p188 = scmp.ne.s32.totalorder %s180, %s182
    %p189 = scmp.eq.s32.totalorder %s73, 1
    %p190 = por %p188, %p189
    %p191 = scmp.ne.s32.totalorder %s182, %s183
    %p192 = scmp.eq.s32.totalorder %s73, 0
    %p193 = por %p191, %p192
    %p194 = scmp.ne.s32.totalorder %s182, %s183
    %p195 = scmp.eq.s32.totalorder %s74, 1
    %p196 = por %p194, %p195
    %p198 = scmp.ne.s32.totalorder %s183, %s197
    %p199 = scmp.eq.s32.totalorder %s74, 0
    %p200 = por %p198, %p199
    %s202 = sadd.s32 %s201, 1
    %p205 = scmp.eq.s32.totalorder %s68, 1
    %p206 = scmp.ne.s32.totalorder %s201, %s203
    %p207 = scmp.eq.s32.totalorder %s68, 0
    %p208 = por %p206, %p207
    %p209 = scmp.ne.s32.totalorder %s201, %s203
    %p210 = scmp.eq.s32.totalorder %s73, 1
    %p211 = por %p209, %p210
    %p212 = scmp.ne.s32.totalorder %s203, %s204
    %p213 = scmp.eq.s32.totalorder %s73, 0
    %p214 = por %p212, %p213
    %p215 = scmp.ne.s32.totalorder %s203, %s204
    %p216 = scmp.eq.s32.totalorder %s74, 1
    %p217 = por %p215, %p216
    %p219 = scmp.ne.s32.totalorder %s204, %s218
    %p220 = scmp.eq.s32.totalorder %s74, 0
    %p221 = por %p219, %p220
    %s223 = sadd.s32 %s222, 1
    %p226 = scmp.eq.s32.totalorder %s68, 1
    %p227 = scmp.ne.s32.totalorder %s222, %s224
    %p228 = scmp.eq.s32.totalorder %s68, 0
    %p229 = por %p227, %p228
    %p230 = scmp.ne.s32.totalorder %s222, %s224
    %p231 = scmp.eq.s32.totalorder %s73, 1
    %p232 = por %p230, %p231
    %p233 = scmp.ne.s32.totalorder %s224, %s225
    %p234 = scmp.eq.s32.totalorder %s73, 0
    %p235 = por %p233, %p234
    %p236 = scmp.ne.s32.totalorder %s224, %s225
    %p237 = scmp.eq.s32.totalorder %s74, 1
    %p238 = por %p236, %p237
    %p240 = scmp.ne.s32.totalorder %s225, %s239
    %p241 = scmp.eq.s32.totalorder %s74, 0
    %p242 = por %p240, %p241
    %s244 = sadd.s32 %s243, 1
    %p247 = scmp.eq.s32.totalorder %s68, 1
    %p248 = scmp.ne.s32.totalorder %s243, %s245
    %p249 = scmp.eq.s32.totalorder %s68, 0
    %p250 = por %p248, %p249
    %p251 = scmp.ne.s32.totalorder %s243, %s245
    %p252 = scmp.eq.s32.totalorder %s73, 1
    %p253 = por %p251, %p252
    %p254 = scmp.ne.s32.totalorder %s245, %s246
    %p255 = scmp.eq.s32.totalorder %s73, 0
    %p256 = por %p254, %p255
    %p257 = scmp.ne.s32.totalorder %s245, %s246
    %p258 = scmp.eq.s32.totalorder %s74, 1
    %p259 = por %p257, %p258
    %p261 = scmp.ne.s32.totalorder %s246, %s260
    %p262 = scmp.eq.s32.totalorder %s74, 0
    %p263 = por %p261, %p262
    %s265 = sadd.s32 %s264, 1
    %p268 = scmp.eq.s32.totalorder %s68, 1
    %p269 = scmp.ne.s32.totalorder %s264, %s266
    %p270 = scmp.eq.s32.totalorder %s68, 0
    %p271 = por %p269, %p270
    %p272 = scmp.ne.s32.totalorder %s264, %s266
    %p273 = scmp.eq.s32.totalorder %s73, 1
    %p274 = por %p272, %p273
    %p275 = scmp.ne.s32.totalorder %s266, %s267
    %p276 = scmp.eq.s32.totalorder %s73, 0
    %p277 = por %p275, %p276
    %p278 = scmp.ne.s32.totalorder %s266, %s267
    %p279 = scmp.eq.s32.totalorder %s74, 1
    %p280 = por %p278, %p279
    %p282 = scmp.ne.s32.totalorder %s267, %s281
    %p283 = scmp.eq.s32.totalorder %s74, 0
    %p284 = por %p282, %p283
    %s286 = sadd.s32 %s285, 1
    %p289 = scmp.eq.s32.totalorder %s68, 1
    %p290 = scmp.ne.s32.totalorder %s285, %s287
    %p291 = scmp.eq.s32.totalorder %s68, 0
    %p292 = por %p290, %p291
    %p293 = scmp.ne.s32.totalorder %s285, %s287
    %p294 = scmp.eq.s32.totalorder %s73, 1
    %p295 = por %p293, %p294
    %p296 = scmp.ne.s32.totalorder %s287, %s288
    %p297 = scmp.eq.s32.totalorder %s73, 0
    %p298 = por %p296, %p297
    %p299 = scmp.ne.s32.totalorder %s287, %s288
    %p300 = scmp.eq.s32.totalorder %s74, 1
    %p301 = por %p299, %p300
    %p303 = scmp.ne.s32.totalorder %s288, %s302
    %p304 = scmp.eq.s32.totalorder %s74, 0
    %p305 = por %p303, %p304
    %s307 = sadd.s32 %s306, 1
    %p310 = scmp.eq.s32.totalorder %s68, 1
    %p311 = scmp.ne.s32.totalorder %s306, %s308
    %p312 = scmp.eq.s32.totalorder %s68, 0
    %p313 = por %p311, %p312
    %p314 = scmp.ne.s32.totalorder %s306, %s308
    %p315 = scmp.eq.s32.totalorder %s73, 1
    %p316 = por %p314, %p315
    %p317 = scmp.ne.s32.totalorder %s308, %s309
    %p318 = scmp.eq.s32.totalorder %s73, 0
    %p319 = por %p317, %p318
    %p320 = scmp.ne.s32.totalorder %s308, %s309
    %p321 = scmp.eq.s32.totalorder %s74, 1
    %p322 = por %p320, %p321
    %p324 = scmp.ne.s32.totalorder %s309, %s323
    %p325 = scmp.eq.s32.totalorder %s74, 0
    %p326 = por %p324, %p325
    %s328 = sadd.s32 %s327, 1
    %p331 = scmp.eq.s32.totalorder %s68, 1
    %p332 = scmp.ne.s32.totalorder %s327, %s329
    %p333 = scmp.eq.s32.totalorder %s68, 0
    %p334 = por %p332, %p333
    %p335 = scmp.ne.s32.totalorder %s327, %s329
    %p336 = scmp.eq.s32.totalorder %s73, 1
    %p337 = por %p335, %p336
    %p338 = scmp.ne.s32.totalorder %s329, %s330
    %p339 = scmp.eq.s32.totalorder %s73, 0
    %p340 = por %p338, %p339
    %p341 = scmp.ne.s32.totalorder %s329, %s330
    %p342 = scmp.eq.s32.totalorder %s74, 1
    %p343 = por %p341, %p342
    %p345 = scmp.ne.s32.totalorder %s330, %s344
    %p346 = scmp.eq.s32.totalorder %s74, 0
    %p347 = por %p345, %p346
    %s349 = sadd.s32 %s348, 1
    %p352 = scmp.eq.s32.totalorder %s68, 1
    %p353 = scmp.ne.s32.totalorder %s348, %s350
    %p354 = scmp.eq.s32.totalorder %s68, 0
    %p355 = por %p353, %p354
    %p356 = scmp.ne.s32.totalorder %s348, %s350
    %p357 = scmp.eq.s32.totalorder %s73, 1
    %p358 = por %p356, %p357
    %p359 = scmp.ne.s32.totalorder %s350, %s351
    %p360 = scmp.eq.s32.totalorder %s73, 0
    %p361 = por %p359, %p360
    %p362 = scmp.ne.s32.totalorder %s350, %s351
    %p363 = scmp.eq.s32.totalorder %s74, 1
    %p364 = por %p362, %p363
    %p366 = scmp.ne.s32.totalorder %s351, %s365
    %p367 = scmp.eq.s32.totalorder %s74, 0
    %p368 = por %p366, %p367
    %s370 = sadd.s32 %s369, 1
    %p373 = scmp.eq.s32.totalorder %s68, 1
    %p374 = scmp.ne.s32.totalorder %s369, %s371
    %p375 = scmp.eq.s32.totalorder %s68, 0
    %p376 = por %p374, %p375
    %p377 = scmp.ne.s32.totalorder %s369, %s371
    %p378 = scmp.eq.s32.totalorder %s73, 1
    %p379 = por %p377, %p378
    %p380 = scmp.ne.s32.totalorder %s371, %s372
    %p381 = scmp.eq.s32.totalorder %s73, 0
    %p382 = por %p380, %p381
    %p383 = scmp.ne.s32.totalorder %s371, %s372
    %p384 = scmp.eq.s32.totalorder %s74, 1
    %p385 = por %p383, %p384
    %p387 = scmp.ne.s32.totalorder %s372, %s386
    %p388 = scmp.eq.s32.totalorder %s74, 0
    %p389 = por %p387, %p388
    %s391 = sadd.s32 %s390, 1
    %p394 = scmp.eq.s32.totalorder %s68, 1
    %p395 = scmp.ne.s32.totalorder %s390, %s392
    %p396 = scmp.eq.s32.totalorder %s68, 0
    %p397 = por %p395, %p396
    %p398 = scmp.ne.s32.totalorder %s390, %s392
    %p399 = scmp.eq.s32.totalorder %s73, 1
    %p400 = por %p398, %p399
    %p401 = scmp.ne.s32.totalorder %s392, %s393
    %p402 = scmp.eq.s32.totalorder %s73, 0
    %p403 = por %p401, %p402
    %p404 = scmp.ne.s32.totalorder %s392, %s393
    %p405 = scmp.eq.s32.totalorder %s74, 1
    %p406 = por %p404, %p405
    %p408 = scmp.ne.s32.totalorder %s393, %s407
    %p409 = scmp.eq.s32.totalorder %s74, 0
    %p410 = por %p408, %p409
    %s412 = sadd.s32 %s411, 1
    %p415 = scmp.eq.s32.totalorder %s68, 1
    %p416 = scmp.ne.s32.totalorder %s411, %s413
    %p417 = scmp.eq.s32.totalorder %s68, 0
    %p418 = por %p416, %p417
    %p419 = scmp.ne.s32.totalorder %s411, %s413
    %p420 = scmp.eq.s32.totalorder %s73, 1
    %p421 = por %p419, %p420
    %p422 = scmp.ne.s32.totalorder %s413, %s414
    %p423 = scmp.eq.s32.totalorder %s73, 0
    %p424 = por %p422, %p423
    %p425 = scmp.ne.s32.totalorder %s413, %s414
    %p426 = scmp.eq.s32.totalorder %s74, 1
    %p427 = por %p425, %p426
    %p429 = scmp.ne.s32.totalorder %s414, %s428
    %p430 = scmp.eq.s32.totalorder %s74, 0
    %p431 = por %p429, %p430
    %s433 = sadd.s32 %s432, 1
    %p436 = scmp.eq.s32.totalorder %s68, 1
    %p437 = scmp.ne.s32.totalorder %s432, %s434
    %p438 = scmp.eq.s32.totalorder %s68, 0
    %p439 = por %p437, %p438
    %p440 = scmp.ne.s32.totalorder %s432, %s434
    %p441 = scmp.eq.s32.totalorder %s73, 1
    %p442 = por %p440, %p441
    %p443 = scmp.ne.s32.totalorder %s434, %s435
    %p444 = scmp.eq.s32.totalorder %s73, 0
    %p445 = por %p443, %p444
    %p446 = scmp.ne.s32.totalorder %s434, %s435
    %p447 = scmp.eq.s32.totalorder %s74, 1
    %p448 = por %p446, %p447
    %p450 = scmp.ne.s32.totalorder %s435, %s449
    %p451 = scmp.eq.s32.totalorder %s74, 0
    %p452 = por %p450, %p451
    %s454 = sadd.s32 %s453, 1
    %p457 = scmp.eq.s32.totalorder %s68, 1
    %p458 = scmp.ne.s32.totalorder %s453, %s455
    %p459 = scmp.eq.s32.totalorder %s68, 0
    %p460 = por %p458, %p459
    %p461 = scmp.ne.s32.totalorder %s453, %s455
    %p462 = scmp.eq.s32.totalorder %s73, 1
    %p463 = por %p461, %p462
    %p464 = scmp.ne.s32.totalorder %s455, %s456
    %p465 = scmp.eq.s32.totalorder %s73, 0
    %p466 = por %p464, %p465
    %p467 = scmp.ne.s32.totalorder %s455, %s456
    %p468 = scmp.eq.s32.totalorder %s74, 1
    %p469 = por %p467, %p468
    %p471 = scmp.ne.s32.totalorder %s456, %s470
    %p472 = scmp.eq.s32.totalorder %s74, 0
    %p473 = por %p471, %p472
    %s475 = sadd.s32 %s474, 1
    %p478 = scmp.eq.s32.totalorder %s68, 1
    %p479 = scmp.ne.s32.totalorder %s474, %s476
    %p480 = scmp.eq.s32.totalorder %s68, 0
    %p481 = por %p479, %p480
    %p482 = scmp.ne.s32.totalorder %s474, %s476
    %p483 = scmp.eq.s32.totalorder %s73, 1
    %p484 = por %p482, %p483
    %p485 = scmp.ne.s32.totalorder %s476, %s477
    %p486 = scmp.eq.s32.totalorder %s73, 0
    %p487 = por %p485, %p486
    %p488 = scmp.ne.s32.totalorder %s476, %s477
    %p489 = scmp.eq.s32.totalorder %s74, 1
    %p490 = por %p488, %p489
    %p492 = scmp.ne.s32.totalorder %s477, %s491
    %p493 = scmp.eq.s32.totalorder %s74, 0
    %p494 = por %p492, %p493
    %s496 = sadd.s32 %s495, 1
    %p499 = scmp.eq.s32.totalorder %s68, 1
    %p500 = scmp.ne.s32.totalorder %s495, %s497
    %p501 = scmp.eq.s32.totalorder %s68, 0
    %p502 = por %p500, %p501
    %p503 = scmp.ne.s32.totalorder %s495, %s497
    %p504 = scmp.eq.s32.totalorder %s73, 1
    %p505 = por %p503, %p504
    %p506 = scmp.ne.s32.totalorder %s497, %s498
    %p507 = scmp.eq.s32.totalorder %s73, 0
    %p508 = por %p506, %p507
    %p509 = scmp.ne.s32.totalorder %s497, %s498
    %p510 = scmp.eq.s32.totalorder %s74, 1
    %p511 = por %p509, %p510
    %p513 = scmp.ne.s32.totalorder %s498, %s512
    %p514 = scmp.eq.s32.totalorder %s74, 0
    %p515 = por %p513, %p514
    %s517 = sadd.s32 %s516, 1
    %p520 = scmp.eq.s32.totalorder %s68, 1
    %p521 = scmp.ne.s32.totalorder %s516, %s518
    %p522 = scmp.eq.s32.totalorder %s68, 0
    %p523 = por %p521, %p522
    %p524 = scmp.ne.s32.totalorder %s516, %s518
    %p525 = scmp.eq.s32.totalorder %s73, 1
    %p526 = por %p524, %p525
    %p527 = scmp.ne.s32.totalorder %s518, %s519
    %p528 = scmp.eq.s32.totalorder %s73, 0
    %p529 = por %p527, %p528
    %p530 = scmp.ne.s32.totalorder %s518, %s519
    %p531 = scmp.eq.s32.totalorder %s74, 1
    %p532 = por %p530, %p531
    %p534 = scmp.ne.s32.totalorder %s519, %s533
    %p535 = scmp.eq.s32.totalorder %s74, 0
    %p536 = por %p534, %p535
    %s538 = sadd.s32 %s537, 1
    %p541 = scmp.eq.s32.totalorder %s68, 1
    %p542 = scmp.ne.s32.totalorder %s537, %s539
    %p543 = scmp.eq.s32.totalorder %s68, 0
    %p544 = por %p542, %p543
    %p545 = scmp.ne.s32.totalorder %s537, %s539
    %p546 = scmp.eq.s32.totalorder %s73, 1
    %p547 = por %p545, %p546
    %p548 = scmp.ne.s32.totalorder %s539, %s540
    %p549 = scmp.eq.s32.totalorder %s73, 0
    %p550 = por %p548, %p549
    %p551 = scmp.ne.s32.totalorder %s539, %s540
    %p552 = scmp.eq.s32.totalorder %s74, 1
    %p553 = por %p551, %p552
    %p555 = scmp.ne.s32.totalorder %s540, %s554
    %p556 = scmp.eq.s32.totalorder %s74, 0
    %p557 = por %p555, %p556
    %s559 = sadd.s32 %s558, 1
    %p562 = scmp.eq.s32.totalorder %s68, 1
    %p563 = scmp.ne.s32.totalorder %s558, %s560
    %p564 = scmp.eq.s32.totalorder %s68, 0
    %p565 = por %p563, %p564
    %p566 = scmp.ne.s32.totalorder %s558, %s560
    %p567 = scmp.eq.s32.totalorder %s73, 1
    %p568 = por %p566, %p567
    %p569 = scmp.ne.s32.totalorder %s560, %s561
    %p570 = scmp.eq.s32.totalorder %s73, 0
    %p571 = por %p569, %p570
    %p572 = scmp.ne.s32.totalorder %s560, %s561
    %p573 = scmp.eq.s32.totalorder %s74, 1
    %p574 = por %p572, %p573
    %p576 = scmp.ne.s32.totalorder %s561, %s575
    %p577 = scmp.eq.s32.totalorder %s74, 0
    %p578 = por %p576, %p577
    %s580 = sadd.s32 %s579, 1
    %p583 = scmp.eq.s32.totalorder %s68, 1
    %p584 = scmp.ne.s32.totalorder %s579, %s581
    %p585 = scmp.eq.s32.totalorder %s68, 0
    %p586 = por %p584, %p585
    %p587 = scmp.ne.s32.totalorder %s579, %s581
    %p588 = scmp.eq.s32.totalorder %s73, 1
    %p589 = por %p587, %p588
    %p590 = scmp.ne.s32.totalorder %s581, %s582
    %p591 = scmp.eq.s32.totalorder %s73, 0
    %p592 = por %p590, %p591
    %p593 = scmp.ne.s32.totalorder %s581, %s582
    %p594 = scmp.eq.s32.totalorder %s74, 1
    %p595 = por %p593, %p594
    %p597 = scmp.ne.s32.totalorder %s582, %s596
    %p598 = scmp.eq.s32.totalorder %s74, 0
    %p599 = por %p597, %p598
    %s601 = sadd.s32 %s600, 1
    %p604 = scmp.eq.s32.totalorder %s68, 1
    %p605 = scmp.ne.s32.totalorder %s600, %s602
    %p606 = scmp.eq.s32.totalorder %s68, 0
    %p607 = por %p605, %p606
    %p608 = scmp.ne.s32.totalorder %s600, %s602
    %p609 = scmp.eq.s32.totalorder %s73, 1
    %p610 = por %p608, %p609
    %p611 = scmp.ne.s32.totalorder %s602, %s603
    %p612 = scmp.eq.s32.totalorder %s73, 0
    %p613 = por %p611, %p612
    %p614 = scmp.ne.s32.totalorder %s602, %s603
    %p615 = scmp.eq.s32.totalorder %s74, 1
    %p616 = por %p614, %p615
    %p618 = scmp.ne.s32.totalorder %s603, %s617
    %p619 = scmp.eq.s32.totalorder %s74, 0
    %p620 = por %p618, %p619
    %s622 = sadd.s32 %s621, 1
    %p625 = scmp.eq.s32.totalorder %s68, 1
    %p626 = scmp.ne.s32.totalorder %s621, %s623
    %p627 = scmp.eq.s32.totalorder %s68, 0
    %p628 = por %p626, %p627
    %p629 = scmp.ne.s32.totalorder %s621, %s623
    %p630 = scmp.eq.s32.totalorder %s73, 1
    %p631 = por %p629, %p630
    %p632 = scmp.ne.s32.totalorder %s623, %s624
    %p633 = scmp.eq.s32.totalorder %s73, 0
    %p634 = por %p632, %p633
    %p635 = scmp.ne.s32.totalorder %s623, %s624
    %p636 = scmp.eq.s32.totalorder %s74, 1
    %p637 = por %p635, %p636
    %p639 = scmp.ne.s32.totalorder %s624, %s638
    %p640 = scmp.eq.s32.totalorder %s74, 0
    %p641 = por %p639, %p640
    %s643 = sadd.s32 %s642, 1
    %p646 = scmp.eq.s32.totalorder %s68, 1
    %p647 = scmp.ne.s32.totalorder %s642, %s644
    %p648 = scmp.eq.s32.totalorder %s68, 0
    %p649 = por %p647, %p648
    %p650 = scmp.ne.s32.totalorder %s642, %s644
    %p651 = scmp.eq.s32.totalorder %s73, 1
    %p652 = por %p650, %p651
    %p653 = scmp.ne.s32.totalorder %s644, %s645
    %p654 = scmp.eq.s32.totalorder %s73, 0
    %p655 = por %p653, %p654
    %p656 = scmp.ne.s32.totalorder %s644, %s645
    %p657 = scmp.eq.s32.totalorder %s74, 1
    %p658 = por %p656, %p657
    %p660 = scmp.ne.s32.totalorder %s645, %s659
    %p661 = scmp.eq.s32.totalorder %s74, 0
    %p662 = por %p660, %p661
    %s664 = sadd.s32 %s663, 1
    %p667 = scmp.eq.s32.totalorder %s68, 1
    %p668 = scmp.ne.s32.totalorder %s663, %s665
    %p669 = scmp.eq.s32.totalorder %s68, 0
    %p670 = por %p668, %p669
    %p671 = scmp.ne.s32.totalorder %s663, %s665
    %p672 = scmp.eq.s32.totalorder %s73, 1
    %p673 = por %p671, %p672
    %p674 = scmp.ne.s32.totalorder %s665, %s666
    %p675 = scmp.eq.s32.totalorder %s73, 0
    %p676 = por %p674, %p675
    %p677 = scmp.ne.s32.totalorder %s665, %s666
    %p678 = scmp.eq.s32.totalorder %s74, 1
    %p679 = por %p677, %p678
    %p681 = scmp.ne.s32.totalorder %s666, %s680
    %p682 = scmp.eq.s32.totalorder %s74, 0
    %p683 = por %p681, %p682
    %s685 = sadd.s32 %s684, 1
    %p688 = scmp.eq.s32.totalorder %s68, 1
    %p689 = scmp.ne.s32.totalorder %s684, %s686
    %p690 = scmp.eq.s32.totalorder %s68, 0
    %p691 = por %p689, %p690
    %p692 = scmp.ne.s32.totalorder %s684, %s686
    %p693 = scmp.eq.s32.totalorder %s73, 1
    %p694 = por %p692, %p693
    %p695 = scmp.ne.s32.totalorder %s686, %s687
    %p696 = scmp.eq.s32.totalorder %s73, 0
    %p697 = por %p695, %p696
    %p698 = scmp.ne.s32.totalorder %s686, %s687
    %p699 = scmp.eq.s32.totalorder %s74, 1
    %p700 = por %p698, %p699
    %p702 = scmp.ne.s32.totalorder %s687, %s701
    %p703 = scmp.eq.s32.totalorder %s74, 0
    %p704 = por %p702, %p703
    %s705 = ssub.s32 %s68, %s75
    %p706 = scmp.eq.s32.totalorder %s705, 0
    %s708 = sadd.s32 %s707, 1
    %s709 = scalar_select %p706, %s707, %s708
    %p712 = pneg %p706
    %p713 = scmp.eq.s32.totalorder %s68, 1
    %p714 = por %p712, %p713
    %p715 = scmp.ne.s32.totalorder %s707, %s710
    %p716 = scmp.eq.s32.totalorder %s68, 0
    %p717 = por %p715, %p716
    %p718 = scmp.ne.s32.totalorder %s707, %s710
    %p719 = scmp.eq.s32.totalorder %s73, 1
    %p720 = por %p718, %p719
    %p721 = scmp.ne.s32.totalorder %s710, %s711
    %p722 = scmp.eq.s32.totalorder %s73, 0
    %p723 = por %p721, %p722
    %p724 = scmp.ne.s32.totalorder %s710, %s711
    %p725 = scmp.eq.s32.totalorder %s74, 1
    %p726 = por %p724, %p725
    %p728 = scmp.ne.s32.totalorder %s711, %s727
    %p729 = scmp.eq.s32.totalorder %s74, 0
    %p730 = por %p728, %p729
    %s731 = ssub.s32 %s68, %s75
    %p732 = scmp.eq.s32.totalorder %s731, 0
    %s734 = sadd.s32 %s733, 1
    %s735 = scalar_select %p732, %s733, %s734
    %p738 = pneg %p732
    %p739 = scmp.eq.s32.totalorder %s68, 1
    %p740 = por %p738, %p739
    %p741 = scmp.ne.s32.totalorder %s733, %s736
    %p742 = scmp.eq.s32.totalorder %s68, 0
    %p743 = por %p741, %p742
    %p744 = scmp.ne.s32.totalorder %s733, %s736
    %p745 = scmp.eq.s32.totalorder %s73, 1
    %p746 = por %p744, %p745
    %p747 = scmp.ne.s32.totalorder %s736, %s737
    %p748 = scmp.eq.s32.totalorder %s73, 0
    %p749 = por %p747, %p748
    %p750 = scmp.ne.s32.totalorder %s736, %s737
    %p751 = scmp.eq.s32.totalorder %s74, 1
    %p752 = por %p750, %p751
    %p754 = scmp.ne.s32.totalorder %s737, %s753
    %p755 = scmp.eq.s32.totalorder %s74, 0
    %p756 = por %p754, %p755
    %p757 = scmp.le.s32.totalorder 1, %s68
    %p758 = scmp.lt.s32.totalorder %s68, 3
    %p759 = pnand %p757, %p758
    %p760 = pneg %p759
    // Predicated region
    $region9: #{decoder_forward.1} parent=5 // pred_check
      _
    $region10: #{decoder_forward.1} parent=5 // pred_check_branch
      %762 = sbr.rel (%p759) target = $region12
    $region11: #{decoder_forward.1} parent=5 // pred_region
      %s763 = ssub.s32 %s68, 1
      // Predicated region
      $region13: #{decoder_forward.1} parent=11 // pred_check
        %p764 = pneg %p193
      $region14: #{decoder_forward.1} parent=11 // pred_check_branch
        %766 = sbr.rel (%p764) target = $region16
      $region15: #{decoder_forward.1} parent=11 // pred_region
        _
      $region16: #{decoder_forward.1} parent=11 // pred_fallthru
        _
      // Predicated region
      $region17: #{decoder_forward.1} parent=11 // pred_check
        %p767 = pneg %p214
      $region18: #{decoder_forward.1} parent=11 // pred_check_branch
        %769 = sbr.rel (%p767) target = $region20
      $region19: #{decoder_forward.1} parent=11 // pred_region
        _
      $region20: #{decoder_forward.1} parent=11 // pred_fallthru
        _
      // Predicated region
      $region21: #{decoder_forward.1} parent=11 // pred_check
        %p770 = pneg %p235
      $region22: #{decoder_forward.1} parent=11 // pred_check_branch
        %772 = sbr.rel (%p770) target = $region24
      $region23: #{decoder_forward.1} parent=11 // pred_region
        _
      $region24: #{decoder_forward.1} parent=11 // pred_fallthru
        _
      // Predicated region
      $region25: #{decoder_forward.1} parent=11 // pred_check
        %p773 = pneg %p256
      $region26: #{decoder_forward.1} parent=11 // pred_check_branch
        %775 = sbr.rel (%p773) target = $region28
      $region27: #{decoder_forward.1} parent=11 // pred_region
        _
      $region28: #{decoder_forward.1} parent=11 // pred_fallthru
        _
      // Predicated region
      $region29: #{decoder_forward.1} parent=11 // pred_check
        %p776 = pneg %p277
      $region30: #{decoder_forward.1} parent=11 // pred_check_branch
        %778 = sbr.rel (%p776) target = $region32
      $region31: #{decoder_forward.1} parent=11 // pred_region
        _
      $region32: #{decoder_forward.1} parent=11 // pred_fallthru
        _
      // Predicated region
      $region33: #{decoder_forward.1} parent=11 // pred_check
        %p779 = pneg %p298
      $region34: #{decoder_forward.1} parent=11 // pred_check_branch
        %781 = sbr.rel (%p779) target = $region36
      $region35: #{decoder_forward.1} parent=11 // pred_region
        _
      $region36: #{decoder_forward.1} parent=11 // pred_fallthru
        _
      // Predicated region
      $region37: #{decoder_forward.1} parent=11 // pred_check
        %p782 = pneg %p319
      $region38: #{decoder_forward.1} parent=11 // pred_check_branch
        %784 = sbr.rel (%p782) target = $region40
      $region39: #{decoder_forward.1} parent=11 // pred_region
        _
      $region40: #{decoder_forward.1} parent=11 // pred_fallthru
        _
      // Predicated region
      $region41: #{decoder_forward.1} parent=11 // pred_check
        %p785 = pneg %p340
      $region42: #{decoder_forward.1} parent=11 // pred_check_branch
        %787 = sbr.rel (%p785) target = $region44
      $region43: #{decoder_forward.1} parent=11 // pred_region
        _
      $region44: #{decoder_forward.1} parent=11 // pred_fallthru
        _
      // Predicated region
      $region45: #{decoder_forward.1} parent=11 // pred_check
        %p788 = pneg %p361
      $region46: #{decoder_forward.1} parent=11 // pred_check_branch
        %790 = sbr.rel (%p788) target = $region48
      $region47: #{decoder_forward.1} parent=11 // pred_region
        _
      $region48: #{decoder_forward.1} parent=11 // pred_fallthru
        _
      // Predicated region
      $region49: #{decoder_forward.1} parent=11 // pred_check
        %p791 = pneg %p382
      $region50: #{decoder_forward.1} parent=11 // pred_check_branch
        %793 = sbr.rel (%p791) target = $region52
      $region51: #{decoder_forward.1} parent=11 // pred_region
        _
      $region52: #{decoder_forward.1} parent=11 // pred_fallthru
        _
      // Predicated region
      $region53: #{decoder_forward.1} parent=11 // pred_check
        %p794 = pneg %p403
      $region54: #{decoder_forward.1} parent=11 // pred_check_branch
        %796 = sbr.rel (%p794) target = $region56
      $region55: #{decoder_forward.1} parent=11 // pred_region
        _
      $region56: #{decoder_forward.1} parent=11 // pred_fallthru
        _
      // Predicated region
      $region57: #{decoder_forward.1} parent=11 // pred_check
        %p797 = pneg %p424
      $region58: #{decoder_forward.1} parent=11 // pred_check_branch
        %799 = sbr.rel (%p797) target = $region60
      $region59: #{decoder_forward.1} parent=11 // pred_region
        _
      $region60: #{decoder_forward.1} parent=11 // pred_fallthru
        _
      // Predicated region
      $region61: #{decoder_forward.1} parent=11 // pred_check
        %p800 = pneg %p445
      $region62: #{decoder_forward.1} parent=11 // pred_check_branch
        %802 = sbr.rel (%p800) target = $region64
      $region63: #{decoder_forward.1} parent=11 // pred_region
        _
      $region64: #{decoder_forward.1} parent=11 // pred_fallthru
        _
      // Predicated region
      $region65: #{decoder_forward.1} parent=11 // pred_check
        %p803 = pneg %p466
      $region66: #{decoder_forward.1} parent=11 // pred_check_branch
        %805 = sbr.rel (%p803) target = $region68
      $region67: #{decoder_forward.1} parent=11 // pred_region
        _
      $region68: #{decoder_forward.1} parent=11 // pred_fallthru
        _
      // Predicated region
      $region69: #{decoder_forward.1} parent=11 // pred_check
        %p806 = pneg %p487
      $region70: #{decoder_forward.1} parent=11 // pred_check_branch
        %808 = sbr.rel (%p806) target = $region72
      $region71: #{decoder_forward.1} parent=11 // pred_region
        _
      $region72: #{decoder_forward.1} parent=11 // pred_fallthru
        _
      // Predicated region
      $region73: #{decoder_forward.1} parent=11 // pred_check
        %p809 = pneg %p508
      $region74: #{decoder_forward.1} parent=11 // pred_check_branch
        %811 = sbr.rel (%p809) target = $region76
      $region75: #{decoder_forward.1} parent=11 // pred_region
        _
      $region76: #{decoder_forward.1} parent=11 // pred_fallthru
        _
      // Predicated region
      $region77: #{decoder_forward.1} parent=11 // pred_check
        %p812 = pneg %p529
      $region78: #{decoder_forward.1} parent=11 // pred_check_branch
        %814 = sbr.rel (%p812) target = $region80
      $region79: #{decoder_forward.1} parent=11 // pred_region
        _
      $region80: #{decoder_forward.1} parent=11 // pred_fallthru
        _
      // Predicated region
      $region81: #{decoder_forward.1} parent=11 // pred_check
        %p815 = pneg %p550
      $region82: #{decoder_forward.1} parent=11 // pred_check_branch
        %817 = sbr.rel (%p815) target = $region84
      $region83: #{decoder_forward.1} parent=11 // pred_region
        _
      $region84: #{decoder_forward.1} parent=11 // pred_fallthru
        _
      // Predicated region
      $region85: #{decoder_forward.1} parent=11 // pred_check
        %p818 = pneg %p571
      $region86: #{decoder_forward.1} parent=11 // pred_check_branch
        %820 = sbr.rel (%p818) target = $region88
      $region87: #{decoder_forward.1} parent=11 // pred_region
        _
      $region88: #{decoder_forward.1} parent=11 // pred_fallthru
        _
      // Predicated region
      $region89: #{decoder_forward.1} parent=11 // pred_check
        %p821 = pneg %p592
      $region90: #{decoder_forward.1} parent=11 // pred_check_branch
        %823 = sbr.rel (%p821) target = $region92
      $region91: #{decoder_forward.1} parent=11 // pred_region
        _
      $region92: #{decoder_forward.1} parent=11 // pred_fallthru
        _
      // Predicated region
      $region93: #{decoder_forward.1} parent=11 // pred_check
        %p824 = pneg %p613
      $region94: #{decoder_forward.1} parent=11 // pred_check_branch
        %826 = sbr.rel (%p824) target = $region96
      $region95: #{decoder_forward.1} parent=11 // pred_region
        _
      $region96: #{decoder_forward.1} parent=11 // pred_fallthru
        _
      // Predicated region
      $region97: #{decoder_forward.1} parent=11 // pred_check
        %p827 = pneg %p634
      $region98: #{decoder_forward.1} parent=11 // pred_check_branch
        %829 = sbr.rel (%p827) target = $region100
      $region99: #{decoder_forward.1} parent=11 // pred_region
        _
      $region100: #{decoder_forward.1} parent=11 // pred_fallthru
        _
      // Predicated region
      $region101: #{decoder_forward.1} parent=11 // pred_check
        %p830 = pneg %p655
      $region102: #{decoder_forward.1} parent=11 // pred_check_branch
        %832 = sbr.rel (%p830) target = $region104
      $region103: #{decoder_forward.1} parent=11 // pred_region
        _
      $region104: #{decoder_forward.1} parent=11 // pred_fallthru
        _
      // Predicated region
      $region105: #{decoder_forward.1} parent=11 // pred_check
        %p833 = pneg %p676
      $region106: #{decoder_forward.1} parent=11 // pred_check_branch
        %835 = sbr.rel (%p833) target = $region108
      $region107: #{decoder_forward.1} parent=11 // pred_region
        _
      $region108: #{decoder_forward.1} parent=11 // pred_fallthru
        _
      // Predicated region
      $region109: #{decoder_forward.1} parent=11 // pred_check
        %p836 = pneg %p697
      $region110: #{decoder_forward.1} parent=11 // pred_check_branch
        %838 = sbr.rel (%p836) target = $region112
      $region111: #{decoder_forward.1} parent=11 // pred_region
        _
      $region112: #{decoder_forward.1} parent=11 // pred_fallthru
        _
    $region12: #{decoder_forward.1} parent=5 // pred_fallthru
      _
    %p839 = scmp.lt.s32.totalorder %s68, 2
    // Predicated region
    $region113: #{decoder_forward.1} parent=5 // pred_check
      %p840 = pneg %p839
    $region114: #{decoder_forward.1} parent=5 // pred_check_branch
      %842 = sbr.rel (%p840) target = $region116
    $region115: #{decoder_forward.1} parent=5 // pred_region
      // Predicated region
      $region117: #{decoder_forward.1} parent=115 // pred_check
        %p843 = pneg %p88
      $region118: #{decoder_forward.1} parent=115 // pred_check_branch
        %845 = sbr.rel (%p843) target = $region120
      $region119: #{decoder_forward.1} parent=115 // pred_region
        %p846 = scmp.lt.s32.totalorder %s68, 1
        %s847 = scalar_select %p846, %s68, 1
        %s848 = smul.addr %s847, 8
        %s849 = smul.addr %s848, 8
        %s850 = scalar_lea.vmem %s1, %s849
      $region120: #{decoder_forward.1} parent=115 // pred_fallthru
        _
      // Predicated region
      $region121: #{decoder_forward.1} parent=115 // pred_check
        %p851 = pneg %p114
      $region122: #{decoder_forward.1} parent=115 // pred_check_branch
        %853 = sbr.rel (%p851) target = $region124
      $region123: #{decoder_forward.1} parent=115 // pred_region
        %p854 = scmp.lt.s32.totalorder %s68, 1
        %s855 = scalar_select %p854, %s68, 1
        %s856 = smul.addr %s855, 8
        %s857 = smul.addr %s856, 8
        %s858 = scalar_lea.vmem %s3, %s857
      $region124: #{decoder_forward.1} parent=115 // pred_fallthru
        _
      // Predicated region
      $region125: #{decoder_forward.1} parent=115 // pred_check
        %p859 = pneg %p140
      $region126: #{decoder_forward.1} parent=115 // pred_check_branch
        %861 = sbr.rel (%p859) target = $region128
      $region127: #{decoder_forward.1} parent=115 // pred_region
        %p862 = scmp.lt.s32.totalorder %s68, 1
        %s863 = scalar_select %p862, %s68, 1
        %s864 = smul.addr %s863, 2
        %s865 = smul.addr %s864, 8
        %s866 = scalar_lea.vmem %s5, %s865
      $region128: #{decoder_forward.1} parent=115 // pred_fallthru
        _
      // Predicated region
      $region129: #{decoder_forward.1} parent=115 // pred_check
        %p867 = pneg %p166
      $region130: #{decoder_forward.1} parent=115 // pred_check_branch
        %869 = sbr.rel (%p867) target = $region132
      $region131: #{decoder_forward.1} parent=115 // pred_region
        %p870 = scmp.lt.s32.totalorder %s68, 1
        %s871 = scalar_select %p870, %s68, 1
        %s872 = smul.addr %s871, 4
        %s873 = scalar_lea.vmem %s7, %s872
      $region132: #{decoder_forward.1} parent=115 // pred_fallthru
        _
    $region116: #{decoder_forward.1} parent=5 // pred_fallthru
      _
    %p874 = scmp.le.s32.totalorder 1, %s68
    %p875 = scmp.lt.s32.totalorder %s68, 3
    %p876 = pnand %p874, %p875
    %p877 = pneg %p876
    // Predicated region
    $region133: #{decoder_forward.1} parent=5 // pred_check
      _
    $region134: #{decoder_forward.1} parent=5 // pred_check_branch
      %879 = sbr.rel (%p876) target = $region136
    $region135: #{decoder_forward.1} parent=5 // pred_region
      %s880 = ssub.s32 %s68, 1
      %p881 = scmp.lt.s32.totalorder %s73, 1
      %s882 = scalar_select %p881, %s73, 1
      %s883 = smul.addr %s882, 8
      %s884 = smul.addr %s883, 8
      %s885 = scalar_lea.vmem %s1, %s884
      %p886 = pneg %p94
      %p887 = pneg %p91
      %p888 = scmp.lt.s32.totalorder %s73, 1
      %s889 = scalar_select %p888, %s73, 1
      %s890 = smul.addr %s889, 8
      %s891 = smul.addr %s890, 8
      %s892 = scalar_lea.vmem %s3, %s891
      %p893 = pneg %p120
      %p894 = pneg %p117
      %p895 = scmp.lt.s32.totalorder %s73, 1
      %s896 = scalar_select %p895, %s73, 1
      %s897 = smul.addr %s896, 2
      %s898 = smul.addr %s897, 8
      %s899 = scalar_lea.vmem %s5, %s898
      %p900 = pneg %p146
      %p901 = pneg %p143
      %p902 = scmp.lt.s32.totalorder %s73, 1
      %s903 = scalar_select %p902, %s73, 1
      %s904 = smul.addr %s903, 4
      %s905 = scalar_lea.vmem %s7, %s904
      %p906 = pneg %p172
      %p907 = pneg %p169
      %p908 = pneg %p193
      %p909 = pneg %p190
      %p910 = pneg %p214
      %p911 = pneg %p211
      %p912 = pneg %p235
      %p913 = pneg %p232
      %p914 = pneg %p256
      %p915 = pneg %p253
      %p916 = pneg %p277
      %p917 = pneg %p274
      %p918 = pneg %p298
      %p919 = pneg %p295
      %p920 = pneg %p319
      %p921 = pneg %p316
      %p922 = pneg %p340
      %p923 = pneg %p337
      %p924 = pneg %p361
      %p925 = pneg %p358
      %p926 = pneg %p382
      %p927 = pneg %p379
      %p928 = pneg %p403
      %p929 = pneg %p400
      %p930 = pneg %p424
      %p931 = pneg %p421
      %p932 = pneg %p445
      %p933 = pneg %p442
      %p934 = pneg %p466
      %p935 = pneg %p463
      %p936 = pneg %p487
      %p937 = pneg %p484
      %p938 = pneg %p508
      %p939 = pneg %p505
      %p940 = pneg %p529
      %p941 = pneg %p526
      %p942 = pneg %p550
      %p943 = pneg %p547
      %p944 = pneg %p571
      %p945 = pneg %p568
      %p946 = pneg %p592
      %p947 = pneg %p589
      %p948 = pneg %p613
      %p949 = pneg %p610
      %p950 = pneg %p634
      %p951 = pneg %p631
      %p952 = pneg %p655
      %p953 = pneg %p652
      %p954 = pneg %p676
      %p955 = pneg %p673
      %p956 = pneg %p697
      %p957 = pneg %p694
      %p958 = pneg %p723
      %p959 = pneg %p720
      %p960 = scmp.lt.s32.totalorder %s73, 1
      %s961 = scalar_select %p960, %s73, 1
      %s962 = smul.addr %s961, 4
      %s963 = smul.addr %s962, 8
      %s964 = scalar_lea.vmem %s59, %s963
      %p965 = pneg %p749
      %p966 = pneg %p746
      %p967 = scmp.lt.s32.totalorder %s73, 1
      %s968 = scalar_select %p967, %s73, 1
      %s969 = smul.addr %s968, 8
      %s970 = smul.addr %s969, 8
      %s971 = scalar_lea.vmem %s61, %s970
      %p972 = scmp.lt.s32.totalorder %s73, 1
      %s973 = scalar_select %p972, %s73, 1
      %s974 = smul.addr %s973, 8
      %s975 = smul.addr %s974, 8
      %s976 = scalar_lea.vmem %s1, %s975
      %p977 = scmp.lt.s32.totalorder %s73, 1
      %s978 = scalar_select %p977, %s73, 1
      %s979 = smul.addr %s978, 8
      %s980 = smul.addr %s979, 8
      %s981 = scalar_lea.vmem %s3, %s980
      %p982 = scmp.lt.s32.totalorder %s73, 1
      %s983 = scalar_select %p982, %s73, 1
      %s984 = smul.addr %s983, 2
      %s985 = smul.addr %s984, 8
      %s986 = scalar_lea.vmem %s5, %s985
      %p987 = scmp.lt.s32.totalorder %s73, 1
      %s988 = scalar_select %p987, %s73, 1
      %s989 = smul.addr %s988, 4
      %s990 = scalar_lea.vmem %s7, %s989
      %p991 = scmp.lt.s32.totalorder %s73, 1
      %s992 = scalar_select %p991, %s73, 1
      %s993 = smul.addr %s992, 4
      %s994 = smul.addr %s993, 8
      %s995 = scalar_lea.vmem %s59, %s994
      %p996 = scmp.lt.s32.totalorder %s73, 1
      %s997 = scalar_select %p996, %s73, 1
      %s998 = smul.addr %s997, 8
      %s999 = smul.addr %s998, 8
      %s1000 = scalar_lea.vmem %s61, %s999
      %v1001 = vld [vmem:[%s13] sm:$0xff]
      %v1002 = vld [vmem:[%s13 + $0x8] sm:$0xff]
      %v1003 = vld [vmem:[%s13 + $0x10] sm:$0xff]
      %v1004 = vld [vmem:[%s13 + $0x18] sm:$0xff]
      %v1005 = vld [vmem:[%s976] sm:$0xff]
      %v1006 = vld [vmem:[%s976 + $0x8] sm:$0xff]
      %v1007 = vld [vmem:[%s976 + $0x10] sm:$0xff]
      %v1008 = vld [vmem:[%s976 + $0x18] sm:$0xff]
      %v1009 = vld [vmem:[%s976 + $0x20] sm:$0xff]
      %v1010 = vld [vmem:[%s976 + $0x28] sm:$0xff]
      %v1011 = vld [vmem:[%s976 + $0x30] sm:$0xff]
      %v1012 = vld [vmem:[%s976 + $0x38] sm:$0xff]
      %v1013 = vld [vmem:[%s11] sm:$0x3]
      %v1014 = vld [vmem:[%s981] sm:$0xff]
      %v1015 = vld [vmem:[%s981 + $0x8] sm:$0xff]
      %v1016 = vld [vmem:[%s981 + $0x10] sm:$0xff]
      %v1017 = vld [vmem:[%s981 + $0x18] sm:$0xff]
      %v1018 = vld [vmem:[%s981 + $0x20] sm:$0xff]
      %v1019 = vld [vmem:[%s981 + $0x28] sm:$0xff]
      %v1020 = vld [vmem:[%s981 + $0x30] sm:$0xff]
      %v1021 = vld [vmem:[%s981 + $0x38] sm:$0xff]
      %v1022 = vld [vmem:[%s986] sm:$0xff]
      %v1023 = vld [vmem:[%s986 + $0x8] sm:$0xff]
      %v1024 = vld [vmem:[%s990] sm:$0xf]
      %v1025 = vld [vmem:[%s21] sm:$0xff]
      %v1026 = vld [vmem:[%s21 + $0x8] sm:$0xff]
      %v1027 = vld [vmem:[%s21 + $0x10] sm:$0xff]
      %v1028 = vld [vmem:[%s21 + $0x18] sm:$0xff]
      %v1029 = vld [vmem:[%s21 + $0x20] sm:$0xff]
      %v1030 = vld [vmem:[%s21 + $0x28] sm:$0xff]
      %v1031 = vld [vmem:[%s21 + $0x30] sm:$0xff]
      %v1032 = vld [vmem:[%s21 + $0x38] sm:$0xff]
      %v1033 = vld [vmem:[%s23] sm:$0xff]
      %v1034 = vld [vmem:[%s23 + $0x8] sm:$0xff]
      %v1035 = vld [vmem:[%s25] sm:$0xf]
      %v1036 = vld [vmem:[%s15] sm:$0xff]
      %v1037 = vld [vmem:[%s15 + $0x8] sm:$0xff]
      %v1038 = vld [vmem:[%s15 + $0x10] sm:$0xff]
      %v1039 = vld [vmem:[%s15 + $0x18] sm:$0xff]
      %v1040 = vld [vmem:[%s15 + $0x20] sm:$0xff]
      %v1041 = vld [vmem:[%s15 + $0x28] sm:$0xff]
      %v1042 = vld [vmem:[%s15 + $0x30] sm:$0xff]
      %v1043 = vld [vmem:[%s15 + $0x38] sm:$0xff]
      %v1044 = vld [vmem:[%s15 + $0x40] sm:$0xff]
      %v1045 = vld [vmem:[%s15 + $0x48] sm:$0xff]
      %v1046 = vld [vmem:[%s15 + $0x50] sm:$0xff]
      %v1047 = vld [vmem:[%s15 + $0x58] sm:$0xff]
      %v1048 = vld [vmem:[%s15 + $0x60] sm:$0xff]
      %v1049 = vld [vmem:[%s15 + $0x68] sm:$0xff]
      %v1050 = vld [vmem:[%s15 + $0x70] sm:$0xff]
      %v1051 = vld [vmem:[%s15 + $0x78] sm:$0xff]
      %v1052 = vld [vmem:[%s15 + $0x80] sm:$0xff]
      %v1053 = vld [vmem:[%s15 + $0x88] sm:$0xff]
      %v1054 = vld [vmem:[%s15 + $0x90] sm:$0xff]
      %v1055 = vld [vmem:[%s15 + $0x98] sm:$0xff]
      %v1056 = vld [vmem:[%s15 + $0xa0] sm:$0xff]
      %v1057 = vld [vmem:[%s15 + $0xa8] sm:$0xff]
      %v1058 = vld [vmem:[%s15 + $0xb0] sm:$0xff]
      %v1059 = vld [vmem:[%s15 + $0xb8] sm:$0xff]
      %v1060 = vld [vmem:[%s15 + $0xc0] sm:$0xff]
      %v1061 = vld [vmem:[%s15 + $0xc8] sm:$0xff]
      %v1062 = vld [vmem:[%s15 + $0xd0] sm:$0xff]
      %v1063 = vld [vmem:[%s15 + $0xd8] sm:$0xff]
      %v1064 = vld [vmem:[%s15 + $0xe0] sm:$0xff]
      %v1065 = vld [vmem:[%s15 + $0xe8] sm:$0xff]
      %v1066 = vld [vmem:[%s15 + $0xf0] sm:$0xff]
      %v1067 = vld [vmem:[%s15 + $0xf8] sm:$0xff]
      %v1068 = vld [vmem:[%s17] sm:$0xff]
      %v1069 = vld [vmem:[%s17 + $0x8] sm:$0xff]
      %v1070 = vld [vmem:[%s17 + $0x10] sm:$0xff]
      %v1071 = vld [vmem:[%s17 + $0x18] sm:$0xff]
      %v1072 = vld [vmem:[%s17 + $0x20] sm:$0xff]
      %v1073 = vld [vmem:[%s17 + $0x28] sm:$0xff]
      %v1074 = vld [vmem:[%s17 + $0x30] sm:$0xff]
      %v1075 = vld [vmem:[%s17 + $0x38] sm:$0xff]
      %v1076 = vld [vmem:[%s17 + $0x40] sm:$0xff]
      %v1077 = vld [vmem:[%s17 + $0x48] sm:$0xff]
      %v1078 = vld [vmem:[%s17 + $0x50] sm:$0xff]
      %v1079 = vld [vmem:[%s17 + $0x58] sm:$0xff]
      %v1080 = vld [vmem:[%s17 + $0x60] sm:$0xff]
      %v1081 = vld [vmem:[%s17 + $0x68] sm:$0xff]
      %v1082 = vld [vmem:[%s17 + $0x70] sm:$0xff]
      %v1083 = vld [vmem:[%s17 + $0x78] sm:$0xff]
      %v1084 = vld [vmem:[%s17 + $0x80] sm:$0xff]
      %v1085 = vld [vmem:[%s17 + $0x88] sm:$0xff]
      %v1086 = vld [vmem:[%s17 + $0x90] sm:$0xff]
      %v1087 = vld [vmem:[%s17 + $0x98] sm:$0xff]
      %v1088 = vld [vmem:[%s17 + $0xa0] sm:$0xff]
      %v1089 = vld [vmem:[%s17 + $0xa8] sm:$0xff]
      %v1090 = vld [vmem:[%s17 + $0xb0] sm:$0xff]
      %v1091 = vld [vmem:[%s17 + $0xb8] sm:$0xff]
      %v1092 = vld [vmem:[%s17 + $0xc0] sm:$0xff]
      %v1093 = vld [vmem:[%s17 + $0xc8] sm:$0xff]
      %v1094 = vld [vmem:[%s17 + $0xd0] sm:$0xff]
      %v1095 = vld [vmem:[%s17 + $0xd8] sm:$0xff]
      %v1096 = vld [vmem:[%s17 + $0xe0] sm:$0xff]
      %v1097 = vld [vmem:[%s17 + $0xe8] sm:$0xff]
      %v1098 = vld [vmem:[%s17 + $0xf0] sm:$0xff]
      %v1099 = vld [vmem:[%s17 + $0xf8] sm:$0xff]
      %v1100 = vld [vmem:[%s19] sm:$0xff]
      %v1101 = vld [vmem:[%s19 + $0x8] sm:$0xff]
      %v1102 = vld [vmem:[%s19 + $0x10] sm:$0xff]
      %v1103 = vld [vmem:[%s19 + $0x18] sm:$0xff]
      %v1104 = vld [vmem:[%s19 + $0x20] sm:$0xff]
      %v1105 = vld [vmem:[%s19 + $0x28] sm:$0xff]
      %v1106 = vld [vmem:[%s19 + $0x30] sm:$0xff]
      %v1107 = vld [vmem:[%s19 + $0x38] sm:$0xff]
      %v1108 = vld [vmem:[%s19 + $0x40] sm:$0xff]
      %v1109 = vld [vmem:[%s19 + $0x48] sm:$0xff]
      %v1110 = vld [vmem:[%s19 + $0x50] sm:$0xff]
      %v1111 = vld [vmem:[%s19 + $0x58] sm:$0xff]
      %v1112 = vld [vmem:[%s19 + $0x60] sm:$0xff]
      %v1113 = vld [vmem:[%s19 + $0x68] sm:$0xff]
      %v1114 = vld [vmem:[%s19 + $0x70] sm:$0xff]
      %v1115 = vld [vmem:[%s19 + $0x78] sm:$0xff]
      %v1116 = vld [vmem:[%s19 + $0x80] sm:$0xff]
      %v1117 = vld [vmem:[%s19 + $0x88] sm:$0xff]
      %v1118 = vld [vmem:[%s19 + $0x90] sm:$0xff]
      %v1119 = vld [vmem:[%s19 + $0x98] sm:$0xff]
      %v1120 = vld [vmem:[%s19 + $0xa0] sm:$0xff]
      %v1121 = vld [vmem:[%s19 + $0xa8] sm:$0xff]
      %v1122 = vld [vmem:[%s19 + $0xb0] sm:$0xff]
      %v1123 = vld [vmem:[%s19 + $0xb8] sm:$0xff]
      %v1124 = vld [vmem:[%s19 + $0xc0] sm:$0xff]
      %v1125 = vld [vmem:[%s19 + $0xc8] sm:$0xff]
      %v1126 = vld [vmem:[%s19 + $0xd0] sm:$0xff]
      %v1127 = vld [vmem:[%s19 + $0xd8] sm:$0xff]
      %v1128 = vld [vmem:[%s19 + $0xe0] sm:$0xff]
      %v1129 = vld [vmem:[%s19 + $0xe8] sm:$0xff]
      %v1130 = vld [vmem:[%s19 + $0xf0] sm:$0xff]
      %v1131 = vld [vmem:[%s19 + $0xf8] sm:$0xff]
      %v1132 = vld [vmem:[%s53] sm:$0xff]
      %v1133 = vld [vmem:[%s53 + $0x8] sm:$0xff]
      %v1134 = vld [vmem:[%s53 + $0x10] sm:$0xff]
      %v1135 = vld [vmem:[%s53 + $0x18] sm:$0xff]
      %v1136 = vld [vmem:[%s53 + $0x20] sm:$0x1]
      %v1137 = vld [vmem:[%s55] sm:$0xff]
      %v1138 = vld [vmem:[%s55 + $0x8] sm:$0xff]
      %v1139 = vld [vmem:[%s55 + $0x10] sm:$0xff]
      %v1140 = vld [vmem:[%s55 + $0x18] sm:$0xff]
      %v1141 = vld [vmem:[%s55 + $0x20] sm:$0xff]
      %v1142 = vld [vmem:[%s55 + $0x28] sm:$0xff]
      %v1143 = vld [vmem:[%s55 + $0x30] sm:$0xff]
      %v1144 = vld [vmem:[%s55 + $0x38] sm:$0xff]
      %v1145 = vld [vmem:[%s55 + $0x40] sm:$0x1]
      %v1146 = vld [vmem:[%s57] sm:$0xff]
      %v1147 = vld [vmem:[%s57 + $0x8] sm:$0xff]
      %v1148 = vld [vmem:[%s57 + $0x10] sm:$0xff]
      %v1149 = vld [vmem:[%s57 + $0x18] sm:$0xff]
      %v1150 = vld [vmem:[%s57 + $0x20] sm:$0xff]
      %v1151 = vld [vmem:[%s57 + $0x28] sm:$0xff]
      %v1152 = vld [vmem:[%s57 + $0x30] sm:$0xff]
      %v1153 = vld [vmem:[%s57 + $0x38] sm:$0xff]
      %v1154 = vld [vmem:[%s57 + $0x40] sm:$0x1]
      %1155 = vst [vmem:[%s995] sm:$0xff] 0.0
      %1156 = vst [vmem:[%s995 + $0x8] sm:$0xff] 0.0
      %1157 = vst [vmem:[%s995 + $0x10] sm:$0xff] 0.0
      %1158 = vst [vmem:[%s995 + $0x18] sm:$0xff] 0.0
      %v1159 = vld [vmem:[%s9] sm:$0xff]
      %vm1160 = vcmask 261120
      %v1161 = vsel %vm1160, %v1159, 0.0
      %1162 = vadd.xlane.f32.xlu0 %v1161
      %v1163 = vpop.xlane.xlu0 %1162
      %v1164 = vrcp.pop 32.0
      %v1165 = vmul.f32 %v1163, %v1164
      %v1166 = vmul.f32 %v1159, %v1159
      %v1167 = vsel %vm1160, %v1166, 0.0
      %1168 = vadd.xlane.f32.xlu0 %v1167
      %v1169 = vpop.xlane.xlu0 %1168
      %v1170 = vmul.f32 %v1169, %v1164
      %v1171 = vmul.f32 %v1165, %v1165
      %v1172 = vsub.f32 %v1170, %v1171
      %v1173 = vsub.f32 %v1159, %v1165
      %v1174 = vadd.f32 %v1172, 1e-05
      %v1175 = vrsqrt.pop %v1174
      %v1176 = vmul.f32 %v1173, %v1175
      %v1177 = vlaneseq
      %v1178 = vshrl.u32 %v1177, 7
      %v1179 = vsub.s32 0, %v1178
      %v1180 = vrot.slane %v1013, %v1179
      %v1181 = vmul.f32 %v1176, %v1180
      %v1182 = vlaneseq
      %v1183 = vshrl.u32 %v1182, 7
      %v1184 = vsub.s32 1, %v1183
      %v1185 = vrot.slane %v1013, %v1184
      %v1186 = vadd.f32 %v1181, %v1185
      %v1187 = vlaneseq
      %v1188 = vshrl.u32 %v1187, 7
      %v1189 = vsub.s32 0, %v1188
      %v1190 = vrot.slane %v1136, %v1189
      %v1192 = vsel %vm1160, %v1186, 0
      %1194 = vmatprep.subr.mxu0 0.0
      %1195 = vmatpush1.msra.mxu0 %v1132
      %1196 = vmatprep.subr.mxu0 0.0
      %1197 = vmatpush1.msra.mxu0 %v1133
      %1198 = vmatprep.subr.mxu0 0.0
      %1199 = vmatpush1.msra.mxu0 %v1134
      %1200 = vmatprep.subr.mxu0 0.0
      %1201 = vmatpush1.msra.mxu0 %v1135
      %1202 = vmatprep.subr.mxu0 0.0
      %1203 = vmatpush1.msra.mxu0 0.0
      %1204 = vmatprep.subr.mxu0 0.0
      %1205 = vmatpush1.msra.mxu0 0.0
      %1206 = vmatprep.subr.mxu0 0.0
      %1207 = vmatpush1.msra.mxu0 0.0
      %1208 = vmatprep.subr.mxu0 0.0
      %1209 = vmatpush1.msra.mxu0 0.0
      %1210 = vmatprep.subr.mxu0 0.0
      %1211 = vmatpush1.msra.mxu0 0.0
      %1212 = vmatprep.subr.mxu0 0.0
      %1213 = vmatpush1.msra.mxu0 0.0
      %1214 = vmatprep.subr.mxu0 0.0
      %1215 = vmatpush1.msra.mxu0 0.0
      %1216 = vmatprep.subr.mxu0 0.0
      %1217 = vmatpush1.msra.mxu0 0.0
      %1218 = vmatprep.subr.mxu0 0.0
      %1219 = vmatpush1.msra.mxu0 0.0
      %1220 = vmatprep.subr.mxu0 0.0
      %1221 = vmatpush1.msra.mxu0 0.0
      %1222 = vmatprep.subr.mxu0 0.0
      %1223 = vmatpush1.msra.mxu0 0.0
      %1224 = vmatprep.subr.mxu0 0.0
      %1225 = vmatpush1.msra.mxu0 0.0
      %1226 = vmatprep.subr.mxu0 0.0
      %1227 = vmatpush1.msra.mxu0 0.0
      %1228 = vmatprep.subr.mxu0 0.0
      %1229 = vmatpush1.msra.mxu0 0.0
      %1230 = vmatprep.subr.mxu0 0.0
      %1231 = vmatpush1.msra.mxu0 0.0
      %1232 = vmatprep.subr.mxu0 0.0
      %1233 = vmatpush1.msra.mxu0 0.0
      %1234 = vmatprep.subr.mxu0 0.0
      %1235 = vmatpush1.msra.mxu0 0.0
      %1236 = vmatprep.subr.mxu0 0.0
      %1237 = vmatpush1.msra.mxu0 0.0
      %1238 = vmatprep.subr.mxu0 0.0
      %1239 = vmatpush1.msra.mxu0 0.0
      %1240 = vmatprep.subr.mxu0 0.0
      %1241 = vmatpush1.msra.mxu0 0.0
      %1242 = vmatprep.subr.mxu0 0.0
      %1243 = vmatpush1.msra.mxu0 0.0
      %1244 = vmatprep.subr.mxu0 0.0
      %1245 = vmatpush1.msra.mxu0 0.0
      %1246 = vmatprep.subr.mxu0 0.0
      %1247 = vmatpush1.msra.mxu0 0.0
      %1248 = vmatprep.subr.mxu0 0.0
      %1249 = vmatpush1.msra.mxu0 0.0
      %1250 = vmatprep.subr.mxu0 0.0
      %1251 = vmatpush1.msra.mxu0 0.0
      %1252 = vmatprep.subr.mxu0 0.0
      %1253 = vmatpush1.msra.mxu0 0.0
      %1254 = vmatprep.subr.mxu0 0.0
      %1255 = vmatpush1.msra.mxu0 0.0
      %1256 = vmatprep.subr.mxu0 0.0
      %1257 = vmatpush1.msra.mxu0 0.0
      %1258 = vmatprep.mubr.f32.mxu0 0.0
      %1259 = vmatmul.mubr.f32.gmra.mrb[0].mxu0 %v1192
      %v1260 = vpop.f32.mrb[0].mxu0
      %v1261 = vadd.f32 %v1190, %v1260
      %v1262 = vpop.f32.mrb[0].mxu0
      %1263 = vdwg.mxu0
      %1265 = vrot.lane.b32.xlu0 %v1261, 64
      %v1266 = vpop.permute.xlu0 %1265
      %vm1268 = vcmask 39936
      %1269 = vst.msk [vmem:[%s995] sm:$0xff] %vm1268, %v1266
      %v1270 = vmax.f32 %v1261, 0.0
      %v1271 = vlaneseq
      %v1272 = vshrl.u32 %v1271, 7
      %v1273 = vsub.s32 0, %v1272
      %v1274 = vrot.slane %v1145, %v1273
      %vm1275 = vcmask 523264
      %v1277 = vsel %vm1275, %v1270, 0
      %1279 = vmatprep.subr.mxu0 0.0
      %1280 = vmatpush1.msra.mxu0 %v1137
      %1281 = vmatprep.subr.mxu0 0.0
      %1282 = vmatpush1.msra.mxu0 %v1138
      %1283 = vmatprep.subr.mxu0 0.0
      %1284 = vmatpush1.msra.mxu0 %v1139
      %1285 = vmatprep.subr.mxu0 0.0
      %1286 = vmatpush1.msra.mxu0 %v1140
      %1287 = vmatprep.subr.mxu0 0.0
      %1288 = vmatpush1.msra.mxu0 %v1141
      %1289 = vmatprep.subr.mxu0 0.0
      %1290 = vmatpush1.msra.mxu0 %v1142
      %1291 = vmatprep.subr.mxu0 0.0
      %1292 = vmatpush1.msra.mxu0 %v1143
      %1293 = vmatprep.subr.mxu0 0.0
      %1294 = vmatpush1.msra.mxu0 %v1144
      %1295 = vmatprep.subr.mxu0 0.0
      %1296 = vmatpush1.msra.mxu0 0.0
      %1297 = vmatprep.subr.mxu0 0.0
      %1298 = vmatpush1.msra.mxu0 0.0
      %1299 = vmatprep.subr.mxu0 0.0
      %1300 = vmatpush1.msra.mxu0 0.0
      %1301 = vmatprep.subr.mxu0 0.0
      %1302 = vmatpush1.msra.mxu0 0.0
      %1303 = vmatprep.subr.mxu0 0.0
      %1304 = vmatpush1.msra.mxu0 0.0
      %1305 = vmatprep.subr.mxu0 0.0
      %1306 = vmatpush1.msra.mxu0 0.0
      %1307 = vmatprep.subr.mxu0 0.0
      %1308 = vmatpush1.msra.mxu0 0.0
      %1309 = vmatprep.subr.mxu0 0.0
      %1310 = vmatpush1.msra.mxu0 0.0
      %1311 = vmatprep.subr.mxu0 0.0
      %1312 = vmatpush1.msra.mxu0 0.0
      %1313 = vmatprep.subr.mxu0 0.0
      %1314 = vmatpush1.msra.mxu0 0.0
      %1315 = vmatprep.subr.mxu0 0.0
      %1316 = vmatpush1.msra.mxu0 0.0
      %1317 = vmatprep.subr.mxu0 0.0
      %1318 = vmatpush1.msra.mxu0 0.0
      %1319 = vmatprep.subr.mxu0 0.0
      %1320 = vmatpush1.msra.mxu0 0.0
      %1321 = vmatprep.subr.mxu0 0.0
      %1322 = vmatpush1.msra.mxu0 0.0
      %1323 = vmatprep.subr.mxu0 0.0
      %1324 = vmatpush1.msra.mxu0 0.0
      %1325 = vmatprep.subr.mxu0 0.0
      %1326 = vmatpush1.msra.mxu0 0.0
      %1327 = vmatprep.subr.mxu0 0.0
      %1328 = vmatpush1.msra.mxu0 0.0
      %1329 = vmatprep.subr.mxu0 0.0
      %1330 = vmatpush1.msra.mxu0 0.0
      %1331 = vmatprep.subr.mxu0 0.0
      %1332 = vmatpush1.msra.mxu0 0.0
      %1333 = vmatprep.subr.mxu0 0.0
      %1334 = vmatpush1.msra.mxu0 0.0
      %1335 = vmatprep.subr.mxu0 0.0
      %1336 = vmatpush1.msra.mxu0 0.0
      %1337 = vmatprep.subr.mxu0 0.0
      %1338 = vmatpush1.msra.mxu0 0.0
      %1339 = vmatprep.subr.mxu0 0.0
      %1340 = vmatpush1.msra.mxu0 0.0
      %1341 = vmatprep.subr.mxu0 0.0
      %1342 = vmatpush1.msra.mxu0 0.0
      %1343 = vmatprep.mubr.f32.mxu0 0.0
      %1344 = vmatmul.mubr.f32.gmra.mrb[0].mxu0 %v1277
      %v1345 = vpop.f32.mrb[0].mxu0
      %v1346 = vadd.f32 %v1274, %v1345
      %v1347 = vpop.f32.mrb[0].mxu0
      %1348 = vdwg.mxu0
      %v1349 = vmax.f32 %v1346, 0.0
      %v1350 = vlaneseq
      %v1351 = vshrl.u32 %v1350, 7
      %v1352 = vsub.s32 0, %v1351
      %v1353 = vrot.slane %v1154, %v1352
      %v1355 = vsel %vm1275, %v1349, 0
      %1357 = vmatprep.subr.mxu0 0.0
      %1358 = vmatpush1.msra.mxu0 %v1146
      %1359 = vmatprep.subr.mxu0 0.0
      %1360 = vmatpush1.msra.mxu0 %v1147
      %1361 = vmatprep.subr.mxu0 0.0
      %1362 = vmatpush1.msra.mxu0 %v1148
      %1363 = vmatprep.subr.mxu0 0.0
      %1364 = vmatpush1.msra.mxu0 %v1149
      %1365 = vmatprep.subr.mxu0 0.0
      %1366 = vmatpush1.msra.mxu0 %v1150
      %1367 = vmatprep.subr.mxu0 0.0
      %1368 = vmatpush1.msra.mxu0 %v1151
      %1369 = vmatprep.subr.mxu0 0.0
      %1370 = vmatpush1.msra.mxu0 %v1152
      %1371 = vmatprep.subr.mxu0 0.0
      %1372 = vmatpush1.msra.mxu0 %v1153
      %1373 = vmatprep.subr.mxu0 0.0
      %1374 = vmatpush1.msra.mxu0 0.0
      %1375 = vmatprep.subr.mxu0 0.0
      %1376 = vmatpush1.msra.mxu0 0.0
      %1377 = vmatprep.subr.mxu0 0.0
      %1378 = vmatpush1.msra.mxu0 0.0
      %1379 = vmatprep.subr.mxu0 0.0
      %1380 = vmatpush1.msra.mxu0 0.0
      %1381 = vmatprep.subr.mxu0 0.0
      %1382 = vmatpush1.msra.mxu0 0.0
      %1383 = vmatprep.subr.mxu0 0.0
      %1384 = vmatpush1.msra.mxu0 0.0
      %1385 = vmatprep.subr.mxu0 0.0
      %1386 = vmatpush1.msra.mxu0 0.0
      %1387 = vmatprep.subr.mxu0 0.0
      %1388 = vmatpush1.msra.mxu0 0.0
      %1389 = vmatprep.subr.mxu0 0.0
      %1390 = vmatpush1.msra.mxu0 0.0
      %1391 = vmatprep.subr.mxu0 0.0
      %1392 = vmatpush1.msra.mxu0 0.0
      %1393 = vmatprep.subr.mxu0 0.0
      %1394 = vmatpush1.msra.mxu0 0.0
      %1395 = vmatprep.subr.mxu0 0.0
      %1396 = vmatpush1.msra.mxu0 0.0
      %1397 = vmatprep.subr.mxu0 0.0
      %1398 = vmatpush1.msra.mxu0 0.0
      %1399 = vmatprep.subr.mxu0 0.0
      %1400 = vmatpush1.msra.mxu0 0.0
      %1401 = vmatprep.subr.mxu0 0.0
      %1402 = vmatpush1.msra.mxu0 0.0
      %1403 = vmatprep.subr.mxu0 0.0
      %1404 = vmatpush1.msra.mxu0 0.0
      %1405 = vmatprep.subr.mxu0 0.0
      %1406 = vmatpush1.msra.mxu0 0.0
      %1407 = vmatprep.subr.mxu0 0.0
      %1408 = vmatpush1.msra.mxu0 0.0
      %1409 = vmatprep.subr.mxu0 0.0
      %1410 = vmatpush1.msra.mxu0 0.0
      %1411 = vmatprep.subr.mxu0 0.0
      %1412 = vmatpush1.msra.mxu0 0.0
      %1413 = vmatprep.subr.mxu0 0.0
      %1414 = vmatpush1.msra.mxu0 0.0
      %1415 = vmatprep.subr.mxu0 0.0
      %1416 = vmatpush1.msra.mxu0 0.0
      %1417 = vmatprep.subr.mxu0 0.0
      %1418 = vmatpush1.msra.mxu0 0.0
      %1419 = vmatprep.subr.mxu0 0.0
      %1420 = vmatpush1.msra.mxu0 0.0
      %1421 = vmatprep.mubr.f32.mxu0 0.0
      %1422 = vmatmul.mubr.f32.gmra.mrb[0].mxu0 %v1355
      %v1423 = vpop.f32.mrb[0].mxu0
      %v1424 = vadd.f32 %v1353, %v1423
      %v1425 = vpop.f32.mrb[0].mxu0
      %1426 = vdwg.mxu0
      %v1428 = vsel %vm1160, %v1424, 0
      %1430 = vmatprep.subr.mxu0 %v1006
      %1431 = vmatpush1.msra.mxu0 %v1005
      %1432 = vmatprep.subr.mxu0 %v1008
      %1433 = vmatpush1.msra.mxu0 %v1007
      %1434 = vmatprep.subr.mxu0 %v1010
      %1435 = vmatpush1.msra.mxu0 %v1009
      %1436 = vmatprep.subr.mxu0 %v1012
      %1437 = vmatpush1.msra.mxu0 %v1011
      %1438 = vmatprep.subr.mxu0 0.0
      %1439 = vmatpush1.msra.mxu0 0.0
      %1440 = vmatprep.subr.mxu0 0.0
      %1441 = vmatpush1.msra.mxu0 0.0
      %1442 = vmatprep.subr.mxu0 0.0
      %1443 = vmatpush1.msra.mxu0 0.0
      %1444 = vmatprep.subr.mxu0 0.0
      %1445 = vmatpush1.msra.mxu0 0.0
      %1446 = vmatprep.subr.mxu0 0.0
      %1447 = vmatpush1.msra.mxu0 0.0
      %1448 = vmatprep.subr.mxu0 0.0
      %1449 = vmatpush1.msra.mxu0 0.0
      %1450 = vmatprep.subr.mxu0 0.0
      %1451 = vmatpush1.msra.mxu0 0.0
      %1452 = vmatprep.subr.mxu0 0.0
      %1453 = vmatpush1.msra.mxu0 0.0
      %1454 = vmatprep.subr.mxu0 0.0
      %1455 = vmatpush1.msra.mxu0 0.0
      %1456 = vmatprep.subr.mxu0 0.0
      %1457 = vmatpush1.msra.mxu0 0.0
      %1458 = vmatprep.subr.mxu0 0.0
      %1459 = vmatpush1.msra.mxu0 0.0
      %1460 = vmatprep.subr.mxu0 0.0
      %1461 = vmatpush1.msra.mxu0 0.0
      %1462 = vmatprep.subr.mxu0 0.0
      %1463 = vmatpush1.msra.mxu0 0.0
      %1464 = vmatprep.subr.mxu0 0.0
      %1465 = vmatpush1.msra.mxu0 0.0
      %1466 = vmatprep.subr.mxu0 0.0
      %1467 = vmatpush1.msra.mxu0 0.0
      %1468 = vmatprep.subr.mxu0 0.0
      %1469 = vmatpush1.msra.mxu0 0.0
      %1470 = vmatprep.subr.mxu0 0.0
      %1471 = vmatpush1.msra.mxu0 0.0
      %1472 = vmatprep.subr.mxu0 0.0
      %1473 = vmatpush1.msra.mxu0 0.0
      %1474 = vmatprep.subr.mxu0 0.0
      %1475 = vmatpush1.msra.mxu0 0.0
      %1476 = vmatprep.subr.mxu0 0.0
      %1477 = vmatpush1.msra.mxu0 0.0
      %1478 = vmatprep.subr.mxu0 0.0
      %1479 = vmatpush1.msra.mxu0 0.0
      %1480 = vmatprep.subr.mxu0 0.0
      %1481 = vmatpush1.msra.mxu0 0.0
      %1482 = vmatprep.subr.mxu0 0.0
      %1483 = vmatpush1.msra.mxu0 0.0
      %1484 = vmatprep.subr.mxu0 0.0
      %1485 = vmatpush1.msra.mxu0 0.0
      %1486 = vmatprep.subr.mxu0 0.0
      %1487 = vmatpush1.msra.mxu0 0.0
      %1488 = vmatprep.subr.mxu0 0.0
      %1489 = vmatpush1.msra.mxu0 0.0
      %1490 = vmatprep.subr.mxu0 0.0
      %1491 = vmatpush1.msra.mxu0 0.0
      %1492 = vmatprep.subr.mxu0 0.0
      %1493 = vmatpush1.msra.mxu0 0.0
      %1494 = vmatprep.mubr.f32.mxu0 0.0
      %1495 = vmatmul.mubr.f32.gmra.mrb[0].mxu0 %v1428
      %v1496 = vpop.f32.mrb[0].mxu0
      %v1497 = vadd.f32 0.0, %v1496
      %v1498 = vpop.f32.mrb[0].mxu0
      %v1499 = vadd.f32 0.0, %v1498
      %1500 = vdwg.mxu0
      %1501 = vst [vmem:[%s1000] sm:$0xff] %v1497
      %1502 = vst [vmem:[%s1000 + $0x8] sm:$0xff] %v1499
      %1503 = vmatprep.subr.mxu0 0.0
      %1504 = vmatpush1.msra.mxu0 %v1036
      %1505 = vmatprep.subr.mxu0 0.0
      %1506 = vmatpush1.msra.mxu0 %v1037
      %1507 = vmatprep.subr.mxu0 0.0
      %1508 = vmatpush1.msra.mxu0 %v1038
      %1509 = vmatprep.subr.mxu0 0.0
      %1510 = vmatpush1.msra.mxu0 %v1039
      %1511 = vmatprep.subr.mxu0 0.0
      %1512 = vmatpush1.msra.mxu0 %v1040
      %1513 = vmatprep.subr.mxu0 0.0
      %1514 = vmatpush1.msra.mxu0 %v1041
      %1515 = vmatprep.subr.mxu0 0.0
      %1516 = vmatpush1.msra.mxu0 %v1042
      %1517 = vmatprep.subr.mxu0 0.0
      %1518 = vmatpush1.msra.mxu0 %v1043
      %1519 = vmatprep.subr.mxu0 0.0
      %1520 = vmatpush1.msra.mxu0 %v1044
      %1521 = vmatprep.subr.mxu0 0.0
      %1522 = vmatpush1.msra.mxu0 %v1045
      %1523 = vmatprep.subr.mxu0 0.0
      %1524 = vmatpush1.msra.mxu0 %v1046
      %1525 = vmatprep.subr.mxu0 0.0
      %1526 = vmatpush1.msra.mxu0 %v1047
      %1527 = vmatprep.subr.mxu0 0.0
      %1528 = vmatpush1.msra.mxu0 %v1048
      %1529 = vmatprep.subr.mxu0 0.0
      %1530 = vmatpush1.msra.mxu0 %v1049
      %1531 = vmatprep.subr.mxu0 0.0
      %1532 = vmatpush1.msra.mxu0 %v1050
      %1533 = vmatprep.subr.mxu0 0.0
      %1534 = vmatpush1.msra.mxu0 %v1051
      %1535 = vmatprep.subr.mxu0 0.0
      %1536 = vmatpush1.msra.mxu0 %v1052
      %1537 = vmatprep.subr.mxu0 0.0
      %1538 = vmatpush1.msra.mxu0 %v1053
      %1539 = vmatprep.subr.mxu0 0.0
      %1540 = vmatpush1.msra.mxu0 %v1054
      %1541 = vmatprep.subr.mxu0 0.0
      %1542 = vmatpush1.msra.mxu0 %v1055
      %1543 = vmatprep.subr.mxu0 0.0
      %1544 = vmatpush1.msra.mxu0 %v1056
      %1545 = vmatprep.subr.mxu0 0.0
      %1546 = vmatpush1.msra.mxu0 %v1057
      %1547 = vmatprep.subr.mxu0 0.0
      %1548 = vmatpush1.msra.mxu0 %v1058
      %1549 = vmatprep.subr.mxu0 0.0
      %1550 = vmatpush1.msra.mxu0 %v1059
      %1551 = vmatprep.subr.mxu0 0.0
      %1552 = vmatpush1.msra.mxu0 %v1060
      %1553 = vmatprep.subr.mxu0 0.0
      %1554 = vmatpush1.msra.mxu0 %v1061
      %1555 = vmatprep.subr.mxu0 0.0
      %1556 = vmatpush1.msra.mxu0 %v1062
      %1557 = vmatprep.subr.mxu0 0.0
      %1558 = vmatpush1.msra.mxu0 %v1063
      %1559 = vmatprep.subr.mxu0 0.0
      %1560 = vmatpush1.msra.mxu0 %v1064
      %1561 = vmatprep.subr.mxu0 0.0
      %1562 = vmatpush1.msra.mxu0 %v1065
      %1563 = vmatprep.subr.mxu0 0.0
      %1564 = vmatpush1.msra.mxu0 %v1066
      %1565 = vmatprep.subr.mxu0 0.0
      %1566 = vmatpush1.msra.mxu0 %v1067
      %1567 = vmatprep.mubr.f32.mxu0 %v1499
      %1568 = vmatmul.mubr.f32.gmra.mrb[0].mxu0 %v1497
      %v1569 = vpop.f32.mrb[0].mxu0
      %v1570 = vadd.f32 0.0, %v1569
      %v1571 = vpop.f32.mrb[0].mxu0
      %1572 = vdwg.mxu0
      %v1573 = vsel %vm1275, %v1570, -inf
      %1574 = vmax.xlane.f32.xlu0 %v1573
      %v1575 = vpop.xlane.xlu0 %1574
      %vm1576 = vcmp.ge.f32.partialorder %v1575, 0.0
      %vm1577 = vcmp.lt.f32.partialorder %v1570, 0.0
      %v1578 = vsel %vm1576, 1, 0
      %vm1579 = vcmp.eq.s32.totalorder %v1578, 1
      %vm1580 = vmand %vm1577, %vm1579
      %v1581 = vsel %vm1580, -1e+30, 0.0
      %v1582 = vld [vmem:[%s51] sm:$0xff]
      %v1583 = vld [vmem:[%s51 + $0x8] sm:$0x3]
      %v1584 = vld [vmem:[%s31] sm:$0xff]
      %v1585 = vld [vmem:[%s31 + $0x8] sm:$0xff]
      %v1586 = vld [vmem:[%s31 + $0x10] sm:$0xff]
      %v1587 = vld [vmem:[%s31 + $0x18] sm:$0xff]
      %v1589 = vsel %vm1160, %v1014, 0
      %v1592 = vsel %vm1160, %v1015, 0
      %v1595 = vsel %vm1160, %v1016, 0
      %v1598 = vsel %vm1160, %v1017, 0
      %v1601 = vsel %vm1160, %v1018, 0
      %v1604 = vsel %vm1160, %v1019, 0
      %v1607 = vsel %vm1160, %v1020, 0
      %v1610 = vsel %vm1160, %v1021, 0
      %1612 = vmatprep.subr.mxu0 0.0
      %1613 = vmatpush1.msra.mxu0 %v1584
      %1614 = vmatprep.subr.mxu0 0.0
      %1615 = vmatpush1.msra.mxu0 %v1585
      %1616 = vmatprep.subr.mxu0 0.0
      %1617 = vmatpush1.msra.mxu0 %v1586
      %1618 = vmatprep.subr.mxu0 0.0
      %1619 = vmatpush1.msra.mxu0 %v1587
      %1620 = vmatprep.subr.mxu0 0.0
      %1621 = vmatpush1.msra.mxu0 0.0
      %1622 = vmatprep.subr.mxu0 0.0
      %1623 = vmatpush1.msra.mxu0 0.0
      %1624 = vmatprep.subr.mxu0 0.0
      %1625 = vmatpush1.msra.mxu0 0.0
      %1626 = vmatprep.subr.mxu0 0.0
      %1627 = vmatpush1.msra.mxu0 0.0
      %1628 = vmatprep.subr.mxu0 0.0
      %1629 = vmatpush1.msra.mxu0 0.0
      %1630 = vmatprep.subr.mxu0 0.0
      %1631 = vmatpush1.msra.mxu0 0.0
      %1632 = vmatprep.subr.mxu0 0.0
      %1633 = vmatpush1.msra.mxu0 0.0
      %1634 = vmatprep.subr.mxu0 0.0
      %1635 = vmatpush1.msra.mxu0 0.0
      %1636 = vmatprep.subr.mxu0 0.0
      %1637 = vmatpush1.msra.mxu0 0.0
      %1638 = vmatprep.subr.mxu0 0.0
      %1639 = vmatpush1.msra.mxu0 0.0
      %1640 = vmatprep.subr.mxu0 0.0
      %1641 = vmatpush1.msra.mxu0 0.0
      %1642 = vmatprep.subr.mxu0 0.0
      %1643 = vmatpush1.msra.mxu0 0.0
      %1644 = vmatprep.subr.mxu0 0.0
      %1645 = vmatpush1.msra.mxu0 0.0
      %1646 = vmatprep.subr.mxu0 0.0
      %1647 = vmatpush1.msra.mxu0 0.0
      %1648 = vmatprep.subr.mxu0 0.0
      %1649 = vmatpush1.msra.mxu0 0.0
      %1650 = vmatprep.subr.mxu0 0.0
      %1651 = vmatpush1.msra.mxu0 0.0
      %1652 = vmatprep.subr.mxu0 0.0
      %1653 = vmatpush1.msra.mxu0 0.0
      %1654 = vmatprep.subr.mxu0 0.0
      %1655 = vmatpush1.msra.mxu0 0.0
      %1656 = vmatprep.subr.mxu0 0.0
      %1657 = vmatpush1.msra.mxu0 0.0
      %1658 = vmatprep.subr.mxu0 0.0
      %1659 = vmatpush1.msra.mxu0 0.0
      %1660 = vmatprep.subr.mxu0 0.0
      %1661 = vmatpush1.msra.mxu0 0.0
      %1662 = vmatprep.subr.mxu0 0.0
      %1663 = vmatpush1.msra.mxu0 0.0
      %1664 = vmatprep.subr.mxu0 0.0
      %1665 = vmatpush1.msra.mxu0 0.0
      %1666 = vmatprep.subr.mxu0 0.0
      %1667 = vmatpush1.msra.mxu0 0.0
      %1668 = vmatprep.subr.mxu0 0.0
      %1669 = vmatpush1.msra.mxu0 0.0
      %1670 = vmatprep.subr.mxu0 0.0
      %1671 = vmatpush1.msra.mxu0 0.0
      %1672 = vmatprep.subr.mxu0 0.0
      %1673 = vmatpush1.msra.mxu0 0.0
      %1674 = vmatprep.subr.mxu0 0.0
      %1675 = vmatpush1.msra.mxu0 0.0
      %1676 = vmatprep.mubr.f32.mxu0 0.0
      %1677 = vmatmul.mubr.f32.gmra.mrb[0].mxu0 %v1589
      %v1678 = vpop.f32.mrb[0].mxu0
      %v1679 = vadd.f32 0.0, %v1678
      %v1680 = vpop.f32.mrb[0].mxu0
      %1681 = vmatprep.mubr.f32.mxu0 0.0
      %1682 = vmatmul.mubr.f32.gmra.mrb[0].mxu0 %v1592
      %v1683 = vpop.f32.mrb[0].mxu0
      %v1684 = vadd.f32 0.0, %v1683
      %v1685 = vpop.f32.mrb[0].mxu0
      %1686 = vmatprep.mubr.f32.mxu0 0.0
      %1687 = vmatmul.mubr.f32.gmra.mrb[0].mxu0 %v1595
      %v1688 = vpop.f32.mrb[0].mxu0
      %v1689 = vadd.f32 0.0, %v1688
      %v1690 = vpop.f32.mrb[0].mxu0
      %1691 = vmatprep.mubr.f32.mxu0 0.0
      %1692 = vmatmul.mubr.f32.gmra.mrb[0].mxu0 %v1598
      %v1693 = vpop.f32.mrb[0].mxu0
      %v1694 = vadd.f32 0.0, %v1693
      %v1695 = vpop.f32.mrb[0].mxu0
      %1696 = vmatprep.mubr.f32.mxu0 0.0
      %1697 = vmatmul.mubr.f32.gmra.mrb[0].mxu0 %v1601
      %v1698 = vpop.f32.mrb[0].mxu0
      %v1699 = vadd.f32 0.0, %v1698
      %v1700 = vpop.f32.mrb[0].mxu0
      %1701 = vmatprep.mubr.f32.mxu0 0.0
      %1702 = vmatmul.mubr.f32.gmra.mrb[0].mxu0 %v1604
      %v1703 = vpop.f32.mrb[0].mxu0
      %v1704 = vadd.f32 0.0, %v1703
      %v1705 = vpop.f32.mrb[0].mxu0
      %1706 = vmatprep.mubr.f32.mxu0 0.0
      %1707 = vmatmul.mubr.f32.gmra.mrb[0].mxu0 %v1607
      %v1708 = vpop.f32.mrb[0].mxu0
      %v1709 = vadd.f32 0.0, %v1708
      %v1710 = vpop.f32.mrb[0].mxu0
      %1711 = vmatprep.mubr.f32.mxu0 0.0
      %1712 = vmatmul.mubr.f32.gmra.mrb[0].mxu0 %v1610
      %v1713 = vpop.f32.mrb[0].mxu0
      %v1714 = vadd.f32 0.0, %v1713
      %v1715 = vpop.f32.mrb[0].mxu0
      %1716 = vdwg.mxu0
      %v1717 = vadd.f32 %v1679, %v1025
      %v1718 = vadd.f32 %v1684, %v1026
      %v1719 = vadd.f32 %v1689, %v1027
      %v1720 = vadd.f32 %v1694, %v1028
      %v1721 = vadd.f32 %v1699, %v1029
      %v1722 = vadd.f32 %v1704, %v1030
      %v1723 = vadd.f32 %v1709, %v1031
      %v1724 = vadd.f32 %v1714, %v1032
      %v1725 = vlaneseq
      %v1726 = vshrl.u32 %v1725, 7
      %v1727 = vsub.s32 0, %v1726
      %v1728 = vrot.slane %v1582, %v1727
      %1730 = vrot.lane.b32.xlu0 %v1728, 32
      %v1731 = vpop.permute.xlu0 %1730
      %v1733 = vadd.f32 %v1679, %v1731
      %v1734 = vadd.f32 %v1684, %v1731
      %v1735 = vadd.f32 %v1689, %v1731
      %v1736 = vadd.f32 %v1694, %v1731
      %v1737 = vadd.f32 %v1699, %v1731
      %v1738 = vadd.f32 %v1704, %v1731
      %v1739 = vadd.f32 %v1709, %v1731
      %v1740 = vadd.f32 %v1714, %v1731
      %v1741 = vld [vmem:[%s27] sm:$0xff]
      %v1742 = vld [vmem:[%s27 + $0x8] sm:$0xff]
      %v1743 = vld [vmem:[%s27 + $0x10] sm:$0xff]
      %v1744 = vld [vmem:[%s27 + $0x18] sm:$0xff]
      %v1745 = vld [vmem:[%s29] sm:$0xff]
      %v1746 = vld [vmem:[%s29 + $0x8] sm:$0xff]
      %v1747 = vld [vmem:[%s29 + $0x10] sm:$0xff]
      %v1748 = vld [vmem:[%s29 + $0x18] sm:$0xff]
      %v1749 = vld [vmem:[%s33] sm:$0xff]
      %v1750 = vld [vmem:[%s33 + $0x8] sm:$0xff]
      %v1751 = vld [vmem:[%s33 + $0x10] sm:$0xff]
      %v1752 = vld [vmem:[%s33 + $0x18] sm:$0xff]
      %v1754 = vsel %vm1160, %v1159, 0
      %1756 = vmatprep.subr.mxu0 0.0
      %1757 = vmatpush1.msra.mxu0 %v1741
      %1758 = vmatprep.subr.mxu0 0.0
      %1759 = vmatpush1.msra.mxu0 %v1742
      %1760 = vmatprep.subr.mxu0 0.0
      %1761 = vmatpush1.msra.mxu0 %v1743
      %1762 = vmatprep.subr.mxu0 0.0
      %1763 = vmatpush1.msra.mxu0 %v1744
      %1764 = vmatprep.subr.mxu0 0.0
      %1765 = vmatpush1.msra.mxu0 0.0
      %1766 = vmatprep.subr.mxu0 0.0
      %1767 = vmatpush1.msra.mxu0 0.0
      %1768 = vmatprep.subr.mxu0 0.0
      %1769 = vmatpush1.msra.mxu0 0.0
      %1770 = vmatprep.subr.mxu0 0.0
      %1771 = vmatpush1.msra.mxu0 0.0
      %1772 = vmatprep.subr.mxu0 0.0
      %1773 = vmatpush1.msra.mxu0 0.0
      %1774 = vmatprep.subr.mxu0 0.0
      %1775 = vmatpush1.msra.mxu0 0.0
      %1776 = vmatprep.subr.mxu0 0.0
      %1777 = vmatpush1.msra.mxu0 0.0
      %1778 = vmatprep.subr.mxu0 0.0
      %1779 = vmatpush1.msra.mxu0 0.0
      %1780 = vmatprep.subr.mxu0 0.0
      %1781 = vmatpush1.msra.mxu0 0.0
      %1782 = vmatprep.subr.mxu0 0.0
      %1783 = vmatpush1.msra.mxu0 0.0
      %1784 = vmatprep.subr.mxu0 0.0
      %1785 = vmatpush1.msra.mxu0 0.0
      %1786 = vmatprep.subr.mxu0 0.0
      %1787 = vmatpush1.msra.mxu0 0.0
      %1788 = vmatprep.subr.mxu0 0.0
      %1789 = vmatpush1.msra.mxu0 0.0
      %1790 = vmatprep.subr.mxu0 0.0
      %1791 = vmatpush1.msra.mxu0 0.0
      %1792 = vmatprep.subr.mxu0 0.0
      %1793 = vmatpush1.msra.mxu0 0.0
      %1794 = vmatprep.subr.mxu0 0.0
      %1795 = vmatpush1.msra.mxu0 0.0
      %1796 = vmatprep.subr.mxu0 0.0
      %1797 = vmatpush1.msra.mxu0 0.0
      %1798 = vmatprep.subr.mxu0 0.0
      %1799 = vmatpush1.msra.mxu0 0.0
      %1800 = vmatprep.subr.mxu0 0.0
      %1801 = vmatpush1.msra.mxu0 0.0
      %1802 = vmatprep.subr.mxu0 0.0
      %1803 = vmatpush1.msra.mxu0 0.0
      %1804 = vmatprep.subr.mxu0 0.0
      %1805 = vmatpush1.msra.mxu0 0.0
      %1806 = vmatprep.subr.mxu0 0.0
      %1807 = vmatpush1.msra.mxu0 0.0
      %1808 = vmatprep.subr.mxu0 0.0
      %1809 = vmatpush1.msra.mxu0 0.0
      %1810 = vmatprep.subr.mxu0 0.0
      %1811 = vmatpush1.msra.mxu0 0.0
      %1812 = vmatprep.subr.mxu0 0.0
      %1813 = vmatpush1.msra.mxu0 0.0
      %1814 = vmatprep.subr.mxu0 0.0
      %1815 = vmatpush1.msra.mxu0 0.0
      %1816 = vmatprep.subr.mxu0 0.0
      %1817 = vmatpush1.msra.mxu0 0.0
      %1818 = vmatprep.subr.mxu0 0.0
      %1819 = vmatpush1.msra.mxu0 0.0
      %1820 = vmatprep.mubr.f32.mxu0 0.0
      %1821 = vmatmul.mubr.f32.gmra.mrb[0].mxu0 %v1754
      %v1822 = vpop.f32.mrb[0].mxu0
      %v1823 = vadd.f32 0.0, %v1822
      %v1824 = vpop.f32.mrb[0].mxu0
      %1825 = vmatprep.mubr.f32.mxu0 0.0
      %1826 = vmatmul.mubr.f32.gmra.mrb[0].mxu0 %v1754
      %v1827 = vpop.f32.mrb[0].mxu0
      %v1828 = vadd.f32 0.0, %v1827
      %v1829 = vpop.f32.mrb[0].mxu0
      %1830 = vmatprep.mubr.f32.mxu0 0.0
      %1831 = vmatmul.mubr.f32.gmra.mrb[0].mxu0 %v1754
      %v1832 = vpop.f32.mrb[0].mxu0
      %v1833 = vadd.f32 0.0, %v1832
      %v1834 = vpop.f32.mrb[0].mxu0
      %1835 = vmatprep.mubr.f32.mxu0 0.0
      %1836 = vmatmul.mubr.f32.gmra.mrb[0].mxu0 %v1754
      %v1837 = vpop.f32.mrb[0].mxu0
      %v1838 = vadd.f32 0.0, %v1837
      %v1839 = vpop.f32.mrb[0].mxu0
      %1840 = vdwg.mxu0
      %v1841 = vmul.f32 %v1823, %v1001
      %v1842 = vmul.f32 %v1828, %v1002
      %v1843 = vmul.f32 %v1833, %v1003
      %v1844 = vmul.f32 %v1838, %v1004
      %v1845 = vadd.f32 %v1841, %v1745
      %v1846 = vadd.f32 %v1842, %v1746
      %v1847 = vadd.f32 %v1843, %v1747
      %v1848 = vadd.f32 %v1844, %v1748
      %v1850 = vsel %vm1160, %v1845, 0
      %v1853 = vsel %vm1160, %v1846, 0
      %v1856 = vsel %vm1160, %v1847, 0
      %v1859 = vsel %vm1160, %v1848, 0
      %v1862 = vsel %vm1160, %v1717, 0
      %v1865 = vsel %vm1160, %v1718, 0
      %v1868 = vsel %vm1160, %v1719, 0
      %v1871 = vsel %vm1160, %v1720, 0
      %v1874 = vsel %vm1160, %v1721, 0
      %v1877 = vsel %vm1160, %v1722, 0
      %v1880 = vsel %vm1160, %v1723, 0
      %v1883 = vsel %vm1160, %v1724, 0
      %1885 = vmatprep.subr.mxu0 0.0
      %1886 = vmatpush1.xpose.msra.mxu0 %v1862
      %1887 = vmatprep.subr.mxu0 0.0
      %1888 = vmatpush1.xpose.msra.mxu0 %v1865
      %1889 = vmatprep.subr.mxu0 0.0
      %1890 = vmatpush1.xpose.msra.mxu0 %v1868
      %1891 = vmatprep.subr.mxu0 0.0
      %1892 = vmatpush1.xpose.msra.mxu0 %v1871
      %1893 = vmatprep.subr.mxu0 0.0
      %1894 = vmatpush1.xpose.msra.mxu0 %v1874
      %1895 = vmatprep.subr.mxu0 0.0
      %1896 = vmatpush1.xpose.msra.mxu0 %v1877
      %1897 = vmatprep.subr.mxu0 0.0
      %1898 = vmatpush1.xpose.msra.mxu0 %v1880
      %1899 = vmatprep.subr.mxu0 0.0
      %1900 = vmatpush1.xpose.msra.mxu0 %v1883
      %1901 = vmatprep.subr.mxu0 0.0
      %1902 = vmatpush1.xpose.msra.mxu0 0.0
      %1903 = vmatprep.subr.mxu0 0.0
      %1904 = vmatpush1.xpose.msra.mxu0 0.0
      %1905 = vmatprep.subr.mxu0 0.0
      %1906 = vmatpush1.xpose.msra.mxu0 0.0
      %1907 = vmatprep.subr.mxu0 0.0
      %1908 = vmatpush1.xpose.msra.mxu0 0.0
      %1909 = vmatprep.subr.mxu0 0.0
      %1910 = vmatpush1.xpose.msra.mxu0 0.0
      %1911 = vmatprep.subr.mxu0 0.0
      %1912 = vmatpush1.xpose.msra.mxu0 0.0
      %1913 = vmatprep.subr.mxu0 0.0
      %1914 = vmatpush1.xpose.msra.mxu0 0.0
      %1915 = vmatprep.subr.mxu0 0.0
      %1916 = vmatpush1.xpose.msra.mxu0 0.0
      %1917 = vmatprep.subr.mxu0 0.0
      %1918 = vmatpush1.xpose.msra.mxu0 0.0
      %1919 = vmatprep.subr.mxu0 0.0
      %1920 = vmatpush1.xpose.msra.mxu0 0.0
      %1921 = vmatprep.subr.mxu0 0.0
      %1922 = vmatpush1.xpose.msra.mxu0 0.0
      %1923 = vmatprep.subr.mxu0 0.0
      %1924 = vmatpush1.xpose.msra.mxu0 0.0
      %1925 = vmatprep.subr.mxu0 0.0
      %1926 = vmatpush1.xpose.msra.mxu0 0.0
      %1927 = vmatprep.subr.mxu0 0.0
      %1928 = vmatpush1.xpose.msra.mxu0 0.0
      %1929 = vmatprep.subr.mxu0 0.0
      %1930 = vmatpush1.xpose.msra.mxu0 0.0
      %1931 = vmatprep.subr.mxu0 0.0
      %1932 = vmatpush1.xpose.msra.mxu0 0.0
      %1933 = vmatprep.subr.mxu0 0.0
      %1934 = vmatpush1.xpose.msra.mxu0 0.0
      %1935 = vmatprep.subr.mxu0 0.0
      %1936 = vmatpush1.xpose.msra.mxu0 0.0
      %1937 = vmatprep.subr.mxu0 0.0
      %1938 = vmatpush1.xpose.msra.mxu0 0.0
      %1939 = vmatprep.subr.mxu0 0.0
      %1940 = vmatpush1.xpose.msra.mxu0 0.0
      %1941 = vmatprep.subr.mxu0 0.0
      %1942 = vmatpush1.xpose.msra.mxu0 0.0
      %1943 = vmatprep.subr.mxu0 0.0
      %1944 = vmatpush1.xpose.msra.mxu0 0.0
      %1945 = vmatprep.subr.mxu0 0.0
      %1946 = vmatpush1.xpose.msra.mxu0 0.0
      %1947 = vmatprep.subr.mxu0 0.0
      %1948 = vmatpush1.xpose.msra.mxu0 0.0
      %1949 = vmatprep.mubr.f32.mxu0 0.0
      %1950 = vmatmul.mubr.f32.gmra.mrb[0].mxu0 %v1850
      %v1951 = vpop.f32.mrb[0].mxu0
      %v1952 = vadd.f32 %v1581, %v1951
      %v1953 = vpop.f32.mrb[0].mxu0
      %1954 = vmatprep.mubr.f32.mxu0 0.0
      %1955 = vmatmul.mubr.f32.gmra.mrb[0].mxu0 %v1853
      %v1956 = vpop.f32.mrb[0].mxu0
      %v1957 = vadd.f32 %v1581, %v1956
      %v1958 = vpop.f32.mrb[0].mxu0
      %1959 = vmatprep.mubr.f32.mxu0 0.0
      %1960 = vmatmul.mubr.f32.gmra.mrb[0].mxu0 %v1856
      %v1961 = vpop.f32.mrb[0].mxu0
      %v1962 = vadd.f32 %v1581, %v1961
      %v1963 = vpop.f32.mrb[0].mxu0
      %1964 = vmatprep.mubr.f32.mxu0 0.0
      %1965 = vmatmul.mubr.f32.gmra.mrb[0].mxu0 %v1859
      %v1966 = vpop.f32.mrb[0].mxu0
      %v1967 = vadd.f32 %v1581, %v1966
      %v1968 = vpop.f32.mrb[0].mxu0
      %1969 = vdwg.mxu0
      %v1970 = vsel %vm1275, %v1952, -inf
      %1971 = vmax.xlane.f32.xlu0 %v1970
      %v1972 = vpop.xlane.xlu0 %1971
      %v1973 = vsel %vm1275, %v1957, -inf
      %1974 = vmax.xlane.f32.xlu0 %v1973
      %v1975 = vpop.xlane.xlu0 %1974
      %v1976 = vsel %vm1275, %v1962, -inf
      %1977 = vmax.xlane.f32.xlu0 %v1976
      %v1978 = vpop.xlane.xlu0 %1977
      %v1979 = vsel %vm1275, %v1967, -inf
      %1980 = vmax.xlane.f32.xlu0 %v1979
      %v1981 = vpop.xlane.xlu0 %1980
      %v1982 = vsub.f32 %v1952, %v1972
      %v1983 = vsub.f32 %v1957, %v1975
      %v1984 = vsub.f32 %v1962, %v1978
      %v1985 = vsub.f32 %v1967, %v1981
      %v1986 = vmul.f32 %v1982, 1.442695
      %v1987 = vpow.pop %v1986
      %v1988 = vmul.f32 %v1983, 1.442695
      %v1989 = vpow.pop %v1988
      %v1990 = vmul.f32 %v1984, 1.442695
      %v1991 = vpow.pop %v1990
      %v1992 = vmul.f32 %v1985, 1.442695
      %v1993 = vpow.pop %v1992
      %v1994 = vsel %vm1275, %v1987, 0.0
      %1995 = vadd.xlane.f32.xlu0 %v1994
      %v1996 = vpop.xlane.xlu0 %1995
      %v1997 = vsel %vm1275, %v1989, 0.0
      %1998 = vadd.xlane.f32.xlu0 %v1997
      %v1999 = vpop.xlane.xlu0 %1998
      %v2000 = vsel %vm1275, %v1991, 0.0
      %2001 = vadd.xlane.f32.xlu0 %v2000
      %v2002 = vpop.xlane.xlu0 %2001
      %v2003 = vsel %vm1275, %v1993, 0.0
      %2004 = vadd.xlane.f32.xlu0 %v2003
      %v2005 = vpop.xlane.xlu0 %2004
      %v2006 = vrcp.pop %v1996
      %v2007 = vrcp.pop %v1999
      %v2008 = vrcp.pop %v2002
      %v2009 = vrcp.pop %v2005
      %2018 = vrot.lane.b32.xlu0 %v1733, 96
      %v2019 = vpop.permute.xlu0 %2018
      %2020 = vrot.lane.b32.xlu0 %v1734, 96
      %v2021 = vpop.permute.xlu0 %2020
      %2022 = vrot.lane.b32.xlu0 %v1735, 96
      %v2023 = vpop.permute.xlu0 %2022
      %2024 = vrot.lane.b32.xlu0 %v1736, 96
      %v2025 = vpop.permute.xlu0 %2024
      %2026 = vrot.lane.b32.xlu0 %v1737, 96
      %v2027 = vpop.permute.xlu0 %2026
      %2028 = vrot.lane.b32.xlu0 %v1738, 96
      %v2029 = vpop.permute.xlu0 %2028
      %2030 = vrot.lane.b32.xlu0 %v1739, 96
      %v2031 = vpop.permute.xlu0 %2030
      %2032 = vrot.lane.b32.xlu0 %v1740, 96
      %v2033 = vpop.permute.xlu0 %2032
      %v2043 = vsel %vm1275, %v1987, 0
      %v2046 = vsel %vm1275, %v1989, 0
      %v2049 = vsel %vm1275, %v1991, 0
      %v2052 = vsel %vm1275, %v1993, 0
      %2054 = vmatprep.subr.mxu0 0.0
      %2055 = vmatpush1.msra.mxu0 %v2019
      %2056 = vmatprep.subr.mxu0 0.0
      %2057 = vmatpush1.msra.mxu0 %v2021
      %2058 = vmatprep.subr.mxu0 0.0
      %2059 = vmatpush1.msra.mxu0 %v2023
      %2060 = vmatprep.subr.mxu0 0.0
      %2061 = vmatpush1.msra.mxu0 %v2025
      %2062 = vmatprep.subr.mxu0 0.0
      %2063 = vmatpush1.msra.mxu0 %v2027
      %2064 = vmatprep.subr.mxu0 0.0
      %2065 = vmatpush1.msra.mxu0 %v2029
      %2066 = vmatprep.subr.mxu0 0.0
      %2067 = vmatpush1.msra.mxu0 %v2031
      %2068 = vmatprep.subr.mxu0 0.0
      %2069 = vmatpush1.msra.mxu0 %v2033
      %2070 = vmatprep.subr.mxu0 0.0
      %2071 = vmatpush1.msra.mxu0 0.0
      %2072 = vmatprep.subr.mxu0 0.0
      %2073 = vmatpush1.msra.mxu0 0.0
      %2074 = vmatprep.subr.mxu0 0.0
      %2075 = vmatpush1.msra.mxu0 0.0
      %2076 = vmatprep.subr.mxu0 0.0
      %2077 = vmatpush1.msra.mxu0 0.0
      %2078 = vmatprep.subr.mxu0 0.0
      %2079 = vmatpush1.msra.mxu0 0.0
      %2080 = vmatprep.subr.mxu0 0.0
      %2081 = vmatpush1.msra.mxu0 0.0
      %2082 = vmatprep.subr.mxu0 0.0
      %2083 = vmatpush1.msra.mxu0 0.0
      %2084 = vmatprep.subr.mxu0 0.0
      %2085 = vmatpush1.msra.mxu0 0.0
      %2086 = vmatprep.subr.mxu0 0.0
      %2087 = vmatpush1.msra.mxu0 0.0
      %2088 = vmatprep.subr.mxu0 0.0
      %2089 = vmatpush1.msra.mxu0 0.0
      %2090 = vmatprep.subr.mxu0 0.0
      %2091 = vmatpush1.msra.mxu0 0.0
      %2092 = vmatprep.subr.mxu0 0.0
      %2093 = vmatpush1.msra.mxu0 0.0
      %2094 = vmatprep.subr.mxu0 0.0
      %2095 = vmatpush1.msra.mxu0 0.0
      %2096 = vmatprep.subr.mxu0 0.0
      %2097 = vmatpush1.msra.mxu0 0.0
      %2098 = vmatprep.subr.mxu0 0.0
      %2099 = vmatpush1.msra.mxu0 0.0
      %2100 = vmatprep.subr.mxu0 0.0
      %2101 = vmatpush1.msra.mxu0 0.0
      %2102 = vmatprep.subr.mxu0 0.0
      %2103 = vmatpush1.msra.mxu0 0.0
      %2104 = vmatprep.subr.mxu0 0.0
      %2105 = vmatpush1.msra.mxu0 0.0
      %2106 = vmatprep.subr.mxu0 0.0
      %2107 = vmatpush1.msra.mxu0 0.0
      %2108 = vmatprep.subr.mxu0 0.0
      %2109 = vmatpush1.msra.mxu0 0.0
      %2110 = vmatprep.subr.mxu0 0.0
      %2111 = vmatpush1.msra.mxu0 0.0
      %2112 = vmatprep.subr.mxu0 0.0
      %2113 = vmatpush1.msra.mxu0 0.0
      %2114 = vmatprep.subr.mxu0 0.0
      %2115 = vmatpush1.msra.mxu0 0.0
      %2116 = vmatprep.subr.mxu0 0.0
      %2117 = vmatpush1.msra.mxu0 0.0
      %2118 = vmatprep.mubr.f32.mxu0 0.0
      %2119 = vmatmul.mubr.f32.gmra.mrb[0].mxu0 %v2043
      %v2120 = vpop.f32.mrb[0].mxu0
      %v2121 = vadd.f32 0.0, %v2120
      %v2122 = vpop.f32.mrb[0].mxu0
      %2123 = vmatprep.mubr.f32.mxu0 0.0
      %2124 = vmatmul.mubr.f32.gmra.mrb[0].mxu0 %v2046
      %v2125 = vpop.f32.mrb[0].mxu0
      %v2126 = vadd.f32 0.0, %v2125
      %v2127 = vpop.f32.mrb[0].mxu0
      %2128 = vmatprep.mubr.f32.mxu0 0.0
      %2129 = vmatmul.mubr.f32.gmra.mrb[0].mxu0 %v2049
      %v2130 = vpop.f32.mrb[0].mxu0
      %v2131 = vadd.f32 0.0, %v2130
      %v2132 = vpop.f32.mrb[0].mxu0
      %2133 = vmatprep.mubr.f32.mxu0 0.0
      %2134 = vmatmul.mubr.f32.gmra.mrb[0].mxu0 %v2052
      %v2135 = vpop.f32.mrb[0].mxu0
      %v2136 = vadd.f32 0.0, %v2135
      %v2137 = vpop.f32.mrb[0].mxu0
      %2138 = vdwg.mxu0
      %v2139 = vmul.f32 %v2006, %v1001
      %v2140 = vmul.f32 %v2007, %v1002
      %v2141 = vmul.f32 %v2008, %v1003
      %v2142 = vmul.f32 %v2009, %v1004
      %v2143 = vmul.f32 %v2121, %v2139
      %v2144 = vmul.f32 %v2126, %v2140
      %v2145 = vmul.f32 %v2131, %v2141
      %v2146 = vmul.f32 %v2136, %v2142
      %v2147 = vadd.f32 %v2143, %v2144
      %v2148 = vadd.f32 %v2147, %v2145
      %v2149 = vadd.f32 %v2148, %v2146
      %v2150 = vlaneseq
      %v2151 = vshrl.u32 %v2150, 7
      %v2152 = vsub.s32 1, %v2151
      %v2153 = vrot.slane %v1582, %v2152
      %v2155 = vsel %vm1160, %v2149, 0
      %2157 = vmatprep.subr.mxu0 0.0
      %2158 = vmatpush1.msra.mxu0 %v1749
      %2159 = vmatprep.subr.mxu0 0.0
      %2160 = vmatpush1.msra.mxu0 %v1750
      %2161 = vmatprep.subr.mxu0 0.0
      %2162 = vmatpush1.msra.mxu0 %v1751
      %2163 = vmatprep.subr.mxu0 0.0
      %2164 = vmatpush1.msra.mxu0 %v1752
      %2165 = vmatprep.subr.mxu0 0.0
      %2166 = vmatpush1.msra.mxu0 0.0
      %2167 = vmatprep.subr.mxu0 0.0
      %2168 = vmatpush1.msra.mxu0 0.0
      %2169 = vmatprep.subr.mxu0 0.0
      %2170 = vmatpush1.msra.mxu0 0.0
      %2171 = vmatprep.subr.mxu0 0.0
      %2172 = vmatpush1.msra.mxu0 0.0
      %2173 = vmatprep.subr.mxu0 0.0
      %2174 = vmatpush1.msra.mxu0 0.0
      %2175 = vmatprep.subr.mxu0 0.0
      %2176 = vmatpush1.msra.mxu0 0.0
      %2177 = vmatprep.subr.mxu0 0.0
      %2178 = vmatpush1.msra.mxu0 0.0
      %2179 = vmatprep.subr.mxu0 0.0
      %2180 = vmatpush1.msra.mxu0 0.0
      %2181 = vmatprep.subr.mxu0 0.0
      %2182 = vmatpush1.msra.mxu0 0.0
      %2183 = vmatprep.subr.mxu0 0.0
      %2184 = vmatpush1.msra.mxu0 0.0
      %2185 = vmatprep.subr.mxu0 0.0
      %2186 = vmatpush1.msra.mxu0 0.0
      %2187 = vmatprep.subr.mxu0 0.0
      %2188 = vmatpush1.msra.mxu0 0.0
      %2189 = vmatprep.subr.mxu0 0.0
      %2190 = vmatpush1.msra.mxu0 0.0
      %2191 = vmatprep.subr.mxu0 0.0
      %2192 = vmatpush1.msra.mxu0 0.0
      %2193 = vmatprep.subr.mxu0 0.0
      %2194 = vmatpush1.msra.mxu0 0.0
      %2195 = vmatprep.subr.mxu0 0.0
      %2196 = vmatpush1.msra.mxu0 0.0
      %2197 = vmatprep.subr.mxu0 0.0
      %2198 = vmatpush1.msra.mxu0 0.0
      %2199 = vmatprep.subr.mxu0 0.0
      %2200 = vmatpush1.msra.mxu0 0.0
      %2201 = vmatprep.subr.mxu0 0.0
      %2202 = vmatpush1.msra.mxu0 0.0
      %2203 = vmatprep.subr.mxu0 0.0
      %2204 = vmatpush1.msra.mxu0 0.0
      %2205 = vmatprep.subr.mxu0 0.0
      %2206 = vmatpush1.msra.mxu0 0.0
      %2207 = vmatprep.subr.mxu0 0.0
      %2208 = vmatpush1.msra.mxu0 0.0
      %2209 = vmatprep.subr.mxu0 0.0
      %2210 = vmatpush1.msra.mxu0 0.0
      %2211 = vmatprep.subr.mxu0 0.0
      %2212 = vmatpush1.msra.mxu0 0.0
      %2213 = vmatprep.subr.mxu0 0.0
      %2214 = vmatpush1.msra.mxu0 0.0
      %2215 = vmatprep.subr.mxu0 0.0
      %2216 = vmatpush1.msra.mxu0 0.0
      %2217 = vmatprep.subr.mxu0 0.0
      %2218 = vmatpush1.msra.mxu0 0.0
      %2219 = vmatprep.subr.mxu0 0.0
      %2220 = vmatpush1.msra.mxu0 0.0
      %2221 = vmatprep.mubr.f32.mxu0 0.0
      %2222 = vmatmul.mubr.f32.gmra.mrb[0].mxu0 %v2155
      %v2223 = vpop.f32.mrb[0].mxu0
      %v2224 = vadd.f32 %v2153, %v2223
      %v2225 = vpop.f32.mrb[0].mxu0
      %2226 = vdwg.mxu0
      %v2227 = vadd.f32 %v1159, %v2224
      %v2228 = vsel %vm1160, %v2227, 0.0
      %2229 = vadd.xlane.f32.xlu0 %v2228
      %v2230 = vpop.xlane.xlu0 %2229
      %v2231 = vmul.f32 %v2230, %v1164
      %v2232 = vmul.f32 %v2227, %v2227
      %v2233 = vsel %vm1160, %v2232, 0.0
      %2234 = vadd.xlane.f32.xlu0 %v2233
      %v2235 = vpop.xlane.xlu0 %2234
      %v2236 = vmul.f32 %v2235, %v1164
      %v2237 = vmul.f32 %v2231, %v2231
      %v2238 = vsub.f32 %v2236, %v2237
      %v2239 = vsub.f32 %v2227, %v2231
      %v2240 = vadd.f32 %v2238, 1e-05
      %v2241 = vrsqrt.pop %v2240
      %v2242 = vmul.f32 %v2239, %v2241
      %v2243 = vlaneseq
      %v2244 = vshrl.u32 %v2243, 7
      %v2245 = vsub.s32 4, %v2244
      %v2246 = vrot.slane %v1582, %v2245
      %v2247 = vmul.f32 %v2242, %v2246
      %v2248 = vlaneseq
      %v2249 = vshrl.u32 %v2248, 7
      %v2250 = vsub.s32 5, %v2249
      %v2251 = vrot.slane %v1582, %v2250
      %v2252 = vadd.f32 %v2247, %v2251
      %v2253 = vld [vmem:[%s39] sm:$0xff]
      %v2254 = vld [vmem:[%s39 + $0x8] sm:$0xff]
      %v2255 = vld [vmem:[%s39 + $0x10] sm:$0xff]
      %v2256 = vld [vmem:[%s39 + $0x18] sm:$0xff]
      %v2257 = vld [vmem:[%s41] sm:$0xff]
      %v2259 = vsel %vm1160, %v2252, 0
      %2261 = vmatprep.subr.mxu0 0.0
      %2262 = vmatpush1.msra.mxu0 %v2253
      %2263 = vmatprep.subr.mxu0 0.0
      %2264 = vmatpush1.msra.mxu0 %v2254
      %2265 = vmatprep.subr.mxu0 0.0
      %2266 = vmatpush1.msra.mxu0 %v2255
      %2267 = vmatprep.subr.mxu0 0.0
      %2268 = vmatpush1.msra.mxu0 %v2256
      %2269 = vmatprep.subr.mxu0 0.0
      %2270 = vmatpush1.msra.mxu0 0.0
      %2271 = vmatprep.subr.mxu0 0.0
      %2272 = vmatpush1.msra.mxu0 0.0
      %2273 = vmatprep.subr.mxu0 0.0
      %2274 = vmatpush1.msra.mxu0 0.0
      %2275 = vmatprep.subr.mxu0 0.0
      %2276 = vmatpush1.msra.mxu0 0.0
      %2277 = vmatprep.subr.mxu0 0.0
      %2278 = vmatpush1.msra.mxu0 0.0
      %2279 = vmatprep.subr.mxu0 0.0
      %2280 = vmatpush1.msra.mxu0 0.0
      %2281 = vmatprep.subr.mxu0 0.0
      %2282 = vmatpush1.msra.mxu0 0.0
      %2283 = vmatprep.subr.mxu0 0.0
      %2284 = vmatpush1.msra.mxu0 0.0
      %2285 = vmatprep.subr.mxu0 0.0
      %2286 = vmatpush1.msra.mxu0 0.0
      %2287 = vmatprep.subr.mxu0 0.0
      %2288 = vmatpush1.msra.mxu0 0.0
      %2289 = vmatprep.subr.mxu0 0.0
      %2290 = vmatpush1.msra.mxu0 0.0
      %2291 = vmatprep.subr.mxu0 0.0
      %2292 = vmatpush1.msra.mxu0 0.0
      %2293 = vmatprep.subr.mxu0 0.0
      %2294 = vmatpush1.msra.mxu0 0.0
      %2295 = vmatprep.subr.mxu0 0.0
      %2296 = vmatpush1.msra.mxu0 0.0
      %2297 = vmatprep.subr.mxu0 0.0
      %2298 = vmatpush1.msra.mxu0 0.0
      %2299 = vmatprep.subr.mxu0 0.0
      %2300 = vmatpush1.msra.mxu0 0.0
      %2301 = vmatprep.subr.mxu0 0.0
      %2302 = vmatpush1.msra.mxu0 0.0
      %2303 = vmatprep.subr.mxu0 0.0
      %2304 = vmatpush1.msra.mxu0 0.0
      %2305 = vmatprep.subr.mxu0 0.0
      %2306 = vmatpush1.msra.mxu0 0.0
      %2307 = vmatprep.subr.mxu0 0.0
      %2308 = vmatpush1.msra.mxu0 0.0
      %2309 = vmatprep.subr.mxu0 0.0
      %2310 = vmatpush1.msra.mxu0 0.0
      %2311 = vmatprep.subr.mxu0 0.0
      %2312 = vmatpush1.msra.mxu0 0.0
      %2313 = vmatprep.subr.mxu0 0.0
      %2314 = vmatpush1.msra.mxu0 0.0
      %2315 = vmatprep.subr.mxu0 0.0
      %2316 = vmatpush1.msra.mxu0 0.0
      %2317 = vmatprep.subr.mxu0 0.0
      %2318 = vmatpush1.msra.mxu0 0.0
      %2319 = vmatprep.subr.mxu0 0.0
      %2320 = vmatpush1.msra.mxu0 0.0
      %2321 = vmatprep.subr.mxu0 0.0
      %2322 = vmatpush1.msra.mxu0 0.0
      %2323 = vmatprep.subr.mxu0 0.0
      %2324 = vmatpush1.msra.mxu0 0.0
      %2325 = vmatprep.mubr.f32.mxu0 0.0
      %2326 = vmatmul.mubr.f32.gmra.mrb[0].mxu0 %v2259
      %v2327 = vpop.f32.mrb[0].mxu0
      %v2328 = vadd.f32 %v2257, %v2327
      %v2329 = vpop.f32.mrb[0].mxu0
      %2330 = vdwg.mxu0
      %v2331 = vld [vmem:[%s35] sm:$0xff]
      %v2332 = vld [vmem:[%s35 + $0x8] sm:$0xff]
      %v2333 = vld [vmem:[%s35 + $0x10] sm:$0xff]
      %v2334 = vld [vmem:[%s35 + $0x18] sm:$0xff]
      %v2335 = vld [vmem:[%s37] sm:$0xff]
      %v2336 = vld [vmem:[%s37 + $0x8] sm:$0xff]
      %v2337 = vld [vmem:[%s37 + $0x10] sm:$0xff]
      %v2338 = vld [vmem:[%s37 + $0x18] sm:$0xff]
      %v2339 = vld [vmem:[%s43] sm:$0xff]
      %v2340 = vld [vmem:[%s43 + $0x8] sm:$0xff]
      %v2341 = vld [vmem:[%s43 + $0x10] sm:$0xff]
      %v2342 = vld [vmem:[%s43 + $0x18] sm:$0xff]
      %2343 = vmatprep.subr.mxu0 0.0
      %2344 = vmatpush1.msra.mxu0 %v2331
      %2345 = vmatprep.subr.mxu0 0.0
      %2346 = vmatpush1.msra.mxu0 %v2332
      %2347 = vmatprep.subr.mxu0 0.0
      %2348 = vmatpush1.msra.mxu0 %v2333
      %2349 = vmatprep.subr.mxu0 0.0
      %2350 = vmatpush1.msra.mxu0 %v2334
      %2351 = vmatprep.subr.mxu0 0.0
      %2352 = vmatpush1.msra.mxu0 0.0
      %2353 = vmatprep.subr.mxu0 0.0
      %2354 = vmatpush1.msra.mxu0 0.0
      %2355 = vmatprep.subr.mxu0 0.0
      %2356 = vmatpush1.msra.mxu0 0.0
      %2357 = vmatprep.subr.mxu0 0.0
      %2358 = vmatpush1.msra.mxu0 0.0
      %2359 = vmatprep.subr.mxu0 0.0
      %2360 = vmatpush1.msra.mxu0 0.0
      %2361 = vmatprep.subr.mxu0 0.0
      %2362 = vmatpush1.msra.mxu0 0.0
      %2363 = vmatprep.subr.mxu0 0.0
      %2364 = vmatpush1.msra.mxu0 0.0
      %2365 = vmatprep.subr.mxu0 0.0
      %2366 = vmatpush1.msra.mxu0 0.0
      %2367 = vmatprep.subr.mxu0 0.0
      %2368 = vmatpush1.msra.mxu0 0.0
      %2369 = vmatprep.subr.mxu0 0.0
      %2370 = vmatpush1.msra.mxu0 0.0
      %2371 = vmatprep.subr.mxu0 0.0
      %2372 = vmatpush1.msra.mxu0 0.0
      %2373 = vmatprep.subr.mxu0 0.0
      %2374 = vmatpush1.msra.mxu0 0.0
      %2375 = vmatprep.subr.mxu0 0.0
      %2376 = vmatpush1.msra.mxu0 0.0
      %2377 = vmatprep.subr.mxu0 0.0
      %2378 = vmatpush1.msra.mxu0 0.0
      %2379 = vmatprep.subr.mxu0 0.0
      %2380 = vmatpush1.msra.mxu0 0.0
      %2381 = vmatprep.subr.mxu0 0.0
      %2382 = vmatpush1.msra.mxu0 0.0
      %2383 = vmatprep.subr.mxu0 0.0
      %2384 = vmatpush1.msra.mxu0 0.0
      %2385 = vmatprep.subr.mxu0 0.0
      %2386 = vmatpush1.msra.mxu0 0.0
      %2387 = vmatprep.subr.mxu0 0.0
      %2388 = vmatpush1.msra.mxu0 0.0
      %2389 = vmatprep.subr.mxu0 0.0
      %2390 = vmatpush1.msra.mxu0 0.0
      %2391 = vmatprep.subr.mxu0 0.0
      %2392 = vmatpush1.msra.mxu0 0.0
      %2393 = vmatprep.subr.mxu0 0.0
      %2394 = vmatpush1.msra.mxu0 0.0
      %2395 = vmatprep.subr.mxu0 0.0
      %2396 = vmatpush1.msra.mxu0 0.0
      %2397 = vmatprep.subr.mxu0 0.0
      %2398 = vmatpush1.msra.mxu0 0.0
      %2399 = vmatprep.subr.mxu0 0.0
      %2400 = vmatpush1.msra.mxu0 0.0
      %2401 = vmatprep.subr.mxu0 0.0
      %2402 = vmatpush1.msra.mxu0 0.0
      %2403 = vmatprep.subr.mxu0 0.0
      %2404 = vmatpush1.msra.mxu0 0.0
      %2405 = vmatprep.subr.mxu0 0.0
      %2406 = vmatpush1.msra.mxu0 0.0
      %2407 = vmatprep.mubr.f32.mxu0 0.0
      %2408 = vmatmul.mubr.f32.gmra.mrb[0].mxu0 %v2259
      %v2409 = vpop.f32.mrb[0].mxu0
      %v2410 = vadd.f32 0.0, %v2409
      %v2411 = vpop.f32.mrb[0].mxu0
      %2412 = vmatprep.mubr.f32.mxu0 0.0
      %2413 = vmatmul.mubr.f32.gmra.mrb[0].mxu0 %v2259
      %v2414 = vpop.f32.mrb[0].mxu0
      %v2415 = vadd.f32 0.0, %v2414
      %v2416 = vpop.f32.mrb[0].mxu0
      %2417 = vmatprep.mubr.f32.mxu0 0.0
      %2418 = vmatmul.mubr.f32.gmra.mrb[0].mxu0 %v2259
      %v2419 = vpop.f32.mrb[0].mxu0
      %v2420 = vadd.f32 0.0, %v2419
      %v2421 = vpop.f32.mrb[0].mxu0
      %2422 = vmatprep.mubr.f32.mxu0 0.0
      %2423 = vmatmul.mubr.f32.gmra.mrb[0].mxu0 %v2259
      %v2424 = vpop.f32.mrb[0].mxu0
      %v2425 = vadd.f32 0.0, %v2424
      %v2426 = vpop.f32.mrb[0].mxu0
      %2427 = vdwg.mxu0
      %v2428 = vmul.f32 %v2410, %v1001
      %v2429 = vmul.f32 %v2415, %v1002
      %v2430 = vmul.f32 %v2420, %v1003
      %v2431 = vmul.f32 %v2425, %v1004
      %v2432 = vadd.f32 %v2428, %v2335
      %v2433 = vadd.f32 %v2429, %v2336
      %v2434 = vadd.f32 %v2430, %v2337
      %v2435 = vadd.f32 %v2431, %v2338
      %v2437 = vsel %vm1160, %v2432, 0
      %v2440 = vsel %vm1160, %v2433, 0
      %v2443 = vsel %vm1160, %v2434, 0
      %v2446 = vsel %vm1160, %v2435, 0
      %v2449 = vsel %vm1160, %v2328, 0
      %2451 = vmatprep.subr.mxu0 0.0
      %2452 = vmatpush1.xpose.msra.mxu0 %v2449
      %2453 = vmatprep.subr.mxu0 0.0
      %2454 = vmatpush1.xpose.msra.mxu0 0.0
      %2455 = vmatprep.subr.mxu0 0.0
      %2456 = vmatpush1.xpose.msra.mxu0 0.0
      %2457 = vmatprep.subr.mxu0 0.0
      %2458 = vmatpush1.xpose.msra.mxu0 0.0
      %2459 = vmatprep.subr.mxu0 0.0
      %2460 = vmatpush1.xpose.msra.mxu0 0.0
      %2461 = vmatprep.subr.mxu0 0.0
      %2462 = vmatpush1.xpose.msra.mxu0 0.0
      %2463 = vmatprep.subr.mxu0 0.0
      %2464 = vmatpush1.xpose.msra.mxu0 0.0
      %2465 = vmatprep.subr.mxu0 0.0
      %2466 = vmatpush1.xpose.msra.mxu0 0.0
      %2467 = vmatprep.subr.mxu0 0.0
      %2468 = vmatpush1.xpose.msra.mxu0 0.0
      %2469 = vmatprep.subr.mxu0 0.0
      %2470 = vmatpush1.xpose.msra.mxu0 0.0
      %2471 = vmatprep.subr.mxu0 0.0
      %2472 = vmatpush1.xpose.msra.mxu0 0.0
      %2473 = vmatprep.subr.mxu0 0.0
      %2474 = vmatpush1.xpose.msra.mxu0 0.0
      %2475 = vmatprep.subr.mxu0 0.0
      %2476 = vmatpush1.xpose.msra.mxu0 0.0
      %2477 = vmatprep.subr.mxu0 0.0
      %2478 = vmatpush1.xpose.msra.mxu0 0.0
      %2479 = vmatprep.subr.mxu0 0.0
      %2480 = vmatpush1.xpose.msra.mxu0 0.0
      %2481 = vmatprep.subr.mxu0 0.0
      %2482 = vmatpush1.xpose.msra.mxu0 0.0
      %2483 = vmatprep.subr.mxu0 0.0
      %2484 = vmatpush1.xpose.msra.mxu0 0.0
      %2485 = vmatprep.subr.mxu0 0.0
      %2486 = vmatpush1.xpose.msra.mxu0 0.0
      %2487 = vmatprep.subr.mxu0 0.0
      %2488 = vmatpush1.xpose.msra.mxu0 0.0
      %2489 = vmatprep.subr.mxu0 0.0
      %2490 = vmatpush1.xpose.msra.mxu0 0.0
      %2491 = vmatprep.subr.mxu0 0.0
      %2492 = vmatpush1.xpose.msra.mxu0 0.0
      %2493 = vmatprep.subr.mxu0 0.0
      %2494 = vmatpush1.xpose.msra.mxu0 0.0
      %2495 = vmatprep.subr.mxu0 0.0
      %2496 = vmatpush1.xpose.msra.mxu0 0.0
      %2497 = vmatprep.subr.mxu0 0.0
      %2498 = vmatpush1.xpose.msra.mxu0 0.0
      %2499 = vmatprep.subr.mxu0 0.0
      %2500 = vmatpush1.xpose.msra.mxu0 0.0
      %2501 = vmatprep.subr.mxu0 0.0
      %2502 = vmatpush1.xpose.msra.mxu0 0.0
      %2503 = vmatprep.subr.mxu0 0.0
      %2504 = vmatpush1.xpose.msra.mxu0 0.0
      %2505 = vmatprep.subr.mxu0 0.0
      %2506 = vmatpush1.xpose.msra.mxu0 0.0
      %2507 = vmatprep.subr.mxu0 0.0
      %2508 = vmatpush1.xpose.msra.mxu0 0.0
      %2509 = vmatprep.subr.mxu0 0.0
      %2510 = vmatpush1.xpose.msra.mxu0 0.0
      %2511 = vmatprep.subr.mxu0 0.0
      %2512 = vmatpush1.xpose.msra.mxu0 0.0
      %2513 = vmatprep.subr.mxu0 0.0
      %2514 = vmatpush1.xpose.msra.mxu0 0.0
      %2515 = vmatprep.mubr.f32.mxu0 0.0
      %2516 = vmatmul.mubr.f32.gmra.mrb[0].mxu0 %v2437
      %v2517 = vpop.f32.mrb[0].mxu0
      %v2518 = vadd.f32 0.0, %v2517
      %v2519 = vpop.f32.mrb[0].mxu0
      %2520 = vmatprep.mubr.f32.mxu0 0.0
      %2521 = vmatmul.mubr.f32.gmra.mrb[0].mxu0 %v2440
      %v2522 = vpop.f32.mrb[0].mxu0
      %v2523 = vadd.f32 0.0, %v2522
      %v2524 = vpop.f32.mrb[0].mxu0
      %2525 = vmatprep.mubr.f32.mxu0 0.0
      %2526 = vmatmul.mubr.f32.gmra.mrb[0].mxu0 %v2443
      %v2527 = vpop.f32.mrb[0].mxu0
      %v2528 = vadd.f32 0.0, %v2527
      %v2529 = vpop.f32.mrb[0].mxu0
      %2530 = vmatprep.mubr.f32.mxu0 0.0
      %2531 = vmatmul.mubr.f32.gmra.mrb[0].mxu0 %v2446
      %v2532 = vpop.f32.mrb[0].mxu0
      %v2533 = vadd.f32 0.0, %v2532
      %v2534 = vpop.f32.mrb[0].mxu0
      %2535 = vdwg.mxu0
      %vm2536 = vcmask 64512
      %v2537 = vsel %vm2536, %v2518, -inf
      %2538 = vmax.xlane.f32.xlu0 %v2537
      %v2539 = vpop.xlane.xlu0 %2538
      %v2540 = vsel %vm2536, %v2523, -inf
      %2541 = vmax.xlane.f32.xlu0 %v2540
      %v2542 = vpop.xlane.xlu0 %2541
      %v2543 = vsel %vm2536, %v2528, -inf
      %2544 = vmax.xlane.f32.xlu0 %v2543
      %v2545 = vpop.xlane.xlu0 %2544
      %v2546 = vsel %vm2536, %v2533, -inf
      %2547 = vmax.xlane.f32.xlu0 %v2546
      %v2548 = vpop.xlane.xlu0 %2547
      %v2549 = vsub.f32 %v2518, %v2539
      %v2550 = vsub.f32 %v2523, %v2542
      %v2551 = vsub.f32 %v2528, %v2545
      %v2552 = vsub.f32 %v2533, %v2548
      %v2553 = vmul.f32 %v2549, 1.442695
      %v2554 = vpow.pop %v2553
      %v2555 = vmul.f32 %v2550, 1.442695
      %v2556 = vpow.pop %v2555
      %v2557 = vmul.f32 %v2551, 1.442695
      %v2558 = vpow.pop %v2557
      %v2559 = vmul.f32 %v2552, 1.442695
      %v2560 = vpow.pop %v2559
      %v2561 = vsel %vm2536, %v2554, 0.0
      %2562 = vadd.xlane.f32.xlu0 %v2561
      %v2563 = vpop.xlane.xlu0 %2562
      %v2564 = vsel %vm2536, %v2556, 0.0
      %2565 = vadd.xlane.f32.xlu0 %v2564
      %v2566 = vpop.xlane.xlu0 %2565
      %v2567 = vsel %vm2536, %v2558, 0.0
      %2568 = vadd.xlane.f32.xlu0 %v2567
      %v2569 = vpop.xlane.xlu0 %2568
      %v2570 = vsel %vm2536, %v2560, 0.0
      %2571 = vadd.xlane.f32.xlu0 %v2570
      %v2572 = vpop.xlane.xlu0 %2571
      %v2573 = vrcp.pop %v2563
      %v2574 = vrcp.pop %v2566
      %v2575 = vrcp.pop %v2569
      %v2576 = vrcp.pop %v2572
      %2577 = vrot.lane.b32.xlu0 %v2328, 96
      %v2578 = vpop.permute.xlu0 %2577
      %v2581 = vsel %vm2536, %v2554, 0
      %v2584 = vsel %vm2536, %v2556, 0
      %v2587 = vsel %vm2536, %v2558, 0
      %v2590 = vsel %vm2536, %v2560, 0
      %2592 = vmatprep.subr.mxu0 0.0
      %2593 = vmatpush1.msra.mxu0 %v2578
      %2594 = vmatprep.subr.mxu0 0.0
      %2595 = vmatpush1.msra.mxu0 0.0
      %2596 = vmatprep.subr.mxu0 0.0
      %2597 = vmatpush1.msra.mxu0 0.0
      %2598 = vmatprep.subr.mxu0 0.0
      %2599 = vmatpush1.msra.mxu0 0.0
      %2600 = vmatprep.subr.mxu0 0.0
      %2601 = vmatpush1.msra.mxu0 0.0
      %2602 = vmatprep.subr.mxu0 0.0
      %2603 = vmatpush1.msra.mxu0 0.0
      %2604 = vmatprep.subr.mxu0 0.0
      %2605 = vmatpush1.msra.mxu0 0.0
      %2606 = vmatprep.subr.mxu0 0.0
      %2607 = vmatpush1.msra.mxu0 0.0
      %2608 = vmatprep.subr.mxu0 0.0
      %2609 = vmatpush1.msra.mxu0 0.0
      %2610 = vmatprep.subr.mxu0 0.0
      %2611 = vmatpush1.msra.mxu0 0.0
      %2612 = vmatprep.subr.mxu0 0.0
      %2613 = vmatpush1.msra.mxu0 0.0
      %2614 = vmatprep.subr.mxu0 0.0
      %2615 = vmatpush1.msra.mxu0 0.0
      %2616 = vmatprep.subr.mxu0 0.0
      %2617 = vmatpush1.msra.mxu0 0.0
      %2618 = vmatprep.subr.mxu0 0.0
      %2619 = vmatpush1.msra.mxu0 0.0
      %2620 = vmatprep.subr.mxu0 0.0
      %2621 = vmatpush1.msra.mxu0 0.0
      %2622 = vmatprep.subr.mxu0 0.0
      %2623 = vmatpush1.msra.mxu0 0.0
      %2624 = vmatprep.subr.mxu0 0.0
      %2625 = vmatpush1.msra.mxu0 0.0
      %2626 = vmatprep.subr.mxu0 0.0
      %2627 = vmatpush1.msra.mxu0 0.0
      %2628 = vmatprep.subr.mxu0 0.0
      %2629 = vmatpush1.msra.mxu0 0.0
      %2630 = vmatprep.subr.mxu0 0.0
      %2631 = vmatpush1.msra.mxu0 0.0
      %2632 = vmatprep.subr.mxu0 0.0
      %2633 = vmatpush1.msra.mxu0 0.0
      %2634 = vmatprep.subr.mxu0 0.0
      %2635 = vmatpush1.msra.mxu0 0.0
      %2636 = vmatprep.subr.mxu0 0.0
      %2637 = vmatpush1.msra.mxu0 0.0
      %2638 = vmatprep.subr.mxu0 0.0
      %2639 = vmatpush1.msra.mxu0 0.0
      %2640 = vmatprep.subr.mxu0 0.0
      %2641 = vmatpush1.msra.mxu0 0.0
      %2642 = vmatprep.subr.mxu0 0.0
      %2643 = vmatpush1.msra.mxu0 0.0
      %2644 = vmatprep.subr.mxu0 0.0
      %2645 = vmatpush1.msra.mxu0 0.0
      %2646 = vmatprep.subr.mxu0 0.0
      %2647 = vmatpush1.msra.mxu0 0.0
      %2648 = vmatprep.subr.mxu0 0.0
      %2649 = vmatpush1.msra.mxu0 0.0
      %2650 = vmatprep.subr.mxu0 0.0
      %2651 = vmatpush1.msra.mxu0 0.0
      %2652 = vmatprep.subr.mxu0 0.0
      %2653 = vmatpush1.msra.mxu0 0.0
      %2654 = vmatprep.subr.mxu0 0.0
      %2655 = vmatpush1.msra.mxu0 0.0
      %2656 = vmatprep.mubr.f32.mxu0 0.0
      %2657 = vmatmul.mubr.f32.gmra.mrb[0].mxu0 %v2581
      %v2658 = vpop.f32.mrb[0].mxu0
      %v2659 = vadd.f32 0.0, %v2658
      %v2660 = vpop.f32.mrb[0].mxu0
      %2661 = vmatprep.mubr.f32.mxu0 0.0
      %2662 = vmatmul.mubr.f32.gmra.mrb[0].mxu0 %v2584
      %v2663 = vpop.f32.mrb[0].mxu0
      %v2664 = vadd.f32 0.0, %v2663
      %v2665 = vpop.f32.mrb[0].mxu0
      %2666 = vmatprep.mubr.f32.mxu0 0.0
      %2667 = vmatmul.mubr.f32.gmra.mrb[0].mxu0 %v2587
      %v2668 = vpop.f32.mrb[0].mxu0
      %v2669 = vadd.f32 0.0, %v2668
      %v2670 = vpop.f32.mrb[0].mxu0
      %2671 = vmatprep.mubr.f32.mxu0 0.0
      %2672 = vmatmul.mubr.f32.gmra.mrb[0].mxu0 %v2590
      %v2673 = vpop.f32.mrb[0].mxu0
      %v2674 = vadd.f32 0.0, %v2673
      %v2675 = vpop.f32.mrb[0].mxu0
      %2676 = vdwg.mxu0
      %v2677 = vmul.f32 %v2573, %v1001
      %v2678 = vmul.f32 %v2574, %v1002
      %v2679 = vmul.f32 %v2575, %v1003
      %v2680 = vmul.f32 %v2576, %v1004
      %v2681 = vmul.f32 %v2659, %v2677
      %v2682 = vmul.f32 %v2664, %v2678
      %v2683 = vmul.f32 %v2669, %v2679
      %v2684 = vmul.f32 %v2674, %v2680
      %v2685 = vadd.f32 %v2681, %v2682
      %v2686 = vadd.f32 %v2685, %v2683
      %v2687 = vadd.f32 %v2686, %v2684
      %v2688 = vlaneseq
      %v2689 = vshrl.u32 %v2688, 7
      %v2690 = vsub.s32 2, %v2689
      %v2691 = vrot.slane %v1582, %v2690
      %v2693 = vsel %vm1160, %v2687, 0
      %2695 = vmatprep.subr.mxu0 0.0
      %2696 = vmatpush1.msra.mxu0 %v2339
      %2697 = vmatprep.subr.mxu0 0.0
      %2698 = vmatpush1.msra.mxu0 %v2340
      %2699 = vmatprep.subr.mxu0 0.0
      %2700 = vmatpush1.msra.mxu0 %v2341
      %2701 = vmatprep.subr.mxu0 0.0
      %2702 = vmatpush1.msra.mxu0 %v2342
      %2703 = vmatprep.subr.mxu0 0.0
      %2704 = vmatpush1.msra.mxu0 0.0
      %2705 = vmatprep.subr.mxu0 0.0
      %2706 = vmatpush1.msra.mxu0 0.0
      %2707 = vmatprep.subr.mxu0 0.0
      %2708 = vmatpush1.msra.mxu0 0.0
      %2709 = vmatprep.subr.mxu0 0.0
      %2710 = vmatpush1.msra.mxu0 0.0
      %2711 = vmatprep.subr.mxu0 0.0
      %2712 = vmatpush1.msra.mxu0 0.0
      %2713 = vmatprep.subr.mxu0 0.0
      %2714 = vmatpush1.msra.mxu0 0.0
      %2715 = vmatprep.subr.mxu0 0.0
      %2716 = vmatpush1.msra.mxu0 0.0
      %2717 = vmatprep.subr.mxu0 0.0
      %2718 = vmatpush1.msra.mxu0 0.0
      %2719 = vmatprep.subr.mxu0 0.0
      %2720 = vmatpush1.msra.mxu0 0.0
      %2721 = vmatprep.subr.mxu0 0.0
      %2722 = vmatpush1.msra.mxu0 0.0
      %2723 = vmatprep.subr.mxu0 0.0
      %2724 = vmatpush1.msra.mxu0 0.0
      %2725 = vmatprep.subr.mxu0 0.0
      %2726 = vmatpush1.msra.mxu0 0.0
      %2727 = vmatprep.subr.mxu0 0.0
      %2728 = vmatpush1.msra.mxu0 0.0
      %2729 = vmatprep.subr.mxu0 0.0
      %2730 = vmatpush1.msra.mxu0 0.0
      %2731 = vmatprep.subr.mxu0 0.0
      %2732 = vmatpush1.msra.mxu0 0.0
      %2733 = vmatprep.subr.mxu0 0.0
      %2734 = vmatpush1.msra.mxu0 0.0
      %2735 = vmatprep.subr.mxu0 0.0
      %2736 = vmatpush1.msra.mxu0 0.0
      %2737 = vmatprep.subr.mxu0 0.0
      %2738 = vmatpush1.msra.mxu0 0.0
      %2739 = vmatprep.subr.mxu0 0.0
      %2740 = vmatpush1.msra.mxu0 0.0
      %2741 = vmatprep.subr.mxu0 0.0
      %2742 = vmatpush1.msra.mxu0 0.0
      %2743 = vmatprep.subr.mxu0 0.0
      %2744 = vmatpush1.msra.mxu0 0.0
      %2745 = vmatprep.subr.mxu0 0.0
      %2746 = vmatpush1.msra.mxu0 0.0
      %2747 = vmatprep.subr.mxu0 0.0
      %2748 = vmatpush1.msra.mxu0 0.0
      %2749 = vmatprep.subr.mxu0 0.0
      %2750 = vmatpush1.msra.mxu0 0.0
      %2751 = vmatprep.subr.mxu0 0.0
      %2752 = vmatpush1.msra.mxu0 0.0
      %2753 = vmatprep.subr.mxu0 0.0
      %2754 = vmatpush1.msra.mxu0 0.0
      %2755 = vmatprep.subr.mxu0 0.0
      %2756 = vmatpush1.msra.mxu0 0.0
      %2757 = vmatprep.subr.mxu0 0.0
      %2758 = vmatpush1.msra.mxu0 0.0
      %2759 = vmatprep.mubr.f32.mxu0 0.0
      %2760 = vmatmul.mubr.f32.gmra.mrb[0].mxu0 %v2693
      %v2761 = vpop.f32.mrb[0].mxu0
      %v2762 = vadd.f32 %v2691, %v2761
      %v2763 = vpop.f32.mrb[0].mxu0
      %2764 = vdwg.mxu0
      %v2765 = vadd.f32 %v2252, %v2762
      %v2766 = vsel %vm1160, %v2765, 0.0
      %2767 = vadd.xlane.f32.xlu0 %v2766
      %v2768 = vpop.xlane.xlu0 %2767
      %v2769 = vmul.f32 %v2768, %v1164
      %v2770 = vmul.f32 %v2765, %v2765
      %v2771 = vsel %vm1160, %v2770, 0.0
      %2772 = vadd.xlane.f32.xlu0 %v2771
      %v2773 = vpop.xlane.xlu0 %2772
      %v2774 = vmul.f32 %v2773, %v1164
      %v2775 = vmul.f32 %v2769, %v2769
      %v2776 = vsub.f32 %v2774, %v2775
      %v2777 = vsub.f32 %v2765, %v2769
      %v2778 = vadd.f32 %v2776, 1e-05
      %v2779 = vrsqrt.pop %v2778
      %v2780 = vmul.f32 %v2777, %v2779
      %v2781 = vlaneseq
      %v2782 = vshrl.u32 %v2781, 7
      %v2783 = vsub.s32 6, %v2782
      %v2784 = vrot.slane %v1582, %v2783
      %v2785 = vmul.f32 %v2780, %v2784
      %v2786 = vlaneseq
      %v2787 = vshrl.u32 %v2786, 7
      %v2788 = vsub.s32 7, %v2787
      %v2789 = vrot.slane %v1582, %v2788
      %v2790 = vadd.f32 %v2785, %v2789
      %v2791 = vld [vmem:[%s45] sm:$0xff]
      %v2792 = vld [vmem:[%s45 + $0x8] sm:$0xff]
      %v2793 = vld [vmem:[%s45 + $0x10] sm:$0xff]
      %v2794 = vld [vmem:[%s45 + $0x18] sm:$0xff]
      %v2795 = vld [vmem:[%s47] sm:$0x1]
      %v2797 = vlaneseq
      %v2798 = vshrl.u32 %v2797, 7
      %v2799 = vsub.s32 0, %v2798
      %v2800 = vrot.slane %v2795, %v2799
      %v2803 = vsel %vm1160, %v2790, 0
      %2805 = vmatprep.subr.mxu0 0.0
      %2806 = vmatpush1.msra.mxu0 %v2791
      %2807 = vmatprep.subr.mxu0 0.0
      %2808 = vmatpush1.msra.mxu0 %v2792
      %2809 = vmatprep.subr.mxu0 0.0
      %2810 = vmatpush1.msra.mxu0 %v2793
      %2811 = vmatprep.subr.mxu0 0.0
      %2812 = vmatpush1.msra.mxu0 %v2794
      %2813 = vmatprep.subr.mxu0 0.0
      %2814 = vmatpush1.msra.mxu0 0.0
      %2815 = vmatprep.subr.mxu0 0.0
      %2816 = vmatpush1.msra.mxu0 0.0
      %2817 = vmatprep.subr.mxu0 0.0
      %2818 = vmatpush1.msra.mxu0 0.0
      %2819 = vmatprep.subr.mxu0 0.0
      %2820 = vmatpush1.msra.mxu0 0.0
      %2821 = vmatprep.subr.mxu0 0.0
      %2822 = vmatpush1.msra.mxu0 0.0
      %2823 = vmatprep.subr.mxu0 0.0
      %2824 = vmatpush1.msra.mxu0 0.0
      %2825 = vmatprep.subr.mxu0 0.0
      %2826 = vmatpush1.msra.mxu0 0.0
      %2827 = vmatprep.subr.mxu0 0.0
      %2828 = vmatpush1.msra.mxu0 0.0
      %2829 = vmatprep.subr.mxu0 0.0
      %2830 = vmatpush1.msra.mxu0 0.0
      %2831 = vmatprep.subr.mxu0 0.0
      %2832 = vmatpush1.msra.mxu0 0.0
      %2833 = vmatprep.subr.mxu0 0.0
      %2834 = vmatpush1.msra.mxu0 0.0
      %2835 = vmatprep.subr.mxu0 0.0
      %2836 = vmatpush1.msra.mxu0 0.0
      %2837 = vmatprep.subr.mxu0 0.0
      %2838 = vmatpush1.msra.mxu0 0.0
      %2839 = vmatprep.subr.mxu0 0.0
      %2840 = vmatpush1.msra.mxu0 0.0
      %2841 = vmatprep.subr.mxu0 0.0
      %2842 = vmatpush1.msra.mxu0 0.0
      %2843 = vmatprep.subr.mxu0 0.0
      %2844 = vmatpush1.msra.mxu0 0.0
      %2845 = vmatprep.subr.mxu0 0.0
      %2846 = vmatpush1.msra.mxu0 0.0
      %2847 = vmatprep.subr.mxu0 0.0
      %2848 = vmatpush1.msra.mxu0 0.0
      %2849 = vmatprep.subr.mxu0 0.0
      %2850 = vmatpush1.msra.mxu0 0.0
      %2851 = vmatprep.subr.mxu0 0.0
      %2852 = vmatpush1.msra.mxu0 0.0
      %2853 = vmatprep.subr.mxu0 0.0
      %2854 = vmatpush1.msra.mxu0 0.0
      %2855 = vmatprep.subr.mxu0 0.0
      %2856 = vmatpush1.msra.mxu0 0.0
      %2857 = vmatprep.subr.mxu0 0.0
      %2858 = vmatpush1.msra.mxu0 0.0
      %2859 = vmatprep.subr.mxu0 0.0
      %2860 = vmatpush1.msra.mxu0 0.0
      %2861 = vmatprep.subr.mxu0 0.0
      %2862 = vmatpush1.msra.mxu0 0.0
      %2863 = vmatprep.subr.mxu0 0.0
      %2864 = vmatpush1.msra.mxu0 0.0
      %2865 = vmatprep.subr.mxu0 0.0
      %2866 = vmatpush1.msra.mxu0 0.0
      %2867 = vmatprep.subr.mxu0 0.0
      %2868 = vmatpush1.msra.mxu0 0.0
      %2869 = vmatprep.mubr.f32.mxu0 0.0
      %2870 = vmatmul.mubr.f32.gmra.mrb[0].mxu0 %v2803
      %v2871 = vpop.f32.mrb[0].mxu0
      %v2872 = vadd.f32 %v2800, %v2871
      %v2873 = vpop.f32.mrb[0].mxu0
      %2874 = vdwg.mxu0
      %v2875 = vmax.f32 %v2872, 0.0
      %v2876 = vld [vmem:[%s49] sm:$0xff]
      %v2877 = vld [vmem:[%s49 + $0x8] sm:$0xff]
      %v2878 = vld [vmem:[%s49 + $0x10] sm:$0xff]
      %v2879 = vld [vmem:[%s49 + $0x18] sm:$0xff]
      %v2880 = vld [vmem:[%s49 + $0x20] sm:$0xff]
      %v2881 = vld [vmem:[%s49 + $0x28] sm:$0xff]
      %v2882 = vld [vmem:[%s49 + $0x30] sm:$0xff]
      %v2883 = vld [vmem:[%s49 + $0x38] sm:$0xff]
      %v2885 = vsel %vm1275, %v2875, 0
      %2887 = vmatprep.subr.mxu0 0.0
      %2888 = vmatpush1.msra.mxu0 %v2876
      %2889 = vmatprep.subr.mxu0 0.0
      %2890 = vmatpush1.msra.mxu0 %v2877
      %2891 = vmatprep.subr.mxu0 0.0
      %2892 = vmatpush1.msra.mxu0 %v2878
      %2893 = vmatprep.subr.mxu0 0.0
      %2894 = vmatpush1.msra.mxu0 %v2879
      %2895 = vmatprep.subr.mxu0 0.0
      %2896 = vmatpush1.msra.mxu0 %v2880
      %2897 = vmatprep.subr.mxu0 0.0
      %2898 = vmatpush1.msra.mxu0 %v2881
      %2899 = vmatprep.subr.mxu0 0.0
      %2900 = vmatpush1.msra.mxu0 %v2882
      %2901 = vmatprep.subr.mxu0 0.0
      %2902 = vmatpush1.msra.mxu0 %v2883
      %2903 = vmatprep.subr.mxu0 0.0
      %2904 = vmatpush1.msra.mxu0 0.0
      %2905 = vmatprep.subr.mxu0 0.0
      %2906 = vmatpush1.msra.mxu0 0.0
      %2907 = vmatprep.subr.mxu0 0.0
      %2908 = vmatpush1.msra.mxu0 0.0
      %2909 = vmatprep.subr.mxu0 0.0
      %2910 = vmatpush1.msra.mxu0 0.0
      %2911 = vmatprep.subr.mxu0 0.0
      %2912 = vmatpush1.msra.mxu0 0.0
      %2913 = vmatprep.subr.mxu0 0.0
      %2914 = vmatpush1.msra.mxu0 0.0
      %2915 = vmatprep.subr.mxu0 0.0
      %2916 = vmatpush1.msra.mxu0 0.0
      %2917 = vmatprep.subr.mxu0 0.0
      %2918 = vmatpush1.msra.mxu0 0.0
      %2919 = vmatprep.subr.mxu0 0.0
      %2920 = vmatpush1.msra.mxu0 0.0
      %2921 = vmatprep.subr.mxu0 0.0
      %2922 = vmatpush1.msra.mxu0 0.0
      %2923 = vmatprep.subr.mxu0 0.0
      %2924 = vmatpush1.msra.mxu0 0.0
      %2925 = vmatprep.subr.mxu0 0.0
      %2926 = vmatpush1.msra.mxu0 0.0
      %2927 = vmatprep.subr.mxu0 0.0
      %2928 = vmatpush1.msra.mxu0 0.0
      %2929 = vmatprep.subr.mxu0 0.0
      %2930 = vmatpush1.msra.mxu0 0.0
      %2931 = vmatprep.subr.mxu0 0.0
      %2932 = vmatpush1.msra.mxu0 0.0
      %2933 = vmatprep.subr.mxu0 0.0
      %2934 = vmatpush1.msra.mxu0 0.0
      %2935 = vmatprep.subr.mxu0 0.0
      %2936 = vmatpush1.msra.mxu0 0.0
      %2937 = vmatprep.subr.mxu0 0.0
      %2938 = vmatpush1.msra.mxu0 0.0
      %2939 = vmatprep.subr.mxu0 0.0
      %2940 = vmatpush1.msra.mxu0 0.0
      %2941 = vmatprep.subr.mxu0 0.0
      %2942 = vmatpush1.msra.mxu0 0.0
      %2943 = vmatprep.subr.mxu0 0.0
      %2944 = vmatpush1.msra.mxu0 0.0
      %2945 = vmatprep.subr.mxu0 0.0
      %2946 = vmatpush1.msra.mxu0 0.0
      %2947 = vmatprep.subr.mxu0 0.0
      %2948 = vmatpush1.msra.mxu0 0.0
      %2949 = vmatprep.subr.mxu0 0.0
      %2950 = vmatpush1.msra.mxu0 0.0
      %2951 = vmatprep.mubr.f32.mxu0 0.0
      %2952 = vmatmul.mubr.f32.gmra.mrb[0].mxu0 %v2885
      %v2953 = vpop.f32.mrb[0].mxu0
      %v2954 = vadd.f32 0.0, %v2953
      %v2955 = vpop.f32.mrb[0].mxu0
      %2956 = vdwg.mxu0
      %v2957 = vadd.f32 %v2790, %v2954
      %v2958 = vlaneseq
      %v2959 = vshrl.u32 %v2958, 7
      %v2960 = vsub.s32 3, %v2959
      %v2961 = vrot.slane %v1582, %v2960
      %v2962 = vadd.f32 %v2957, %v2961
      %v2963 = vsel %vm1160, %v2962, 0.0
      %2964 = vadd.xlane.f32.xlu0 %v2963
      %v2965 = vpop.xlane.xlu0 %2964
      %v2966 = vmul.f32 %v2965, %v1164
      %v2967 = vmul.f32 %v2962, %v2962
      %v2968 = vsel %vm1160, %v2967, 0.0
      %2969 = vadd.xlane.f32.xlu0 %v2968
      %v2970 = vpop.xlane.xlu0 %2969
      %v2971 = vmul.f32 %v2970, %v1164
      %v2972 = vmul.f32 %v2966, %v2966
      %v2973 = vsub.f32 %v2971, %v2972
      %v2974 = vsub.f32 %v2962, %v2966
      %v2975 = vadd.f32 %v2973, 1e-05
      %v2976 = vrsqrt.pop %v2975
      %v2977 = vmul.f32 %v2974, %v2976
      %v2978 = vlaneseq
      %v2979 = vshrl.u32 %v2978, 7
      %v2980 = vsub.s32 0, %v2979
      %v2981 = vrot.slane %v1583, %v2980
      %v2982 = vmul.f32 %v2977, %v2981
      %v2983 = vlaneseq
      %v2984 = vshrl.u32 %v2983, 7
      %v2985 = vsub.s32 1, %v2984
      %v2986 = vrot.slane %v1583, %v2985
      %v2987 = vadd.f32 %v2982, %v2986
      %v2988 = vsel %vm1160, %v2987, 0.0
      %2989 = vadd.xlane.f32.xlu0 %v2988
      %v2990 = vpop.xlane.xlu0 %2989
      %v2991 = vmul.f32 %v2990, %v1164
      %v2992 = vmul.f32 %v2987, %v2987
      %v2993 = vsel %vm1160, %v2992, 0.0
      %2994 = vadd.xlane.f32.xlu0 %v2993
      %v2995 = vpop.xlane.xlu0 %2994
      %v2996 = vmul.f32 %v2995, %v1164
      %v2997 = vmul.f32 %v2991, %v2991
      %v2998 = vsub.f32 %v2996, %v2997
      %v2999 = vsub.f32 %v2987, %v2991
      %v3000 = vadd.f32 %v2998, 1e-05
      %v3001 = vrsqrt.pop %v3000
      %v3002 = vmul.f32 %v2999, %v3001
      %v3003 = vmul.f32 %v3002, %v1180
      %v3004 = vadd.f32 %v3003, %v1185
      %v3006 = vsel %vm1160, %v3004, 0
      %3008 = vmatprep.subr.mxu0 0.0
      %3009 = vmatpush1.msra.mxu0 %v1132
      %3010 = vmatprep.subr.mxu0 0.0
      %3011 = vmatpush1.msra.mxu0 %v1133
      %3012 = vmatprep.subr.mxu0 0.0
      %3013 = vmatpush1.msra.mxu0 %v1134
      %3014 = vmatprep.subr.mxu0 0.0
      %3015 = vmatpush1.msra.mxu0 %v1135
      %3016 = vmatprep.subr.mxu0 0.0
      %3017 = vmatpush1.msra.mxu0 0.0
      %3018 = vmatprep.subr.mxu0 0.0
      %3019 = vmatpush1.msra.mxu0 0.0
      %3020 = vmatprep.subr.mxu0 0.0
      %3021 = vmatpush1.msra.mxu0 0.0
      %3022 = vmatprep.subr.mxu0 0.0
      %3023 = vmatpush1.msra.mxu0 0.0
      %3024 = vmatprep.subr.mxu0 0.0
      %3025 = vmatpush1.msra.mxu0 0.0
      %3026 = vmatprep.subr.mxu0 0.0
      %3027 = vmatpush1.msra.mxu0 0.0
      %3028 = vmatprep.subr.mxu0 0.0
      %3029 = vmatpush1.msra.mxu0 0.0
      %3030 = vmatprep.subr.mxu0 0.0
      %3031 = vmatpush1.msra.mxu0 0.0
      %3032 = vmatprep.subr.mxu0 0.0
      %3033 = vmatpush1.msra.mxu0 0.0
      %3034 = vmatprep.subr.mxu0 0.0
      %3035 = vmatpush1.msra.mxu0 0.0
      %3036 = vmatprep.subr.mxu0 0.0
      %3037 = vmatpush1.msra.mxu0 0.0
      %3038 = vmatprep.subr.mxu0 0.0
      %3039 = vmatpush1.msra.mxu0 0.0
      %3040 = vmatprep.subr.mxu0 0.0
      %3041 = vmatpush1.msra.mxu0 0.0
      %3042 = vmatprep.subr.mxu0 0.0
      %3043 = vmatpush1.msra.mxu0 0.0
      %3044 = vmatprep.subr.mxu0 0.0
      %3045 = vmatpush1.msra.mxu0 0.0
      %3046 = vmatprep.subr.mxu0 0.0
      %3047 = vmatpush1.msra.mxu0 0.0
      %3048 = vmatprep.subr.mxu0 0.0
      %3049 = vmatpush1.msra.mxu0 0.0
      %3050 = vmatprep.subr.mxu0 0.0
      %3051 = vmatpush1.msra.mxu0 0.0
      %3052 = vmatprep.subr.mxu0 0.0
      %3053 = vmatpush1.msra.mxu0 0.0
      %3054 = vmatprep.subr.mxu0 0.0
      %3055 = vmatpush1.msra.mxu0 0.0
      %3056 = vmatprep.subr.mxu0 0.0
      %3057 = vmatpush1.msra.mxu0 0.0
      %3058 = vmatprep.subr.mxu0 0.0
      %3059 = vmatpush1.msra.mxu0 0.0
      %3060 = vmatprep.subr.mxu0 0.0
      %3061 = vmatpush1.msra.mxu0 0.0
      %3062 = vmatprep.subr.mxu0 0.0
      %3063 = vmatpush1.msra.mxu0 0.0
      %3064 = vmatprep.subr.mxu0 0.0
      %3065 = vmatpush1.msra.mxu0 0.0
      %3066 = vmatprep.subr.mxu0 0.0
      %3067 = vmatpush1.msra.mxu0 0.0
      %3068 = vmatprep.subr.mxu0 0.0
      %3069 = vmatpush1.msra.mxu0 0.0
      %3070 = vmatprep.subr.mxu0 0.0
      %3071 = vmatpush1.msra.mxu0 0.0
      %3072 = vmatprep.mubr.f32.mxu0 0.0
      %3073 = vmatmul.mubr.f32.gmra.mrb[0].mxu0 %v3006
      %v3074 = vpop.f32.mrb[0].mxu0
      %v3075 = vadd.f32 %v1190, %v3074
      %v3076 = vpop.f32.mrb[0].mxu0
      %3077 = vdwg.mxu0
      %3079 = vrot.lane.b32.xlu0 %v3075, 64
      %v3080 = vpop.permute.xlu0 %3079
      %s3082 = scalar_lea.vmem %s995, 8
      %3083 = vst.msk [vmem:[%s3082] sm:$0xff] %vm1268, %v3080
      %v3084 = vmax.f32 %v3075, 0.0
      %v3086 = vsel %vm1275, %v3084, 0
      %3088 = vmatprep.subr.mxu0 0.0
      %3089 = vmatpush1.msra.mxu0 %v1137
      %3090 = vmatprep.subr.mxu0 0.0
      %3091 = vmatpush1.msra.mxu0 %v1138
      %3092 = vmatprep.subr.mxu0 0.0
      %3093 = vmatpush1.msra.mxu0 %v1139
      %3094 = vmatprep.subr.mxu0 0.0
      %3095 = vmatpush1.msra.mxu0 %v1140
      %3096 = vmatprep.subr.mxu0 0.0
      %3097 = vmatpush1.msra.mxu0 %v1141
      %3098 = vmatprep.subr.mxu0 0.0
      %3099 = vmatpush1.msra.mxu0 %v1142
      %3100 = vmatprep.subr.mxu0 0.0
      %3101 = vmatpush1.msra.mxu0 %v1143
      %3102 = vmatprep.subr.mxu0 0.0
      %3103 = vmatpush1.msra.mxu0 %v1144
      %3104 = vmatprep.subr.mxu0 0.0
      %3105 = vmatpush1.msra.mxu0 0.0
      %3106 = vmatprep.subr.mxu0 0.0
      %3107 = vmatpush1.msra.mxu0 0.0
      %3108 = vmatprep.subr.mxu0 0.0
      %3109 = vmatpush1.msra.mxu0 0.0
      %3110 = vmatprep.subr.mxu0 0.0
      %3111 = vmatpush1.msra.mxu0 0.0
      %3112 = vmatprep.subr.mxu0 0.0
      %3113 = vmatpush1.msra.mxu0 0.0
      %3114 = vmatprep.subr.mxu0 0.0
      %3115 = vmatpush1.msra.mxu0 0.0
      %3116 = vmatprep.subr.mxu0 0.0
      %3117 = vmatpush1.msra.mxu0 0.0
      %3118 = vmatprep.subr.mxu0 0.0
      %3119 = vmatpush1.msra.mxu0 0.0
      %3120 = vmatprep.subr.mxu0 0.0
      %3121 = vmatpush1.msra.mxu0 0.0
      %3122 = vmatprep.subr.mxu0 0.0
      %3123 = vmatpush1.msra.mxu0 0.0
      %3124 = vmatprep.subr.mxu0 0.0
      %3125 = vmatpush1.msra.mxu0 0.0
      %3126 = vmatprep.subr.mxu0 0.0
      %3127 = vmatpush1.msra.mxu0 0.0
      %3128 = vmatprep.subr.mxu0 0.0
      %3129 = vmatpush1.msra.mxu0 0.0
      %3130 = vmatprep.subr.mxu0 0.0
      %3131 = vmatpush1.msra.mxu0 0.0
      %3132 = vmatprep.subr.mxu0 0.0
      %3133 = vmatpush1.msra.mxu0 0.0
      %3134 = vmatprep.subr.mxu0 0.0
      %3135 = vmatpush1.msra.mxu0 0.0
      %3136 = vmatprep.subr.mxu0 0.0
      %3137 = vmatpush1.msra.mxu0 0.0
      %3138 = vmatprep.subr.mxu0 0.0
      %3139 = vmatpush1.msra.mxu0 0.0
      %3140 = vmatprep.subr.mxu0 0.0
      %3141 = vmatpush1.msra.mxu0 0.0
      %3142 = vmatprep.subr.mxu0 0.0
      %3143 = vmatpush1.msra.mxu0 0.0
      %3144 = vmatprep.subr.mxu0 0.0
      %3145 = vmatpush1.msra.mxu0 0.0
      %3146 = vmatprep.subr.mxu0 0.0
      %3147 = vmatpush1.msra.mxu0 0.0
      %3148 = vmatprep.subr.mxu0 0.0
      %3149 = vmatpush1.msra.mxu0 0.0
      %3150 = vmatprep.subr.mxu0 0.0
      %3151 = vmatpush1.msra.mxu0 0.0
      %3152 = vmatprep.mubr.f32.mxu0 0.0
      %3153 = vmatmul.mubr.f32.gmra.mrb[0].mxu0 %v3086
      %v3154 = vpop.f32.mrb[0].mxu0
      %v3155 = vadd.f32 %v1274, %v3154
      %v3156 = vpop.f32.mrb[0].mxu0
      %3157 = vdwg.mxu0
      %v3158 = vmax.f32 %v3155, 0.0
      %v3160 = vsel %vm1275, %v3158, 0
      %3162 = vmatprep.subr.mxu0 0.0
      %3163 = vmatpush1.msra.mxu0 %v1146
      %3164 = vmatprep.subr.mxu0 0.0
      %3165 = vmatpush1.msra.mxu0 %v1147
      %3166 = vmatprep.subr.mxu0 0.0
      %3167 = vmatpush1.msra.mxu0 %v1148
      %3168 = vmatprep.subr.mxu0 0.0
      %3169 = vmatpush1.msra.mxu0 %v1149
      %3170 = vmatprep.subr.mxu0 0.0
      %3171 = vmatpush1.msra.mxu0 %v1150
      %3172 = vmatprep.subr.mxu0 0.0
      %3173 = vmatpush1.msra.mxu0 %v1151
      %3174 = vmatprep.subr.mxu0 0.0
      %3175 = vmatpush1.msra.mxu0 %v1152
      %3176 = vmatprep.subr.mxu0 0.0
      %3177 = vmatpush1.msra.mxu0 %v1153
      %3178 = vmatprep.subr.mxu0 0.0
      %3179 = vmatpush1.msra.mxu0 0.0
      %3180 = vmatprep.subr.mxu0 0.0
      %3181 = vmatpush1.msra.mxu0 0.0
      %3182 = vmatprep.subr.mxu0 0.0
      %3183 = vmatpush1.msra.mxu0 0.0
      %3184 = vmatprep.subr.mxu0 0.0
      %3185 = vmatpush1.msra.mxu0 0.0
      %3186 = vmatprep.subr.mxu0 0.0
      %3187 = vmatpush1.msra.mxu0 0.0
      %3188 = vmatprep.subr.mxu0 0.0
      %3189 = vmatpush1.msra.mxu0 0.0
      %3190 = vmatprep.subr.mxu0 0.0
      %3191 = vmatpush1.msra.mxu0 0.0
      %3192 = vmatprep.subr.mxu0 0.0
      %3193 = vmatpush1.msra.mxu0 0.0
      %3194 = vmatprep.subr.mxu0 0.0
      %3195 = vmatpush1.msra.mxu0 0.0
      %3196 = vmatprep.subr.mxu0 0.0
      %3197 = vmatpush1.msra.mxu0 0.0
      %3198 = vmatprep.subr.mxu0 0.0
      %3199 = vmatpush1.msra.mxu0 0.0
      %3200 = vmatprep.subr.mxu0 0.0
      %3201 = vmatpush1.msra.mxu0 0.0
      %3202 = vmatprep.subr.mxu0 0.0
      %3203 = vmatpush1.msra.mxu0 0.0
      %3204 = vmatprep.subr.mxu0 0.0
      %3205 = vmatpush1.msra.mxu0 0.0
      %3206 = vmatprep.subr.mxu0 0.0
      %3207 = vmatpush1.msra.mxu0 0.0
      %3208 = vmatprep.subr.mxu0 0.0
      %3209 = vmatpush1.msra.mxu0 0.0
      %3210 = vmatprep.subr.mxu0 0.0
      %3211 = vmatpush1.msra.mxu0 0.0
      %3212 = vmatprep.subr.mxu0 0.0
      %3213 = vmatpush1.msra.mxu0 0.0
      %3214 = vmatprep.subr.mxu0 0.0
      %3215 = vmatpush1.msra.mxu0 0.0
      %3216 = vmatprep.subr.mxu0 0.0
      %3217 = vmatpush1.msra.mxu0 0.0
      %3218 = vmatprep.subr.mxu0 0.0
      %3219 = vmatpush1.msra.mxu0 0.0
      %3220 = vmatprep.subr.mxu0 0.0
      %3221 = vmatpush1.msra.mxu0 0.0
      %3222 = vmatprep.subr.mxu0 0.0
      %3223 = vmatpush1.msra.mxu0 0.0
      %3224 = vmatprep.subr.mxu0 0.0
      %3225 = vmatpush1.msra.mxu0 0.0
      %3226 = vmatprep.mubr.f32.mxu0 0.0
      %3227 = vmatmul.mubr.f32.gmra.mrb[0].mxu0 %v3160
      %v3228 = vpop.f32.mrb[0].mxu0
      %v3229 = vadd.f32 %v1353, %v3228
      %v3230 = vpop.f32.mrb[0].mxu0
      %3231 = vdwg.mxu0
      %v3232 = vxor.u32 %v3229, 2147483648
      %v3233 = vmul.f32 %v3232, 1.442695
      %v3234 = vpow.pop %v3233
      %v3235 = vadd.f32 %v3234, 1.0
      %v3236 = vrcp.pop %v3235
      %v3237 = vmul.f32 1.0, %v3236
      %3239 = vrot.lane.b32.xlu0 %v3237, 104
      %v3240 = vpop.permute.xlu0 %3239
      %vm3242 = vcmask 97344
      %3243 = vst.msk [vmem:[%s3082] sm:$0xff] %vm3242, %v3240
      %v3245 = vsel %vm1160, %v3229, 0
      %3247 = vmatprep.subr.mxu0 %v1006
      %3248 = vmatpush1.msra.mxu0 %v1005
      %3249 = vmatprep.subr.mxu0 %v1008
      %3250 = vmatpush1.msra.mxu0 %v1007
      %3251 = vmatprep.subr.mxu0 %v1010
      %3252 = vmatpush1.msra.mxu0 %v1009
      %3253 = vmatprep.subr.mxu0 %v1012
      %3254 = vmatpush1.msra.mxu0 %v1011
      %3255 = vmatprep.subr.mxu0 0.0
      %3256 = vmatpush1.msra.mxu0 0.0
      %3257 = vmatprep.subr.mxu0 0.0
      %3258 = vmatpush1.msra.mxu0 0.0
      %3259 = vmatprep.subr.mxu0 0.0
      %3260 = vmatpush1.msra.mxu0 0.0
      %3261 = vmatprep.subr.mxu0 0.0
      %3262 = vmatpush1.msra.mxu0 0.0
      %3263 = vmatprep.subr.mxu0 0.0
      %3264 = vmatpush1.msra.mxu0 0.0
      %3265 = vmatprep.subr.mxu0 0.0
      %3266 = vmatpush1.msra.mxu0 0.0
      %3267 = vmatprep.subr.mxu0 0.0
      %3268 = vmatpush1.msra.mxu0 0.0
      %3269 = vmatprep.subr.mxu0 0.0
      %3270 = vmatpush1.msra.mxu0 0.0
      %3271 = vmatprep.subr.mxu0 0.0
      %3272 = vmatpush1.msra.mxu0 0.0
      %3273 = vmatprep.subr.mxu0 0.0
      %3274 = vmatpush1.msra.mxu0 0.0
      %3275 = vmatprep.subr.mxu0 0.0
      %3276 = vmatpush1.msra.mxu0 0.0
      %3277 = vmatprep.subr.mxu0 0.0
      %3278 = vmatpush1.msra.mxu0 0.0
      %3279 = vmatprep.subr.mxu0 0.0
      %3280 = vmatpush1.msra.mxu0 0.0
      %3281 = vmatprep.subr.mxu0 0.0
      %3282 = vmatpush1.msra.mxu0 0.0
      %3283 = vmatprep.subr.mxu0 0.0
      %3284 = vmatpush1.msra.mxu0 0.0
      %3285 = vmatprep.subr.mxu0 0.0
      %3286 = vmatpush1.msra.mxu0 0.0
      %3287 = vmatprep.subr.mxu0 0.0
      %3288 = vmatpush1.msra.mxu0 0.0
      %3289 = vmatprep.subr.mxu0 0.0
      %3290 = vmatpush1.msra.mxu0 0.0
      %3291 = vmatprep.subr.mxu0 0.0
      %3292 = vmatpush1.msra.mxu0 0.0
      %3293 = vmatprep.subr.mxu0 0.0
      %3294 = vmatpush1.msra.mxu0 0.0
      %3295 = vmatprep.subr.mxu0 0.0
      %3296 = vmatpush1.msra.mxu0 0.0
      %3297 = vmatprep.subr.mxu0 0.0
      %3298 = vmatpush1.msra.mxu0 0.0
      %3299 = vmatprep.subr.mxu0 0.0
      %3300 = vmatpush1.msra.mxu0 0.0
      %3301 = vmatprep.subr.mxu0 0.0
      %3302 = vmatpush1.msra.mxu0 0.0
      %3303 = vmatprep.subr.mxu0 0.0
      %3304 = vmatpush1.msra.mxu0 0.0
      %3305 = vmatprep.subr.mxu0 0.0
      %3306 = vmatpush1.msra.mxu0 0.0
      %3307 = vmatprep.subr.mxu0 0.0
      %3308 = vmatpush1.msra.mxu0 0.0
      %3309 = vmatprep.subr.mxu0 0.0
      %3310 = vmatpush1.msra.mxu0 0.0
      %3311 = vmatprep.mubr.f32.mxu0 0.0
      %3312 = vmatmul.mubr.f32.gmra.mrb[0].mxu0 %v3245
      %v3313 = vpop.f32.mrb[0].mxu0
      %v3314 = vadd.f32 0.0, %v3313
      %v3315 = vpop.f32.mrb[0].mxu0
      %v3316 = vadd.f32 0.0, %v3315
      %3317 = vdwg.mxu0
      %s3318 = scalar_lea.vmem %s1000, 16
      %3319 = vst [vmem:[%s3318] sm:$0xff] %v3314
      %3320 = vst [vmem:[%s3318 + $0x8] sm:$0xff] %v3316
      %3321 = vmatprep.subr.mxu0 0.0
      %3322 = vmatpush1.msra.mxu0 %v1068
      %3323 = vmatprep.subr.mxu0 0.0
      %3324 = vmatpush1.msra.mxu0 %v1069
      %3325 = vmatprep.subr.mxu0 0.0
      %3326 = vmatpush1.msra.mxu0 %v1070
      %3327 = vmatprep.subr.mxu0 0.0
      %3328 = vmatpush1.msra.mxu0 %v1071
      %3329 = vmatprep.subr.mxu0 0.0
      %3330 = vmatpush1.msra.mxu0 %v1072
      %3331 = vmatprep.subr.mxu0 0.0
      %3332 = vmatpush1.msra.mxu0 %v1073
      %3333 = vmatprep.subr.mxu0 0.0
      %3334 = vmatpush1.msra.mxu0 %v1074
      %3335 = vmatprep.subr.mxu0 0.0
      %3336 = vmatpush1.msra.mxu0 %v1075
      %3337 = vmatprep.subr.mxu0 0.0
      %3338 = vmatpush1.msra.mxu0 %v1076
      %3339 = vmatprep.subr.mxu0 0.0
      %3340 = vmatpush1.msra.mxu0 %v1077
      %3341 = vmatprep.subr.mxu0 0.0
      %3342 = vmatpush1.msra.mxu0 %v1078
      %3343 = vmatprep.subr.mxu0 0.0
      %3344 = vmatpush1.msra.mxu0 %v1079
      %3345 = vmatprep.subr.mxu0 0.0
      %3346 = vmatpush1.msra.mxu0 %v1080
      %3347 = vmatprep.subr.mxu0 0.0
      %3348 = vmatpush1.msra.mxu0 %v1081
      %3349 = vmatprep.subr.mxu0 0.0
      %3350 = vmatpush1.msra.mxu0 %v1082
      %3351 = vmatprep.subr.mxu0 0.0
      %3352 = vmatpush1.msra.mxu0 %v1083
      %3353 = vmatprep.subr.mxu0 0.0
      %3354 = vmatpush1.msra.mxu0 %v1084
      %3355 = vmatprep.subr.mxu0 0.0
      %3356 = vmatpush1.msra.mxu0 %v1085
      %3357 = vmatprep.subr.mxu0 0.0
      %3358 = vmatpush1.msra.mxu0 %v1086
      %3359 = vmatprep.subr.mxu0 0.0
      %3360 = vmatpush1.msra.mxu0 %v1087
      %3361 = vmatprep.subr.mxu0 0.0
      %3362 = vmatpush1.msra.mxu0 %v1088
      %3363 = vmatprep.subr.mxu0 0.0
      %3364 = vmatpush1.msra.mxu0 %v1089
      %3365 = vmatprep.subr.mxu0 0.0
      %3366 = vmatpush1.msra.mxu0 %v1090
      %3367 = vmatprep.subr.mxu0 0.0
      %3368 = vmatpush1.msra.mxu0 %v1091
      %3369 = vmatprep.subr.mxu0 0.0
      %3370 = vmatpush1.msra.mxu0 %v1092
      %3371 = vmatprep.subr.mxu0 0.0
      %3372 = vmatpush1.msra.mxu0 %v1093
      %3373 = vmatprep.subr.mxu0 0.0
      %3374 = vmatpush1.msra.mxu0 %v1094
      %3375 = vmatprep.subr.mxu0 0.0
      %3376 = vmatpush1.msra.mxu0 %v1095
      %3377 = vmatprep.subr.mxu0 0.0
      %3378 = vmatpush1.msra.mxu0 %v1096
      %3379 = vmatprep.subr.mxu0 0.0
      %3380 = vmatpush1.msra.mxu0 %v1097
      %3381 = vmatprep.subr.mxu0 0.0
      %3382 = vmatpush1.msra.mxu0 %v1098
      %3383 = vmatprep.subr.mxu0 0.0
      %3384 = vmatpush1.msra.mxu0 %v1099
      %3385 = vmatprep.mubr.f32.mxu0 %v3316
      %3386 = vmatmul.mubr.f32.gmra.mrb[0].mxu0 %v3314
      %v3387 = vpop.f32.mrb[0].mxu0
      %v3388 = vadd.f32 0.0, %v3387
      %v3389 = vpop.f32.mrb[0].mxu0
      %3390 = vdwg.mxu0
      %vm3391 = vcmask 130048
      %v3392 = vsel %vm3391, %v3388, -inf
      %3393 = vmax.xlane.f32.xlu0 %v3392
      %v3394 = vpop.xlane.xlu0 %3393
      %vm3395 = vcmp.ge.f32.partialorder %v3394, 0.0
      %vm3396 = vcmp.lt.f32.partialorder %v3388, 0.0
      %v3397 = vsel %vm3395, 1, 0
      %vm3398 = vcmp.eq.s32.totalorder %v3397, 1
      %vm3399 = vmand %vm3396, %vm3398
      %v3400 = vsel %vm3399, -1e+30, 0.0
      %s3401 = scalar_lea.vmem %s51, 16
      %v3402 = vld [vmem:[%s3401] sm:$0xff]
      %v3403 = vld [vmem:[%s3401 + $0x8] sm:$0x3]
      %s3404 = scalar_lea.vmem %s31, 32
      %v3405 = vld [vmem:[%s3404] sm:$0xff]
      %v3406 = vld [vmem:[%s3404 + $0x8] sm:$0xff]
      %v3407 = vld [vmem:[%s3404 + $0x10] sm:$0xff]
      %v3408 = vld [vmem:[%s3404 + $0x18] sm:$0xff]
      %v3410 = vsel %vm1160, %v1022, 0
      %v3413 = vsel %vm1160, %v1023, 0
      %3415 = vmatprep.subr.mxu0 0.0
      %3416 = vmatpush1.msra.mxu0 %v3405
      %3417 = vmatprep.subr.mxu0 0.0
      %3418 = vmatpush1.msra.mxu0 %v3406
      %3419 = vmatprep.subr.mxu0 0.0
      %3420 = vmatpush1.msra.mxu0 %v3407
      %3421 = vmatprep.subr.mxu0 0.0
      %3422 = vmatpush1.msra.mxu0 %v3408
      %3423 = vmatprep.subr.mxu0 0.0
      %3424 = vmatpush1.msra.mxu0 0.0
      %3425 = vmatprep.subr.mxu0 0.0
      %3426 = vmatpush1.msra.mxu0 0.0
      %3427 = vmatprep.subr.mxu0 0.0
      %3428 = vmatpush1.msra.mxu0 0.0
      %3429 = vmatprep.subr.mxu0 0.0
      %3430 = vmatpush1.msra.mxu0 0.0
      %3431 = vmatprep.subr.mxu0 0.0
      %3432 = vmatpush1.msra.mxu0 0.0
      %3433 = vmatprep.subr.mxu0 0.0
      %3434 = vmatpush1.msra.mxu0 0.0
      %3435 = vmatprep.subr.mxu0 0.0
      %3436 = vmatpush1.msra.mxu0 0.0
      %3437 = vmatprep.subr.mxu0 0.0
      %3438 = vmatpush1.msra.mxu0 0.0
      %3439 = vmatprep.subr.mxu0 0.0
      %3440 = vmatpush1.msra.mxu0 0.0
      %3441 = vmatprep.subr.mxu0 0.0
      %3442 = vmatpush1.msra.mxu0 0.0
      %3443 = vmatprep.subr.mxu0 0.0
      %3444 = vmatpush1.msra.mxu0 0.0
      %3445 = vmatprep.subr.mxu0 0.0
      %3446 = vmatpush1.msra.mxu0 0.0
      %3447 = vmatprep.subr.mxu0 0.0
      %3448 = vmatpush1.msra.mxu0 0.0
      %3449 = vmatprep.subr.mxu0 0.0
      %3450 = vmatpush1.msra.mxu0 0.0
      %3451 = vmatprep.subr.mxu0 0.0
      %3452 = vmatpush1.msra.mxu0 0.0
      %3453 = vmatprep.subr.mxu0 0.0
      %3454 = vmatpush1.msra.mxu0 0.0
      %3455 = vmatprep.subr.mxu0 0.0
      %3456 = vmatpush1.msra.mxu0 0.0
      %3457 = vmatprep.subr.mxu0 0.0
      %3458 = vmatpush1.msra.mxu0 0.0
      %3459 = vmatprep.subr.mxu0 0.0
      %3460 = vmatpush1.msra.mxu0 0.0
      %3461 = vmatprep.subr.mxu0 0.0
      %3462 = vmatpush1.msra.mxu0 0.0
      %3463 = vmatprep.subr.mxu0 0.0
      %3464 = vmatpush1.msra.mxu0 0.0
      %3465 = vmatprep.subr.mxu0 0.0
      %3466 = vmatpush1.msra.mxu0 0.0
      %3467 = vmatprep.subr.mxu0 0.0
      %3468 = vmatpush1.msra.mxu0 0.0
      %3469 = vmatprep.subr.mxu0 0.0
      %3470 = vmatpush1.msra.mxu0 0.0
      %3471 = vmatprep.subr.mxu0 0.0
      %3472 = vmatpush1.msra.mxu0 0.0
      %3473 = vmatprep.subr.mxu0 0.0
      %3474 = vmatpush1.msra.mxu0 0.0
      %3475 = vmatprep.subr.mxu0 0.0
      %3476 = vmatpush1.msra.mxu0 0.0
      %3477 = vmatprep.subr.mxu0 0.0
      %3478 = vmatpush1.msra.mxu0 0.0
      %3479 = vmatprep.mubr.f32.mxu0 0.0
      %3480 = vmatmul.mubr.f32.gmra.mrb[0].mxu0 %v3410
      %v3481 = vpop.f32.mrb[0].mxu0
      %v3482 = vadd.f32 0.0, %v3481
      %v3483 = vpop.f32.mrb[0].mxu0
      %3484 = vmatprep.mubr.f32.mxu0 0.0
      %3485 = vmatmul.mubr.f32.gmra.mrb[0].mxu0 %v3413
      %v3486 = vpop.f32.mrb[0].mxu0
      %v3487 = vadd.f32 0.0, %v3486
      %v3488 = vpop.f32.mrb[0].mxu0
      %3489 = vdwg.mxu0
      %v3490 = vadd.f32 %v3482, %v1033
      %v3491 = vadd.f32 %v3487, %v1034
      %v3492 = vlaneseq
      %v3493 = vshrl.u32 %v3492, 7
      %v3494 = vsub.s32 0, %v3493
      %v3495 = vrot.slane %v3402, %v3494
      %3497 = vrot.lane.b32.xlu0 %v3495, 32
      %v3498 = vpop.permute.xlu0 %3497
      %v3500 = vadd.f32 %v3482, %v3498
      %v3501 = vadd.f32 %v3487, %v3498
      %s3502 = scalar_lea.vmem %s27, 32
      %v3503 = vld [vmem:[%s3502] sm:$0xff]
      %v3504 = vld [vmem:[%s3502 + $0x8] sm:$0xff]
      %v3505 = vld [vmem:[%s3502 + $0x10] sm:$0xff]
      %v3506 = vld [vmem:[%s3502 + $0x18] sm:$0xff]
      %s3507 = scalar_lea.vmem %s29, 32
      %v3508 = vld [vmem:[%s3507] sm:$0xff]
      %v3509 = vld [vmem:[%s3507 + $0x8] sm:$0xff]
      %v3510 = vld [vmem:[%s3507 + $0x10] sm:$0xff]
      %v3511 = vld [vmem:[%s3507 + $0x18] sm:$0xff]
      %s3512 = scalar_lea.vmem %s33, 32
      %v3513 = vld [vmem:[%s3512] sm:$0xff]
      %v3514 = vld [vmem:[%s3512 + $0x8] sm:$0xff]
      %v3515 = vld [vmem:[%s3512 + $0x10] sm:$0xff]
      %v3516 = vld [vmem:[%s3512 + $0x18] sm:$0xff]
      %v3518 = vsel %vm1160, %v2987, 0
      %3520 = vmatprep.subr.mxu0 0.0
      %3521 = vmatpush1.msra.mxu0 %v3503
      %3522 = vmatprep.subr.mxu0 0.0
      %3523 = vmatpush1.msra.mxu0 %v3504
      %3524 = vmatprep.subr.mxu0 0.0
      %3525 = vmatpush1.msra.mxu0 %v3505
      %3526 = vmatprep.subr.mxu0 0.0
      %3527 = vmatpush1.msra.mxu0 %v3506
      %3528 = vmatprep.subr.mxu0 0.0
      %3529 = vmatpush1.msra.mxu0 0.0
      %3530 = vmatprep.subr.mxu0 0.0
      %3531 = vmatpush1.msra.mxu0 0.0
      %3532 = vmatprep.subr.mxu0 0.0
      %3533 = vmatpush1.msra.mxu0 0.0
      %3534 = vmatprep.subr.mxu0 0.0
      %3535 = vmatpush1.msra.mxu0 0.0
      %3536 = vmatprep.subr.mxu0 0.0
      %3537 = vmatpush1.msra.mxu0 0.0
      %3538 = vmatprep.subr.mxu0 0.0
      %3539 = vmatpush1.msra.mxu0 0.0
      %3540 = vmatprep.subr.mxu0 0.0
      %3541 = vmatpush1.msra.mxu0 0.0
      %3542 = vmatprep.subr.mxu0 0.0
      %3543 = vmatpush1.msra.mxu0 0.0
      %3544 = vmatprep.subr.mxu0 0.0
      %3545 = vmatpush1.msra.mxu0 0.0
      %3546 = vmatprep.subr.mxu0 0.0
      %3547 = vmatpush1.msra.mxu0 0.0
      %3548 = vmatprep.subr.mxu0 0.0
      %3549 = vmatpush1.msra.mxu0 0.0
      %3550 = vmatprep.subr.mxu0 0.0
      %3551 = vmatpush1.msra.mxu0 0.0
      %3552 = vmatprep.subr.mxu0 0.0
      %3553 = vmatpush1.msra.mxu0 0.0
      %3554 = vmatprep.subr.mxu0 0.0
      %3555 = vmatpush1.msra.mxu0 0.0
      %3556 = vmatprep.subr.mxu0 0.0
      %3557 = vmatpush1.msra.mxu0 0.0
      %3558 = vmatprep.subr.mxu0 0.0
      %3559 = vmatpush1.msra.mxu0 0.0
      %3560 = vmatprep.subr.mxu0 0.0
      %3561 = vmatpush1.msra.mxu0 0.0
      %3562 = vmatprep.subr.mxu0 0.0
      %3563 = vmatpush1.msra.mxu0 0.0
      %3564 = vmatprep.subr.mxu0 0.0
      %3565 = vmatpush1.msra.mxu0 0.0
      %3566 = vmatprep.subr.mxu0 0.0
      %3567 = vmatpush1.msra.mxu0 0.0
      %3568 = vmatprep.subr.mxu0 0.0
      %3569 = vmatpush1.msra.mxu0 0.0
      %3570 = vmatprep.subr.mxu0 0.0
      %3571 = vmatpush1.msra.mxu0 0.0
      %3572 = vmatprep.subr.mxu0 0.0
      %3573 = vmatpush1.msra.mxu0 0.0
      %3574 = vmatprep.subr.mxu0 0.0
      %3575 = vmatpush1.msra.mxu0 0.0
      %3576 = vmatprep.subr.mxu0 0.0
      %3577 = vmatpush1.msra.mxu0 0.0
      %3578 = vmatprep.subr.mxu0 0.0
      %3579 = vmatpush1.msra.mxu0 0.0
      %3580 = vmatprep.subr.mxu0 0.0
      %3581 = vmatpush1.msra.mxu0 0.0
      %3582 = vmatprep.subr.mxu0 0.0
      %3583 = vmatpush1.msra.mxu0 0.0
      %3584 = vmatprep.mubr.f32.mxu0 0.0
      %3585 = vmatmul.mubr.f32.gmra.mrb[0].mxu0 %v3518
      %v3586 = vpop.f32.mrb[0].mxu0
      %v3587 = vadd.f32 0.0, %v3586
      %v3588 = vpop.f32.mrb[0].mxu0
      %3589 = vmatprep.mubr.f32.mxu0 0.0
      %3590 = vmatmul.mubr.f32.gmra.mrb[0].mxu0 %v3518
      %v3591 = vpop.f32.mrb[0].mxu0
      %v3592 = vadd.f32 0.0, %v3591
      %v3593 = vpop.f32.mrb[0].mxu0
      %3594 = vmatprep.mubr.f32.mxu0 0.0
      %3595 = vmatmul.mubr.f32.gmra.mrb[0].mxu0 %v3518
      %v3596 = vpop.f32.mrb[0].mxu0
      %v3597 = vadd.f32 0.0, %v3596
      %v3598 = vpop.f32.mrb[0].mxu0
      %3599 = vmatprep.mubr.f32.mxu0 0.0
      %3600 = vmatmul.mubr.f32.gmra.mrb[0].mxu0 %v3518
      %v3601 = vpop.f32.mrb[0].mxu0
      %v3602 = vadd.f32 0.0, %v3601
      %v3603 = vpop.f32.mrb[0].mxu0
      %3604 = vdwg.mxu0
      %v3605 = vmul.f32 %v3587, %v1001
      %v3606 = vmul.f32 %v3592, %v1002
      %v3607 = vmul.f32 %v3597, %v1003
      %v3608 = vmul.f32 %v3602, %v1004
      %v3609 = vadd.f32 %v3605, %v3508
      %v3610 = vadd.f32 %v3606, %v3509
      %v3611 = vadd.f32 %v3607, %v3510
      %v3612 = vadd.f32 %v3608, %v3511
      %v3614 = vsel %vm1160, %v3609, 0
      %v3617 = vsel %vm1160, %v3610, 0
      %v3620 = vsel %vm1160, %v3611, 0
      %v3623 = vsel %vm1160, %v3612, 0
      %v3626 = vsel %vm1160, %v3490, 0
      %v3629 = vsel %vm1160, %v3491, 0
      %3631 = vmatprep.subr.mxu0 0.0
      %3632 = vmatpush1.xpose.msra.mxu0 %v3626
      %3633 = vmatprep.subr.mxu0 0.0
      %3634 = vmatpush1.xpose.msra.mxu0 %v3629
      %3635 = vmatprep.subr.mxu0 0.0
      %3636 = vmatpush1.xpose.msra.mxu0 0.0
      %3637 = vmatprep.subr.mxu0 0.0
      %3638 = vmatpush1.xpose.msra.mxu0 0.0
      %3639 = vmatprep.subr.mxu0 0.0
      %3640 = vmatpush1.xpose.msra.mxu0 0.0
      %3641 = vmatprep.subr.mxu0 0.0
      %3642 = vmatpush1.xpose.msra.mxu0 0.0
      %3643 = vmatprep.subr.mxu0 0.0
      %3644 = vmatpush1.xpose.msra.mxu0 0.0
      %3645 = vmatprep.subr.mxu0 0.0
      %3646 = vmatpush1.xpose.msra.mxu0 0.0
      %3647 = vmatprep.subr.mxu0 0.0
      %3648 = vmatpush1.xpose.msra.mxu0 0.0
      %3649 = vmatprep.subr.mxu0 0.0
      %3650 = vmatpush1.xpose.msra.mxu0 0.0
      %3651 = vmatprep.subr.mxu0 0.0
      %3652 = vmatpush1.xpose.msra.mxu0 0.0
      %3653 = vmatprep.subr.mxu0 0.0
      %3654 = vmatpush1.xpose.msra.mxu0 0.0
      %3655 = vmatprep.subr.mxu0 0.0
      %3656 = vmatpush1.xpose.msra.mxu0 0.0
      %3657 = vmatprep.subr.mxu0 0.0
      %3658 = vmatpush1.xpose.msra.mxu0 0.0
      %3659 = vmatprep.subr.mxu0 0.0
      %3660 = vmatpush1.xpose.msra.mxu0 0.0
      %3661 = vmatprep.subr.mxu0 0.0
      %3662 = vmatpush1.xpose.msra.mxu0 0.0
      %3663 = vmatprep.subr.mxu0 0.0
      %3664 = vmatpush1.xpose.msra.mxu0 0.0
      %3665 = vmatprep.subr.mxu0 0.0
      %3666 = vmatpush1.xpose.msra.mxu0 0.0
      %3667 = vmatprep.subr.mxu0 0.0
      %3668 = vmatpush1.xpose.msra.mxu0 0.0
      %3669 = vmatprep.subr.mxu0 0.0
      %3670 = vmatpush1.xpose.msra.mxu0 0.0
      %3671 = vmatprep.subr.mxu0 0.0
      %3672 = vmatpush1.xpose.msra.mxu0 0.0
      %3673 = vmatprep.subr.mxu0 0.0
      %3674 = vmatpush1.xpose.msra.mxu0 0.0
      %3675 = vmatprep.subr.mxu0 0.0
      %3676 = vmatpush1.xpose.msra.mxu0 0.0
      %3677 = vmatprep.subr.mxu0 0.0
      %3678 = vmatpush1.xpose.msra.mxu0 0.0
      %3679 = vmatprep.subr.mxu0 0.0
      %3680 = vmatpush1.xpose.msra.mxu0 0.0
      %3681 = vmatprep.subr.mxu0 0.0
      %3682 = vmatpush1.xpose.msra.mxu0 0.0
      %3683 = vmatprep.subr.mxu0 0.0
      %3684 = vmatpush1.xpose.msra.mxu0 0.0
      %3685 = vmatprep.subr.mxu0 0.0
      %3686 = vmatpush1.xpose.msra.mxu0 0.0
      %3687 = vmatprep.subr.mxu0 0.0
      %3688 = vmatpush1.xpose.msra.mxu0 0.0
      %3689 = vmatprep.subr.mxu0 0.0
      %3690 = vmatpush1.xpose.msra.mxu0 0.0
      %3691 = vmatprep.subr.mxu0 0.0
      %3692 = vmatpush1.xpose.msra.mxu0 0.0
      %3693 = vmatprep.subr.mxu0 0.0
      %3694 = vmatpush1.xpose.msra.mxu0 0.0
      %3695 = vmatprep.mubr.f32.mxu0 0.0
      %3696 = vmatmul.mubr.f32.gmra.mrb[0].mxu0 %v3614
      %v3697 = vpop.f32.mrb[0].mxu0
      %v3698 = vadd.f32 %v3400, %v3697
      %v3699 = vpop.f32.mrb[0].mxu0
      %3700 = vmatprep.mubr.f32.mxu0 0.0
      %3701 = vmatmul.mubr.f32.gmra.mrb[0].mxu0 %v3617
      %v3702 = vpop.f32.mrb[0].mxu0
      %v3703 = vadd.f32 %v3400, %v3702
      %v3704 = vpop.f32.mrb[0].mxu0
      %3705 = vmatprep.mubr.f32.mxu0 0.0
      %3706 = vmatmul.mubr.f32.gmra.mrb[0].mxu0 %v3620
      %v3707 = vpop.f32.mrb[0].mxu0
      %v3708 = vadd.f32 %v3400, %v3707
      %v3709 = vpop.f32.mrb[0].mxu0
      %3710 = vmatprep.mubr.f32.mxu0 0.0
      %3711 = vmatmul.mubr.f32.gmra.mrb[0].mxu0 %v3623
      %v3712 = vpop.f32.mrb[0].mxu0
      %v3713 = vadd.f32 %v3400, %v3712
      %v3714 = vpop.f32.mrb[0].mxu0
      %3715 = vdwg.mxu0
      %v3716 = vsel %vm3391, %v3698, -inf
      %3717 = vmax.xlane.f32.xlu0 %v3716
      %v3718 = vpop.xlane.xlu0 %3717
      %v3719 = vsel %vm3391, %v3703, -inf
      %3720 = vmax.xlane.f32.xlu0 %v3719
      %v3721 = vpop.xlane.xlu0 %3720
      %v3722 = vsel %vm3391, %v3708, -inf
      %3723 = vmax.xlane.f32.xlu0 %v3722
      %v3724 = vpop.xlane.xlu0 %3723
      %v3725 = vsel %vm3391, %v3713, -inf
      %3726 = vmax.xlane.f32.xlu0 %v3725
      %v3727 = vpop.xlane.xlu0 %3726
      %v3728 = vsub.f32 %v3698, %v3718
      %v3729 = vsub.f32 %v3703, %v3721
      %v3730 = vsub.f32 %v3708, %v3724
      %v3731 = vsub.f32 %v3713, %v3727
      %v3732 = vmul.f32 %v3728, 1.442695
      %v3733 = vpow.pop %v3732
      %v3734 = vmul.f32 %v3729, 1.442695
      %v3735 = vpow.pop %v3734
      %v3736 = vmul.f32 %v3730, 1.442695
      %v3737 = vpow.pop %v3736
      %v3738 = vmul.f32 %v3731, 1.442695
      %v3739 = vpow.pop %v3738
      %v3740 = vsel %vm3391, %v3733, 0.0
      %3741 = vadd.xlane.f32.xlu0 %v3740
      %v3742 = vpop.xlane.xlu0 %3741
      %v3743 = vsel %vm3391, %v3735, 0.0
      %3744 = vadd.xlane.f32.xlu0 %v3743
      %v3745 = vpop.xlane.xlu0 %3744
      %v3746 = vsel %vm3391, %v3737, 0.0
      %3747 = vadd.xlane.f32.xlu0 %v3746
      %v3748 = vpop.xlane.xlu0 %3747
      %v3749 = vsel %vm3391, %v3739, 0.0
      %3750 = vadd.xlane.f32.xlu0 %v3749
      %v3751 = vpop.xlane.xlu0 %3750
      %v3752 = vrcp.pop %v3742
      %v3753 = vrcp.pop %v3745
      %v3754 = vrcp.pop %v3748
      %v3755 = vrcp.pop %v3751
      %3758 = vrot.lane.b32.xlu0 %v3500, 96
      %v3759 = vpop.permute.xlu0 %3758
      %3760 = vrot.lane.b32.xlu0 %v3501, 96
      %v3761 = vpop.permute.xlu0 %3760
      %v3765 = vsel %vm3391, %v3733, 0
      %v3768 = vsel %vm3391, %v3735, 0
      %v3771 = vsel %vm3391, %v3737, 0
      %v3774 = vsel %vm3391, %v3739, 0
      %3776 = vmatprep.subr.mxu0 0.0
      %3777 = vmatpush1.msra.mxu0 %v3759
      %3778 = vmatprep.subr.mxu0 0.0
      %3779 = vmatpush1.msra.mxu0 %v3761
      %3780 = vmatprep.subr.mxu0 0.0
      %3781 = vmatpush1.msra.mxu0 0.0
      %3782 = vmatprep.subr.mxu0 0.0
      %3783 = vmatpush1.msra.mxu0 0.0
      %3784 = vmatprep.subr.mxu0 0.0
      %3785 = vmatpush1.msra.mxu0 0.0
      %3786 = vmatprep.subr.mxu0 0.0
      %3787 = vmatpush1.msra.mxu0 0.0
      %3788 = vmatprep.subr.mxu0 0.0
      %3789 = vmatpush1.msra.mxu0 0.0
      %3790 = vmatprep.subr.mxu0 0.0
      %3791 = vmatpush1.msra.mxu0 0.0
      %3792 = vmatprep.subr.mxu0 0.0
      %3793 = vmatpush1.msra.mxu0 0.0
      %3794 = vmatprep.subr.mxu0 0.0
      %3795 = vmatpush1.msra.mxu0 0.0
      %3796 = vmatprep.subr.mxu0 0.0
      %3797 = vmatpush1.msra.mxu0 0.0
      %3798 = vmatprep.subr.mxu0 0.0
      %3799 = vmatpush1.msra.mxu0 0.0
      %3800 = vmatprep.subr.mxu0 0.0
      %3801 = vmatpush1.msra.mxu0 0.0
      %3802 = vmatprep.subr.mxu0 0.0
      %3803 = vmatpush1.msra.mxu0 0.0
      %3804 = vmatprep.subr.mxu0 0.0
      %3805 = vmatpush1.msra.mxu0 0.0
      %3806 = vmatprep.subr.mxu0 0.0
      %3807 = vmatpush1.msra.mxu0 0.0
      %3808 = vmatprep.subr.mxu0 0.0
      %3809 = vmatpush1.msra.mxu0 0.0
      %3810 = vmatprep.subr.mxu0 0.0
      %3811 = vmatpush1.msra.mxu0 0.0
      %3812 = vmatprep.subr.mxu0 0.0
      %3813 = vmatpush1.msra.mxu0 0.0
      %3814 = vmatprep.subr.mxu0 0.0
      %3815 = vmatpush1.msra.mxu0 0.0
      %3816 = vmatprep.subr.mxu0 0.0
      %3817 = vmatpush1.msra.mxu0 0.0
      %3818 = vmatprep.subr.mxu0 0.0
      %3819 = vmatpush1.msra.mxu0 0.0
      %3820 = vmatprep.subr.mxu0 0.0
      %3821 = vmatpush1.msra.mxu0 0.0
      %3822 = vmatprep.subr.mxu0 0.0
      %3823 = vmatpush1.msra.mxu0 0.0
      %3824 = vmatprep.subr.mxu0 0.0
      %3825 = vmatpush1.msra.mxu0 0.0
      %3826 = vmatprep.subr.mxu0 0.0
      %3827 = vmatpush1.msra.mxu0 0.0
      %3828 = vmatprep.subr.mxu0 0.0
      %3829 = vmatpush1.msra.mxu0 0.0
      %3830 = vmatprep.subr.mxu0 0.0
      %3831 = vmatpush1.msra.mxu0 0.0
      %3832 = vmatprep.subr.mxu0 0.0
      %3833 = vmatpush1.msra.mxu0 0.0
      %3834 = vmatprep.subr.mxu0 0.0
      %3835 = vmatpush1.msra.mxu0 0.0
      %3836 = vmatprep.subr.mxu0 0.0
      %3837 = vmatpush1.msra.mxu0 0.0
      %3838 = vmatprep.subr.mxu0 0.0
      %3839 = vmatpush1.msra.mxu0 0.0
      %3840 = vmatprep.mubr.f32.mxu0 0.0
      %3841 = vmatmul.mubr.f32.gmra.mrb[0].mxu0 %v3765
      %v3842 = vpop.f32.mrb[0].mxu0
      %v3843 = vadd.f32 0.0, %v3842
      %v3844 = vpop.f32.mrb[0].mxu0
      %3845 = vmatprep.mubr.f32.mxu0 0.0
      %3846 = vmatmul.mubr.f32.gmra.mrb[0].mxu0 %v3768
      %v3847 = vpop.f32.mrb[0].mxu0
      %v3848 = vadd.f32 0.0, %v3847
      %v3849 = vpop.f32.mrb[0].mxu0
      %3850 = vmatprep.mubr.f32.mxu0 0.0
      %3851 = vmatmul.mubr.f32.gmra.mrb[0].mxu0 %v3771
      %v3852 = vpop.f32.mrb[0].mxu0
      %v3853 = vadd.f32 0.0, %v3852
      %v3854 = vpop.f32.mrb[0].mxu0
      %3855 = vmatprep.mubr.f32.mxu0 0.0
      %3856 = vmatmul.mubr.f32.gmra.mrb[0].mxu0 %v3774
      %v3857 = vpop.f32.mrb[0].mxu0
      %v3858 = vadd.f32 0.0, %v3857
      %v3859 = vpop.f32.mrb[0].mxu0
      %3860 = vdwg.mxu0
      %v3861 = vmul.f32 %v3752, %v1001
      %v3862 = vmul.f32 %v3753, %v1002
      %v3863 = vmul.f32 %v3754, %v1003
      %v3864 = vmul.f32 %v3755, %v1004
      %v3865 = vmul.f32 %v3843, %v3861
      %v3866 = vmul.f32 %v3848, %v3862
      %v3867 = vmul.f32 %v3853, %v3863
      %v3868 = vmul.f32 %v3858, %v3864
      %v3869 = vadd.f32 %v3865, %v3866
      %v3870 = vadd.f32 %v3869, %v3867
      %v3871 = vadd.f32 %v3870, %v3868
      %v3872 = vlaneseq
      %v3873 = vshrl.u32 %v3872, 7
      %v3874 = vsub.s32 1, %v3873
      %v3875 = vrot.slane %v3402, %v3874
      %v3877 = vsel %vm1160, %v3871, 0
      %3879 = vmatprep.subr.mxu0 0.0
      %3880 = vmatpush1.msra.mxu0 %v3513
      %3881 = vmatprep.subr.mxu0 0.0
      %3882 = vmatpush1.msra.mxu0 %v3514
      %3883 = vmatprep.subr.mxu0 0.0
      %3884 = vmatpush1.msra.mxu0 %v3515
      %3885 = vmatprep.subr.mxu0 0.0
      %3886 = vmatpush1.msra.mxu0 %v3516
      %3887 = vmatprep.subr.mxu0 0.0
      %3888 = vmatpush1.msra.mxu0 0.0
      %3889 = vmatprep.subr.mxu0 0.0
      %3890 = vmatpush1.msra.mxu0 0.0
      %3891 = vmatprep.subr.mxu0 0.0
      %3892 = vmatpush1.msra.mxu0 0.0
      %3893 = vmatprep.subr.mxu0 0.0
      %3894 = vmatpush1.msra.mxu0 0.0
      %3895 = vmatprep.subr.mxu0 0.0
      %3896 = vmatpush1.msra.mxu0 0.0
      %3897 = vmatprep.subr.mxu0 0.0
      %3898 = vmatpush1.msra.mxu0 0.0
      %3899 = vmatprep.subr.mxu0 0.0
      %3900 = vmatpush1.msra.mxu0 0.0
      %3901 = vmatprep.subr.mxu0 0.0
      %3902 = vmatpush1.msra.mxu0 0.0
      %3903 = vmatprep.subr.mxu0 0.0
      %3904 = vmatpush1.msra.mxu0 0.0
      %3905 = vmatprep.subr.mxu0 0.0
      %3906 = vmatpush1.msra.mxu0 0.0
      %3907 = vmatprep.subr.mxu0 0.0
      %3908 = vmatpush1.msra.mxu0 0.0
      %3909 = vmatprep.subr.mxu0 0.0
      %3910 = vmatpush1.msra.mxu0 0.0
      %3911 = vmatprep.subr.mxu0 0.0
      %3912 = vmatpush1.msra.mxu0 0.0
      %3913 = vmatprep.subr.mxu0 0.0
      %3914 = vmatpush1.msra.mxu0 0.0
      %3915 = vmatprep.subr.mxu0 0.0
      %3916 = vmatpush1.msra.mxu0 0.0
      %3917 = vmatprep.subr.mxu0 0.0
      %3918 = vmatpush1.msra.mxu0 0.0
      %3919 = vmatprep.subr.mxu0 0.0
      %3920 = vmatpush1.msra.mxu0 0.0
      %3921 = vmatprep.subr.mxu0 0.0
      %3922 = vmatpush1.msra.mxu0 0.0
      %3923 = vmatprep.subr.mxu0 0.0
      %3924 = vmatpush1.msra.mxu0 0.0
      %3925 = vmatprep.subr.mxu0 0.0
      %3926 = vmatpush1.msra.mxu0 0.0
      %3927 = vmatprep.subr.mxu0 0.0
      %3928 = vmatpush1.msra.mxu0 0.0
      %3929 = vmatprep.subr.mxu0 0.0
      %3930 = vmatpush1.msra.mxu0 0.0
      %3931 = vmatprep.subr.mxu0 0.0
      %3932 = vmatpush1.msra.mxu0 0.0
      %3933 = vmatprep.subr.mxu0 0.0
      %3934 = vmatpush1.msra.mxu0 0.0
      %3935 = vmatprep.subr.mxu0 0.0
      %3936 = vmatpush1.msra.mxu0 0.0
      %3937 = vmatprep.subr.mxu0 0.0
      %3938 = vmatpush1.msra.mxu0 0.0
      %3939 = vmatprep.subr.mxu0 0.0
      %3940 = vmatpush1.msra.mxu0 0.0
      %3941 = vmatprep.subr.mxu0 0.0
      %3942 = vmatpush1.msra.mxu0 0.0
      %3943 = vmatprep.mubr.f32.mxu0 0.0
      %3944 = vmatmul.mubr.f32.gmra.mrb[0].mxu0 %v3877
      %v3945 = vpop.f32.mrb[0].mxu0
      %v3946 = vadd.f32 %v3875, %v3945
      %v3947 = vpop.f32.mrb[0].mxu0
      %3948 = vdwg.mxu0
      %v3949 = vadd.f32 %v2987, %v3946
      %v3950 = vsel %vm1160, %v3949, 0.0
      %3951 = vadd.xlane.f32.xlu0 %v3950
      %v3952 = vpop.xlane.xlu0 %3951
      %v3953 = vmul.f32 %v3952, %v1164
      %v3954 = vmul.f32 %v3949, %v3949
      %v3955 = vsel %vm1160, %v3954, 0.0
      %3956 = vadd.xlane.f32.xlu0 %v3955
      %v3957 = vpop.xlane.xlu0 %3956
      %v3958 = vmul.f32 %v3957, %v1164
      %v3959 = vmul.f32 %v3953, %v3953
      %v3960 = vsub.f32 %v3958, %v3959
      %v3961 = vsub.f32 %v3949, %v3953
      %v3962 = vadd.f32 %v3960, 1e-05
      %v3963 = vrsqrt.pop %v3962
      %v3964 = vmul.f32 %v3961, %v3963
      %v3965 = vlaneseq
      %v3966 = vshrl.u32 %v3965, 7
      %v3967 = vsub.s32 4, %v3966
      %v3968 = vrot.slane %v3402, %v3967
      %v3969 = vmul.f32 %v3964, %v3968
      %v3970 = vlaneseq
      %v3971 = vshrl.u32 %v3970, 7
      %v3972 = vsub.s32 5, %v3971
      %v3973 = vrot.slane %v3402, %v3972
      %v3974 = vadd.f32 %v3969, %v3973
      %s3975 = scalar_lea.vmem %s39, 32
      %v3976 = vld [vmem:[%s3975] sm:$0xff]
      %v3977 = vld [vmem:[%s3975 + $0x8] sm:$0xff]
      %v3978 = vld [vmem:[%s3975 + $0x10] sm:$0xff]
      %v3979 = vld [vmem:[%s3975 + $0x18] sm:$0xff]
      %s3980 = scalar_lea.vmem %s41, 8
      %v3981 = vld [vmem:[%s3980] sm:$0xff]
      %v3983 = vsel %vm1160, %v3974, 0
      %3985 = vmatprep.subr.mxu0 0.0
      %3986 = vmatpush1.msra.mxu0 %v3976
      %3987 = vmatprep.subr.mxu0 0.0
      %3988 = vmatpush1.msra.mxu0 %v3977
      %3989 = vmatprep.subr.mxu0 0.0
      %3990 = vmatpush1.msra.mxu0 %v3978
      %3991 = vmatprep.subr.mxu0 0.0
      %3992 = vmatpush1.msra.mxu0 %v3979
      %3993 = vmatprep.subr.mxu0 0.0
      %3994 = vmatpush1.msra.mxu0 0.0
      %3995 = vmatprep.subr.mxu0 0.0
      %3996 = vmatpush1.msra.mxu0 0.0
      %3997 = vmatprep.subr.mxu0 0.0
      %3998 = vmatpush1.msra.mxu0 0.0
      %3999 = vmatprep.subr.mxu0 0.0
      %4000 = vmatpush1.msra.mxu0 0.0
      %4001 = vmatprep.subr.mxu0 0.0
      %4002 = vmatpush1.msra.mxu0 0.0
      %4003 = vmatprep.subr.mxu0 0.0
      %4004 = vmatpush1.msra.mxu0 0.0
      %4005 = vmatprep.subr.mxu0 0.0
      %4006 = vmatpush1.msra.mxu0 0.0
      %4007 = vmatprep.subr.mxu0 0.0
      %4008 = vmatpush1.msra.mxu0 0.0
      %4009 = vmatprep.subr.mxu0 0.0
      %4010 = vmatpush1.msra.mxu0 0.0
      %4011 = vmatprep.subr.mxu0 0.0
      %4012 = vmatpush1.msra.mxu0 0.0
      %4013 = vmatprep.subr.mxu0 0.0
      %4014 = vmatpush1.msra.mxu0 0.0
      %4015 = vmatprep.subr.mxu0 0.0
      %4016 = vmatpush1.msra.mxu0 0.0
      %4017 = vmatprep.subr.mxu0 0.0
      %4018 = vmatpush1.msra.mxu0 0.0
      %4019 = vmatprep.subr.mxu0 0.0
      %4020 = vmatpush1.msra.mxu0 0.0
      %4021 = vmatprep.subr.mxu0 0.0
      %4022 = vmatpush1.msra.mxu0 0.0
      %4023 = vmatprep.subr.mxu0 0.0
      %4024 = vmatpush1.msra.mxu0 0.0
      %4025 = vmatprep.subr.mxu0 0.0
      %4026 = vmatpush1.msra.mxu0 0.0
      %4027 = vmatprep.subr.mxu0 0.0
      %4028 = vmatpush1.msra.mxu0 0.0
      %4029 = vmatprep.subr.mxu0 0.0
      %4030 = vmatpush1.msra.mxu0 0.0
      %4031 = vmatprep.subr.mxu0 0.0
      %4032 = vmatpush1.msra.mxu0 0.0
      %4033 = vmatprep.subr.mxu0 0.0
      %4034 = vmatpush1.msra.mxu0 0.0
      %4035 = vmatprep.subr.mxu0 0.0
      %4036 = vmatpush1.msra.mxu0 0.0
      %4037 = vmatprep.subr.mxu0 0.0
      %4038 = vmatpush1.msra.mxu0 0.0
      %4039 = vmatprep.subr.mxu0 0.0
      %4040 = vmatpush1.msra.mxu0 0.0
      %4041 = vmatprep.subr.mxu0 0.0
      %4042 = vmatpush1.msra.mxu0 0.0
      %4043 = vmatprep.subr.mxu0 0.0
      %4044 = vmatpush1.msra.mxu0 0.0
      %4045 = vmatprep.subr.mxu0 0.0
      %4046 = vmatpush1.msra.mxu0 0.0
      %4047 = vmatprep.subr.mxu0 0.0
      %4048 = vmatpush1.msra.mxu0 0.0
      %4049 = vmatprep.mubr.f32.mxu0 0.0
      %4050 = vmatmul.mubr.f32.gmra.mrb[0].mxu0 %v3983
      %v4051 = vpop.f32.mrb[0].mxu0
      %v4052 = vadd.f32 %v3981, %v4051
      %v4053 = vpop.f32.mrb[0].mxu0
      %4054 = vdwg.mxu0
      %s4055 = scalar_lea.vmem %s35, 32
      %v4056 = vld [vmem:[%s4055] sm:$0xff]
      %v4057 = vld [vmem:[%s4055 + $0x8] sm:$0xff]
      %v4058 = vld [vmem:[%s4055 + $0x10] sm:$0xff]
      %v4059 = vld [vmem:[%s4055 + $0x18] sm:$0xff]
      %s4060 = scalar_lea.vmem %s37, 32
      %v4061 = vld [vmem:[%s4060] sm:$0xff]
      %v4062 = vld [vmem:[%s4060 + $0x8] sm:$0xff]
      %v4063 = vld [vmem:[%s4060 + $0x10] sm:$0xff]
      %v4064 = vld [vmem:[%s4060 + $0x18] sm:$0xff]
      %s4065 = scalar_lea.vmem %s43, 32
      %v4066 = vld [vmem:[%s4065] sm:$0xff]
      %v4067 = vld [vmem:[%s4065 + $0x8] sm:$0xff]
      %v4068 = vld [vmem:[%s4065 + $0x10] sm:$0xff]
      %v4069 = vld [vmem:[%s4065 + $0x18] sm:$0xff]
      %4070 = vmatprep.subr.mxu0 0.0
      %4071 = vmatpush1.msra.mxu0 %v4056
      %4072 = vmatprep.subr.mxu0 0.0
      %4073 = vmatpush1.msra.mxu0 %v4057
      %4074 = vmatprep.subr.mxu0 0.0
      %4075 = vmatpush1.msra.mxu0 %v4058
      %4076 = vmatprep.subr.mxu0 0.0
      %4077 = vmatpush1.msra.mxu0 %v4059
      %4078 = vmatprep.subr.mxu0 0.0
      %4079 = vmatpush1.msra.mxu0 0.0
      %4080 = vmatprep.subr.mxu0 0.0
      %4081 = vmatpush1.msra.mxu0 0.0
      %4082 = vmatprep.subr.mxu0 0.0
      %4083 = vmatpush1.msra.mxu0 0.0
      %4084 = vmatprep.subr.mxu0 0.0
      %4085 = vmatpush1.msra.mxu0 0.0
      %4086 = vmatprep.subr.mxu0 0.0
      %4087 = vmatpush1.msra.mxu0 0.0
      %4088 = vmatprep.subr.mxu0 0.0
      %4089 = vmatpush1.msra.mxu0 0.0
      %4090 = vmatprep.subr.mxu0 0.0
      %4091 = vmatpush1.msra.mxu0 0.0
      %4092 = vmatprep.subr.mxu0 0.0
      %4093 = vmatpush1.msra.mxu0 0.0
      %4094 = vmatprep.subr.mxu0 0.0
      %4095 = vmatpush1.msra.mxu0 0.0
      %4096 = vmatprep.subr.mxu0 0.0
      %4097 = vmatpush1.msra.mxu0 0.0
      %4098 = vmatprep.subr.mxu0 0.0
      %4099 = vmatpush1.msra.mxu0 0.0
      %4100 = vmatprep.subr.mxu0 0.0
      %4101 = vmatpush1.msra.mxu0 0.0
      %4102 = vmatprep.subr.mxu0 0.0
      %4103 = vmatpush1.msra.mxu0 0.0
      %4104 = vmatprep.subr.mxu0 0.0
      %4105 = vmatpush1.msra.mxu0 0.0
      %4106 = vmatprep.subr.mxu0 0.0
      %4107 = vmatpush1.msra.mxu0 0.0
      %4108 = vmatprep.subr.mxu0 0.0
      %4109 = vmatpush1.msra.mxu0 0.0
      %4110 = vmatprep.subr.mxu0 0.0
      %4111 = vmatpush1.msra.mxu0 0.0
      %4112 = vmatprep.subr.mxu0 0.0
      %4113 = vmatpush1.msra.mxu0 0.0
      %4114 = vmatprep.subr.mxu0 0.0
      %4115 = vmatpush1.msra.mxu0 0.0
      %4116 = vmatprep.subr.mxu0 0.0
      %4117 = vmatpush1.msra.mxu0 0.0
      %4118 = vmatprep.subr.mxu0 0.0
      %4119 = vmatpush1.msra.mxu0 0.0
      %4120 = vmatprep.subr.mxu0 0.0
      %4121 = vmatpush1.msra.mxu0 0.0
      %4122 = vmatprep.subr.mxu0 0.0
      %4123 = vmatpush1.msra.mxu0 0.0
      %4124 = vmatprep.subr.mxu0 0.0
      %4125 = vmatpush1.msra.mxu0 0.0
      %4126 = vmatprep.subr.mxu0 0.0
      %4127 = vmatpush1.msra.mxu0 0.0
      %4128 = vmatprep.subr.mxu0 0.0
      %4129 = vmatpush1.msra.mxu0 0.0
      %4130 = vmatprep.subr.mxu0 0.0
      %4131 = vmatpush1.msra.mxu0 0.0
      %4132 = vmatprep.subr.mxu0 0.0
      %4133 = vmatpush1.msra.mxu0 0.0
      %4134 = vmatprep.mubr.f32.mxu0 0.0
      %4135 = vmatmul.mubr.f32.gmra.mrb[0].mxu0 %v3983
      %v4136 = vpop.f32.mrb[0].mxu0
      %v4137 = vadd.f32 0.0, %v4136
      %v4138 = vpop.f32.mrb[0].mxu0
      %4139 = vmatprep.mubr.f32.mxu0 0.0
      %4140 = vmatmul.mubr.f32.gmra.mrb[0].mxu0 %v3983
      %v4141 = vpop.f32.mrb[0].mxu0
      %v4142 = vadd.f32 0.0, %v4141
      %v4143 = vpop.f32.mrb[0].mxu0
      %4144 = vmatprep.mubr.f32.mxu0 0.0
      %4145 = vmatmul.mubr.f32.gmra.mrb[0].mxu0 %v3983
      %v4146 = vpop.f32.mrb[0].mxu0
      %v4147 = vadd.f32 0.0, %v4146
      %v4148 = vpop.f32.mrb[0].mxu0
      %4149 = vmatprep.mubr.f32.mxu0 0.0
      %4150 = vmatmul.mubr.f32.gmra.mrb[0].mxu0 %v3983
      %v4151 = vpop.f32.mrb[0].mxu0
      %v4152 = vadd.f32 0.0, %v4151
      %v4153 = vpop.f32.mrb[0].mxu0
      %4154 = vdwg.mxu0
      %v4155 = vmul.f32 %v4137, %v1001
      %v4156 = vmul.f32 %v4142, %v1002
      %v4157 = vmul.f32 %v4147, %v1003
      %v4158 = vmul.f32 %v4152, %v1004
      %v4159 = vadd.f32 %v4155, %v4061
      %v4160 = vadd.f32 %v4156, %v4062
      %v4161 = vadd.f32 %v4157, %v4063
      %v4162 = vadd.f32 %v4158, %v4064
      %v4164 = vsel %vm1160, %v4159, 0
      %v4167 = vsel %vm1160, %v4160, 0
      %v4170 = vsel %vm1160, %v4161, 0
      %v4173 = vsel %vm1160, %v4162, 0
      %v4176 = vsel %vm1160, %v4052, 0
      %4178 = vmatprep.subr.mxu0 0.0
      %4179 = vmatpush1.xpose.msra.mxu0 %v4176
      %4180 = vmatprep.subr.mxu0 0.0
      %4181 = vmatpush1.xpose.msra.mxu0 0.0
      %4182 = vmatprep.subr.mxu0 0.0
      %4183 = vmatpush1.xpose.msra.mxu0 0.0
      %4184 = vmatprep.subr.mxu0 0.0
      %4185 = vmatpush1.xpose.msra.mxu0 0.0
      %4186 = vmatprep.subr.mxu0 0.0
      %4187 = vmatpush1.xpose.msra.mxu0 0.0
      %4188 = vmatprep.subr.mxu0 0.0
      %4189 = vmatpush1.xpose.msra.mxu0 0.0
      %4190 = vmatprep.subr.mxu0 0.0
      %4191 = vmatpush1.xpose.msra.mxu0 0.0
      %4192 = vmatprep.subr.mxu0 0.0
      %4193 = vmatpush1.xpose.msra.mxu0 0.0
      %4194 = vmatprep.subr.mxu0 0.0
      %4195 = vmatpush1.xpose.msra.mxu0 0.0
      %4196 = vmatprep.subr.mxu0 0.0
      %4197 = vmatpush1.xpose.msra.mxu0 0.0
      %4198 = vmatprep.subr.mxu0 0.0
      %4199 = vmatpush1.xpose.msra.mxu0 0.0
      %4200 = vmatprep.subr.mxu0 0.0
      %4201 = vmatpush1.xpose.msra.mxu0 0.0
      %4202 = vmatprep.subr.mxu0 0.0
      %4203 = vmatpush1.xpose.msra.mxu0 0.0
      %4204 = vmatprep.subr.mxu0 0.0
      %4205 = vmatpush1.xpose.msra.mxu0 0.0
      %4206 = vmatprep.subr.mxu0 0.0
      %4207 = vmatpush1.xpose.msra.mxu0 0.0
      %4208 = vmatprep.subr.mxu0 0.0
      %4209 = vmatpush1.xpose.msra.mxu0 0.0
      %4210 = vmatprep.subr.mxu0 0.0
      %4211 = vmatpush1.xpose.msra.mxu0 0.0
      %4212 = vmatprep.subr.mxu0 0.0
      %4213 = vmatpush1.xpose.msra.mxu0 0.0
      %4214 = vmatprep.subr.mxu0 0.0
      %4215 = vmatpush1.xpose.msra.mxu0 0.0
      %4216 = vmatprep.subr.mxu0 0.0
      %4217 = vmatpush1.xpose.msra.mxu0 0.0
      %4218 = vmatprep.subr.mxu0 0.0
      %4219 = vmatpush1.xpose.msra.mxu0 0.0
      %4220 = vmatprep.subr.mxu0 0.0
      %4221 = vmatpush1.xpose.msra.mxu0 0.0
      %4222 = vmatprep.subr.mxu0 0.0
      %4223 = vmatpush1.xpose.msra.mxu0 0.0
      %4224 = vmatprep.subr.mxu0 0.0
      %4225 = vmatpush1.xpose.msra.mxu0 0.0
      %4226 = vmatprep.subr.mxu0 0.0
      %4227 = vmatpush1.xpose.msra.mxu0 0.0
      %4228 = vmatprep.subr.mxu0 0.0
      %4229 = vmatpush1.xpose.msra.mxu0 0.0
      %4230 = vmatprep.subr.mxu0 0.0
      %4231 = vmatpush1.xpose.msra.mxu0 0.0
      %4232 = vmatprep.subr.mxu0 0.0
      %4233 = vmatpush1.xpose.msra.mxu0 0.0
      %4234 = vmatprep.subr.mxu0 0.0
      %4235 = vmatpush1.xpose.msra.mxu0 0.0
      %4236 = vmatprep.subr.mxu0 0.0
      %4237 = vmatpush1.xpose.msra.mxu0 0.0
      %4238 = vmatprep.subr.mxu0 0.0
      %4239 = vmatpush1.xpose.msra.mxu0 0.0
      %4240 = vmatprep.subr.mxu0 0.0
      %4241 = vmatpush1.xpose.msra.mxu0 0.0
      %4242 = vmatprep.mubr.f32.mxu0 0.0
      %4243 = vmatmul.mubr.f32.gmra.mrb[0].mxu0 %v4164
      %v4244 = vpop.f32.mrb[0].mxu0
      %v4245 = vadd.f32 0.0, %v4244
      %v4246 = vpop.f32.mrb[0].mxu0
      %4247 = vmatprep.mubr.f32.mxu0 0.0
      %4248 = vmatmul.mubr.f32.gmra.mrb[0].mxu0 %v4167
      %v4249 = vpop.f32.mrb[0].mxu0
      %v4250 = vadd.f32 0.0, %v4249
      %v4251 = vpop.f32.mrb[0].mxu0
      %4252 = vmatprep.mubr.f32.mxu0 0.0
      %4253 = vmatmul.mubr.f32.gmra.mrb[0].mxu0 %v4170
      %v4254 = vpop.f32.mrb[0].mxu0
      %v4255 = vadd.f32 0.0, %v4254
      %v4256 = vpop.f32.mrb[0].mxu0
      %4257 = vmatprep.mubr.f32.mxu0 0.0
      %4258 = vmatmul.mubr.f32.gmra.mrb[0].mxu0 %v4173
      %v4259 = vpop.f32.mrb[0].mxu0
      %v4260 = vadd.f32 0.0, %v4259
      %v4261 = vpop.f32.mrb[0].mxu0
      %4262 = vdwg.mxu0
      %v4263 = vsel %vm2536, %v4245, -inf
      %4264 = vmax.xlane.f32.xlu0 %v4263
      %v4265 = vpop.xlane.xlu0 %4264
      %v4266 = vsel %vm2536, %v4250, -inf
      %4267 = vmax.xlane.f32.xlu0 %v4266
      %v4268 = vpop.xlane.xlu0 %4267
      %v4269 = vsel %vm2536, %v4255, -inf
      %4270 = vmax.xlane.f32.xlu0 %v4269
      %v4271 = vpop.xlane.xlu0 %4270
      %v4272 = vsel %vm2536, %v4260, -inf
      %4273 = vmax.xlane.f32.xlu0 %v4272
      %v4274 = vpop.xlane.xlu0 %4273
      %v4275 = vsub.f32 %v4245, %v4265
      %v4276 = vsub.f32 %v4250, %v4268
      %v4277 = vsub.f32 %v4255, %v4271
      %v4278 = vsub.f32 %v4260, %v4274
      %v4279 = vmul.f32 %v4275, 1.442695
      %v4280 = vpow.pop %v4279
      %v4281 = vmul.f32 %v4276, 1.442695
      %v4282 = vpow.pop %v4281
      %v4283 = vmul.f32 %v4277, 1.442695
      %v4284 = vpow.pop %v4283
      %v4285 = vmul.f32 %v4278, 1.442695
      %v4286 = vpow.pop %v4285
      %v4287 = vsel %vm2536, %v4280, 0.0
      %4288 = vadd.xlane.f32.xlu0 %v4287
      %v4289 = vpop.xlane.xlu0 %4288
      %v4290 = vsel %vm2536, %v4282, 0.0
      %4291 = vadd.xlane.f32.xlu0 %v4290
      %v4292 = vpop.xlane.xlu0 %4291
      %v4293 = vsel %vm2536, %v4284, 0.0
      %4294 = vadd.xlane.f32.xlu0 %v4293
      %v4295 = vpop.xlane.xlu0 %4294
      %v4296 = vsel %vm2536, %v4286, 0.0
      %4297 = vadd.xlane.f32.xlu0 %v4296
      %v4298 = vpop.xlane.xlu0 %4297
      %v4299 = vrcp.pop %v4289
      %v4300 = vrcp.pop %v4292
      %v4301 = vrcp.pop %v4295
      %v4302 = vrcp.pop %v4298
      %4303 = vrot.lane.b32.xlu0 %v4052, 96
      %v4304 = vpop.permute.xlu0 %4303
      %v4307 = vsel %vm2536, %v4280, 0
      %v4310 = vsel %vm2536, %v4282, 0
      %v4313 = vsel %vm2536, %v4284, 0
      %v4316 = vsel %vm2536, %v4286, 0
      %4318 = vmatprep.subr.mxu0 0.0
      %4319 = vmatpush1.msra.mxu0 %v4304
      %4320 = vmatprep.subr.mxu0 0.0
      %4321 = vmatpush1.msra.mxu0 0.0
      %4322 = vmatprep.subr.mxu0 0.0
      %4323 = vmatpush1.msra.mxu0 0.0
      %4324 = vmatprep.subr.mxu0 0.0
      %4325 = vmatpush1.msra.mxu0 0.0
      %4326 = vmatprep.subr.mxu0 0.0
      %4327 = vmatpush1.msra.mxu0 0.0
      %4328 = vmatprep.subr.mxu0 0.0
      %4329 = vmatpush1.msra.mxu0 0.0
      %4330 = vmatprep.subr.mxu0 0.0
      %4331 = vmatpush1.msra.mxu0 0.0
      %4332 = vmatprep.subr.mxu0 0.0
      %4333 = vmatpush1.msra.mxu0 0.0
      %4334 = vmatprep.subr.mxu0 0.0
      %4335 = vmatpush1.msra.mxu0 0.0
      %4336 = vmatprep.subr.mxu0 0.0
      %4337 = vmatpush1.msra.mxu0 0.0
      %4338 = vmatprep.subr.mxu0 0.0
      %4339 = vmatpush1.msra.mxu0 0.0
      %4340 = vmatprep.subr.mxu0 0.0
      %4341 = vmatpush1.msra.mxu0 0.0
      %4342 = vmatprep.subr.mxu0 0.0
      %4343 = vmatpush1.msra.mxu0 0.0
      %4344 = vmatprep.subr.mxu0 0.0
      %4345 = vmatpush1.msra.mxu0 0.0
      %4346 = vmatprep.subr.mxu0 0.0
      %4347 = vmatpush1.msra.mxu0 0.0
      %4348 = vmatprep.subr.mxu0 0.0
      %4349 = vmatpush1.msra.mxu0 0.0
      %4350 = vmatprep.subr.mxu0 0.0
      %4351 = vmatpush1.msra.mxu0 0.0
      %4352 = vmatprep.subr.mxu0 0.0
      %4353 = vmatpush1.msra.mxu0 0.0
      %4354 = vmatprep.subr.mxu0 0.0
      %4355 = vmatpush1.msra.mxu0 0.0
      %4356 = vmatprep.subr.mxu0 0.0
      %4357 = vmatpush1.msra.mxu0 0.0
      %4358 = vmatprep.subr.mxu0 0.0
      %4359 = vmatpush1.msra.mxu0 0.0
      %4360 = vmatprep.subr.mxu0 0.0
      %4361 = vmatpush1.msra.mxu0 0.0
      %4362 = vmatprep.subr.mxu0 0.0
      %4363 = vmatpush1.msra.mxu0 0.0
      %4364 = vmatprep.subr.mxu0 0.0
      %4365 = vmatpush1.msra.mxu0 0.0
      %4366 = vmatprep.subr.mxu0 0.0
      %4367 = vmatpush1.msra.mxu0 0.0
      %4368 = vmatprep.subr.mxu0 0.0
      %4369 = vmatpush1.msra.mxu0 0.0
      %4370 = vmatprep.subr.mxu0 0.0
      %4371 = vmatpush1.msra.mxu0 0.0
      %4372 = vmatprep.subr.mxu0 0.0
      %4373 = vmatpush1.msra.mxu0 0.0
      %4374 = vmatprep.subr.mxu0 0.0
      %4375 = vmatpush1.msra.mxu0 0.0
      %4376 = vmatprep.subr.mxu0 0.0
      %4377 = vmatpush1.msra.mxu0 0.0
      %4378 = vmatprep.subr.mxu0 0.0
      %4379 = vmatpush1.msra.mxu0 0.0
      %4380 = vmatprep.subr.mxu0 0.0
      %4381 = vmatpush1.msra.mxu0 0.0
      %4382 = vmatprep.mubr.f32.mxu0 0.0
      %4383 = vmatmul.mubr.f32.gmra.mrb[0].mxu0 %v4307
      %v4384 = vpop.f32.mrb[0].mxu0
      %v4385 = vadd.f32 0.0, %v4384
      %v4386 = vpop.f32.mrb[0].mxu0
      %4387 = vmatprep.mubr.f32.mxu0 0.0
      %4388 = vmatmul.mubr.f32.gmra.mrb[0].mxu0 %v4310
      %v4389 = vpop.f32.mrb[0].mxu0
      %v4390 = vadd.f32 0.0, %v4389
      %v4391 = vpop.f32.mrb[0].mxu0
      %4392 = vmatprep.mubr.f32.mxu0 0.0
      %4393 = vmatmul.mubr.f32.gmra.mrb[0].mxu0 %v4313
      %v4394 = vpop.f32.mrb[0].mxu0
      %v4395 = vadd.f32 0.0, %v4394
      %v4396 = vpop.f32.mrb[0].mxu0
      %4397 = vmatprep.mubr.f32.mxu0 0.0
      %4398 = vmatmul.mubr.f32.gmra.mrb[0].mxu0 %v4316
      %v4399 = vpop.f32.mrb[0].mxu0
      %v4400 = vadd.f32 0.0, %v4399
      %v4401 = vpop.f32.mrb[0].mxu0
      %4402 = vdwg.mxu0
      %v4403 = vmul.f32 %v4299, %v1001
      %v4404 = vmul.f32 %v4300, %v1002
      %v4405 = vmul.f32 %v4301, %v1003
      %v4406 = vmul.f32 %v4302, %v1004
      %v4407 = vmul.f32 %v4385, %v4403
      %v4408 = vmul.f32 %v4390, %v4404
      %v4409 = vmul.f32 %v4395, %v4405
      %v4410 = vmul.f32 %v4400, %v4406
      %v4411 = vadd.f32 %v4407, %v4408
      %v4412 = vadd.f32 %v4411, %v4409
      %v4413 = vadd.f32 %v4412, %v4410
      %v4414 = vlaneseq
      %v4415 = vshrl.u32 %v4414, 7
      %v4416 = vsub.s32 2, %v4415
      %v4417 = vrot.slane %v3402, %v4416
      %v4419 = vsel %vm1160, %v4413, 0
      %4421 = vmatprep.subr.mxu0 0.0
      %4422 = vmatpush1.msra.mxu0 %v4066
      %4423 = vmatprep.subr.mxu0 0.0
      %4424 = vmatpush1.msra.mxu0 %v4067
      %4425 = vmatprep.subr.mxu0 0.0
      %4426 = vmatpush1.msra.mxu0 %v4068
      %4427 = vmatprep.subr.mxu0 0.0
      %4428 = vmatpush1.msra.mxu0 %v4069
      %4429 = vmatprep.subr.mxu0 0.0
      %4430 = vmatpush1.msra.mxu0 0.0
      %4431 = vmatprep.subr.mxu0 0.0
      %4432 = vmatpush1.msra.mxu0 0.0
      %4433 = vmatprep.subr.mxu0 0.0
      %4434 = vmatpush1.msra.mxu0 0.0
      %4435 = vmatprep.subr.mxu0 0.0
      %4436 = vmatpush1.msra.mxu0 0.0
      %4437 = vmatprep.subr.mxu0 0.0
      %4438 = vmatpush1.msra.mxu0 0.0
      %4439 = vmatprep.subr.mxu0 0.0
      %4440 = vmatpush1.msra.mxu0 0.0
      %4441 = vmatprep.subr.mxu0 0.0
      %4442 = vmatpush1.msra.mxu0 0.0
      %4443 = vmatprep.subr.mxu0 0.0
      %4444 = vmatpush1.msra.mxu0 0.0
      %4445 = vmatprep.subr.mxu0 0.0
      %4446 = vmatpush1.msra.mxu0 0.0
      %4447 = vmatprep.subr.mxu0 0.0
      %4448 = vmatpush1.msra.mxu0 0.0
      %4449 = vmatprep.subr.mxu0 0.0
      %4450 = vmatpush1.msra.mxu0 0.0
      %4451 = vmatprep.subr.mxu0 0.0
      %4452 = vmatpush1.msra.mxu0 0.0
      %4453 = vmatprep.subr.mxu0 0.0
      %4454 = vmatpush1.msra.mxu0 0.0
      %4455 = vmatprep.subr.mxu0 0.0
      %4456 = vmatpush1.msra.mxu0 0.0
      %4457 = vmatprep.subr.mxu0 0.0
      %4458 = vmatpush1.msra.mxu0 0.0
      %4459 = vmatprep.subr.mxu0 0.0
      %4460 = vmatpush1.msra.mxu0 0.0
      %4461 = vmatprep.subr.mxu0 0.0
      %4462 = vmatpush1.msra.mxu0 0.0
      %4463 = vmatprep.subr.mxu0 0.0
      %4464 = vmatpush1.msra.mxu0 0.0
      %4465 = vmatprep.subr.mxu0 0.0
      %4466 = vmatpush1.msra.mxu0 0.0
      %4467 = vmatprep.subr.mxu0 0.0
      %4468 = vmatpush1.msra.mxu0 0.0
      %4469 = vmatprep.subr.mxu0 0.0
      %4470 = vmatpush1.msra.mxu0 0.0
      %4471 = vmatprep.subr.mxu0 0.0
      %4472 = vmatpush1.msra.mxu0 0.0
      %4473 = vmatprep.subr.mxu0 0.0
      %4474 = vmatpush1.msra.mxu0 0.0
      %4475 = vmatprep.subr.mxu0 0.0
      %4476 = vmatpush1.msra.mxu0 0.0
      %4477 = vmatprep.subr.mxu0 0.0
      %4478 = vmatpush1.msra.mxu0 0.0
      %4479 = vmatprep.subr.mxu0 0.0
      %4480 = vmatpush1.msra.mxu0 0.0
      %4481 = vmatprep.subr.mxu0 0.0
      %4482 = vmatpush1.msra.mxu0 0.0
      %4483 = vmatprep.subr.mxu0 0.0
      %4484 = vmatpush1.msra.mxu0 0.0
      %4485 = vmatprep.mubr.f32.mxu0 0.0
      %4486 = vmatmul.mubr.f32.gmra.mrb[0].mxu0 %v4419
      %v4487 = vpop.f32.mrb[0].mxu0
      %v4488 = vadd.f32 %v4417, %v4487
      %v4489 = vpop.f32.mrb[0].mxu0
      %4490 = vdwg.mxu0
      %v4491 = vadd.f32 %v3974, %v4488
      %v4492 = vsel %vm1160, %v4491, 0.0
      %4493 = vadd.xlane.f32.xlu0 %v4492
      %v4494 = vpop.xlane.xlu0 %4493
      %v4495 = vmul.f32 %v4494, %v1164
      %v4496 = vmul.f32 %v4491, %v4491
      %v4497 = vsel %vm1160, %v4496, 0.0
      %4498 = vadd.xlane.f32.xlu0 %v4497
      %v4499 = vpop.xlane.xlu0 %4498
      %v4500 = vmul.f32 %v4499, %v1164
      %v4501 = vmul.f32 %v4495, %v4495
      %v4502 = vsub.f32 %v4500, %v4501
      %v4503 = vsub.f32 %v4491, %v4495
      %v4504 = vadd.f32 %v4502, 1e-05
      %v4505 = vrsqrt.pop %v4504
      %v4506 = vmul.f32 %v4503, %v4505
      %v4507 = vlaneseq
      %v4508 = vshrl.u32 %v4507, 7
      %v4509 = vsub.s32 6, %v4508
      %v4510 = vrot.slane %v3402, %v4509
      %v4511 = vmul.f32 %v4506, %v4510
      %v4512 = vlaneseq
      %v4513 = vshrl.u32 %v4512, 7
      %v4514 = vsub.s32 7, %v4513
      %v4515 = vrot.slane %v3402, %v4514
      %v4516 = vadd.f32 %v4511, %v4515
      %s4517 = scalar_lea.vmem %s45, 32
      %v4518 = vld [vmem:[%s4517] sm:$0xff]
      %v4519 = vld [vmem:[%s4517 + $0x8] sm:$0xff]
      %v4520 = vld [vmem:[%s4517 + $0x10] sm:$0xff]
      %v4521 = vld [vmem:[%s4517 + $0x18] sm:$0xff]
      %s4522 = scalar_lea.vmem %s47, 1
      %v4523 = vld [vmem:[%s4522] sm:$0x1]
      %v4525 = vlaneseq
      %v4526 = vshrl.u32 %v4525, 7
      %v4527 = vsub.s32 0, %v4526
      %v4528 = vrot.slane %v4523, %v4527
      %v4531 = vsel %vm1160, %v4516, 0
      %4533 = vmatprep.subr.mxu0 0.0
      %4534 = vmatpush1.msra.mxu0 %v4518
      %4535 = vmatprep.subr.mxu0 0.0
      %4536 = vmatpush1.msra.mxu0 %v4519
      %4537 = vmatprep.subr.mxu0 0.0
      %4538 = vmatpush1.msra.mxu0 %v4520
      %4539 = vmatprep.subr.mxu0 0.0
      %4540 = vmatpush1.msra.mxu0 %v4521
      %4541 = vmatprep.subr.mxu0 0.0
      %4542 = vmatpush1.msra.mxu0 0.0
      %4543 = vmatprep.subr.mxu0 0.0
      %4544 = vmatpush1.msra.mxu0 0.0
      %4545 = vmatprep.subr.mxu0 0.0
      %4546 = vmatpush1.msra.mxu0 0.0
      %4547 = vmatprep.subr.mxu0 0.0
      %4548 = vmatpush1.msra.mxu0 0.0
      %4549 = vmatprep.subr.mxu0 0.0
      %4550 = vmatpush1.msra.mxu0 0.0
      %4551 = vmatprep.subr.mxu0 0.0
      %4552 = vmatpush1.msra.mxu0 0.0
      %4553 = vmatprep.subr.mxu0 0.0
      %4554 = vmatpush1.msra.mxu0 0.0
      %4555 = vmatprep.subr.mxu0 0.0
      %4556 = vmatpush1.msra.mxu0 0.0
      %4557 = vmatprep.subr.mxu0 0.0
      %4558 = vmatpush1.msra.mxu0 0.0
      %4559 = vmatprep.subr.mxu0 0.0
      %4560 = vmatpush1.msra.mxu0 0.0
      %4561 = vmatprep.subr.mxu0 0.0
      %4562 = vmatpush1.msra.mxu0 0.0
      %4563 = vmatprep.subr.mxu0 0.0
      %4564 = vmatpush1.msra.mxu0 0.0
      %4565 = vmatprep.subr.mxu0 0.0
      %4566 = vmatpush1.msra.mxu0 0.0
      %4567 = vmatprep.subr.mxu0 0.0
      %4568 = vmatpush1.msra.mxu0 0.0
      %4569 = vmatprep.subr.mxu0 0.0
      %4570 = vmatpush1.msra.mxu0 0.0
      %4571 = vmatprep.subr.mxu0 0.0
      %4572 = vmatpush1.msra.mxu0 0.0
      %4573 = vmatprep.subr.mxu0 0.0
      %4574 = vmatpush1.msra.mxu0 0.0
      %4575 = vmatprep.subr.mxu0 0.0
      %4576 = vmatpush1.msra.mxu0 0.0
      %4577 = vmatprep.subr.mxu0 0.0
      %4578 = vmatpush1.msra.mxu0 0.0
      %4579 = vmatprep.subr.mxu0 0.0
      %4580 = vmatpush1.msra.mxu0 0.0
      %4581 = vmatprep.subr.mxu0 0.0
      %4582 = vmatpush1.msra.mxu0 0.0
      %4583 = vmatprep.subr.mxu0 0.0
      %4584 = vmatpush1.msra.mxu0 0.0
      %4585 = vmatprep.subr.mxu0 0.0
      %4586 = vmatpush1.msra.mxu0 0.0
      %4587 = vmatprep.subr.mxu0 0.0
      %4588 = vmatpush1.msra.mxu0 0.0
      %4589 = vmatprep.subr.mxu0 0.0
      %4590 = vmatpush1.msra.mxu0 0.0
      %4591 = vmatprep.subr.mxu0 0.0
      %4592 = vmatpush1.msra.mxu0 0.0
      %4593 = vmatprep.subr.mxu0 0.0
      %4594 = vmatpush1.msra.mxu0 0.0
      %4595 = vmatprep.subr.mxu0 0.0
      %4596 = vmatpush1.msra.mxu0 0.0
      %4597 = vmatprep.mubr.f32.mxu0 0.0
      %4598 = vmatmul.mubr.f32.gmra.mrb[0].mxu0 %v4531
      %v4599 = vpop.f32.mrb[0].mxu0
      %v4600 = vadd.f32 %v4528, %v4599
      %v4601 = vpop.f32.mrb[0].mxu0
      %4602 = vdwg.mxu0
      %v4603 = vmax.f32 %v4600, 0.0
      %s4604 = scalar_lea.vmem %s49, 64
      %v4605 = vld [vmem:[%s4604] sm:$0xff]
      %v4606 = vld [vmem:[%s4604 + $0x8] sm:$0xff]
      %v4607 = vld [vmem:[%s4604 + $0x10] sm:$0xff]
      %v4608 = vld [vmem:[%s4604 + $0x18] sm:$0xff]
      %v4609 = vld [vmem:[%s4604 + $0x20] sm:$0xff]
      %v4610 = vld [vmem:[%s4604 + $0x28] sm:$0xff]
      %v4611 = vld [vmem:[%s4604 + $0x30] sm:$0xff]
      %v4612 = vld [vmem:[%s4604 + $0x38] sm:$0xff]
      %v4614 = vsel %vm1275, %v4603, 0
      %4616 = vmatprep.subr.mxu0 0.0
      %4617 = vmatpush1.msra.mxu0 %v4605
      %4618 = vmatprep.subr.mxu0 0.0
      %4619 = vmatpush1.msra.mxu0 %v4606
      %4620 = vmatprep.subr.mxu0 0.0
      %4621 = vmatpush1.msra.mxu0 %v4607
      %4622 = vmatprep.subr.mxu0 0.0
      %4623 = vmatpush1.msra.mxu0 %v4608
      %4624 = vmatprep.subr.mxu0 0.0
      %4625 = vmatpush1.msra.mxu0 %v4609
      %4626 = vmatprep.subr.mxu0 0.0
      %4627 = vmatpush1.msra.mxu0 %v4610
      %4628 = vmatprep.subr.mxu0 0.0
      %4629 = vmatpush1.msra.mxu0 %v4611
      %4630 = vmatprep.subr.mxu0 0.0
      %4631 = vmatpush1.msra.mxu0 %v4612
      %4632 = vmatprep.subr.mxu0 0.0
      %4633 = vmatpush1.msra.mxu0 0.0
      %4634 = vmatprep.subr.mxu0 0.0
      %4635 = vmatpush1.msra.mxu0 0.0
      %4636 = vmatprep.subr.mxu0 0.0
      %4637 = vmatpush1.msra.mxu0 0.0
      %4638 = vmatprep.subr.mxu0 0.0
      %4639 = vmatpush1.msra.mxu0 0.0
      %4640 = vmatprep.subr.mxu0 0.0
      %4641 = vmatpush1.msra.mxu0 0.0
      %4642 = vmatprep.subr.mxu0 0.0
      %4643 = vmatpush1.msra.mxu0 0.0
      %4644 = vmatprep.subr.mxu0 0.0
      %4645 = vmatpush1.msra.mxu0 0.0
      %4646 = vmatprep.subr.mxu0 0.0
      %4647 = vmatpush1.msra.mxu0 0.0
      %4648 = vmatprep.subr.mxu0 0.0
      %4649 = vmatpush1.msra.mxu0 0.0
      %4650 = vmatprep.subr.mxu0 0.0
      %4651 = vmatpush1.msra.mxu0 0.0
      %4652 = vmatprep.subr.mxu0 0.0
      %4653 = vmatpush1.msra.mxu0 0.0
      %4654 = vmatprep.subr.mxu0 0.0
      %4655 = vmatpush1.msra.mxu0 0.0
      %4656 = vmatprep.subr.mxu0 0.0
      %4657 = vmatpush1.msra.mxu0 0.0
      %4658 = vmatprep.subr.mxu0 0.0
      %4659 = vmatpush1.msra.mxu0 0.0
      %4660 = vmatprep.subr.mxu0 0.0
      %4661 = vmatpush1.msra.mxu0 0.0
      %4662 = vmatprep.subr.mxu0 0.0
      %4663 = vmatpush1.msra.mxu0 0.0
      %4664 = vmatprep.subr.mxu0 0.0
      %4665 = vmatpush1.msra.mxu0 0.0
      %4666 = vmatprep.subr.mxu0 0.0
      %4667 = vmatpush1.msra.mxu0 0.0
      %4668 = vmatprep.subr.mxu0 0.0
      %4669 = vmatpush1.msra.mxu0 0.0
      %4670 = vmatprep.subr.mxu0 0.0
      %4671 = vmatpush1.msra.mxu0 0.0
      %4672 = vmatprep.subr.mxu0 0.0
      %4673 = vmatpush1.msra.mxu0 0.0
      %4674 = vmatprep.subr.mxu0 0.0
      %4675 = vmatpush1.msra.mxu0 0.0
      %4676 = vmatprep.subr.mxu0 0.0
      %4677 = vmatpush1.msra.mxu0 0.0
      %4678 = vmatprep.subr.mxu0 0.0
      %4679 = vmatpush1.msra.mxu0 0.0
      %4680 = vmatprep.mubr.f32.mxu0 0.0
      %4681 = vmatmul.mubr.f32.gmra.mrb[0].mxu0 %v4614
      %v4682 = vpop.f32.mrb[0].mxu0
      %v4683 = vadd.f32 0.0, %v4682
      %v4684 = vpop.f32.mrb[0].mxu0
      %4685 = vdwg.mxu0
      %v4686 = vadd.f32 %v4516, %v4683
      %v4687 = vlaneseq
      %v4688 = vshrl.u32 %v4687, 7
      %v4689 = vsub.s32 3, %v4688
      %v4690 = vrot.slane %v3402, %v4689
      %v4691 = vadd.f32 %v4686, %v4690
      %v4692 = vsel %vm1160, %v4691, 0.0
      %4693 = vadd.xlane.f32.xlu0 %v4692
      %v4694 = vpop.xlane.xlu0 %4693
      %v4695 = vmul.f32 %v4694, %v1164
      %v4696 = vmul.f32 %v4691, %v4691
      %v4697 = vsel %vm1160, %v4696, 0.0
      %4698 = vadd.xlane.f32.xlu0 %v4697
      %v4699 = vpop.xlane.xlu0 %4698
      %v4700 = vmul.f32 %v4699, %v1164
      %v4701 = vmul.f32 %v4695, %v4695
      %v4702 = vsub.f32 %v4700, %v4701
      %v4703 = vsub.f32 %v4691, %v4695
      %v4704 = vadd.f32 %v4702, 1e-05
      %v4705 = vrsqrt.pop %v4704
      %v4706 = vmul.f32 %v4703, %v4705
      %v4707 = vlaneseq
      %v4708 = vshrl.u32 %v4707, 7
      %v4709 = vsub.s32 0, %v4708
      %v4710 = vrot.slane %v3403, %v4709
      %v4711 = vmul.f32 %v4706, %v4710
      %v4712 = vlaneseq
      %v4713 = vshrl.u32 %v4712, 7
      %v4714 = vsub.s32 1, %v4713
      %v4715 = vrot.slane %v3403, %v4714
      %v4716 = vadd.f32 %v4711, %v4715
      %v4717 = vsel %vm1160, %v4716, 0.0
      %4718 = vadd.xlane.f32.xlu0 %v4717
      %v4719 = vpop.xlane.xlu0 %4718
      %v4720 = vmul.f32 %v4719, %v1164
      %v4721 = vmul.f32 %v4716, %v4716
      %v4722 = vsel %vm1160, %v4721, 0.0
      %4723 = vadd.xlane.f32.xlu0 %v4722
      %v4724 = vpop.xlane.xlu0 %4723
      %v4725 = vmul.f32 %v4724, %v1164
      %v4726 = vmul.f32 %v4720, %v4720
      %v4727 = vsub.f32 %v4725, %v4726
      %v4728 = vsub.f32 %v4716, %v4720
      %v4729 = vadd.f32 %v4727, 1e-05
      %v4730 = vrsqrt.pop %v4729
      %v4731 = vmul.f32 %v4728, %v4730
      %v4732 = vmul.f32 %v4731, %v1180
      %v4733 = vadd.f32 %v4732, %v1185
      %v4735 = vsel %vm1160, %v4733, 0
      %4737 = vmatprep.subr.mxu0 0.0
      %4738 = vmatpush1.msra.mxu0 %v1132
      %4739 = vmatprep.subr.mxu0 0.0
      %4740 = vmatpush1.msra.mxu0 %v1133
      %4741 = vmatprep.subr.mxu0 0.0
      %4742 = vmatpush1.msra.mxu0 %v1134
      %4743 = vmatprep.subr.mxu0 0.0
      %4744 = vmatpush1.msra.mxu0 %v1135
      %4745 = vmatprep.subr.mxu0 0.0
      %4746 = vmatpush1.msra.mxu0 0.0
      %4747 = vmatprep.subr.mxu0 0.0
      %4748 = vmatpush1.msra.mxu0 0.0
      %4749 = vmatprep.subr.mxu0 0.0
      %4750 = vmatpush1.msra.mxu0 0.0
      %4751 = vmatprep.subr.mxu0 0.0
      %4752 = vmatpush1.msra.mxu0 0.0
      %4753 = vmatprep.subr.mxu0 0.0
      %4754 = vmatpush1.msra.mxu0 0.0
      %4755 = vmatprep.subr.mxu0 0.0
      %4756 = vmatpush1.msra.mxu0 0.0
      %4757 = vmatprep.subr.mxu0 0.0
      %4758 = vmatpush1.msra.mxu0 0.0
      %4759 = vmatprep.subr.mxu0 0.0
      %4760 = vmatpush1.msra.mxu0 0.0
      %4761 = vmatprep.subr.mxu0 0.0
      %4762 = vmatpush1.msra.mxu0 0.0
      %4763 = vmatprep.subr.mxu0 0.0
      %4764 = vmatpush1.msra.mxu0 0.0
      %4765 = vmatprep.subr.mxu0 0.0
      %4766 = vmatpush1.msra.mxu0 0.0
      %4767 = vmatprep.subr.mxu0 0.0
      %4768 = vmatpush1.msra.mxu0 0.0
      %4769 = vmatprep.subr.mxu0 0.0
      %4770 = vmatpush1.msra.mxu0 0.0
      %4771 = vmatprep.subr.mxu0 0.0
      %4772 = vmatpush1.msra.mxu0 0.0
      %4773 = vmatprep.subr.mxu0 0.0
      %4774 = vmatpush1.msra.mxu0 0.0
      %4775 = vmatprep.subr.mxu0 0.0
      %4776 = vmatpush1.msra.mxu0 0.0
      %4777 = vmatprep.subr.mxu0 0.0
      %4778 = vmatpush1.msra.mxu0 0.0
      %4779 = vmatprep.subr.mxu0 0.0
      %4780 = vmatpush1.msra.mxu0 0.0
      %4781 = vmatprep.subr.mxu0 0.0
      %4782 = vmatpush1.msra.mxu0 0.0
      %4783 = vmatprep.subr.mxu0 0.0
      %4784 = vmatpush1.msra.mxu0 0.0
      %4785 = vmatprep.subr.mxu0 0.0
      %4786 = vmatpush1.msra.mxu0 0.0
      %4787 = vmatprep.subr.mxu0 0.0
      %4788 = vmatpush1.msra.mxu0 0.0
      %4789 = vmatprep.subr.mxu0 0.0
      %4790 = vmatpush1.msra.mxu0 0.0
      %4791 = vmatprep.subr.mxu0 0.0
      %4792 = vmatpush1.msra.mxu0 0.0
      %4793 = vmatprep.subr.mxu0 0.0
      %4794 = vmatpush1.msra.mxu0 0.0
      %4795 = vmatprep.subr.mxu0 0.0
      %4796 = vmatpush1.msra.mxu0 0.0
      %4797 = vmatprep.subr.mxu0 0.0
      %4798 = vmatpush1.msra.mxu0 0.0
      %4799 = vmatprep.subr.mxu0 0.0
      %4800 = vmatpush1.msra.mxu0 0.0
      %4801 = vmatprep.mubr.f32.mxu0 0.0
      %4802 = vmatmul.mubr.f32.gmra.mrb[0].mxu0 %v4735
      %v4803 = vpop.f32.mrb[0].mxu0
      %v4804 = vadd.f32 %v1190, %v4803
      %v4805 = vpop.f32.mrb[0].mxu0
      %4806 = vdwg.mxu0
      %4808 = vrot.lane.b32.xlu0 %v4804, 64
      %v4809 = vpop.permute.xlu0 %4808
      %s4811 = scalar_lea.vmem %s995, 16
      %4812 = vst.msk [vmem:[%s4811] sm:$0xff] %vm1268, %v4809
      %v4813 = vmax.f32 %v4804, 0.0
      %v4815 = vsel %vm1275, %v4813, 0
      %4817 = vmatprep.subr.mxu0 0.0
      %4818 = vmatpush1.msra.mxu0 %v1137
      %4819 = vmatprep.subr.mxu0 0.0
      %4820 = vmatpush1.msra.mxu0 %v1138
      %4821 = vmatprep.subr.mxu0 0.0
      %4822 = vmatpush1.msra.mxu0 %v1139
      %4823 = vmatprep.subr.mxu0 0.0
      %4824 = vmatpush1.msra.mxu0 %v1140
      %4825 = vmatprep.subr.mxu0 0.0
      %4826 = vmatpush1.msra.mxu0 %v1141
      %4827 = vmatprep.subr.mxu0 0.0
      %4828 = vmatpush1.msra.mxu0 %v1142
      %4829 = vmatprep.subr.mxu0 0.0
      %4830 = vmatpush1.msra.mxu0 %v1143
      %4831 = vmatprep.subr.mxu0 0.0
      %4832 = vmatpush1.msra.mxu0 %v1144
      %4833 = vmatprep.subr.mxu0 0.0
      %4834 = vmatpush1.msra.mxu0 0.0
      %4835 = vmatprep.subr.mxu0 0.0
      %4836 = vmatpush1.msra.mxu0 0.0
      %4837 = vmatprep.subr.mxu0 0.0
      %4838 = vmatpush1.msra.mxu0 0.0
      %4839 = vmatprep.subr.mxu0 0.0
      %4840 = vmatpush1.msra.mxu0 0.0
      %4841 = vmatprep.subr.mxu0 0.0
      %4842 = vmatpush1.msra.mxu0 0.0
      %4843 = vmatprep.subr.mxu0 0.0
      %4844 = vmatpush1.msra.mxu0 0.0
      %4845 = vmatprep.subr.mxu0 0.0
      %4846 = vmatpush1.msra.mxu0 0.0
      %4847 = vmatprep.subr.mxu0 0.0
      %4848 = vmatpush1.msra.mxu0 0.0
      %4849 = vmatprep.subr.mxu0 0.0
      %4850 = vmatpush1.msra.mxu0 0.0
      %4851 = vmatprep.subr.mxu0 0.0
      %4852 = vmatpush1.msra.mxu0 0.0
      %4853 = vmatprep.subr.mxu0 0.0
      %4854 = vmatpush1.msra.mxu0 0.0
      %4855 = vmatprep.subr.mxu0 0.0
      %4856 = vmatpush1.msra.mxu0 0.0
      %4857 = vmatprep.subr.mxu0 0.0
      %4858 = vmatpush1.msra.mxu0 0.0
      %4859 = vmatprep.subr.mxu0 0.0
      %4860 = vmatpush1.msra.mxu0 0.0
      %4861 = vmatprep.subr.mxu0 0.0
      %4862 = vmatpush1.msra.mxu0 0.0
      %4863 = vmatprep.subr.mxu0 0.0
      %4864 = vmatpush1.msra.mxu0 0.0
      %4865 = vmatprep.subr.mxu0 0.0
      %4866 = vmatpush1.msra.mxu0 0.0
      %4867 = vmatprep.subr.mxu0 0.0
      %4868 = vmatpush1.msra.mxu0 0.0
      %4869 = vmatprep.subr.mxu0 0.0
      %4870 = vmatpush1.msra.mxu0 0.0
      %4871 = vmatprep.subr.mxu0 0.0
      %4872 = vmatpush1.msra.mxu0 0.0
      %4873 = vmatprep.subr.mxu0 0.0
      %4874 = vmatpush1.msra.mxu0 0.0
      %4875 = vmatprep.subr.mxu0 0.0
      %4876 = vmatpush1.msra.mxu0 0.0
      %4877 = vmatprep.subr.mxu0 0.0
      %4878 = vmatpush1.msra.mxu0 0.0
      %4879 = vmatprep.subr.mxu0 0.0
      %4880 = vmatpush1.msra.mxu0 0.0
      %4881 = vmatprep.mubr.f32.mxu0 0.0
      %4882 = vmatmul.mubr.f32.gmra.mrb[0].mxu0 %v4815
      %v4883 = vpop.f32.mrb[0].mxu0
      %v4884 = vadd.f32 %v1274, %v4883
      %v4885 = vpop.f32.mrb[0].mxu0
      %4886 = vdwg.mxu0
      %v4887 = vmax.f32 %v4884, 0.0
      %v4889 = vsel %vm1275, %v4887, 0
      %4891 = vmatprep.subr.mxu0 0.0
      %4892 = vmatpush1.msra.mxu0 %v1146
      %4893 = vmatprep.subr.mxu0 0.0
      %4894 = vmatpush1.msra.mxu0 %v1147
      %4895 = vmatprep.subr.mxu0 0.0
      %4896 = vmatpush1.msra.mxu0 %v1148
      %4897 = vmatprep.subr.mxu0 0.0
      %4898 = vmatpush1.msra.mxu0 %v1149
      %4899 = vmatprep.subr.mxu0 0.0
      %4900 = vmatpush1.msra.mxu0 %v1150
      %4901 = vmatprep.subr.mxu0 0.0
      %4902 = vmatpush1.msra.mxu0 %v1151
      %4903 = vmatprep.subr.mxu0 0.0
      %4904 = vmatpush1.msra.mxu0 %v1152
      %4905 = vmatprep.subr.mxu0 0.0
      %4906 = vmatpush1.msra.mxu0 %v1153
      %4907 = vmatprep.subr.mxu0 0.0
      %4908 = vmatpush1.msra.mxu0 0.0
      %4909 = vmatprep.subr.mxu0 0.0
      %4910 = vmatpush1.msra.mxu0 0.0
      %4911 = vmatprep.subr.mxu0 0.0
      %4912 = vmatpush1.msra.mxu0 0.0
      %4913 = vmatprep.subr.mxu0 0.0
      %4914 = vmatpush1.msra.mxu0 0.0
      %4915 = vmatprep.subr.mxu0 0.0
      %4916 = vmatpush1.msra.mxu0 0.0
      %4917 = vmatprep.subr.mxu0 0.0
      %4918 = vmatpush1.msra.mxu0 0.0
      %4919 = vmatprep.subr.mxu0 0.0
      %4920 = vmatpush1.msra.mxu0 0.0
      %4921 = vmatprep.subr.mxu0 0.0
      %4922 = vmatpush1.msra.mxu0 0.0
      %4923 = vmatprep.subr.mxu0 0.0
      %4924 = vmatpush1.msra.mxu0 0.0
      %4925 = vmatprep.subr.mxu0 0.0
      %4926 = vmatpush1.msra.mxu0 0.0
      %4927 = vmatprep.subr.mxu0 0.0
      %4928 = vmatpush1.msra.mxu0 0.0
      %4929 = vmatprep.subr.mxu0 0.0
      %4930 = vmatpush1.msra.mxu0 0.0
      %4931 = vmatprep.subr.mxu0 0.0
      %4932 = vmatpush1.msra.mxu0 0.0
      %4933 = vmatprep.subr.mxu0 0.0
      %4934 = vmatpush1.msra.mxu0 0.0
      %4935 = vmatprep.subr.mxu0 0.0
      %4936 = vmatpush1.msra.mxu0 0.0
      %4937 = vmatprep.subr.mxu0 0.0
      %4938 = vmatpush1.msra.mxu0 0.0
      %4939 = vmatprep.subr.mxu0 0.0
      %4940 = vmatpush1.msra.mxu0 0.0
      %4941 = vmatprep.subr.mxu0 0.0
      %4942 = vmatpush1.msra.mxu0 0.0
      %4943 = vmatprep.subr.mxu0 0.0
      %4944 = vmatpush1.msra.mxu0 0.0
      %4945 = vmatprep.subr.mxu0 0.0
      %4946 = vmatpush1.msra.mxu0 0.0
      %4947 = vmatprep.subr.mxu0 0.0
      %4948 = vmatpush1.msra.mxu0 0.0
      %4949 = vmatprep.subr.mxu0 0.0
      %4950 = vmatpush1.msra.mxu0 0.0
      %4951 = vmatprep.subr.mxu0 0.0
      %4952 = vmatpush1.msra.mxu0 0.0
      %4953 = vmatprep.subr.mxu0 0.0
      %4954 = vmatpush1.msra.mxu0 0.0
      %4955 = vmatprep.mubr.f32.mxu0 0.0
      %4956 = vmatmul.mubr.f32.gmra.mrb[0].mxu0 %v4889
      %v4957 = vpop.f32.mrb[0].mxu0
      %v4958 = vadd.f32 %v1353, %v4957
      %v4959 = vpop.f32.mrb[0].mxu0
      %4960 = vdwg.mxu0
      %v4961 = vxor.u32 %v4958, 2147483648
      %v4962 = vmul.f32 %v4961, 1.442695
      %v4963 = vpow.pop %v4962
      %v4964 = vadd.f32 %v4963, 1.0
      %v4965 = vrcp.pop %v4964
      %v4966 = vmul.f32 1.0, %v4965
      %4968 = vrot.lane.b32.xlu0 %v4966, 104
      %v4969 = vpop.permute.xlu0 %4968
      %4971 = vst.msk [vmem:[%s4811] sm:$0xff] %vm3242, %v4969
      %v4973 = vsel %vm1160, %v4958, 0
      %4975 = vmatprep.subr.mxu0 %v1006
      %4976 = vmatpush1.msra.mxu0 %v1005
      %4977 = vmatprep.subr.mxu0 %v1008
      %4978 = vmatpush1.msra.mxu0 %v1007
      %4979 = vmatprep.subr.mxu0 %v1010
      %4980 = vmatpush1.msra.mxu0 %v1009
      %4981 = vmatprep.subr.mxu0 %v1012
      %4982 = vmatpush1.msra.mxu0 %v1011
      %4983 = vmatprep.subr.mxu0 0.0
      %4984 = vmatpush1.msra.mxu0 0.0
      %4985 = vmatprep.subr.mxu0 0.0
      %4986 = vmatpush1.msra.mxu0 0.0
      %4987 = vmatprep.subr.mxu0 0.0
      %4988 = vmatpush1.msra.mxu0 0.0
      %4989 = vmatprep.subr.mxu0 0.0
      %4990 = vmatpush1.msra.mxu0 0.0
      %4991 = vmatprep.subr.mxu0 0.0
      %4992 = vmatpush1.msra.mxu0 0.0
      %4993 = vmatprep.subr.mxu0 0.0
      %4994 = vmatpush1.msra.mxu0 0.0
      %4995 = vmatprep.subr.mxu0 0.0
      %4996 = vmatpush1.msra.mxu0 0.0
      %4997 = vmatprep.subr.mxu0 0.0
      %4998 = vmatpush1.msra.mxu0 0.0
      %4999 = vmatprep.subr.mxu0 0.0
      %5000 = vmatpush1.msra.mxu0 0.0
      %5001 = vmatprep.subr.mxu0 0.0
      %5002 = vmatpush1.msra.mxu0 0.0
      %5003 = vmatprep.subr.mxu0 0.0
      %5004 = vmatpush1.msra.mxu0 0.0
      %5005 = vmatprep.subr.mxu0 0.0
      %5006 = vmatpush1.msra.mxu0 0.0
      %5007 = vmatprep.subr.mxu0 0.0
      %5008 = vmatpush1.msra.mxu0 0.0
      %5009 = vmatprep.subr.mxu0 0.0
      %5010 = vmatpush1.msra.mxu0 0.0
      %5011 = vmatprep.subr.mxu0 0.0
      %5012 = vmatpush1.msra.mxu0 0.0
      %5013 = vmatprep.subr.mxu0 0.0
      %5014 = vmatpush1.msra.mxu0 0.0
      %5015 = vmatprep.subr.mxu0 0.0
      %5016 = vmatpush1.msra.mxu0 0.0
      %5017 = vmatprep.subr.mxu0 0.0
      %5018 = vmatpush1.msra.mxu0 0.0
      %5019 = vmatprep.subr.mxu0 0.0
      %5020 = vmatpush1.msra.mxu0 0.0
      %5021 = vmatprep.subr.mxu0 0.0
      %5022 = vmatpush1.msra.mxu0 0.0
      %5023 = vmatprep.subr.mxu0 0.0
      %5024 = vmatpush1.msra.mxu0 0.0
      %5025 = vmatprep.subr.mxu0 0.0
      %5026 = vmatpush1.msra.mxu0 0.0
      %5027 = vmatprep.subr.mxu0 0.0
      %5028 = vmatpush1.msra.mxu0 0.0
      %5029 = vmatprep.subr.mxu0 0.0
      %5030 = vmatpush1.msra.mxu0 0.0
      %5031 = vmatprep.subr.mxu0 0.0
      %5032 = vmatpush1.msra.mxu0 0.0
      %5033 = vmatprep.subr.mxu0 0.0
      %5034 = vmatpush1.msra.mxu0 0.0
      %5035 = vmatprep.subr.mxu0 0.0
      %5036 = vmatpush1.msra.mxu0 0.0
      %5037 = vmatprep.subr.mxu0 0.0
      %5038 = vmatpush1.msra.mxu0 0.0
      %5039 = vmatprep.mubr.f32.mxu0 0.0
      %5040 = vmatmul.mubr.f32.gmra.mrb[0].mxu0 %v4973
      %v5041 = vpop.f32.mrb[0].mxu0
      %v5042 = vadd.f32 0.0, %v5041
      %v5043 = vpop.f32.mrb[0].mxu0
      %v5044 = vadd.f32 0.0, %v5043
      %5045 = vdwg.mxu0
      %s5046 = scalar_lea.vmem %s1000, 32
      %5047 = vst [vmem:[%s5046] sm:$0xff] %v5042
      %5048 = vst [vmem:[%s5046 + $0x8] sm:$0xff] %v5044
      %5049 = vmatprep.subr.mxu0 0.0
      %5050 = vmatpush1.msra.mxu0 %v1100
      %5051 = vmatprep.subr.mxu0 0.0
      %5052 = vmatpush1.msra.mxu0 %v1101
      %5053 = vmatprep.subr.mxu0 0.0
      %5054 = vmatpush1.msra.mxu0 %v1102
      %5055 = vmatprep.subr.mxu0 0.0
      %5056 = vmatpush1.msra.mxu0 %v1103
      %5057 = vmatprep.subr.mxu0 0.0
      %5058 = vmatpush1.msra.mxu0 %v1104
      %5059 = vmatprep.subr.mxu0 0.0
      %5060 = vmatpush1.msra.mxu0 %v1105
      %5061 = vmatprep.subr.mxu0 0.0
      %5062 = vmatpush1.msra.mxu0 %v1106
      %5063 = vmatprep.subr.mxu0 0.0
      %5064 = vmatpush1.msra.mxu0 %v1107
      %5065 = vmatprep.subr.mxu0 0.0
      %5066 = vmatpush1.msra.mxu0 %v1108
      %5067 = vmatprep.subr.mxu0 0.0
      %5068 = vmatpush1.msra.mxu0 %v1109
      %5069 = vmatprep.subr.mxu0 0.0
      %5070 = vmatpush1.msra.mxu0 %v1110
      %5071 = vmatprep.subr.mxu0 0.0
      %5072 = vmatpush1.msra.mxu0 %v1111
      %5073 = vmatprep.subr.mxu0 0.0
      %5074 = vmatpush1.msra.mxu0 %v1112
      %5075 = vmatprep.subr.mxu0 0.0
      %5076 = vmatpush1.msra.mxu0 %v1113
      %5077 = vmatprep.subr.mxu0 0.0
      %5078 = vmatpush1.msra.mxu0 %v1114
      %5079 = vmatprep.subr.mxu0 0.0
      %5080 = vmatpush1.msra.mxu0 %v1115
      %5081 = vmatprep.subr.mxu0 0.0
      %5082 = vmatpush1.msra.mxu0 %v1116
      %5083 = vmatprep.subr.mxu0 0.0
      %5084 = vmatpush1.msra.mxu0 %v1117
      %5085 = vmatprep.subr.mxu0 0.0
      %5086 = vmatpush1.msra.mxu0 %v1118
      %5087 = vmatprep.subr.mxu0 0.0
      %5088 = vmatpush1.msra.mxu0 %v1119
      %5089 = vmatprep.subr.mxu0 0.0
      %5090 = vmatpush1.msra.mxu0 %v1120
      %5091 = vmatprep.subr.mxu0 0.0
      %5092 = vmatpush1.msra.mxu0 %v1121
      %5093 = vmatprep.subr.mxu0 0.0
      %5094 = vmatpush1.msra.mxu0 %v1122
      %5095 = vmatprep.subr.mxu0 0.0
      %5096 = vmatpush1.msra.mxu0 %v1123
      %5097 = vmatprep.subr.mxu0 0.0
      %5098 = vmatpush1.msra.mxu0 %v1124
      %5099 = vmatprep.subr.mxu0 0.0
      %5100 = vmatpush1.msra.mxu0 %v1125
      %5101 = vmatprep.subr.mxu0 0.0
      %5102 = vmatpush1.msra.mxu0 %v1126
      %5103 = vmatprep.subr.mxu0 0.0
      %5104 = vmatpush1.msra.mxu0 %v1127
      %5105 = vmatprep.subr.mxu0 0.0
      %5106 = vmatpush1.msra.mxu0 %v1128
      %5107 = vmatprep.subr.mxu0 0.0
      %5108 = vmatpush1.msra.mxu0 %v1129
      %5109 = vmatprep.subr.mxu0 0.0
      %5110 = vmatpush1.msra.mxu0 %v1130
      %5111 = vmatprep.subr.mxu0 0.0
      %5112 = vmatpush1.msra.mxu0 %v1131
      %5113 = vmatprep.mubr.f32.mxu0 %v5044
      %5114 = vmatmul.mubr.f32.gmra.mrb[0].mxu0 %v5042
      %v5115 = vpop.f32.mrb[0].mxu0
      %v5116 = vadd.f32 0.0, %v5115
      %v5117 = vpop.f32.mrb[0].mxu0
      %5118 = vdwg.mxu0
      %vm5119 = vcmask 31744
      %v5120 = vsel %vm5119, %v5116, -inf
      %5121 = vmax.xlane.f32.xlu0 %v5120
      %v5122 = vpop.xlane.xlu0 %5121
      %vm5123 = vcmp.ge.f32.partialorder %v5122, 0.0
      %vm5124 = vcmp.lt.f32.partialorder %v5116, 0.0
      %v5125 = vsel %vm5123, 1, 0
      %vm5126 = vcmp.eq.s32.totalorder %v5125, 1
      %vm5127 = vmand %vm5124, %vm5126
      %v5128 = vsel %vm5127, -1e+30, 0.0
      %s5129 = scalar_lea.vmem %s51, 32
      %v5130 = vld [vmem:[%s5129] sm:$0xff]
      %v5131 = vld [vmem:[%s5129 + $0x8] sm:$0x3]
      %s5132 = scalar_lea.vmem %s31, 64
      %v5133 = vld [vmem:[%s5132] sm:$0xff]
      %v5134 = vld [vmem:[%s5132 + $0x8] sm:$0xff]
      %v5135 = vld [vmem:[%s5132 + $0x10] sm:$0xff]
      %v5136 = vld [vmem:[%s5132 + $0x18] sm:$0xff]
      %v5138 = vsel %vm1160, %v1024, 0
      %5140 = vmatprep.subr.mxu0 0.0
      %5141 = vmatpush1.msra.mxu0 %v5133
      %5142 = vmatprep.subr.mxu0 0.0
      %5143 = vmatpush1.msra.mxu0 %v5134
      %5144 = vmatprep.subr.mxu0 0.0
      %5145 = vmatpush1.msra.mxu0 %v5135
      %5146 = vmatprep.subr.mxu0 0.0
      %5147 = vmatpush1.msra.mxu0 %v5136
      %5148 = vmatprep.subr.mxu0 0.0
      %5149 = vmatpush1.msra.mxu0 0.0
      %5150 = vmatprep.subr.mxu0 0.0
      %5151 = vmatpush1.msra.mxu0 0.0
      %5152 = vmatprep.subr.mxu0 0.0
      %5153 = vmatpush1.msra.mxu0 0.0
      %5154 = vmatprep.subr.mxu0 0.0
      %5155 = vmatpush1.msra.mxu0 0.0
      %5156 = vmatprep.subr.mxu0 0.0
      %5157 = vmatpush1.msra.mxu0 0.0
      %5158 = vmatprep.subr.mxu0 0.0
      %5159 = vmatpush1.msra.mxu0 0.0
      %5160 = vmatprep.subr.mxu0 0.0
      %5161 = vmatpush1.msra.mxu0 0.0
      %5162 = vmatprep.subr.mxu0 0.0
      %5163 = vmatpush1.msra.mxu0 0.0
      %5164 = vmatprep.subr.mxu0 0.0
      %5165 = vmatpush1.msra.mxu0 0.0
      %5166 = vmatprep.subr.mxu0 0.0
      %5167 = vmatpush1.msra.mxu0 0.0
      %5168 = vmatprep.subr.mxu0 0.0
      %5169 = vmatpush1.msra.mxu0 0.0
      %5170 = vmatprep.subr.mxu0 0.0
      %5171 = vmatpush1.msra.mxu0 0.0
      %5172 = vmatprep.subr.mxu0 0.0
      %5173 = vmatpush1.msra.mxu0 0.0
      %5174 = vmatprep.subr.mxu0 0.0
      %5175 = vmatpush1.msra.mxu0 0.0
      %5176 = vmatprep.subr.mxu0 0.0
      %5177 = vmatpush1.msra.mxu0 0.0
      %5178 = vmatprep.subr.mxu0 0.0
      %5179 = vmatpush1.msra.mxu0 0.0
      %5180 = vmatprep.subr.mxu0 0.0
      %5181 = vmatpush1.msra.mxu0 0.0
      %5182 = vmatprep.subr.mxu0 0.0
      %5183 = vmatpush1.msra.mxu0 0.0
      %5184 = vmatprep.subr.mxu0 0.0
      %5185 = vmatpush1.msra.mxu0 0.0
      %5186 = vmatprep.subr.mxu0 0.0
      %5187 = vmatpush1.msra.mxu0 0.0
      %5188 = vmatprep.subr.mxu0 0.0
      %5189 = vmatpush1.msra.mxu0 0.0
      %5190 = vmatprep.subr.mxu0 0.0
      %5191 = vmatpush1.msra.mxu0 0.0
      %5192 = vmatprep.subr.mxu0 0.0
      %5193 = vmatpush1.msra.mxu0 0.0
      %5194 = vmatprep.subr.mxu0 0.0
      %5195 = vmatpush1.msra.mxu0 0.0
      %5196 = vmatprep.subr.mxu0 0.0
      %5197 = vmatpush1.msra.mxu0 0.0
      %5198 = vmatprep.subr.mxu0 0.0
      %5199 = vmatpush1.msra.mxu0 0.0
      %5200 = vmatprep.subr.mxu0 0.0
      %5201 = vmatpush1.msra.mxu0 0.0
      %5202 = vmatprep.subr.mxu0 0.0
      %5203 = vmatpush1.msra.mxu0 0.0
      %5204 = vmatprep.mubr.f32.mxu0 0.0
      %5205 = vmatmul.mubr.f32.gmra.mrb[0].mxu0 %v5138
      %v5206 = vpop.f32.mrb[0].mxu0
      %v5207 = vadd.f32 0.0, %v5206
      %v5208 = vpop.f32.mrb[0].mxu0
      %5209 = vdwg.mxu0
      %v5210 = vadd.f32 %v5207, %v1035
      %v5211 = vlaneseq
      %v5212 = vshrl.u32 %v5211, 7
      %v5213 = vsub.s32 0, %v5212
      %v5214 = vrot.slane %v5130, %v5213
      %5216 = vrot.lane.b32.xlu0 %v5214, 32
      %v5217 = vpop.permute.xlu0 %5216
      %v5219 = vadd.f32 %v5207, %v5217
      %s5220 = scalar_lea.vmem %s27, 64
      %v5221 = vld [vmem:[%s5220] sm:$0xff]
      %v5222 = vld [vmem:[%s5220 + $0x8] sm:$0xff]
      %v5223 = vld [vmem:[%s5220 + $0x10] sm:$0xff]
      %v5224 = vld [vmem:[%s5220 + $0x18] sm:$0xff]
      %s5225 = scalar_lea.vmem %s29, 64
      %v5226 = vld [vmem:[%s5225] sm:$0xff]
      %v5227 = vld [vmem:[%s5225 + $0x8] sm:$0xff]
      %v5228 = vld [vmem:[%s5225 + $0x10] sm:$0xff]
      %v5229 = vld [vmem:[%s5225 + $0x18] sm:$0xff]
      %s5230 = scalar_lea.vmem %s33, 64
      %v5231 = vld [vmem:[%s5230] sm:$0xff]
      %v5232 = vld [vmem:[%s5230 + $0x8] sm:$0xff]
      %v5233 = vld [vmem:[%s5230 + $0x10] sm:$0xff]
      %v5234 = vld [vmem:[%s5230 + $0x18] sm:$0xff]
      %v5236 = vsel %vm1160, %v4716, 0
      %5238 = vmatprep.subr.mxu0 0.0
      %5239 = vmatpush1.msra.mxu0 %v5221
      %5240 = vmatprep.subr.mxu0 0.0
      %5241 = vmatpush1.msra.mxu0 %v5222
      %5242 = vmatprep.subr.mxu0 0.0
      %5243 = vmatpush1.msra.mxu0 %v5223
      %5244 = vmatprep.subr.mxu0 0.0
      %5245 = vmatpush1.msra.mxu0 %v5224
      %5246 = vmatprep.subr.mxu0 0.0
      %5247 = vmatpush1.msra.mxu0 0.0
      %5248 = vmatprep.subr.mxu0 0.0
      %5249 = vmatpush1.msra.mxu0 0.0
      %5250 = vmatprep.subr.mxu0 0.0
      %5251 = vmatpush1.msra.mxu0 0.0
      %5252 = vmatprep.subr.mxu0 0.0
      %5253 = vmatpush1.msra.mxu0 0.0
      %5254 = vmatprep.subr.mxu0 0.0
      %5255 = vmatpush1.msra.mxu0 0.0
      %5256 = vmatprep.subr.mxu0 0.0
      %5257 = vmatpush1.msra.mxu0 0.0
      %5258 = vmatprep.subr.mxu0 0.0
      %5259 = vmatpush1.msra.mxu0 0.0
      %5260 = vmatprep.subr.mxu0 0.0
      %5261 = vmatpush1.msra.mxu0 0.0
      %5262 = vmatprep.subr.mxu0 0.0
      %5263 = vmatpush1.msra.mxu0 0.0
      %5264 = vmatprep.subr.mxu0 0.0
      %5265 = vmatpush1.msra.mxu0 0.0
      %5266 = vmatprep.subr.mxu0 0.0
      %5267 = vmatpush1.msra.mxu0 0.0
      %5268 = vmatprep.subr.mxu0 0.0
      %5269 = vmatpush1.msra.mxu0 0.0
      %5270 = vmatprep.subr.mxu0 0.0
      %5271 = vmatpush1.msra.mxu0 0.0
      %5272 = vmatprep.subr.mxu0 0.0
      %5273 = vmatpush1.msra.mxu0 0.0
      %5274 = vmatprep.subr.mxu0 0.0
      %5275 = vmatpush1.msra.mxu0 0.0
      %5276 = vmatprep.subr.mxu0 0.0
      %5277 = vmatpush1.msra.mxu0 0.0
      %5278 = vmatprep.subr.mxu0 0.0
      %5279 = vmatpush1.msra.mxu0 0.0
      %5280 = vmatprep.subr.mxu0 0.0
      %5281 = vmatpush1.msra.mxu0 0.0
      %5282 = vmatprep.subr.mxu0 0.0
      %5283 = vmatpush1.msra.mxu0 0.0
      %5284 = vmatprep.subr.mxu0 0.0
      %5285 = vmatpush1.msra.mxu0 0.0
      %5286 = vmatprep.subr.mxu0 0.0
      %5287 = vmatpush1.msra.mxu0 0.0
      %5288 = vmatprep.subr.mxu0 0.0
      %5289 = vmatpush1.msra.mxu0 0.0
      %5290 = vmatprep.subr.mxu0 0.0
      %5291 = vmatpush1.msra.mxu0 0.0
      %5292 = vmatprep.subr.mxu0 0.0
      %5293 = vmatpush1.msra.mxu0 0.0
      %5294 = vmatprep.subr.mxu0 0.0
      %5295 = vmatpush1.msra.mxu0 0.0
      %5296 = vmatprep.subr.mxu0 0.0
      %5297 = vmatpush1.msra.mxu0 0.0
      %5298 = vmatprep.subr.mxu0 0.0
      %5299 = vmatpush1.msra.mxu0 0.0
      %5300 = vmatprep.subr.mxu0 0.0
      %5301 = vmatpush1.msra.mxu0 0.0
      %5302 = vmatprep.mubr.f32.mxu0 0.0
      %5303 = vmatmul.mubr.f32.gmra.mrb[0].mxu0 %v5236
      %v5304 = vpop.f32.mrb[0].mxu0
      %v5305 = vadd.f32 0.0, %v5304
      %v5306 = vpop.f32.mrb[0].mxu0
      %5307 = vmatprep.mubr.f32.mxu0 0.0
      %5308 = vmatmul.mubr.f32.gmra.mrb[0].mxu0 %v5236
      %v5309 = vpop.f32.mrb[0].mxu0
      %v5310 = vadd.f32 0.0, %v5309
      %v5311 = vpop.f32.mrb[0].mxu0
      %5312 = vmatprep.mubr.f32.mxu0 0.0
      %5313 = vmatmul.mubr.f32.gmra.mrb[0].mxu0 %v5236
      %v5314 = vpop.f32.mrb[0].mxu0
      %v5315 = vadd.f32 0.0, %v5314
      %v5316 = vpop.f32.mrb[0].mxu0
      %5317 = vmatprep.mubr.f32.mxu0 0.0
      %5318 = vmatmul.mubr.f32.gmra.mrb[0].mxu0 %v5236
      %v5319 = vpop.f32.mrb[0].mxu0
      %v5320 = vadd.f32 0.0, %v5319
      %v5321 = vpop.f32.mrb[0].mxu0
      %5322 = vdwg.mxu0
      %v5323 = vmul.f32 %v5305, %v1001
      %v5324 = vmul.f32 %v5310, %v1002
      %v5325 = vmul.f32 %v5315, %v1003
      %v5326 = vmul.f32 %v5320, %v1004
      %v5327 = vadd.f32 %v5323, %v5226
      %v5328 = vadd.f32 %v5324, %v5227
      %v5329 = vadd.f32 %v5325, %v5228
      %v5330 = vadd.f32 %v5326, %v5229
      %v5332 = vsel %vm1160, %v5327, 0
      %v5335 = vsel %vm1160, %v5328, 0
      %v5338 = vsel %vm1160, %v5329, 0
      %v5341 = vsel %vm1160, %v5330, 0
      %v5344 = vsel %vm1160, %v5210, 0
      %5346 = vmatprep.subr.mxu0 0.0
      %5347 = vmatpush1.xpose.msra.mxu0 %v5344
      %5348 = vmatprep.subr.mxu0 0.0
      %5349 = vmatpush1.xpose.msra.mxu0 0.0
      %5350 = vmatprep.subr.mxu0 0.0
      %5351 = vmatpush1.xpose.msra.mxu0 0.0
      %5352 = vmatprep.subr.mxu0 0.0
      %5353 = vmatpush1.xpose.msra.mxu0 0.0
      %5354 = vmatprep.subr.mxu0 0.0
      %5355 = vmatpush1.xpose.msra.mxu0 0.0
      %5356 = vmatprep.subr.mxu0 0.0
      %5357 = vmatpush1.xpose.msra.mxu0 0.0
      %5358 = vmatprep.subr.mxu0 0.0
      %5359 = vmatpush1.xpose.msra.mxu0 0.0
      %5360 = vmatprep.subr.mxu0 0.0
      %5361 = vmatpush1.xpose.msra.mxu0 0.0
      %5362 = vmatprep.subr.mxu0 0.0
      %5363 = vmatpush1.xpose.msra.mxu0 0.0
      %5364 = vmatprep.subr.mxu0 0.0
      %5365 = vmatpush1.xpose.msra.mxu0 0.0
      %5366 = vmatprep.subr.mxu0 0.0
      %5367 = vmatpush1.xpose.msra.mxu0 0.0
      %5368 = vmatprep.subr.mxu0 0.0
      %5369 = vmatpush1.xpose.msra.mxu0 0.0
      %5370 = vmatprep.subr.mxu0 0.0
      %5371 = vmatpush1.xpose.msra.mxu0 0.0
      %5372 = vmatprep.subr.mxu0 0.0
      %5373 = vmatpush1.xpose.msra.mxu0 0.0
      %5374 = vmatprep.subr.mxu0 0.0
      %5375 = vmatpush1.xpose.msra.mxu0 0.0
      %5376 = vmatprep.subr.mxu0 0.0
      %5377 = vmatpush1.xpose.msra.mxu0 0.0
      %5378 = vmatprep.subr.mxu0 0.0
      %5379 = vmatpush1.xpose.msra.mxu0 0.0
      %5380 = vmatprep.subr.mxu0 0.0
      %5381 = vmatpush1.xpose.msra.mxu0 0.0
      %5382 = vmatprep.subr.mxu0 0.0
      %5383 = vmatpush1.xpose.msra.mxu0 0.0
      %5384 = vmatprep.subr.mxu0 0.0
      %5385 = vmatpush1.xpose.msra.mxu0 0.0
      %5386 = vmatprep.subr.mxu0 0.0
      %5387 = vmatpush1.xpose.msra.mxu0 0.0
      %5388 = vmatprep.subr.mxu0 0.0
      %5389 = vmatpush1.xpose.msra.mxu0 0.0
      %5390 = vmatprep.subr.mxu0 0.0
      %5391 = vmatpush1.xpose.msra.mxu0 0.0
      %5392 = vmatprep.subr.mxu0 0.0
      %5393 = vmatpush1.xpose.msra.mxu0 0.0
      %5394 = vmatprep.subr.mxu0 0.0
      %5395 = vmatpush1.xpose.msra.mxu0 0.0
      %5396 = vmatprep.subr.mxu0 0.0
      %5397 = vmatpush1.xpose.msra.mxu0 0.0
      %5398 = vmatprep.subr.mxu0 0.0
      %5399 = vmatpush1.xpose.msra.mxu0 0.0
      %5400 = vmatprep.subr.mxu0 0.0
      %5401 = vmatpush1.xpose.msra.mxu0 0.0
      %5402 = vmatprep.subr.mxu0 0.0
      %5403 = vmatpush1.xpose.msra.mxu0 0.0
      %5404 = vmatprep.subr.mxu0 0.0
      %5405 = vmatpush1.xpose.msra.mxu0 0.0
      %5406 = vmatprep.subr.mxu0 0.0
      %5407 = vmatpush1.xpose.msra.mxu0 0.0
      %5408 = vmatprep.subr.mxu0 0.0
      %5409 = vmatpush1.xpose.msra.mxu0 0.0
      %5410 = vmatprep.mubr.f32.mxu0 0.0
      %5411 = vmatmul.mubr.f32.gmra.mrb[0].mxu0 %v5332
      %v5412 = vpop.f32.mrb[0].mxu0
      %v5413 = vadd.f32 %v5128, %v5412
      %v5414 = vpop.f32.mrb[0].mxu0
      %5415 = vmatprep.mubr.f32.mxu0 0.0
      %5416 = vmatmul.mubr.f32.gmra.mrb[0].mxu0 %v5335
      %v5417 = vpop.f32.mrb[0].mxu0
      %v5418 = vadd.f32 %v5128, %v5417
      %v5419 = vpop.f32.mrb[0].mxu0
      %5420 = vmatprep.mubr.f32.mxu0 0.0
      %5421 = vmatmul.mubr.f32.gmra.mrb[0].mxu0 %v5338
      %v5422 = vpop.f32.mrb[0].mxu0
      %v5423 = vadd.f32 %v5128, %v5422
      %v5424 = vpop.f32.mrb[0].mxu0
      %5425 = vmatprep.mubr.f32.mxu0 0.0
      %5426 = vmatmul.mubr.f32.gmra.mrb[0].mxu0 %v5341
      %v5427 = vpop.f32.mrb[0].mxu0
      %v5428 = vadd.f32 %v5128, %v5427
      %v5429 = vpop.f32.mrb[0].mxu0
      %5430 = vdwg.mxu0
      %v5431 = vsel %vm5119, %v5413, -inf
      %5432 = vmax.xlane.f32.xlu0 %v5431
      %v5433 = vpop.xlane.xlu0 %5432
      %v5434 = vsel %vm5119, %v5418, -inf
      %5435 = vmax.xlane.f32.xlu0 %v5434
      %v5436 = vpop.xlane.xlu0 %5435
      %v5437 = vsel %vm5119, %v5423, -inf
      %5438 = vmax.xlane.f32.xlu0 %v5437
      %v5439 = vpop.xlane.xlu0 %5438
      %v5440 = vsel %vm5119, %v5428, -inf
      %5441 = vmax.xlane.f32.xlu0 %v5440
      %v5442 = vpop.xlane.xlu0 %5441
      %v5443 = vsub.f32 %v5413, %v5433
      %v5444 = vsub.f32 %v5418, %v5436
      %v5445 = vsub.f32 %v5423, %v5439
      %v5446 = vsub.f32 %v5428, %v5442
      %v5447 = vmul.f32 %v5443, 1.442695
      %v5448 = vpow.pop %v5447
      %v5449 = vmul.f32 %v5444, 1.442695
      %v5450 = vpow.pop %v5449
      %v5451 = vmul.f32 %v5445, 1.442695
      %v5452 = vpow.pop %v5451
      %v5453 = vmul.f32 %v5446, 1.442695
      %v5454 = vpow.pop %v5453
      %v5455 = vsel %vm5119, %v5448, 0.0
      %5456 = vadd.xlane.f32.xlu0 %v5455
      %v5457 = vpop.xlane.xlu0 %5456
      %v5458 = vsel %vm5119, %v5450, 0.0
      %5459 = vadd.xlane.f32.xlu0 %v5458
      %v5460 = vpop.xlane.xlu0 %5459
      %v5461 = vsel %vm5119, %v5452, 0.0
      %5462 = vadd.xlane.f32.xlu0 %v5461
      %v5463 = vpop.xlane.xlu0 %5462
      %v5464 = vsel %vm5119, %v5454, 0.0
      %5465 = vadd.xlane.f32.xlu0 %v5464
      %v5466 = vpop.xlane.xlu0 %5465
      %v5467 = vrcp.pop %v5457
      %v5468 = vrcp.pop %v5460
      %v5469 = vrcp.pop %v5463
      %v5470 = vrcp.pop %v5466
      %5472 = vrot.lane.b32.xlu0 %v5219, 96
      %v5473 = vpop.permute.xlu0 %5472
      %v5475 = vsel %vm5119, %v5448, 0
      %v5478 = vsel %vm5119, %v5450, 0
      %v5481 = vsel %vm5119, %v5452, 0
      %v5484 = vsel %vm5119, %v5454, 0
      %vm5486 = vcmask 1043456
      %v5487 = vsel %vm5486, %v5473, 0
      %5489 = vmatprep.subr.mxu0 0.0
      %5490 = vmatpush1.msra.mxu0 %v5487
      %5491 = vmatprep.subr.mxu0 0.0
      %5492 = vmatpush1.msra.mxu0 0.0
      %5493 = vmatprep.subr.mxu0 0.0
      %5494 = vmatpush1.msra.mxu0 0.0
      %5495 = vmatprep.subr.mxu0 0.0
      %5496 = vmatpush1.msra.mxu0 0.0
      %5497 = vmatprep.subr.mxu0 0.0
      %5498 = vmatpush1.msra.mxu0 0.0
      %5499 = vmatprep.subr.mxu0 0.0
      %5500 = vmatpush1.msra.mxu0 0.0
      %5501 = vmatprep.subr.mxu0 0.0
      %5502 = vmatpush1.msra.mxu0 0.0
      %5503 = vmatprep.subr.mxu0 0.0
      %5504 = vmatpush1.msra.mxu0 0.0
      %5505 = vmatprep.subr.mxu0 0.0
      %5506 = vmatpush1.msra.mxu0 0.0
      %5507 = vmatprep.subr.mxu0 0.0
      %5508 = vmatpush1.msra.mxu0 0.0
      %5509 = vmatprep.subr.mxu0 0.0
      %5510 = vmatpush1.msra.mxu0 0.0
      %5511 = vmatprep.subr.mxu0 0.0
      %5512 = vmatpush1.msra.mxu0 0.0
      %5513 = vmatprep.subr.mxu0 0.0
      %5514 = vmatpush1.msra.mxu0 0.0
      %5515 = vmatprep.subr.mxu0 0.0
      %5516 = vmatpush1.msra.mxu0 0.0
      %5517 = vmatprep.subr.mxu0 0.0
      %5518 = vmatpush1.msra.mxu0 0.0
      %5519 = vmatprep.subr.mxu0 0.0
      %5520 = vmatpush1.msra.mxu0 0.0
      %5521 = vmatprep.subr.mxu0 0.0
      %5522 = vmatpush1.msra.mxu0 0.0
      %5523 = vmatprep.subr.mxu0 0.0
      %5524 = vmatpush1.msra.mxu0 0.0
      %5525 = vmatprep.subr.mxu0 0.0
      %5526 = vmatpush1.msra.mxu0 0.0
      %5527 = vmatprep.subr.mxu0 0.0
      %5528 = vmatpush1.msra.mxu0 0.0
      %5529 = vmatprep.subr.mxu0 0.0
      %5530 = vmatpush1.msra.mxu0 0.0
      %5531 = vmatprep.subr.mxu0 0.0
      %5532 = vmatpush1.msra.mxu0 0.0
      %5533 = vmatprep.subr.mxu0 0.0
      %5534 = vmatpush1.msra.mxu0 0.0
      %5535 = vmatprep.subr.mxu0 0.0
      %5536 = vmatpush1.msra.mxu0 0.0
      %5537 = vmatprep.subr.mxu0 0.0
      %5538 = vmatpush1.msra.mxu0 0.0
      %5539 = vmatprep.subr.mxu0 0.0
      %5540 = vmatpush1.msra.mxu0 0.0
      %5541 = vmatprep.subr.mxu0 0.0
      %5542 = vmatpush1.msra.mxu0 0.0
      %5543 = vmatprep.subr.mxu0 0.0
      %5544 = vmatpush1.msra.mxu0 0.0
      %5545 = vmatprep.subr.mxu0 0.0
      %5546 = vmatpush1.msra.mxu0 0.0
      %5547 = vmatprep.subr.mxu0 0.0
      %5548 = vmatpush1.msra.mxu0 0.0
      %5549 = vmatprep.subr.mxu0 0.0
      %5550 = vmatpush1.msra.mxu0 0.0
      %5551 = vmatprep.subr.mxu0 0.0
      %5552 = vmatpush1.msra.mxu0 0.0
      %5553 = vmatprep.mubr.f32.mxu0 0.0
      %5554 = vmatmul.mubr.f32.gmra.mrb[0].mxu0 %v5475
      %v5555 = vpop.f32.mrb[0].mxu0
      %v5556 = vadd.f32 0.0, %v5555
      %v5557 = vpop.f32.mrb[0].mxu0
      %5558 = vmatprep.mubr.f32.mxu0 0.0
      %5559 = vmatmul.mubr.f32.gmra.mrb[0].mxu0 %v5478
      %v5560 = vpop.f32.mrb[0].mxu0
      %v5561 = vadd.f32 0.0, %v5560
      %v5562 = vpop.f32.mrb[0].mxu0
      %5563 = vmatprep.mubr.f32.mxu0 0.0
      %5564 = vmatmul.mubr.f32.gmra.mrb[0].mxu0 %v5481
      %v5565 = vpop.f32.mrb[0].mxu0
      %v5566 = vadd.f32 0.0, %v5565
      %v5567 = vpop.f32.mrb[0].mxu0
      %5568 = vmatprep.mubr.f32.mxu0 0.0
      %5569 = vmatmul.mubr.f32.gmra.mrb[0].mxu0 %v5484
      %v5570 = vpop.f32.mrb[0].mxu0
      %v5571 = vadd.f32 0.0, %v5570
      %v5572 = vpop.f32.mrb[0].mxu0
      %5573 = vdwg.mxu0
      %v5574 = vmul.f32 %v5467, %v1001
      %v5575 = vmul.f32 %v5468, %v1002
      %v5576 = vmul.f32 %v5469, %v1003
      %v5577 = vmul.f32 %v5470, %v1004
      %v5578 = vmul.f32 %v5556, %v5574
      %v5579 = vmul.f32 %v5561, %v5575
      %v5580 = vmul.f32 %v5566, %v5576
      %v5581 = vmul.f32 %v5571, %v5577
      %v5582 = vadd.f32 %v5578, %v5579
      %v5583 = vadd.f32 %v5582, %v5580
      %v5584 = vadd.f32 %v5583, %v5581
      %v5585 = vlaneseq
      %v5586 = vshrl.u32 %v5585, 7
      %v5587 = vsub.s32 1, %v5586
      %v5588 = vrot.slane %v5130, %v5587
      %v5590 = vsel %vm1160, %v5584, 0
      %5592 = vmatprep.subr.mxu0 0.0
      %5593 = vmatpush1.msra.mxu0 %v5231
      %5594 = vmatprep.subr.mxu0 0.0
      %5595 = vmatpush1.msra.mxu0 %v5232
      %5596 = vmatprep.subr.mxu0 0.0
      %5597 = vmatpush1.msra.mxu0 %v5233
      %5598 = vmatprep.subr.mxu0 0.0
      %5599 = vmatpush1.msra.mxu0 %v5234
      %5600 = vmatprep.subr.mxu0 0.0
      %5601 = vmatpush1.msra.mxu0 0.0
      %5602 = vmatprep.subr.mxu0 0.0
      %5603 = vmatpush1.msra.mxu0 0.0
      %5604 = vmatprep.subr.mxu0 0.0
      %5605 = vmatpush1.msra.mxu0 0.0
      %5606 = vmatprep.subr.mxu0 0.0
      %5607 = vmatpush1.msra.mxu0 0.0
      %5608 = vmatprep.subr.mxu0 0.0
      %5609 = vmatpush1.msra.mxu0 0.0
      %5610 = vmatprep.subr.mxu0 0.0
      %5611 = vmatpush1.msra.mxu0 0.0
      %5612 = vmatprep.subr.mxu0 0.0
      %5613 = vmatpush1.msra.mxu0 0.0
      %5614 = vmatprep.subr.mxu0 0.0
      %5615 = vmatpush1.msra.mxu0 0.0
      %5616 = vmatprep.subr.mxu0 0.0
      %5617 = vmatpush1.msra.mxu0 0.0
      %5618 = vmatprep.subr.mxu0 0.0
      %5619 = vmatpush1.msra.mxu0 0.0
      %5620 = vmatprep.subr.mxu0 0.0
      %5621 = vmatpush1.msra.mxu0 0.0
      %5622 = vmatprep.subr.mxu0 0.0
      %5623 = vmatpush1.msra.mxu0 0.0
      %5624 = vmatprep.subr.mxu0 0.0
      %5625 = vmatpush1.msra.mxu0 0.0
      %5626 = vmatprep.subr.mxu0 0.0
      %5627 = vmatpush1.msra.mxu0 0.0
      %5628 = vmatprep.subr.mxu0 0.0
      %5629 = vmatpush1.msra.mxu0 0.0
      %5630 = vmatprep.subr.mxu0 0.0
      %5631 = vmatpush1.msra.mxu0 0.0
      %5632 = vmatprep.subr.mxu0 0.0
      %5633 = vmatpush1.msra.mxu0 0.0
      %5634 = vmatprep.subr.mxu0 0.0
      %5635 = vmatpush1.msra.mxu0 0.0
      %5636 = vmatprep.subr.mxu0 0.0
      %5637 = vmatpush1.msra.mxu0 0.0
      %5638 = vmatprep.subr.mxu0 0.0
      %5639 = vmatpush1.msra.mxu0 0.0
      %5640 = vmatprep.subr.mxu0 0.0
      %5641 = vmatpush1.msra.mxu0 0.0
      %5642 = vmatprep.subr.mxu0 0.0
      %5643 = vmatpush1.msra.mxu0 0.0
      %5644 = vmatprep.subr.mxu0 0.0
      %5645 = vmatpush1.msra.mxu0 0.0
      %5646 = vmatprep.subr.mxu0 0.0
      %5647 = vmatpush1.msra.mxu0 0.0
      %5648 = vmatprep.subr.mxu0 0.0
      %5649 = vmatpush1.msra.mxu0 0.0
      %5650 = vmatprep.subr.mxu0 0.0
      %5651 = vmatpush1.msra.mxu0 0.0
      %5652 = vmatprep.subr.mxu0 0.0
      %5653 = vmatpush1.msra.mxu0 0.0
      %5654 = vmatprep.subr.mxu0 0.0
      %5655 = vmatpush1.msra.mxu0 0.0
      %5656 = vmatprep.mubr.f32.mxu0 0.0
      %5657 = vmatmul.mubr.f32.gmra.mrb[0].mxu0 %v5590
      %v5658 = vpop.f32.mrb[0].mxu0
      %v5659 = vadd.f32 %v5588, %v5658
      %v5660 = vpop.f32.mrb[0].mxu0
      %5661 = vdwg.mxu0
      %v5662 = vadd.f32 %v4716, %v5659
      %v5663 = vsel %vm1160, %v5662, 0.0
      %5664 = vadd.xlane.f32.xlu0 %v5663
      %v5665 = vpop.xlane.xlu0 %5664
      %v5666 = vmul.f32 %v5665, %v1164
      %v5667 = vmul.f32 %v5662, %v5662
      %v5668 = vsel %vm1160, %v5667, 0.0
      %5669 = vadd.xlane.f32.xlu0 %v5668
      %v5670 = vpop.xlane.xlu0 %5669
      %v5671 = vmul.f32 %v5670, %v1164
      %v5672 = vmul.f32 %v5666, %v5666
      %v5673 = vsub.f32 %v5671, %v5672
      %v5674 = vsub.f32 %v5662, %v5666
      %v5675 = vadd.f32 %v5673, 1e-05
      %v5676 = vrsqrt.pop %v5675
      %v5677 = vmul.f32 %v5674, %v5676
      %v5678 = vlaneseq
      %v5679 = vshrl.u32 %v5678, 7
      %v5680 = vsub.s32 4, %v5679
      %v5681 = vrot.slane %v5130, %v5680
      %v5682 = vmul.f32 %v5677, %v5681
      %v5683 = vlaneseq
      %v5684 = vshrl.u32 %v5683, 7
      %v5685 = vsub.s32 5, %v5684
      %v5686 = vrot.slane %v5130, %v5685
      %v5687 = vadd.f32 %v5682, %v5686
      %s5688 = scalar_lea.vmem %s39, 64
      %v5689 = vld [vmem:[%s5688] sm:$0xff]
      %v5690 = vld [vmem:[%s5688 + $0x8] sm:$0xff]
      %v5691 = vld [vmem:[%s5688 + $0x10] sm:$0xff]
      %v5692 = vld [vmem:[%s5688 + $0x18] sm:$0xff]
      %s5693 = scalar_lea.vmem %s41, 16
      %v5694 = vld [vmem:[%s5693] sm:$0xff]
      %v5696 = vsel %vm1160, %v5687, 0
      %5698 = vmatprep.subr.mxu0 0.0
      %5699 = vmatpush1.msra.mxu0 %v5689
      %5700 = vmatprep.subr.mxu0 0.0
      %5701 = vmatpush1.msra.mxu0 %v5690
      %5702 = vmatprep.subr.mxu0 0.0
      %5703 = vmatpush1.msra.mxu0 %v5691
      %5704 = vmatprep.subr.mxu0 0.0
      %5705 = vmatpush1.msra.mxu0 %v5692
      %5706 = vmatprep.subr.mxu0 0.0
      %5707 = vmatpush1.msra.mxu0 0.0
      %5708 = vmatprep.subr.mxu0 0.0
      %5709 = vmatpush1.msra.mxu0 0.0
      %5710 = vmatprep.subr.mxu0 0.0
      %5711 = vmatpush1.msra.mxu0 0.0
      %5712 = vmatprep.subr.mxu0 0.0
      %5713 = vmatpush1.msra.mxu0 0.0
      %5714 = vmatprep.subr.mxu0 0.0
      %5715 = vmatpush1.msra.mxu0 0.0
      %5716 = vmatprep.subr.mxu0 0.0
      %5717 = vmatpush1.msra.mxu0 0.0
      %5718 = vmatprep.subr.mxu0 0.0
      %5719 = vmatpush1.msra.mxu0 0.0
      %5720 = vmatprep.subr.mxu0 0.0
      %5721 = vmatpush1.msra.mxu0 0.0
      %5722 = vmatprep.subr.mxu0 0.0
      %5723 = vmatpush1.msra.mxu0 0.0
      %5724 = vmatprep.subr.mxu0 0.0
      %5725 = vmatpush1.msra.mxu0 0.0
      %5726 = vmatprep.subr.mxu0 0.0
      %5727 = vmatpush1.msra.mxu0 0.0
      %5728 = vmatprep.subr.mxu0 0.0
      %5729 = vmatpush1.msra.mxu0 0.0
      %5730 = vmatprep.subr.mxu0 0.0
      %5731 = vmatpush1.msra.mxu0 0.0
      %5732 = vmatprep.subr.mxu0 0.0
      %5733 = vmatpush1.msra.mxu0 0.0
      %5734 = vmatprep.subr.mxu0 0.0
      %5735 = vmatpush1.msra.mxu0 0.0
      %5736 = vmatprep.subr.mxu0 0.0
      %5737 = vmatpush1.msra.mxu0 0.0
      %5738 = vmatprep.subr.mxu0 0.0
      %5739 = vmatpush1.msra.mxu0 0.0
      %5740 = vmatprep.subr.mxu0 0.0
      %5741 = vmatpush1.msra.mxu0 0.0
      %5742 = vmatprep.subr.mxu0 0.0
      %5743 = vmatpush1.msra.mxu0 0.0
      %5744 = vmatprep.subr.mxu0 0.0
      %5745 = vmatpush1.msra.mxu0 0.0
      %5746 = vmatprep.subr.mxu0 0.0
      %5747 = vmatpush1.msra.mxu0 0.0
      %5748 = vmatprep.subr.mxu0 0.0
      %5749 = vmatpush1.msra.mxu0 0.0
      %5750 = vmatprep.subr.mxu0 0.0
      %5751 = vmatpush1.msra.mxu0 0.0
      %5752 = vmatprep.subr.mxu0 0.0
      %5753 = vmatpush1.msra.mxu0 0.0
      %5754 = vmatprep.subr.mxu0 0.0
      %5755 = vmatpush1.msra.mxu0 0.0
      %5756 = vmatprep.subr.mxu0 0.0
      %5757 = vmatpush1.msra.mxu0 0.0
      %5758 = vmatprep.subr.mxu0 0.0
      %5759 = vmatpush1.msra.mxu0 0.0
      %5760 = vmatprep.subr.mxu0 0.0
      %5761 = vmatpush1.msra.mxu0 0.0
      %5762 = vmatprep.mubr.f32.mxu0 0.0
      %5763 = vmatmul.mubr.f32.gmra.mrb[0].mxu0 %v5696
      %v5764 = vpop.f32.mrb[0].mxu0
      %v5765 = vadd.f32 %v5694, %v5764
      %v5766 = vpop.f32.mrb[0].mxu0
      %5767 = vdwg.mxu0
      %s5768 = scalar_lea.vmem %s35, 64
      %v5769 = vld [vmem:[%s5768] sm:$0xff]
      %v5770 = vld [vmem:[%s5768 + $0x8] sm:$0xff]
      %v5771 = vld [vmem:[%s5768 + $0x10] sm:$0xff]
      %v5772 = vld [vmem:[%s5768 + $0x18] sm:$0xff]
      %s5773 = scalar_lea.vmem %s37, 64
      %v5774 = vld [vmem:[%s5773] sm:$0xff]
      %v5775 = vld [vmem:[%s5773 + $0x8] sm:$0xff]
      %v5776 = vld [vmem:[%s5773 + $0x10] sm:$0xff]
      %v5777 = vld [vmem:[%s5773 + $0x18] sm:$0xff]
      %s5778 = scalar_lea.vmem %s43, 64
      %v5779 = vld [vmem:[%s5778] sm:$0xff]
      %v5780 = vld [vmem:[%s5778 + $0x8] sm:$0xff]
      %v5781 = vld [vmem:[%s5778 + $0x10] sm:$0xff]
      %v5782 = vld [vmem:[%s5778 + $0x18] sm:$0xff]
      %5783 = vmatprep.subr.mxu0 0.0
      %5784 = vmatpush1.msra.mxu0 %v5769
      %5785 = vmatprep.subr.mxu0 0.0
      %5786 = vmatpush1.msra.mxu0 %v5770
      %5787 = vmatprep.subr.mxu0 0.0
      %5788 = vmatpush1.msra.mxu0 %v5771
      %5789 = vmatprep.subr.mxu0 0.0
      %5790 = vmatpush1.msra.mxu0 %v5772
      %5791 = vmatprep.subr.mxu0 0.0
      %5792 = vmatpush1.msra.mxu0 0.0
      %5793 = vmatprep.subr.mxu0 0.0
      %5794 = vmatpush1.msra.mxu0 0.0
      %5795 = vmatprep.subr.mxu0 0.0
      %5796 = vmatpush1.msra.mxu0 0.0
      %5797 = vmatprep.subr.mxu0 0.0
      %5798 = vmatpush1.msra.mxu0 0.0
      %5799 = vmatprep.subr.mxu0 0.0
      %5800 = vmatpush1.msra.mxu0 0.0
      %5801 = vmatprep.subr.mxu0 0.0
      %5802 = vmatpush1.msra.mxu0 0.0
      %5803 = vmatprep.subr.mxu0 0.0
      %5804 = vmatpush1.msra.mxu0 0.0
      %5805 = vmatprep.subr.mxu0 0.0
      %5806 = vmatpush1.msra.mxu0 0.0
      %5807 = vmatprep.subr.mxu0 0.0
      %5808 = vmatpush1.msra.mxu0 0.0
      %5809 = vmatprep.subr.mxu0 0.0
      %5810 = vmatpush1.msra.mxu0 0.0
      %5811 = vmatprep.subr.mxu0 0.0
      %5812 = vmatpush1.msra.mxu0 0.0
      %5813 = vmatprep.subr.mxu0 0.0
      %5814 = vmatpush1.msra.mxu0 0.0
      %5815 = vmatprep.subr.mxu0 0.0
      %5816 = vmatpush1.msra.mxu0 0.0
      %5817 = vmatprep.subr.mxu0 0.0
      %5818 = vmatpush1.msra.mxu0 0.0
      %5819 = vmatprep.subr.mxu0 0.0
      %5820 = vmatpush1.msra.mxu0 0.0
      %5821 = vmatprep.subr.mxu0 0.0
      %5822 = vmatpush1.msra.mxu0 0.0
      %5823 = vmatprep.subr.mxu0 0.0
      %5824 = vmatpush1.msra.mxu0 0.0
      %5825 = vmatprep.subr.mxu0 0.0
      %5826 = vmatpush1.msra.mxu0 0.0
      %5827 = vmatprep.subr.mxu0 0.0
      %5828 = vmatpush1.msra.mxu0 0.0
      %5829 = vmatprep.subr.mxu0 0.0
      %5830 = vmatpush1.msra.mxu0 0.0
      %5831 = vmatprep.subr.mxu0 0.0
      %5832 = vmatpush1.msra.mxu0 0.0
      %5833 = vmatprep.subr.mxu0 0.0
      %5834 = vmatpush1.msra.mxu0 0.0
      %5835 = vmatprep.subr.mxu0 0.0
      %5836 = vmatpush1.msra.mxu0 0.0
      %5837 = vmatprep.subr.mxu0 0.0
      %5838 = vmatpush1.msra.mxu0 0.0
      %5839 = vmatprep.subr.mxu0 0.0
      %5840 = vmatpush1.msra.mxu0 0.0
      %5841 = vmatprep.subr.mxu0 0.0
      %5842 = vmatpush1.msra.mxu0 0.0
      %5843 = vmatprep.subr.mxu0 0.0
      %5844 = vmatpush1.msra.mxu0 0.0
      %5845 = vmatprep.subr.mxu0 0.0
      %5846 = vmatpush1.msra.mxu0 0.0
      %5847 = vmatprep.mubr.f32.mxu0 0.0
      %5848 = vmatmul.mubr.f32.gmra.mrb[0].mxu0 %v5696
      %v5849 = vpop.f32.mrb[0].mxu0
      %v5850 = vadd.f32 0.0, %v5849
      %v5851 = vpop.f32.mrb[0].mxu0
      %5852 = vmatprep.mubr.f32.mxu0 0.0
      %5853 = vmatmul.mubr.f32.gmra.mrb[0].mxu0 %v5696
      %v5854 = vpop.f32.mrb[0].mxu0
      %v5855 = vadd.f32 0.0, %v5854
      %v5856 = vpop.f32.mrb[0].mxu0
      %5857 = vmatprep.mubr.f32.mxu0 0.0
      %5858 = vmatmul.mubr.f32.gmra.mrb[0].mxu0 %v5696
      %v5859 = vpop.f32.mrb[0].mxu0
      %v5860 = vadd.f32 0.0, %v5859
      %v5861 = vpop.f32.mrb[0].mxu0
      %5862 = vmatprep.mubr.f32.mxu0 0.0
      %5863 = vmatmul.mubr.f32.gmra.mrb[0].mxu0 %v5696
      %v5864 = vpop.f32.mrb[0].mxu0
      %v5865 = vadd.f32 0.0, %v5864
      %v5866 = vpop.f32.mrb[0].mxu0
      %5867 = vdwg.mxu0
      %v5868 = vmul.f32 %v5850, %v1001
      %v5869 = vmul.f32 %v5855, %v1002
      %v5870 = vmul.f32 %v5860, %v1003
      %v5871 = vmul.f32 %v5865, %v1004
      %v5872 = vadd.f32 %v5868, %v5774
      %v5873 = vadd.f32 %v5869, %v5775
      %v5874 = vadd.f32 %v5870, %v5776
      %v5875 = vadd.f32 %v5871, %v5777
      %v5877 = vsel %vm1160, %v5872, 0
      %v5880 = vsel %vm1160, %v5873, 0
      %v5883 = vsel %vm1160, %v5874, 0
      %v5886 = vsel %vm1160, %v5875, 0
      %v5889 = vsel %vm1160, %v5765, 0
      %5891 = vmatprep.subr.mxu0 0.0
      %5892 = vmatpush1.xpose.msra.mxu0 %v5889
      %5893 = vmatprep.subr.mxu0 0.0
      %5894 = vmatpush1.xpose.msra.mxu0 0.0
      %5895 = vmatprep.subr.mxu0 0.0
      %5896 = vmatpush1.xpose.msra.mxu0 0.0
      %5897 = vmatprep.subr.mxu0 0.0
      %5898 = vmatpush1.xpose.msra.mxu0 0.0
      %5899 = vmatprep.subr.mxu0 0.0
      %5900 = vmatpush1.xpose.msra.mxu0 0.0
      %5901 = vmatprep.subr.mxu0 0.0
      %5902 = vmatpush1.xpose.msra.mxu0 0.0
      %5903 = vmatprep.subr.mxu0 0.0
      %5904 = vmatpush1.xpose.msra.mxu0 0.0
      %5905 = vmatprep.subr.mxu0 0.0
      %5906 = vmatpush1.xpose.msra.mxu0 0.0
      %5907 = vmatprep.subr.mxu0 0.0
      %5908 = vmatpush1.xpose.msra.mxu0 0.0
      %5909 = vmatprep.subr.mxu0 0.0
      %5910 = vmatpush1.xpose.msra.mxu0 0.0
      %5911 = vmatprep.subr.mxu0 0.0
      %5912 = vmatpush1.xpose.msra.mxu0 0.0
      %5913 = vmatprep.subr.mxu0 0.0
      %5914 = vmatpush1.xpose.msra.mxu0 0.0
      %5915 = vmatprep.subr.mxu0 0.0
      %5916 = vmatpush1.xpose.msra.mxu0 0.0
      %5917 = vmatprep.subr.mxu0 0.0
      %5918 = vmatpush1.xpose.msra.mxu0 0.0
      %5919 = vmatprep.subr.mxu0 0.0
      %5920 = vmatpush1.xpose.msra.mxu0 0.0
      %5921 = vmatprep.subr.mxu0 0.0
      %5922 = vmatpush1.xpose.msra.mxu0 0.0
      %5923 = vmatprep.subr.mxu0 0.0
      %5924 = vmatpush1.xpose.msra.mxu0 0.0
      %5925 = vmatprep.subr.mxu0 0.0
      %5926 = vmatpush1.xpose.msra.mxu0 0.0
      %5927 = vmatprep.subr.mxu0 0.0
      %5928 = vmatpush1.xpose.msra.mxu0 0.0
      %5929 = vmatprep.subr.mxu0 0.0
      %5930 = vmatpush1.xpose.msra.mxu0 0.0
      %5931 = vmatprep.subr.mxu0 0.0
      %5932 = vmatpush1.xpose.msra.mxu0 0.0
      %5933 = vmatprep.subr.mxu0 0.0
      %5934 = vmatpush1.xpose.msra.mxu0 0.0
      %5935 = vmatprep.subr.mxu0 0.0
      %5936 = vmatpush1.xpose.msra.mxu0 0.0
      %5937 = vmatprep.subr.mxu0 0.0
      %5938 = vmatpush1.xpose.msra.mxu0 0.0
      %5939 = vmatprep.subr.mxu0 0.0
      %5940 = vmatpush1.xpose.msra.mxu0 0.0
      %5941 = vmatprep.subr.mxu0 0.0
      %5942 = vmatpush1.xpose.msra.mxu0 0.0
      %5943 = vmatprep.subr.mxu0 0.0
      %5944 = vmatpush1.xpose.msra.mxu0 0.0
      %5945 = vmatprep.subr.mxu0 0.0
      %5946 = vmatpush1.xpose.msra.mxu0 0.0
      %5947 = vmatprep.subr.mxu0 0.0
      %5948 = vmatpush1.xpose.msra.mxu0 0.0
      %5949 = vmatprep.subr.mxu0 0.0
      %5950 = vmatpush1.xpose.msra.mxu0 0.0
      %5951 = vmatprep.subr.mxu0 0.0
      %5952 = vmatpush1.xpose.msra.mxu0 0.0
      %5953 = vmatprep.subr.mxu0 0.0
      %5954 = vmatpush1.xpose.msra.mxu0 0.0
      %5955 = vmatprep.mubr.f32.mxu0 0.0
      %5956 = vmatmul.mubr.f32.gmra.mrb[0].mxu0 %v5877
      %v5957 = vpop.f32.mrb[0].mxu0
      %v5958 = vadd.f32 0.0, %v5957
      %v5959 = vpop.f32.mrb[0].mxu0
      %5960 = vmatprep.mubr.f32.mxu0 0.0
      %5961 = vmatmul.mubr.f32.gmra.mrb[0].mxu0 %v5880
      %v5962 = vpop.f32.mrb[0].mxu0
      %v5963 = vadd.f32 0.0, %v5962
      %v5964 = vpop.f32.mrb[0].mxu0
      %5965 = vmatprep.mubr.f32.mxu0 0.0
      %5966 = vmatmul.mubr.f32.gmra.mrb[0].mxu0 %v5883
      %v5967 = vpop.f32.mrb[0].mxu0
      %v5968 = vadd.f32 0.0, %v5967
      %v5969 = vpop.f32.mrb[0].mxu0
      %5970 = vmatprep.mubr.f32.mxu0 0.0
      %5971 = vmatmul.mubr.f32.gmra.mrb[0].mxu0 %v5886
      %v5972 = vpop.f32.mrb[0].mxu0
      %v5973 = vadd.f32 0.0, %v5972
      %v5974 = vpop.f32.mrb[0].mxu0
      %5975 = vdwg.mxu0
      %v5976 = vsel %vm2536, %v5958, -inf
      %5977 = vmax.xlane.f32.xlu0 %v5976
      %v5978 = vpop.xlane.xlu0 %5977
      %v5979 = vsel %vm2536, %v5963, -inf
      %5980 = vmax.xlane.f32.xlu0 %v5979
      %v5981 = vpop.xlane.xlu0 %5980
      %v5982 = vsel %vm2536, %v5968, -inf
      %5983 = vmax.xlane.f32.xlu0 %v5982
      %v5984 = vpop.xlane.xlu0 %5983
      %v5985 = vsel %vm2536, %v5973, -inf
      %5986 = vmax.xlane.f32.xlu0 %v5985
      %v5987 = vpop.xlane.xlu0 %5986
      %v5988 = vsub.f32 %v5958, %v5978
      %v5989 = vsub.f32 %v5963, %v5981
      %v5990 = vsub.f32 %v5968, %v5984
      %v5991 = vsub.f32 %v5973, %v5987
      %v5992 = vmul.f32 %v5988, 1.442695
      %v5993 = vpow.pop %v5992
      %v5994 = vmul.f32 %v5989, 1.442695
      %v5995 = vpow.pop %v5994
      %v5996 = vmul.f32 %v5990, 1.442695
      %v5997 = vpow.pop %v5996
      %v5998 = vmul.f32 %v5991, 1.442695
      %v5999 = vpow.pop %v5998
      %v6000 = vsel %vm2536, %v5993, 0.0
      %6001 = vadd.xlane.f32.xlu0 %v6000
      %v6002 = vpop.xlane.xlu0 %6001
      %v6003 = vsel %vm2536, %v5995, 0.0
      %6004 = vadd.xlane.f32.xlu0 %v6003
      %v6005 = vpop.xlane.xlu0 %6004
      %v6006 = vsel %vm2536, %v5997, 0.0
      %6007 = vadd.xlane.f32.xlu0 %v6006
      %v6008 = vpop.xlane.xlu0 %6007
      %v6009 = vsel %vm2536, %v5999, 0.0
      %6010 = vadd.xlane.f32.xlu0 %v6009
      %v6011 = vpop.xlane.xlu0 %6010
      %v6012 = vrcp.pop %v6002
      %v6013 = vrcp.pop %v6005
      %v6014 = vrcp.pop %v6008
      %v6015 = vrcp.pop %v6011
      %6016 = vrot.lane.b32.xlu0 %v5765, 96
      %v6017 = vpop.permute.xlu0 %6016
      %v6020 = vsel %vm2536, %v5993, 0
      %v6023 = vsel %vm2536, %v5995, 0
      %v6026 = vsel %vm2536, %v5997, 0
      %v6029 = vsel %vm2536, %v5999, 0
      %6031 = vmatprep.subr.mxu0 0.0
      %6032 = vmatpush1.msra.mxu0 %v6017
      %6033 = vmatprep.subr.mxu0 0.0
      %6034 = vmatpush1.msra.mxu0 0.0
      %6035 = vmatprep.subr.mxu0 0.0
      %6036 = vmatpush1.msra.mxu0 0.0
      %6037 = vmatprep.subr.mxu0 0.0
      %6038 = vmatpush1.msra.mxu0 0.0
      %6039 = vmatprep.subr.mxu0 0.0
      %6040 = vmatpush1.msra.mxu0 0.0
      %6041 = vmatprep.subr.mxu0 0.0
      %6042 = vmatpush1.msra.mxu0 0.0
      %6043 = vmatprep.subr.mxu0 0.0
      %6044 = vmatpush1.msra.mxu0 0.0
      %6045 = vmatprep.subr.mxu0 0.0
      %6046 = vmatpush1.msra.mxu0 0.0
      %6047 = vmatprep.subr.mxu0 0.0
      %6048 = vmatpush1.msra.mxu0 0.0
      %6049 = vmatprep.subr.mxu0 0.0
      %6050 = vmatpush1.msra.mxu0 0.0
      %6051 = vmatprep.subr.mxu0 0.0
      %6052 = vmatpush1.msra.mxu0 0.0
      %6053 = vmatprep.subr.mxu0 0.0
      %6054 = vmatpush1.msra.mxu0 0.0
      %6055 = vmatprep.subr.mxu0 0.0
      %6056 = vmatpush1.msra.mxu0 0.0
      %6057 = vmatprep.subr.mxu0 0.0
      %6058 = vmatpush1.msra.mxu0 0.0
      %6059 = vmatprep.subr.mxu0 0.0
      %6060 = vmatpush1.msra.mxu0 0.0
      %6061 = vmatprep.subr.mxu0 0.0
      %6062 = vmatpush1.msra.mxu0 0.0
      %6063 = vmatprep.subr.mxu0 0.0
      %6064 = vmatpush1.msra.mxu0 0.0
      %6065 = vmatprep.subr.mxu0 0.0
      %6066 = vmatpush1.msra.mxu0 0.0
      %6067 = vmatprep.subr.mxu0 0.0
      %6068 = vmatpush1.msra.mxu0 0.0
      %6069 = vmatprep.subr.mxu0 0.0
      %6070 = vmatpush1.msra.mxu0 0.0
      %6071 = vmatprep.subr.mxu0 0.0
      %6072 = vmatpush1.msra.mxu0 0.0
      %6073 = vmatprep.subr.mxu0 0.0
      %6074 = vmatpush1.msra.mxu0 0.0
      %6075 = vmatprep.subr.mxu0 0.0
      %6076 = vmatpush1.msra.mxu0 0.0
      %6077 = vmatprep.subr.mxu0 0.0
      %6078 = vmatpush1.msra.mxu0 0.0
      %6079 = vmatprep.subr.mxu0 0.0
      %6080 = vmatpush1.msra.mxu0 0.0
      %6081 = vmatprep.subr.mxu0 0.0
      %6082 = vmatpush1.msra.mxu0 0.0
      %6083 = vmatprep.subr.mxu0 0.0
      %6084 = vmatpush1.msra.mxu0 0.0
      %6085 = vmatprep.subr.mxu0 0.0
      %6086 = vmatpush1.msra.mxu0 0.0
      %6087 = vmatprep.subr.mxu0 0.0
      %6088 = vmatpush1.msra.mxu0 0.0
      %6089 = vmatprep.subr.mxu0 0.0
      %6090 = vmatpush1.msra.mxu0 0.0
      %6091 = vmatprep.subr.mxu0 0.0
      %6092 = vmatpush1.msra.mxu0 0.0
      %6093 = vmatprep.subr.mxu0 0.0
      %6094 = vmatpush1.msra.mxu0 0.0
      %6095 = vmatprep.mubr.f32.mxu0 0.0
      %6096 = vmatmul.mubr.f32.gmra.mrb[0].mxu0 %v6020
      %v6097 = vpop.f32.mrb[0].mxu0
      %v6098 = vadd.f32 0.0, %v6097
      %v6099 = vpop.f32.mrb[0].mxu0
      %6100 = vmatprep.mubr.f32.mxu0 0.0
      %6101 = vmatmul.mubr.f32.gmra.mrb[0].mxu0 %v6023
      %v6102 = vpop.f32.mrb[0].mxu0
      %v6103 = vadd.f32 0.0, %v6102
      %v6104 = vpop.f32.mrb[0].mxu0
      %6105 = vmatprep.mubr.f32.mxu0 0.0
      %6106 = vmatmul.mubr.f32.gmra.mrb[0].mxu0 %v6026
      %v6107 = vpop.f32.mrb[0].mxu0
      %v6108 = vadd.f32 0.0, %v6107
      %v6109 = vpop.f32.mrb[0].mxu0
      %6110 = vmatprep.mubr.f32.mxu0 0.0
      %6111 = vmatmul.mubr.f32.gmra.mrb[0].mxu0 %v6029
      %v6112 = vpop.f32.mrb[0].mxu0
      %v6113 = vadd.f32 0.0, %v6112
      %v6114 = vpop.f32.mrb[0].mxu0
      %6115 = vdwg.mxu0
      %v6116 = vmul.f32 %v6012, %v1001
      %v6117 = vmul.f32 %v6013, %v1002
      %v6118 = vmul.f32 %v6014, %v1003
      %v6119 = vmul.f32 %v6015, %v1004
      %v6120 = vmul.f32 %v6098, %v6116
      %v6121 = vmul.f32 %v6103, %v6117
      %v6122 = vmul.f32 %v6108, %v6118
      %v6123 = vmul.f32 %v6113, %v6119
      %v6124 = vadd.f32 %v6120, %v6121
      %v6125 = vadd.f32 %v6124, %v6122
      %v6126 = vadd.f32 %v6125, %v6123
      %v6127 = vlaneseq
      %v6128 = vshrl.u32 %v6127, 7
      %v6129 = vsub.s32 2, %v6128
      %v6130 = vrot.slane %v5130, %v6129
      %v6132 = vsel %vm1160, %v6126, 0
      %6134 = vmatprep.subr.mxu0 0.0
      %6135 = vmatpush1.msra.mxu0 %v5779
      %6136 = vmatprep.subr.mxu0 0.0
      %6137 = vmatpush1.msra.mxu0 %v5780
      %6138 = vmatprep.subr.mxu0 0.0
      %6139 = vmatpush1.msra.mxu0 %v5781
      %6140 = vmatprep.subr.mxu0 0.0
      %6141 = vmatpush1.msra.mxu0 %v5782
      %6142 = vmatprep.subr.mxu0 0.0
      %6143 = vmatpush1.msra.mxu0 0.0
      %6144 = vmatprep.subr.mxu0 0.0
      %6145 = vmatpush1.msra.mxu0 0.0
      %6146 = vmatprep.subr.mxu0 0.0
      %6147 = vmatpush1.msra.mxu0 0.0
      %6148 = vmatprep.subr.mxu0 0.0
      %6149 = vmatpush1.msra.mxu0 0.0
      %6150 = vmatprep.subr.mxu0 0.0
      %6151 = vmatpush1.msra.mxu0 0.0
      %6152 = vmatprep.subr.mxu0 0.0
      %6153 = vmatpush1.msra.mxu0 0.0
      %6154 = vmatprep.subr.mxu0 0.0
      %6155 = vmatpush1.msra.mxu0 0.0
      %6156 = vmatprep.subr.mxu0 0.0
      %6157 = vmatpush1.msra.mxu0 0.0
      %6158 = vmatprep.subr.mxu0 0.0
      %6159 = vmatpush1.msra.mxu0 0.0
      %6160 = vmatprep.subr.mxu0 0.0
      %6161 = vmatpush1.msra.mxu0 0.0
      %6162 = vmatprep.subr.mxu0 0.0
      %6163 = vmatpush1.msra.mxu0 0.0
      %6164 = vmatprep.subr.mxu0 0.0
      %6165 = vmatpush1.msra.mxu0 0.0
      %6166 = vmatprep.subr.mxu0 0.0
      %6167 = vmatpush1.msra.mxu0 0.0
      %6168 = vmatprep.subr.mxu0 0.0
      %6169 = vmatpush1.msra.mxu0 0.0
      %6170 = vmatprep.subr.mxu0 0.0
      %6171 = vmatpush1.msra.mxu0 0.0
      %6172 = vmatprep.subr.mxu0 0.0
      %6173 = vmatpush1.msra.mxu0 0.0
      %6174 = vmatprep.subr.mxu0 0.0
      %6175 = vmatpush1.msra.mxu0 0.0
      %6176 = vmatprep.subr.mxu0 0.0
      %6177 = vmatpush1.msra.mxu0 0.0
      %6178 = vmatprep.subr.mxu0 0.0
      %6179 = vmatpush1.msra.mxu0 0.0
      %6180 = vmatprep.subr.mxu0 0.0
      %6181 = vmatpush1.msra.mxu0 0.0
      %6182 = vmatprep.subr.mxu0 0.0
      %6183 = vmatpush1.msra.mxu0 0.0
      %6184 = vmatprep.subr.mxu0 0.0
      %6185 = vmatpush1.msra.mxu0 0.0
      %6186 = vmatprep.subr.mxu0 0.0
      %6187 = vmatpush1.msra.mxu0 0.0
      %6188 = vmatprep.subr.mxu0 0.0
      %6189 = vmatpush1.msra.mxu0 0.0
      %6190 = vmatprep.subr.mxu0 0.0
      %6191 = vmatpush1.msra.mxu0 0.0
      %6192 = vmatprep.subr.mxu0 0.0
      %6193 = vmatpush1.msra.mxu0 0.0
      %6194 = vmatprep.subr.mxu0 0.0
      %6195 = vmatpush1.msra.mxu0 0.0
      %6196 = vmatprep.subr.mxu0 0.0
      %6197 = vmatpush1.msra.mxu0 0.0
      %6198 = vmatprep.mubr.f32.mxu0 0.0
      %6199 = vmatmul.mubr.f32.gmra.mrb[0].mxu0 %v6132
      %v6200 = vpop.f32.mrb[0].mxu0
      %v6201 = vadd.f32 %v6130, %v6200
      %v6202 = vpop.f32.mrb[0].mxu0
      %6203 = vdwg.mxu0
      %v6204 = vadd.f32 %v5687, %v6201
      %v6205 = vsel %vm1160, %v6204, 0.0
      %6206 = vadd.xlane.f32.xlu0 %v6205
      %v6207 = vpop.xlane.xlu0 %6206
      %v6208 = vmul.f32 %v6207, %v1164
      %v6209 = vmul.f32 %v6204, %v6204
      %v6210 = vsel %vm1160, %v6209, 0.0
      %6211 = vadd.xlane.f32.xlu0 %v6210
      %v6212 = vpop.xlane.xlu0 %6211
      %v6213 = vmul.f32 %v6212, %v1164
      %v6214 = vmul.f32 %v6208, %v6208
      %v6215 = vsub.f32 %v6213, %v6214
      %v6216 = vsub.f32 %v6204, %v6208
      %v6217 = vadd.f32 %v6215, 1e-05
      %v6218 = vrsqrt.pop %v6217
      %v6219 = vmul.f32 %v6216, %v6218
      %v6220 = vlaneseq
      %v6221 = vshrl.u32 %v6220, 7
      %v6222 = vsub.s32 6, %v6221
      %v6223 = vrot.slane %v5130, %v6222
      %v6224 = vmul.f32 %v6219, %v6223
      %v6225 = vlaneseq
      %v6226 = vshrl.u32 %v6225, 7
      %v6227 = vsub.s32 7, %v6226
      %v6228 = vrot.slane %v5130, %v6227
      %v6229 = vadd.f32 %v6224, %v6228
      %s6230 = scalar_lea.vmem %s45, 64
      %v6231 = vld [vmem:[%s6230] sm:$0xff]
      %v6232 = vld [vmem:[%s6230 + $0x8] sm:$0xff]
      %v6233 = vld [vmem:[%s6230 + $0x10] sm:$0xff]
      %v6234 = vld [vmem:[%s6230 + $0x18] sm:$0xff]
      %s6235 = scalar_lea.vmem %s47, 2
      %v6236 = vld [vmem:[%s6235] sm:$0x1]
      %v6238 = vlaneseq
      %v6239 = vshrl.u32 %v6238, 7
      %v6240 = vsub.s32 0, %v6239
      %v6241 = vrot.slane %v6236, %v6240
      %v6244 = vsel %vm1160, %v6229, 0
      %6246 = vmatprep.subr.mxu0 0.0
      %6247 = vmatpush1.msra.mxu0 %v6231
      %6248 = vmatprep.subr.mxu0 0.0
      %6249 = vmatpush1.msra.mxu0 %v6232
      %6250 = vmatprep.subr.mxu0 0.0
      %6251 = vmatpush1.msra.mxu0 %v6233
      %6252 = vmatprep.subr.mxu0 0.0
      %6253 = vmatpush1.msra.mxu0 %v6234
      %6254 = vmatprep.subr.mxu0 0.0
      %6255 = vmatpush1.msra.mxu0 0.0
      %6256 = vmatprep.subr.mxu0 0.0
      %6257 = vmatpush1.msra.mxu0 0.0
      %6258 = vmatprep.subr.mxu0 0.0
      %6259 = vmatpush1.msra.mxu0 0.0
      %6260 = vmatprep.subr.mxu0 0.0
      %6261 = vmatpush1.msra.mxu0 0.0
      %6262 = vmatprep.subr.mxu0 0.0
      %6263 = vmatpush1.msra.mxu0 0.0
      %6264 = vmatprep.subr.mxu0 0.0
      %6265 = vmatpush1.msra.mxu0 0.0
      %6266 = vmatprep.subr.mxu0 0.0
      %6267 = vmatpush1.msra.mxu0 0.0
      %6268 = vmatprep.subr.mxu0 0.0
      %6269 = vmatpush1.msra.mxu0 0.0
      %6270 = vmatprep.subr.mxu0 0.0
      %6271 = vmatpush1.msra.mxu0 0.0
      %6272 = vmatprep.subr.mxu0 0.0
      %6273 = vmatpush1.msra.mxu0 0.0
      %6274 = vmatprep.subr.mxu0 0.0
      %6275 = vmatpush1.msra.mxu0 0.0
      %6276 = vmatprep.subr.mxu0 0.0
      %6277 = vmatpush1.msra.mxu0 0.0
      %6278 = vmatprep.subr.mxu0 0.0
      %6279 = vmatpush1.msra.mxu0 0.0
      %6280 = vmatprep.subr.mxu0 0.0
      %6281 = vmatpush1.msra.mxu0 0.0
      %6282 = vmatprep.subr.mxu0 0.0
      %6283 = vmatpush1.msra.mxu0 0.0
      %6284 = vmatprep.subr.mxu0 0.0
      %6285 = vmatpush1.msra.mxu0 0.0
      %6286 = vmatprep.subr.mxu0 0.0
      %6287 = vmatpush1.msra.mxu0 0.0
      %6288 = vmatprep.subr.mxu0 0.0
      %6289 = vmatpush1.msra.mxu0 0.0
      %6290 = vmatprep.subr.mxu0 0.0
      %6291 = vmatpush1.msra.mxu0 0.0
      %6292 = vmatprep.subr.mxu0 0.0
      %6293 = vmatpush1.msra.mxu0 0.0
      %6294 = vmatprep.subr.mxu0 0.0
      %6295 = vmatpush1.msra.mxu0 0.0
      %6296 = vmatprep.subr.mxu0 0.0
      %6297 = vmatpush1.msra.mxu0 0.0
      %6298 = vmatprep.subr.mxu0 0.0
      %6299 = vmatpush1.msra.mxu0 0.0
      %6300 = vmatprep.subr.mxu0 0.0
      %6301 = vmatpush1.msra.mxu0 0.0
      %6302 = vmatprep.subr.mxu0 0.0
      %6303 = vmatpush1.msra.mxu0 0.0
      %6304 = vmatprep.subr.mxu0 0.0
      %6305 = vmatpush1.msra.mxu0 0.0
      %6306 = vmatprep.subr.mxu0 0.0
      %6307 = vmatpush1.msra.mxu0 0.0
      %6308 = vmatprep.subr.mxu0 0.0
      %6309 = vmatpush1.msra.mxu0 0.0
      %6310 = vmatprep.mubr.f32.mxu0 0.0
      %6311 = vmatmul.mubr.f32.gmra.mrb[0].mxu0 %v6244
      %v6312 = vpop.f32.mrb[0].mxu0
      %v6313 = vadd.f32 %v6241, %v6312
      %v6314 = vpop.f32.mrb[0].mxu0
      %6315 = vdwg.mxu0
      %v6316 = vmax.f32 %v6313, 0.0
      %s6317 = scalar_lea.vmem %s49, 128
      %v6318 = vld [vmem:[%s6317] sm:$0xff]
      %v6319 = vld [vmem:[%s6317 + $0x8] sm:$0xff]
      %v6320 = vld [vmem:[%s6317 + $0x10] sm:$0xff]
      %v6321 = vld [vmem:[%s6317 + $0x18] sm:$0xff]
      %v6322 = vld [vmem:[%s6317 + $0x20] sm:$0xff]
      %v6323 = vld [vmem:[%s6317 + $0x28] sm:$0xff]
      %v6324 = vld [vmem:[%s6317 + $0x30] sm:$0xff]
      %v6325 = vld [vmem:[%s6317 + $0x38] sm:$0xff]
      %v6327 = vsel %vm1275, %v6316, 0
      %6329 = vmatprep.subr.mxu0 0.0
      %6330 = vmatpush1.msra.mxu0 %v6318
      %6331 = vmatprep.subr.mxu0 0.0
      %6332 = vmatpush1.msra.mxu0 %v6319
      %6333 = vmatprep.subr.mxu0 0.0
      %6334 = vmatpush1.msra.mxu0 %v6320
      %6335 = vmatprep.subr.mxu0 0.0
      %6336 = vmatpush1.msra.mxu0 %v6321
      %6337 = vmatprep.subr.mxu0 0.0
      %6338 = vmatpush1.msra.mxu0 %v6322
      %6339 = vmatprep.subr.mxu0 0.0
      %6340 = vmatpush1.msra.mxu0 %v6323
      %6341 = vmatprep.subr.mxu0 0.0
      %6342 = vmatpush1.msra.mxu0 %v6324
      %6343 = vmatprep.subr.mxu0 0.0
      %6344 = vmatpush1.msra.mxu0 %v6325
      %6345 = vmatprep.subr.mxu0 0.0
      %6346 = vmatpush1.msra.mxu0 0.0
      %6347 = vmatprep.subr.mxu0 0.0
      %6348 = vmatpush1.msra.mxu0 0.0
      %6349 = vmatprep.subr.mxu0 0.0
      %6350 = vmatpush1.msra.mxu0 0.0
      %6351 = vmatprep.subr.mxu0 0.0
      %6352 = vmatpush1.msra.mxu0 0.0
      %6353 = vmatprep.subr.mxu0 0.0
      %6354 = vmatpush1.msra.mxu0 0.0
      %6355 = vmatprep.subr.mxu0 0.0
      %6356 = vmatpush1.msra.mxu0 0.0
      %6357 = vmatprep.subr.mxu0 0.0
      %6358 = vmatpush1.msra.mxu0 0.0
      %6359 = vmatprep.subr.mxu0 0.0
      %6360 = vmatpush1.msra.mxu0 0.0
      %6361 = vmatprep.subr.mxu0 0.0
      %6362 = vmatpush1.msra.mxu0 0.0
      %6363 = vmatprep.subr.mxu0 0.0
      %6364 = vmatpush1.msra.mxu0 0.0
      %6365 = vmatprep.subr.mxu0 0.0
      %6366 = vmatpush1.msra.mxu0 0.0
      %6367 = vmatprep.subr.mxu0 0.0
      %6368 = vmatpush1.msra.mxu0 0.0
      %6369 = vmatprep.subr.mxu0 0.0
      %6370 = vmatpush1.msra.mxu0 0.0
      %6371 = vmatprep.subr.mxu0 0.0
      %6372 = vmatpush1.msra.mxu0 0.0
      %6373 = vmatprep.subr.mxu0 0.0
      %6374 = vmatpush1.msra.mxu0 0.0
      %6375 = vmatprep.subr.mxu0 0.0
      %6376 = vmatpush1.msra.mxu0 0.0
      %6377 = vmatprep.subr.mxu0 0.0
      %6378 = vmatpush1.msra.mxu0 0.0
      %6379 = vmatprep.subr.mxu0 0.0
      %6380 = vmatpush1.msra.mxu0 0.0
      %6381 = vmatprep.subr.mxu0 0.0
      %6382 = vmatpush1.msra.mxu0 0.0
      %6383 = vmatprep.subr.mxu0 0.0
      %6384 = vmatpush1.msra.mxu0 0.0
      %6385 = vmatprep.subr.mxu0 0.0
      %6386 = vmatpush1.msra.mxu0 0.0
      %6387 = vmatprep.subr.mxu0 0.0
      %6388 = vmatpush1.msra.mxu0 0.0
      %6389 = vmatprep.subr.mxu0 0.0
      %6390 = vmatpush1.msra.mxu0 0.0
      %6391 = vmatprep.subr.mxu0 0.0
      %6392 = vmatpush1.msra.mxu0 0.0
      %6393 = vmatprep.mubr.f32.mxu0 0.0
      %6394 = vmatmul.mubr.f32.gmra.mrb[0].mxu0 %v6327
      %v6395 = vpop.f32.mrb[0].mxu0
      %v6396 = vadd.f32 0.0, %v6395
      %v6397 = vpop.f32.mrb[0].mxu0
      %6398 = vdwg.mxu0
      %v6399 = vadd.f32 %v6229, %v6396
      %v6400 = vlaneseq
      %v6401 = vshrl.u32 %v6400, 7
      %v6402 = vsub.s32 3, %v6401
      %v6403 = vrot.slane %v5130, %v6402
      %v6404 = vadd.f32 %v6399, %v6403
      %v6405 = vsel %vm1160, %v6404, 0.0
      %6406 = vadd.xlane.f32.xlu0 %v6405
      %v6407 = vpop.xlane.xlu0 %6406
      %v6408 = vmul.f32 %v6407, %v1164
      %v6409 = vmul.f32 %v6404, %v6404
      %v6410 = vsel %vm1160, %v6409, 0.0
      %6411 = vadd.xlane.f32.xlu0 %v6410
      %v6412 = vpop.xlane.xlu0 %6411
      %v6413 = vmul.f32 %v6412, %v1164
      %v6414 = vmul.f32 %v6408, %v6408
      %v6415 = vsub.f32 %v6413, %v6414
      %v6416 = vsub.f32 %v6404, %v6408
      %v6417 = vadd.f32 %v6415, 1e-05
      %v6418 = vrsqrt.pop %v6417
      %v6419 = vmul.f32 %v6416, %v6418
      %v6420 = vlaneseq
      %v6421 = vshrl.u32 %v6420, 7
      %v6422 = vsub.s32 0, %v6421
      %v6423 = vrot.slane %v5131, %v6422
      %v6424 = vmul.f32 %v6419, %v6423
      %v6425 = vlaneseq
      %v6426 = vshrl.u32 %v6425, 7
      %v6427 = vsub.s32 1, %v6426
      %v6428 = vrot.slane %v5131, %v6427
      %v6429 = vadd.f32 %v6424, %v6428
      %v6430 = vsel %vm1160, %v6429, 0.0
      %6431 = vadd.xlane.f32.xlu0 %v6430
      %v6432 = vpop.xlane.xlu0 %6431
      %v6433 = vmul.f32 %v6432, %v1164
      %v6434 = vmul.f32 %v6429, %v6429
      %v6435 = vsel %vm1160, %v6434, 0.0
      %6436 = vadd.xlane.f32.xlu0 %v6435
      %v6437 = vpop.xlane.xlu0 %6436
      %v6438 = vmul.f32 %v6437, %v1164
      %v6439 = vmul.f32 %v6433, %v6433
      %v6440 = vsub.f32 %v6438, %v6439
      %v6441 = vsub.f32 %v6429, %v6433
      %v6442 = vadd.f32 %v6440, 1e-05
      %v6443 = vrsqrt.pop %v6442
      %v6444 = vmul.f32 %v6441, %v6443
      %v6445 = vmul.f32 %v6444, %v1180
      %v6446 = vadd.f32 %v6445, %v1185
      %v6448 = vsel %vm1160, %v6446, 0
      %6450 = vmatprep.subr.mxu0 0.0
      %6451 = vmatpush1.msra.mxu0 %v1132
      %6452 = vmatprep.subr.mxu0 0.0
      %6453 = vmatpush1.msra.mxu0 %v1133
      %6454 = vmatprep.subr.mxu0 0.0
      %6455 = vmatpush1.msra.mxu0 %v1134
      %6456 = vmatprep.subr.mxu0 0.0
      %6457 = vmatpush1.msra.mxu0 %v1135
      %6458 = vmatprep.subr.mxu0 0.0
      %6459 = vmatpush1.msra.mxu0 0.0
      %6460 = vmatprep.subr.mxu0 0.0
      %6461 = vmatpush1.msra.mxu0 0.0
      %6462 = vmatprep.subr.mxu0 0.0
      %6463 = vmatpush1.msra.mxu0 0.0
      %6464 = vmatprep.subr.mxu0 0.0
      %6465 = vmatpush1.msra.mxu0 0.0
      %6466 = vmatprep.subr.mxu0 0.0
      %6467 = vmatpush1.msra.mxu0 0.0
      %6468 = vmatprep.subr.mxu0 0.0
      %6469 = vmatpush1.msra.mxu0 0.0
      %6470 = vmatprep.subr.mxu0 0.0
      %6471 = vmatpush1.msra.mxu0 0.0
      %6472 = vmatprep.subr.mxu0 0.0
      %6473 = vmatpush1.msra.mxu0 0.0
      %6474 = vmatprep.subr.mxu0 0.0
      %6475 = vmatpush1.msra.mxu0 0.0
      %6476 = vmatprep.subr.mxu0 0.0
      %6477 = vmatpush1.msra.mxu0 0.0
      %6478 = vmatprep.subr.mxu0 0.0
      %6479 = vmatpush1.msra.mxu0 0.0
      %6480 = vmatprep.subr.mxu0 0.0
      %6481 = vmatpush1.msra.mxu0 0.0
      %6482 = vmatprep.subr.mxu0 0.0
      %6483 = vmatpush1.msra.mxu0 0.0
      %6484 = vmatprep.subr.mxu0 0.0
      %6485 = vmatpush1.msra.mxu0 0.0
      %6486 = vmatprep.subr.mxu0 0.0
      %6487 = vmatpush1.msra.mxu0 0.0
      %6488 = vmatprep.subr.mxu0 0.0
      %6489 = vmatpush1.msra.mxu0 0.0
      %6490 = vmatprep.subr.mxu0 0.0
      %6491 = vmatpush1.msra.mxu0 0.0
      %6492 = vmatprep.subr.mxu0 0.0
      %6493 = vmatpush1.msra.mxu0 0.0
      %6494 = vmatprep.subr.mxu0 0.0
      %6495 = vmatpush1.msra.mxu0 0.0
      %6496 = vmatprep.subr.mxu0 0.0
      %6497 = vmatpush1.msra.mxu0 0.0
      %6498 = vmatprep.subr.mxu0 0.0
      %6499 = vmatpush1.msra.mxu0 0.0
      %6500 = vmatprep.subr.mxu0 0.0
      %6501 = vmatpush1.msra.mxu0 0.0
      %6502 = vmatprep.subr.mxu0 0.0
      %6503 = vmatpush1.msra.mxu0 0.0
      %6504 = vmatprep.subr.mxu0 0.0
      %6505 = vmatpush1.msra.mxu0 0.0
      %6506 = vmatprep.subr.mxu0 0.0
      %6507 = vmatpush1.msra.mxu0 0.0
      %6508 = vmatprep.subr.mxu0 0.0
      %6509 = vmatpush1.msra.mxu0 0.0
      %6510 = vmatprep.subr.mxu0 0.0
      %6511 = vmatpush1.msra.mxu0 0.0
      %6512 = vmatprep.subr.mxu0 0.0
      %6513 = vmatpush1.msra.mxu0 0.0
      %6514 = vmatprep.mubr.f32.mxu0 0.0
      %6515 = vmatmul.mubr.f32.gmra.mrb[0].mxu0 %v6448
      %v6516 = vpop.f32.mrb[0].mxu0
      %v6517 = vadd.f32 %v1190, %v6516
      %v6518 = vpop.f32.mrb[0].mxu0
      %6519 = vdwg.mxu0
      %6521 = vrot.lane.b32.xlu0 %v6517, 64
      %v6522 = vpop.permute.xlu0 %6521
      %s6524 = scalar_lea.vmem %s995, 24
      %6525 = vst.msk [vmem:[%s6524] sm:$0xff] %vm1268, %v6522
      %v6526 = vmax.f32 %v6517, 0.0
      %v6528 = vsel %vm1275, %v6526, 0
      %6530 = vmatprep.subr.mxu0 0.0
      %6531 = vmatpush1.msra.mxu0 %v1137
      %6532 = vmatprep.subr.mxu0 0.0
      %6533 = vmatpush1.msra.mxu0 %v1138
      %6534 = vmatprep.subr.mxu0 0.0
      %6535 = vmatpush1.msra.mxu0 %v1139
      %6536 = vmatprep.subr.mxu0 0.0
      %6537 = vmatpush1.msra.mxu0 %v1140
      %6538 = vmatprep.subr.mxu0 0.0
      %6539 = vmatpush1.msra.mxu0 %v1141
      %6540 = vmatprep.subr.mxu0 0.0
      %6541 = vmatpush1.msra.mxu0 %v1142
      %6542 = vmatprep.subr.mxu0 0.0
      %6543 = vmatpush1.msra.mxu0 %v1143
      %6544 = vmatprep.subr.mxu0 0.0
      %6545 = vmatpush1.msra.mxu0 %v1144
      %6546 = vmatprep.subr.mxu0 0.0
      %6547 = vmatpush1.msra.mxu0 0.0
      %6548 = vmatprep.subr.mxu0 0.0
      %6549 = vmatpush1.msra.mxu0 0.0
      %6550 = vmatprep.subr.mxu0 0.0
      %6551 = vmatpush1.msra.mxu0 0.0
      %6552 = vmatprep.subr.mxu0 0.0
      %6553 = vmatpush1.msra.mxu0 0.0
      %6554 = vmatprep.subr.mxu0 0.0
      %6555 = vmatpush1.msra.mxu0 0.0
      %6556 = vmatprep.subr.mxu0 0.0
      %6557 = vmatpush1.msra.mxu0 0.0
      %6558 = vmatprep.subr.mxu0 0.0
      %6559 = vmatpush1.msra.mxu0 0.0
      %6560 = vmatprep.subr.mxu0 0.0
      %6561 = vmatpush1.msra.mxu0 0.0
      %6562 = vmatprep.subr.mxu0 0.0
      %6563 = vmatpush1.msra.mxu0 0.0
      %6564 = vmatprep.subr.mxu0 0.0
      %6565 = vmatpush1.msra.mxu0 0.0
      %6566 = vmatprep.subr.mxu0 0.0
      %6567 = vmatpush1.msra.mxu0 0.0
      %6568 = vmatprep.subr.mxu0 0.0
      %6569 = vmatpush1.msra.mxu0 0.0
      %6570 = vmatprep.subr.mxu0 0.0
      %6571 = vmatpush1.msra.mxu0 0.0
      %6572 = vmatprep.subr.mxu0 0.0
      %6573 = vmatpush1.msra.mxu0 0.0
      %6574 = vmatprep.subr.mxu0 0.0
      %6575 = vmatpush1.msra.mxu0 0.0
      %6576 = vmatprep.subr.mxu0 0.0
      %6577 = vmatpush1.msra.mxu0 0.0
      %6578 = vmatprep.subr.mxu0 0.0
      %6579 = vmatpush1.msra.mxu0 0.0
      %6580 = vmatprep.subr.mxu0 0.0
      %6581 = vmatpush1.msra.mxu0 0.0
      %6582 = vmatprep.subr.mxu0 0.0
      %6583 = vmatpush1.msra.mxu0 0.0
      %6584 = vmatprep.subr.mxu0 0.0
      %6585 = vmatpush1.msra.mxu0 0.0
      %6586 = vmatprep.subr.mxu0 0.0
      %6587 = vmatpush1.msra.mxu0 0.0
      %6588 = vmatprep.subr.mxu0 0.0
      %6589 = vmatpush1.msra.mxu0 0.0
      %6590 = vmatprep.subr.mxu0 0.0
      %6591 = vmatpush1.msra.mxu0 0.0
      %6592 = vmatprep.subr.mxu0 0.0
      %6593 = vmatpush1.msra.mxu0 0.0
      %6594 = vmatprep.mubr.f32.mxu0 0.0
      %6595 = vmatmul.mubr.f32.gmra.mrb[0].mxu0 %v6528
      %v6596 = vpop.f32.mrb[0].mxu0
      %v6597 = vadd.f32 %v1274, %v6596
      %v6598 = vpop.f32.mrb[0].mxu0
      %6599 = vdwg.mxu0
      %v6600 = vmax.f32 %v6597, 0.0
      %v6602 = vsel %vm1275, %v6600, 0
      %6604 = vmatprep.subr.mxu0 0.0
      %6605 = vmatpush1.msra.mxu0 %v1146
      %6606 = vmatprep.subr.mxu0 0.0
      %6607 = vmatpush1.msra.mxu0 %v1147
      %6608 = vmatprep.subr.mxu0 0.0
      %6609 = vmatpush1.msra.mxu0 %v1148
      %6610 = vmatprep.subr.mxu0 0.0
      %6611 = vmatpush1.msra.mxu0 %v1149
      %6612 = vmatprep.subr.mxu0 0.0
      %6613 = vmatpush1.msra.mxu0 %v1150
      %6614 = vmatprep.subr.mxu0 0.0
      %6615 = vmatpush1.msra.mxu0 %v1151
      %6616 = vmatprep.subr.mxu0 0.0
      %6617 = vmatpush1.msra.mxu0 %v1152
      %6618 = vmatprep.subr.mxu0 0.0
      %6619 = vmatpush1.msra.mxu0 %v1153
      %6620 = vmatprep.subr.mxu0 0.0
      %6621 = vmatpush1.msra.mxu0 0.0
      %6622 = vmatprep.subr.mxu0 0.0
      %6623 = vmatpush1.msra.mxu0 0.0
      %6624 = vmatprep.subr.mxu0 0.0
      %6625 = vmatpush1.msra.mxu0 0.0
      %6626 = vmatprep.subr.mxu0 0.0
      %6627 = vmatpush1.msra.mxu0 0.0
      %6628 = vmatprep.subr.mxu0 0.0
      %6629 = vmatpush1.msra.mxu0 0.0
      %6630 = vmatprep.subr.mxu0 0.0
      %6631 = vmatpush1.msra.mxu0 0.0
      %6632 = vmatprep.subr.mxu0 0.0
      %6633 = vmatpush1.msra.mxu0 0.0
      %6634 = vmatprep.subr.mxu0 0.0
      %6635 = vmatpush1.msra.mxu0 0.0
      %6636 = vmatprep.subr.mxu0 0.0
      %6637 = vmatpush1.msra.mxu0 0.0
      %6638 = vmatprep.subr.mxu0 0.0
      %6639 = vmatpush1.msra.mxu0 0.0
      %6640 = vmatprep.subr.mxu0 0.0
      %6641 = vmatpush1.msra.mxu0 0.0
      %6642 = vmatprep.subr.mxu0 0.0
      %6643 = vmatpush1.msra.mxu0 0.0
      %6644 = vmatprep.subr.mxu0 0.0
      %6645 = vmatpush1.msra.mxu0 0.0
      %6646 = vmatprep.subr.mxu0 0.0
      %6647 = vmatpush1.msra.mxu0 0.0
      %6648 = vmatprep.subr.mxu0 0.0
      %6649 = vmatpush1.msra.mxu0 0.0
      %6650 = vmatprep.subr.mxu0 0.0
      %6651 = vmatpush1.msra.mxu0 0.0
      %6652 = vmatprep.subr.mxu0 0.0
      %6653 = vmatpush1.msra.mxu0 0.0
      %6654 = vmatprep.subr.mxu0 0.0
      %6655 = vmatpush1.msra.mxu0 0.0
      %6656 = vmatprep.subr.mxu0 0.0
      %6657 = vmatpush1.msra.mxu0 0.0
      %6658 = vmatprep.subr.mxu0 0.0
      %6659 = vmatpush1.msra.mxu0 0.0
      %6660 = vmatprep.subr.mxu0 0.0
      %6661 = vmatpush1.msra.mxu0 0.0
      %6662 = vmatprep.subr.mxu0 0.0
      %6663 = vmatpush1.msra.mxu0 0.0
      %6664 = vmatprep.subr.mxu0 0.0
      %6665 = vmatpush1.msra.mxu0 0.0
      %6666 = vmatprep.subr.mxu0 0.0
      %6667 = vmatpush1.msra.mxu0 0.0
      %6668 = vmatprep.mubr.f32.mxu0 0.0
      %6669 = vmatmul.mubr.f32.gmra.mrb[0].mxu0 %v6602
      %v6670 = vpop.f32.mrb[0].mxu0
      %v6671 = vadd.f32 %v1353, %v6670
      %v6672 = vpop.f32.mrb[0].mxu0
      %6673 = vdwg.mxu0
      %v6674 = vxor.u32 %v6671, 2147483648
      %v6675 = vmul.f32 %v6674, 1.442695
      %v6676 = vpow.pop %v6675
      %v6677 = vadd.f32 %v6676, 1.0
      %v6678 = vrcp.pop %v6677
      %v6679 = vmul.f32 1.0, %v6678
      %6681 = vrot.lane.b32.xlu0 %v6679, 104
      %v6682 = vpop.permute.xlu0 %6681
      %6684 = vst.msk [vmem:[%s6524] sm:$0xff] %vm3242, %v6682
      %v6686 = vsel %vm1160, %v6671, 0
      %6688 = vmatprep.subr.mxu0 %v1006
      %6689 = vmatpush1.msra.mxu0 %v1005
      %6690 = vmatprep.subr.mxu0 %v1008
      %6691 = vmatpush1.msra.mxu0 %v1007
      %6692 = vmatprep.subr.mxu0 %v1010
      %6693 = vmatpush1.msra.mxu0 %v1009
      %6694 = vmatprep.subr.mxu0 %v1012
      %6695 = vmatpush1.msra.mxu0 %v1011
      %6696 = vmatprep.subr.mxu0 0.0
      %6697 = vmatpush1.msra.mxu0 0.0
      %6698 = vmatprep.subr.mxu0 0.0
      %6699 = vmatpush1.msra.mxu0 0.0
      %6700 = vmatprep.subr.mxu0 0.0
      %6701 = vmatpush1.msra.mxu0 0.0
      %6702 = vmatprep.subr.mxu0 0.0
      %6703 = vmatpush1.msra.mxu0 0.0
      %6704 = vmatprep.subr.mxu0 0.0
      %6705 = vmatpush1.msra.mxu0 0.0
      %6706 = vmatprep.subr.mxu0 0.0
      %6707 = vmatpush1.msra.mxu0 0.0
      %6708 = vmatprep.subr.mxu0 0.0
      %6709 = vmatpush1.msra.mxu0 0.0
      %6710 = vmatprep.subr.mxu0 0.0
      %6711 = vmatpush1.msra.mxu0 0.0
      %6712 = vmatprep.subr.mxu0 0.0
      %6713 = vmatpush1.msra.mxu0 0.0
      %6714 = vmatprep.subr.mxu0 0.0
      %6715 = vmatpush1.msra.mxu0 0.0
      %6716 = vmatprep.subr.mxu0 0.0
      %6717 = vmatpush1.msra.mxu0 0.0
      %6718 = vmatprep.subr.mxu0 0.0
      %6719 = vmatpush1.msra.mxu0 0.0
      %6720 = vmatprep.subr.mxu0 0.0
      %6721 = vmatpush1.msra.mxu0 0.0
      %6722 = vmatprep.subr.mxu0 0.0
      %6723 = vmatpush1.msra.mxu0 0.0
      %6724 = vmatprep.subr.mxu0 0.0
      %6725 = vmatpush1.msra.mxu0 0.0
      %6726 = vmatprep.subr.mxu0 0.0
      %6727 = vmatpush1.msra.mxu0 0.0
      %6728 = vmatprep.subr.mxu0 0.0
      %6729 = vmatpush1.msra.mxu0 0.0
      %6730 = vmatprep.subr.mxu0 0.0
      %6731 = vmatpush1.msra.mxu0 0.0
      %6732 = vmatprep.subr.mxu0 0.0
      %6733 = vmatpush1.msra.mxu0 0.0
      %6734 = vmatprep.subr.mxu0 0.0
      %6735 = vmatpush1.msra.mxu0 0.0
      %6736 = vmatprep.subr.mxu0 0.0
      %6737 = vmatpush1.msra.mxu0 0.0
      %6738 = vmatprep.subr.mxu0 0.0
      %6739 = vmatpush1.msra.mxu0 0.0
      %6740 = vmatprep.subr.mxu0 0.0
      %6741 = vmatpush1.msra.mxu0 0.0
      %6742 = vmatprep.subr.mxu0 0.0
      %6743 = vmatpush1.msra.mxu0 0.0
      %6744 = vmatprep.subr.mxu0 0.0
      %6745 = vmatpush1.msra.mxu0 0.0
      %6746 = vmatprep.subr.mxu0 0.0
      %6747 = vmatpush1.msra.mxu0 0.0
      %6748 = vmatprep.subr.mxu0 0.0
      %6749 = vmatpush1.msra.mxu0 0.0
      %6750 = vmatprep.subr.mxu0 0.0
      %6751 = vmatpush1.msra.mxu0 0.0
      %6752 = vmatprep.mubr.f32.mxu0 0.0
      %6753 = vmatmul.mubr.f32.gmra.mrb[0].mxu0 %v6686
      %v6754 = vpop.f32.mrb[0].mxu0
      %v6755 = vadd.f32 0.0, %v6754
      %v6756 = vpop.f32.mrb[0].mxu0
      %v6757 = vadd.f32 0.0, %v6756
      %6758 = vdwg.mxu0
      %s6759 = scalar_lea.vmem %s1000, 48
      %6760 = vst [vmem:[%s6759] sm:$0xff] %v6755
      %6761 = vst [vmem:[%s6759 + $0x8] sm:$0xff] %v6757
      %p6762 = scmp.lt.s32.totalorder %s73, 1
      %s6763 = scalar_select %p6762, %s73, 1
      %s6764 = smul.addr %s6763, 4
      %s6765 = smul.addr %s6764, 8
      %s6766 = scalar_lea.vmem %s59, %s6765
      %p6767 = scmp.lt.s32.totalorder %s73, 1
      %s6768 = scalar_select %p6767, %s73, 1
      %s6769 = smul.addr %s6768, 8
      %s6770 = smul.addr %s6769, 8
      %s6771 = scalar_lea.vmem %s61, %s6770
      // Predicated region
      $region137: #{decoder_forward.1} parent=135 // pred_check
        %p6772 = pneg %p720
      $region138: #{decoder_forward.1} parent=135 // pred_check_branch
        %6774 = sbr.rel (%p6772) target = $region140
      $region139: #{decoder_forward.1} parent=135 // pred_region
        _
      $region140: #{decoder_forward.1} parent=135 // pred_fallthru
        _
      // Predicated region
      $region141: #{decoder_forward.1} parent=135 // pred_check
        %p6775 = pneg %p746
      $region142: #{decoder_forward.1} parent=135 // pred_check_branch
        %6777 = sbr.rel (%p6775) target = $region144
      $region143: #{decoder_forward.1} parent=135 // pred_region
        _
      $region144: #{decoder_forward.1} parent=135 // pred_fallthru
        _
    $region136: #{decoder_forward.1} parent=5 // pred_fallthru
      _
    %p6778 = scmp.le.s32.totalorder 2, %s68
    // Predicated region
    $region145: #{decoder_forward.1} parent=5 // pred_check
      %p6779 = pneg %p6778
    $region146: #{decoder_forward.1} parent=5 // pred_check_branch
      %6781 = sbr.rel (%p6779) target = $region148
    $region147: #{decoder_forward.1} parent=5 // pred_region
      %s6782 = ssub.s32 %s68, 2
      // Predicated region
      $region149: #{decoder_forward.1} parent=147 // pred_check
        %p6783 = pneg %p726
      $region150: #{decoder_forward.1} parent=147 // pred_check_branch
        %6785 = sbr.rel (%p6783) target = $region152
      $region151: #{decoder_forward.1} parent=147 // pred_region
        %p6786 = scmp.lt.s32.totalorder %s74, 1
        %s6787 = scalar_select %p6786, %s74, 1
        %s6788 = smul.addr %s6787, 4
        %s6789 = smul.addr %s6788, 8
        %s6790 = scalar_lea.vmem %s59, %s6789
      $region152: #{decoder_forward.1} parent=147 // pred_fallthru
        _
      // Predicated region
      $region153: #{decoder_forward.1} parent=147 // pred_check
        %p6791 = pneg %p752
      $region154: #{decoder_forward.1} parent=147 // pred_check_branch
        %6793 = sbr.rel (%p6791) target = $region156
      $region155: #{decoder_forward.1} parent=147 // pred_region
        %p6794 = scmp.lt.s32.totalorder %s74, 1
        %s6795 = scalar_select %p6794, %s74, 1
        %s6796 = smul.addr %s6795, 8
        %s6797 = smul.addr %s6796, 8
        %s6798 = scalar_lea.vmem %s61, %s6797
      $region156: #{decoder_forward.1} parent=147 // pred_fallthru
        _
    $region148: #{decoder_forward.1} parent=5 // pred_fallthru
      _
  $region6: #{decoder_forward.1} parent=0 // loop_footer
    %s72 = sadd.s32 1, %s68
  $region7: #{decoder_forward.1} parent=0 // loop_footer_branch
    %67 = sbr.rel target = $region3
  $region8: #{decoder_forward.1} parent=0 // loop_exit
    _

</llo_original>
